<compile_context>
chip_gen: v7x
topology: tpu7x:2x2x1
jax: 0.10.0
libtpu: 0.0.40
codegen_flags: <defaults>
</compile_context>

<pallas_src>
import math
from functools import partial

import jax
import jax.numpy as jnp
from jax.experimental import pallas as pl
from jax.experimental.pallas import tpu as pltpu

_VMEM_LIMIT = 64 * 1024 * 1024  # explicit scoped-VMEM budget (fits v7x too)
_DEFAULT_ROW_TILE = 256         # target rows per tile (multiple of 8)


def _row_tile(n, target=_DEFAULT_ROW_TILE):
    """Largest row tile <= target that divides n and is a multiple of 8."""
    if n <= target:
        return n
    for t in range(target, 7, -1):
        if n % t == 0 and t % 8 == 0:
            return t
    return n


def _const2d(shape):
    # weight / bias / LN-param tile: same block for every row-grid step,
    # so Pallas keeps it VMEM-resident instead of re-DMAing it.
    return pl.BlockSpec(shape, lambda i: (0, 0))


def _row_cparams():
    return pltpu.CompilerParams(
        dimension_semantics=("parallel",),
        vmem_limit_bytes=_VMEM_LIMIT,
    )


def _ln(x, gamma, beta, eps):
    # LayerNorm over last dim, biased variance (torch semantics), all f32.
    mu = jnp.mean(x, axis=-1, keepdims=True)
    xc = x - mu
    var = jnp.mean(xc * xc, axis=-1, keepdims=True)
    return xc * jax.lax.rsqrt(var + eps) * gamma + beta


# ---------------------------------------------------------------- kernels ---

def _qkv_kernel(x_ref, w_ref, b_ref, o_ref):
    # fused QKV projection: y = x @ [Wq|Wk|Wv] + [bq|bk|bv]
    x = x_ref[...].astype(jnp.bfloat16)                 # w_ref is already bf16
    o_ref[...] = (
        jnp.dot(x, w_ref[...], preferred_element_type=jnp.float32) + b_ref[...]
    )


def _attn_kernel(q_ref, k_ref, v_ref, o_ref, *, scale):
    # one batch: q, k, v : (H, S, dk) f32 in, f32 out
    q = (q_ref[...] * scale).astype(jnp.bfloat16)       # fold 1/sqrt(dk) into Q
    k = k_ref[...].astype(jnp.bfloat16)
    v = v_ref[...].astype(jnp.bfloat16)
    # contract last dims directly (no explicit K transpose / relayout)
    s = jnp.einsum("hqd,hkd->hqk", q, k, preferred_element_type=jnp.float32)
    m = jnp.max(s, axis=-1, keepdims=True)
    e = jnp.exp(s - m)
    denom = jnp.sum(e, axis=-1, keepdims=True)
    p = e * pl.reciprocal(denom, approx=True)           # EUP slot; VPU stays free
    o_ref[...] = jnp.einsum("hqk,hkd->hqd", p.astype(jnp.bfloat16), v,
                            preferred_element_type=jnp.float32)


def _oproj_add_ln_kernel(a_ref, x_ref, w_ref, b_ref, g_ref, beta_ref, o_ref,
                         *, eps):
    # LayerNorm( x + (attn @ Wo + bo) )  -- fused epilogue, one HBM round trip
    a = a_ref[...].astype(jnp.bfloat16)
    y = jnp.dot(a, w_ref[...], preferred_element_type=jnp.float32) + b_ref[...]
    o_ref[...] = _ln(x_ref[...] + y, g_ref[...], beta_ref[...], eps)


def _ffn_add_ln_kernel(x_ref, w1_ref, b1_ref, w2_ref, b2_ref, g_ref, beta_ref,
                       o_ref, *, eps):
    # LayerNorm( x + W2( GELU( W1 x + b1 ) ) + b2 )  with exact (erf) GELU
    x = x_ref[...]
    h = (jnp.dot(x.astype(jnp.bfloat16), w1_ref[...],
                 preferred_element_type=jnp.float32) + b1_ref[...])
    h = 0.5 * h * (1.0 + jax.lax.erf(h * 0.7071067811865476))
    f = (jnp.dot(h.astype(jnp.bfloat16), w2_ref[...],
                 preferred_element_type=jnp.float32) + b2_ref[...])
    o_ref[...] = _ln(x + f, g_ref[...], beta_ref[...], eps)


# ---------------------------------------------------------------- wrappers --

def qkv_proj(x2, wqkv_bf16, bqkv, *, tile_rows=_DEFAULT_ROW_TILE):
    N, D = x2.shape
    D3 = wqkv_bf16.shape[1]
    tn = _row_tile(N, tile_rows)
    return pl.pallas_call(
        _qkv_kernel,
        out_shape=jax.ShapeDtypeStruct((N, D3), jnp.float32),
        grid=(N // tn,),
        in_specs=[pl.BlockSpec((tn, D), lambda i: (i, 0)),
                  _const2d((D, D3)),
                  _const2d((1, D3))],
        out_specs=pl.BlockSpec((tn, D3), lambda i: (i, 0)),
        compiler_params=_row_cparams(),
    )(x2, wqkv_bf16, bqkv)


def attention(q3, k3, v3, num_heads, d_k):
    BH, S, dk = q3.shape
    B = BH // num_heads
    spec = pl.BlockSpec((num_heads, S, dk), lambda i: (i, 0, 0))
    return pl.pallas_call(
        partial(_attn_kernel, scale=1.0 / math.sqrt(d_k)),
        out_shape=jax.ShapeDtypeStruct((BH, S, dk), jnp.float32),
        grid=(B,),
        in_specs=[spec, spec, spec],
        out_specs=spec,
        compiler_params=pltpu.CompilerParams(
            dimension_semantics=("parallel",),
            vmem_limit_bytes=_VMEM_LIMIT),
    )(q3, k3, v3)


def oproj_add_ln(attn2, x2, wo_bf16, bo, gamma, beta, *, eps=1e-5,
                 tile_rows=_DEFAULT_ROW_TILE):
    N, D = x2.shape
    tn = _row_tile(N, tile_rows)
    row = pl.BlockSpec((tn, D), lambda i: (i, 0))
    return pl.pallas_call(
        partial(_oproj_add_ln_kernel, eps=eps),
        out_shape=jax.ShapeDtypeStruct((N, D), jnp.float32),
        grid=(N // tn,),
        in_specs=[row, row, _const2d((D, D)), _const2d((1, D)),
                  _const2d((1, D)), _const2d((1, D))],
        out_specs=row,
        compiler_params=_row_cparams(),
    )(attn2, x2, wo_bf16, bo, gamma, beta)


def ffn_add_ln(x2, w1_bf16, b1, w2_bf16, b2, gamma, beta, *, eps=1e-5,
               tile_rows=_DEFAULT_ROW_TILE):
    N, D = x2.shape
    Dff = w1_bf16.shape[1]
    tn = _row_tile(N, tile_rows)
    row = pl.BlockSpec((tn, D), lambda i: (i, 0))
    return pl.pallas_call(
        partial(_ffn_add_ln_kernel, eps=eps),
        out_shape=jax.ShapeDtypeStruct((N, D), jnp.float32),
        grid=(N // tn,),
        in_specs=[row,
                  _const2d((D, Dff)), _const2d((1, Dff)),
                  _const2d((Dff, D)), _const2d((1, D)),
                  _const2d((1, D)), _const2d((1, D))],
        out_specs=row,
        compiler_params=_row_cparams(),
    )(x2, w1_bf16, b1, w2_bf16, b2, gamma, beta)


@partial(jax.jit, static_argnames=("num_heads",))
def transformer_encode_block(x, p, num_heads):
    B, S, D = x.shape
    H = num_heads
    dk = D // H
    bf = jnp.bfloat16
    x2 = x.reshape(B * S, D)

    # --- MultiHeadAttention ---
    wqkv = jnp.concatenate([p["wq"], p["wk"], p["wv"]], axis=1).astype(bf)
    bqkv = jnp.concatenate([p["bq"], p["bk"], p["bv"]], axis=1)
    qkv = qkv_proj(x2, wqkv, bqkv)                         # (B*S, 3D) f32
    q, k, v = qkv[:, :D], qkv[:, D:2 * D], qkv[:, 2 * D:]
    # PyTorch: Q.view(B, H, S, d_k)  == plain row-major reshape (NOT transpose)
    q3 = q.reshape(B * H, S, dk)
    k3 = k.reshape(B * H, S, dk)
    v3 = v.reshape(B * H, S, dk)
    attn = attention(q3, k3, v3, H, dk)                    # (B*H, S, dk)
    attn2 = attn.reshape(B * S, D)                         # == .contiguous().view

    # --- o_proj (+ dropout == identity) + residual + LayerNorm (shared lay) ---
    h1 = oproj_add_ln(attn2, x2, p["wo"].astype(bf), p["bo"],
                      p["gamma"], p["beta"])

    # --- FeedForward + residual + LayerNorm (same lay) ---
    h2 = ffn_add_ln(h1, p["w1"].astype(bf), p["b1"],
                    p["w2"].astype(bf), p["b2"],
                    p["gamma"], p["beta"])
    return h2.reshape(B, S, D)


# ---------------------------------------------------------------- reference -

def reference_block(x, p, num_heads):
    # Mirrors the kernel's bf16 matmul-input casts (f32 accumulation) so the
    # comparison isolates kernel correctness rather than bf16 rounding.
    B, S, D = x.shape
    H = num_heads
    dk = D // H
    bf = jnp.bfloat16

    def lin(z, w, b):
        return jnp.dot(z.astype(bf), w.astype(bf),
                       preferred_element_type=jnp.float32) + b

    def ln(z, g, b, eps=1e-5):
        mu = z.mean(-1, keepdims=True)
        xc = z - mu
        var = (xc * xc).mean(-1, keepdims=True)
        return xc * jax.lax.rsqrt(var + eps) * g + b

    x2 = x.reshape(B * S, D)
    q = lin(x2, p["wq"], p["bq"]).reshape(B, H, S, dk)
    k = lin(x2, p["wk"], p["bk"]).reshape(B, H, S, dk)
    v = lin(x2, p["wv"], p["bv"]).reshape(B, H, S, dk)
    scale = 1.0 / math.sqrt(dk)
    s = jnp.einsum("bhqd,bhkd->bhqk", (q * scale).astype(bf), k.astype(bf),
                   preferred_element_type=jnp.float32)
    a = jax.nn.softmax(s, axis=-1)
    ctx = jnp.einsum("bhqk,bhkd->bhqd", a.astype(bf), v.astype(bf),
                     preferred_element_type=jnp.float32)
    attn2 = ctx.reshape(B * S, D)
    o = lin(attn2, p["wo"], p["bo"])
    h1 = ln(x2 + o, p["gamma"], p["beta"])
    f = lin(h1, p["w1"], p["b1"])
    f = 0.5 * f * (1.0 + jax.lax.erf(f * 0.7071067811865476))
    f = lin(f, p["w2"], p["b2"])
    h2 = ln(h1 + f, p["gamma"], p["beta"])
    return h2.reshape(B, S, D)


# ---------------------------------------------------------------- main ------

if __name__ == "__main__":
    # Small but tile-exercising shapes: N = B*S = 512 rows -> row grid of 2.
    B, S, D, H = 2, 256, 128, 4
    Dff = 4 * D

    key = jax.random.PRNGKey(0)
    ks = jax.random.split(key, 16)

    def w(k, shape, scale=0.02):
        return (scale * jax.random.normal(k, shape)).astype(jnp.float32)

    params = {
        "wq": w(ks[0], (D, D)), "bq": w(ks[1], (1, D)),
        "wk": w(ks[2], (D, D)), "bk": w(ks[3], (1, D)),
        "wv": w(ks[4], (D, D)), "bv": w(ks[5], (1, D)),
        "wo": w(ks[6], (D, D)), "bo": w(ks[7], (1, D)),
        "w1": w(ks[8], (D, Dff)), "b1": w(ks[9], (1, Dff)),
        "w2": w(ks[10], (Dff, D)), "b2": w(ks[11], (1, D)),
        "gamma": jnp.ones((1, D), jnp.float32),
        "beta": jnp.zeros((1, D), jnp.float32),
    }

    x = jax.random.normal(ks[12], (B, S, D)).astype(jnp.float32)

    out = jax.block_until_ready(transformer_encode_block(x, params, num_heads=H))
    ref = jax.block_until_ready(reference_block(x, params, H))

    assert out.shape == (B, S, D)
    err = float(jnp.max(jnp.abs(out - ref)))
    assert err < 2e-2, f"max abs err = {err}"

    print("KERNEL_OK")
</pallas_src>

<mosaic_0001>
module attributes {stable_mosaic.version = 11 : i64} {
  func.func @_qkv_kernel(%arg0: i32, %arg1: memref<256x128xf32, #tpu.memory_space<vmem>>, %arg2: memref<128x384xbf16, #tpu.memory_space<vmem>>, %arg3: memref<1x384xf32, #tpu.memory_space<vmem>>, %arg4: memref<256x384xf32, #tpu.memory_space<vmem>>) attributes {dimension_semantics = [#tpu.dimension_semantics<parallel>], iteration_bounds = array<i64: 2>, scalar_prefetch = 0 : i64, scratch_operands = 0 : i64, tpu.core_type = #tpu.core_type<tc>, window_params = [{transform_indices = @transform_0, window_bounds = array<i64: 256, 128>}, {pipeline_mode = #tpu.pipeline_mode<synchronous>, transform_indices = @transform_1, window_bounds = array<i64: 128, 384>}, {pipeline_mode = #tpu.pipeline_mode<synchronous>, transform_indices = @transform_2, window_bounds = array<i64: 1, 384>}, {transform_indices = @transform_3, window_bounds = array<i64: 256, 384>}]} {
    %c0 = arith.constant 0 : index
    %c0_0 = arith.constant 0 : index
    %0 = vector.load %arg1[%c0, %c0_0] : memref<256x128xf32, #tpu.memory_space<vmem>>, vector<256x128xf32>
    %1 = arith.truncf %0 : vector<256x128xf32> to vector<256x128xbf16>
    %c0_1 = arith.constant 0 : index
    %c0_2 = arith.constant 0 : index
    %2 = vector.load %arg2[%c0_1, %c0_2] : memref<128x384xbf16, #tpu.memory_space<vmem>>, vector<128x384xbf16>
    %cst = arith.constant dense<0.000000e+00> : vector<256x384xf32>
    %3 = tpu.matmul %1, %2, %cst {dimension_numbers = #tpu.dot_dimension_numbers<[1], [0], [0], [1], [0, 0, 1, 1], [], []>} : vector<256x128xbf16>, vector<128x384xbf16>, vector<256x384xf32> -> vector<256x384xf32>
    %c0_3 = arith.constant 0 : index
    %c0_4 = arith.constant 0 : index
    %4 = vector.load %arg3[%c0_3, %c0_4] : memref<1x384xf32, #tpu.memory_space<vmem>>, vector<1x384xf32>
    %5 = vector.broadcast %4 : vector<1x384xf32> to vector<256x384xf32>
    %6 = arith.addf %3, %5 : vector<256x384xf32>
    %c0_5 = arith.constant 0 : index
    %c0_6 = arith.constant 0 : index
    %7 = vector.load %arg4[%c0_5, %c0_6] : memref<256x384xf32, #tpu.memory_space<vmem>>, vector<256x384xf32>
    tpu.vector_store %arg4[%c0_5, %c0_6], %6 {strides = array<i32>} : memref<256x384xf32, #tpu.memory_space<vmem>>, vector<256x384xf32>,
    return
  }
  func.func @transform_0(%arg0: i32) -> (i32, i32) {
    %c0_i32 = arith.constant 0 : i32
    %c0_i32_0 = arith.constant 0 : i32
    return %arg0, %c0_i32 : i32, i32
  }
  func.func @transform_1(%arg0: i32) -> (i32, i32) {
    %c0_i32 = arith.constant 0 : i32
    %c0_i32_0 = arith.constant 0 : i32
    %c0_i32_1 = arith.constant 0 : i32
    return %c0_i32, %c0_i32_0 : i32, i32
  }
  func.func @transform_2(%arg0: i32) -> (i32, i32) {
    %c0_i32 = arith.constant 0 : i32
    %c0_i32_0 = arith.constant 0 : i32
    %c0_i32_1 = arith.constant 0 : i32
    return %c0_i32, %c0_i32_0 : i32, i32
  }
  func.func @transform_3(%arg0: i32) -> (i32, i32) {
    %c0_i32 = arith.constant 0 : i32
    %c0_i32_0 = arith.constant 0 : i32
    return %arg0, %c0_i32 : i32, i32
  }
}

module attributes {stable_mosaic.version = 11 : i64} {
  func.func @_attn_kernel(%arg0: i32, %arg1: memref<4x256x32xf32, #tpu.memory_space<vmem>>, %arg2: memref<4x256x32xf32, #tpu.memory_space<vmem>>, %arg3: memref<4x256x32xf32, #tpu.memory_space<vmem>>, %arg4: memref<4x256x32xf32, #tpu.memory_space<vmem>>) attributes {dimension_semantics = [#tpu.dimension_semantics<parallel>], iteration_bounds = array<i64: 2>, scalar_prefetch = 0 : i64, scratch_operands = 0 : i64, tpu.core_type = #tpu.core_type<tc>, window_params = [{transform_indices = @transform_0, window_bounds = array<i64: 4, 256, 32>}, {transform_indices = @transform_1, window_bounds = array<i64: 4, 256, 32>}, {transform_indices = @transform_2, window_bounds = array<i64: 4, 256, 32>}, {transform_indices = @transform_3, window_bounds = array<i64: 4, 256, 32>}]} {
    %c0 = arith.constant 0 : index
    %c0_0 = arith.constant 0 : index
    %c0_1 = arith.constant 0 : index
    %0 = vector.load %arg1[%c0, %c0_0, %c0_1] : memref<4x256x32xf32, #tpu.memory_space<vmem>>, vector<4x256x32xf32>
    %cst = arith.constant 0.176776692 : f32
    %1 = vector.broadcast %cst : f32 to vector<4x256x32xf32>
    %2 = arith.mulf %0, %1 : vector<4x256x32xf32>
    %3 = arith.truncf %2 : vector<4x256x32xf32> to vector<4x256x32xbf16>
    %c0_2 = arith.constant 0 : index
    %c0_3 = arith.constant 0 : index
    %c0_4 = arith.constant 0 : index
    %4 = vector.load %arg2[%c0_2, %c0_3, %c0_4] : memref<4x256x32xf32, #tpu.memory_space<vmem>>, vector<4x256x32xf32>
    %5 = arith.truncf %4 : vector<4x256x32xf32> to vector<4x256x32xbf16>
    %c0_5 = arith.constant 0 : index
    %c0_6 = arith.constant 0 : index
    %c0_7 = arith.constant 0 : index
    %6 = vector.load %arg3[%c0_5, %c0_6, %c0_7] : memref<4x256x32xf32, #tpu.memory_space<vmem>>, vector<4x256x32xf32>
    %7 = arith.truncf %6 : vector<4x256x32xf32> to vector<4x256x32xbf16>
    "tpu.trace_start"() <{level = 10 : i32, message = "hqd,hkd->hqk"}> : () -> ()
    %cst_8 = arith.constant dense<0.000000e+00> : vector<4x256x256xf32>
    %8 = tpu.matmul %3, %5, %cst_8 {dimension_numbers = #tpu.dot_dimension_numbers<[2], [2], [1], [1], [0, 0, 0, 1, 1, 1], [0], [0]>} : vector<4x256x32xbf16>, vector<4x256x32xbf16>, vector<4x256x256xf32> -> vector<4x256x256xf32>
    "tpu.trace_stop"() : () -> ()
    %cst_9 = arith.constant dense<0xFF800000> : vector<4x256xf32>
    %9 = vector.multi_reduction <maximumf>, %8, %cst_9 [2] : vector<4x256x256xf32> to vector<4x256xf32>
    %10 = vector.shape_cast %9 : vector<4x256xf32> to vector<4x256x1xf32>
    %11 = vector.broadcast %10 : vector<4x256x1xf32> to vector<4x256x256xf32>
    %12 = arith.subf %8, %11 : vector<4x256x256xf32>
    %13 = math.exp %12 : vector<4x256x256xf32>
    %cst_10 = arith.constant dense<0.000000e+00> : vector<4x256xf32>
    %14 = vector.multi_reduction <add>, %13, %cst_10 [2] : vector<4x256x256xf32> to vector<4x256xf32>
    %15 = vector.shape_cast %14 : vector<4x256xf32> to vector<4x256x1xf32>
    %16 = tpu.reciprocal %15 {approx = true} : vector<4x256x1xf32> -> vector<4x256x1xf32>
    %17 = vector.broadcast %16 : vector<4x256x1xf32> to vector<4x256x256xf32>
    %18 = arith.mulf %13, %17 : vector<4x256x256xf32>
    %19 = arith.truncf %18 : vector<4x256x256xf32> to vector<4x256x256xbf16>
    "tpu.trace_start"() <{level = 10 : i32, message = "hqk,hkd->hqd"}> : () -> ()
    %cst_11 = arith.constant dense<0.000000e+00> : vector<4x256x32xf32>
    %20 = tpu.matmul %19, %7, %cst_11 {dimension_numbers = #tpu.dot_dimension_numbers<[2], [1], [1], [2], [0, 0, 0, 1, 1, 2], [0], [0]>} : vector<4x256x256xbf16>, vector<4x256x32xbf16>, vector<4x256x32xf32> -> vector<4x256x32xf32>
    "tpu.trace_stop"() : () -> ()
    %c0_12 = arith.constant 0 : index
    %c0_13 = arith.constant 0 : index
    %c0_14 = arith.constant 0 : index
    %21 = vector.load %arg4[%c0_12, %c0_13, %c0_14] : memref<4x256x32xf32, #tpu.memory_space<vmem>>, vector<4x256x32xf32>
    tpu.vector_store %arg4[%c0_12, %c0_13, %c0_14], %20 {strides = array<i32>} : memref<4x256x32xf32, #tpu.memory_space<vmem>>, vector<4x256x32xf32>,
    return
  }
  func.func @transform_0(%arg0: i32) -> (i32, i32, i32) {
    %c0_i32 = arith.constant 0 : i32
    %c0_i32_0 = arith.constant 0 : i32
    %c0_i32_1 = arith.constant 0 : i32
    return %arg0, %c0_i32, %c0_i32_0 : i32, i32, i32
  }
  func.func @transform_1(%arg0: i32) -> (i32, i32, i32) {
    %c0_i32 = arith.constant 0 : i32
    %c0_i32_0 = arith.constant 0 : i32
    %c0_i32_1 = arith.constant 0 : i32
    return %arg0, %c0_i32, %c0_i32_0 : i32, i32, i32
  }
  func.func @transform_2(%arg0: i32) -> (i32, i32, i32) {
    %c0_i32 = arith.constant 0 : i32
    %c0_i32_0 = arith.constant 0 : i32
    %c0_i32_1 = arith.constant 0 : i32
    return %arg0, %c0_i32, %c0_i32_0 : i32, i32, i32
  }
  func.func @transform_3(%arg0: i32) -> (i32, i32, i32) {
    %c0_i32 = arith.constant 0 : i32
    %c0_i32_0 = arith.constant 0 : i32
    %c0_i32_1 = arith.constant 0 : i32
    return %arg0, %c0_i32, %c0_i32_0 : i32, i32, i32
  }
}

module attributes {stable_mosaic.version = 11 : i64} {
  func.func @_oproj_add_ln_kernel(%arg0: i32, %arg1: memref<256x128xf32, #tpu.memory_space<vmem>>, %arg2: memref<256x128xf32, #tpu.memory_space<vmem>>, %arg3: memref<128x128xbf16, #tpu.memory_space<vmem>>, %arg4: memref<1x128xf32, #tpu.memory_space<vmem>>, %arg5: memref<1x128xf32, #tpu.memory_space<vmem>>, %arg6: memref<1x128xf32, #tpu.memory_space<vmem>>, %arg7: memref<256x128xf32, #tpu.memory_space<vmem>>) attributes {dimension_semantics = [#tpu.dimension_semantics<parallel>], iteration_bounds = array<i64: 2>, scalar_prefetch = 0 : i64, scratch_operands = 0 : i64, tpu.core_type = #tpu.core_type<tc>, window_params = [{transform_indices = @transform_0, window_bounds = array<i64: 256, 128>}, {transform_indices = @transform_1, window_bounds = array<i64: 256, 128>}, {pipeline_mode = #tpu.pipeline_mode<synchronous>, transform_indices = @transform_2, window_bounds = array<i64: 128, 128>}, {pipeline_mode = #tpu.pipeline_mode<synchronous>, transform_indices = @transform_3, window_bounds = array<i64: 1, 128>}, {pipeline_mode = #tpu.pipeline_mode<synchronous>, transform_indices = @transform_4, window_bounds = array<i64: 1, 128>}, {pipeline_mode = #tpu.pipeline_mode<synchronous>, transform_indices = @transform_5, window_bounds = array<i64: 1, 128>}, {transform_indices = @transform_6, window_bounds = array<i64: 256, 128>}]} {
    %c0 = arith.constant 0 : index
    %c0_0 = arith.constant 0 : index
    %0 = vector.load %arg1[%c0, %c0_0] : memref<256x128xf32, #tpu.memory_space<vmem>>, vector<256x128xf32>
    %1 = arith.truncf %0 : vector<256x128xf32> to vector<256x128xbf16>
    %c0_1 = arith.constant 0 : index
    %c0_2 = arith.constant 0 : index
    %2 = vector.load %arg3[%c0_1, %c0_2] : memref<128x128xbf16, #tpu.memory_space<vmem>>, vector<128x128xbf16>
    %cst = arith.constant dense<0.000000e+00> : vector<256x128xf32>
    %3 = tpu.matmul %1, %2, %cst {dimension_numbers = #tpu.dot_dimension_numbers<[1], [0], [0], [1], [0, 0, 1, 1], [], []>} : vector<256x128xbf16>, vector<128x128xbf16>, vector<256x128xf32> -> vector<256x128xf32>
    %c0_3 = arith.constant 0 : index
    %c0_4 = arith.constant 0 : index
    %4 = vector.load %arg4[%c0_3, %c0_4] : memref<1x128xf32, #tpu.memory_space<vmem>>, vector<1x128xf32>
    %5 = vector.broadcast %4 : vector<1x128xf32> to vector<256x128xf32>
    %6 = arith.addf %3, %5 : vector<256x128xf32>
    %c0_5 = arith.constant 0 : index
    %c0_6 = arith.constant 0 : index
    %7 = vector.load %arg2[%c0_5, %c0_6] : memref<256x128xf32, #tpu.memory_space<vmem>>, vector<256x128xf32>
    %8 = arith.addf %7, %6 : vector<256x128xf32>
    %c0_7 = arith.constant 0 : index
    %c0_8 = arith.constant 0 : index
    %9 = vector.load %arg5[%c0_7, %c0_8] : memref<1x128xf32, #tpu.memory_space<vmem>>, vector<1x128xf32>
    %c0_9 = arith.constant 0 : index
    %c0_10 = arith.constant 0 : index
    %10 = vector.load %arg6[%c0_9, %c0_10] : memref<1x128xf32, #tpu.memory_space<vmem>>, vector<1x128xf32>
    %cst_11 = arith.constant dense<0.000000e+00> : vector<256xf32>
    %11 = vector.multi_reduction <add>, %8, %cst_11 [1] : vector<256x128xf32> to vector<256xf32>
    %12 = vector.shape_cast %11 : vector<256xf32> to vector<256x1xf32>
    %cst_12 = arith.constant 1.280000e+02 : f32
    %13 = vector.broadcast %cst_12 : f32 to vector<256x1xf32>
    %14 = arith.divf %12, %13 : vector<256x1xf32>
    %15 = vector.broadcast %14 : vector<256x1xf32> to vector<256x128xf32>
    %16 = arith.subf %8, %15 : vector<256x128xf32>
    %17 = arith.mulf %16, %16 : vector<256x128xf32>
    %cst_13 = arith.constant dense<0.000000e+00> : vector<256xf32>
    %18 = vector.multi_reduction <add>, %17, %cst_13 [1] : vector<256x128xf32> to vector<256xf32>
    %19 = vector.shape_cast %18 : vector<256xf32> to vector<256x1xf32>
    %cst_14 = arith.constant 1.280000e+02 : f32
    %20 = vector.broadcast %cst_14 : f32 to vector<256x1xf32>
    %21 = arith.divf %19, %20 : vector<256x1xf32>
    %cst_15 = arith.constant 9.99999974E-6 : f32
    %22 = vector.broadcast %cst_15 : f32 to vector<256x1xf32>
    %23 = arith.addf %21, %22 : vector<256x1xf32>
    %24 = math.rsqrt %23 : vector<256x1xf32>
    %25 = vector.broadcast %24 : vector<256x1xf32> to vector<256x128xf32>
    %26 = arith.mulf %16, %25 : vector<256x128xf32>
    %27 = vector.broadcast %9 : vector<1x128xf32> to vector<256x128xf32>
    %28 = arith.mulf %26, %27 : vector<256x128xf32>
    %29 = vector.broadcast %10 : vector<1x128xf32> to vector<256x128xf32>
    %30 = arith.addf %28, %29 : vector<256x128xf32>
    %c0_16 = arith.constant 0 : index
    %c0_17 = arith.constant 0 : index
    %31 = vector.load %arg7[%c0_16, %c0_17] : memref<256x128xf32, #tpu.memory_space<vmem>>, vector<256x128xf32>
    tpu.vector_store %arg7[%c0_16, %c0_17], %30 {strides = array<i32>} : memref<256x128xf32, #tpu.memory_space<vmem>>, vector<256x128xf32>,
    return
  }
  func.func @transform_0(%arg0: i32) -> (i32, i32) {
    %c0_i32 = arith.constant 0 : i32
    %c0_i32_0 = arith.constant 0 : i32
    return %arg0, %c0_i32 : i32, i32
  }
  func.func @transform_1(%arg0: i32) -> (i32, i32) {
    %c0_i32 = arith.constant 0 : i32
    %c0_i32_0 = arith.constant 0 : i32
    return %arg0, %c0_i32 : i32, i32
  }
  func.func @transform_2(%arg0: i32) -> (i32, i32) {
    %c0_i32 = arith.constant 0 : i32
    %c0_i32_0 = arith.constant 0 : i32
    %c0_i32_1 = arith.constant 0 : i32
    return %c0_i32, %c0_i32_0 : i32, i32
  }
  func.func @transform_3(%arg0: i32) -> (i32, i32) {
    %c0_i32 = arith.constant 0 : i32
    %c0_i32_0 = arith.constant 0 : i32
    %c0_i32_1 = arith.constant 0 : i32
    return %c0_i32, %c0_i32_0 : i32, i32
  }
  func.func @transform_4(%arg0: i32) -> (i32, i32) {
    %c0_i32 = arith.constant 0 : i32
    %c0_i32_0 = arith.constant 0 : i32
    %c0_i32_1 = arith.constant 0 : i32
    return %c0_i32, %c0_i32_0 : i32, i32
  }
  func.func @transform_5(%arg0: i32) -> (i32, i32) {
    %c0_i32 = arith.constant 0 : i32
    %c0_i32_0 = arith.constant 0 : i32
    %c0_i32_1 = arith.constant 0 : i32
    return %c0_i32, %c0_i32_0 : i32, i32
  }
  func.func @transform_6(%arg0: i32) -> (i32, i32) {
    %c0_i32 = arith.constant 0 : i32
    %c0_i32_0 = arith.constant 0 : i32
    return %arg0, %c0_i32 : i32, i32
  }
}

module attributes {stable_mosaic.version = 11 : i64} {
  func.func @_ffn_add_ln_kernel(%arg0: i32, %arg1: memref<256x128xf32, #tpu.memory_space<vmem>>, %arg2: memref<128x512xbf16, #tpu.memory_space<vmem>>, %arg3: memref<1x512xf32, #tpu.memory_space<vmem>>, %arg4: memref<512x128xbf16, #tpu.memory_space<vmem>>, %arg5: memref<1x128xf32, #tpu.memory_space<vmem>>, %arg6: memref<1x128xf32, #tpu.memory_space<vmem>>, %arg7: memref<1x128xf32, #tpu.memory_space<vmem>>, %arg8: memref<256x128xf32, #tpu.memory_space<vmem>>) attributes {dimension_semantics = [#tpu.dimension_semantics<parallel>], iteration_bounds = array<i64: 2>, scalar_prefetch = 0 : i64, scratch_operands = 0 : i64, tpu.core_type = #tpu.core_type<tc>, window_params = [{transform_indices = @transform_0, window_bounds = array<i64: 256, 128>}, {pipeline_mode = #tpu.pipeline_mode<synchronous>, transform_indices = @transform_1, window_bounds = array<i64: 128, 512>}, {pipeline_mode = #tpu.pipeline_mode<synchronous>, transform_indices = @transform_2, window_bounds = array<i64: 1, 512>}, {pipeline_mode = #tpu.pipeline_mode<synchronous>, transform_indices = @transform_3, window_bounds = array<i64: 512, 128>}, {pipeline_mode = #tpu.pipeline_mode<synchronous>, transform_indices = @transform_4, window_bounds = array<i64: 1, 128>}, {pipeline_mode = #tpu.pipeline_mode<synchronous>, transform_indices = @transform_5, window_bounds = array<i64: 1, 128>}, {pipeline_mode = #tpu.pipeline_mode<synchronous>, transform_indices = @transform_6, window_bounds = array<i64: 1, 128>}, {transform_indices = @transform_7, window_bounds = array<i64: 256, 128>}]} {
    %c0 = arith.constant 0 : index
    %c0_0 = arith.constant 0 : index
    %0 = vector.load %arg1[%c0, %c0_0] : memref<256x128xf32, #tpu.memory_space<vmem>>, vector<256x128xf32>
    %1 = arith.truncf %0 : vector<256x128xf32> to vector<256x128xbf16>
    %c0_1 = arith.constant 0 : index
    %c0_2 = arith.constant 0 : index
    %2 = vector.load %arg2[%c0_1, %c0_2] : memref<128x512xbf16, #tpu.memory_space<vmem>>, vector<128x512xbf16>
    %cst = arith.constant dense<0.000000e+00> : vector<256x512xf32>
    %3 = tpu.matmul %1, %2, %cst {dimension_numbers = #tpu.dot_dimension_numbers<[1], [0], [0], [1], [0, 0, 1, 1], [], []>} : vector<256x128xbf16>, vector<128x512xbf16>, vector<256x512xf32> -> vector<256x512xf32>
    %c0_3 = arith.constant 0 : index
    %c0_4 = arith.constant 0 : index
    %4 = vector.load %arg3[%c0_3, %c0_4] : memref<1x512xf32, #tpu.memory_space<vmem>>, vector<1x512xf32>
    %5 = vector.broadcast %4 : vector<1x512xf32> to vector<256x512xf32>
    %6 = arith.addf %3, %5 : vector<256x512xf32>
    %cst_5 = arith.constant 5.000000e-01 : f32
    %7 = vector.broadcast %cst_5 : f32 to vector<256x512xf32>
    %8 = arith.mulf %7, %6 : vector<256x512xf32>
    %cst_6 = arith.constant 0.707106769 : f32
    %9 = vector.broadcast %cst_6 : f32 to vector<256x512xf32>
    %10 = arith.mulf %6, %9 : vector<256x512xf32>
    %11 = math.erf %10 : vector<256x512xf32>
    %cst_7 = arith.constant 1.000000e+00 : f32
    %12 = vector.broadcast %cst_7 : f32 to vector<256x512xf32>
    %13 = arith.addf %12, %11 : vector<256x512xf32>
    %14 = arith.mulf %8, %13 : vector<256x512xf32>
    %15 = arith.truncf %14 : vector<256x512xf32> to vector<256x512xbf16>
    %c0_8 = arith.constant 0 : index
    %c0_9 = arith.constant 0 : index
    %16 = vector.load %arg4[%c0_8, %c0_9] : memref<512x128xbf16, #tpu.memory_space<vmem>>, vector<512x128xbf16>
    %cst_10 = arith.constant dense<0.000000e+00> : vector<256x128xf32>
    %17 = tpu.matmul %15, %16, %cst_10 {dimension_numbers = #tpu.dot_dimension_numbers<[1], [0], [0], [1], [0, 0, 1, 1], [], []>} : vector<256x512xbf16>, vector<512x128xbf16>, vector<256x128xf32> -> vector<256x128xf32>
    %c0_11 = arith.constant 0 : index
    %c0_12 = arith.constant 0 : index
    %18 = vector.load %arg5[%c0_11, %c0_12] : memref<1x128xf32, #tpu.memory_space<vmem>>, vector<1x128xf32>
    %19 = vector.broadcast %18 : vector<1x128xf32> to vector<256x128xf32>
    %20 = arith.addf %17, %19 : vector<256x128xf32>
    %21 = arith.addf %0, %20 : vector<256x128xf32>
    %c0_13 = arith.constant 0 : index
    %c0_14 = arith.constant 0 : index
    %22 = vector.load %arg6[%c0_13, %c0_14] : memref<1x128xf32, #tpu.memory_space<vmem>>, vector<1x128xf32>
    %c0_15 = arith.constant 0 : index
    %c0_16 = arith.constant 0 : index
    %23 = vector.load %arg7[%c0_15, %c0_16] : memref<1x128xf32, #tpu.memory_space<vmem>>, vector<1x128xf32>
    %cst_17 = arith.constant dense<0.000000e+00> : vector<256xf32>
    %24 = vector.multi_reduction <add>, %21, %cst_17 [1] : vector<256x128xf32> to vector<256xf32>
    %25 = vector.shape_cast %24 : vector<256xf32> to vector<256x1xf32>
    %cst_18 = arith.constant 1.280000e+02 : f32
    %26 = vector.broadcast %cst_18 : f32 to vector<256x1xf32>
    %27 = arith.divf %25, %26 : vector<256x1xf32>
    %28 = vector.broadcast %27 : vector<256x1xf32> to vector<256x128xf32>
    %29 = arith.subf %21, %28 : vector<256x128xf32>
    %30 = arith.mulf %29, %29 : vector<256x128xf32>
    %cst_19 = arith.constant dense<0.000000e+00> : vector<256xf32>
    %31 = vector.multi_reduction <add>, %30, %cst_19 [1] : vector<256x128xf32> to vector<256xf32>
    %32 = vector.shape_cast %31 : vector<256xf32> to vector<256x1xf32>
    %cst_20 = arith.constant 1.280000e+02 : f32
    %33 = vector.broadcast %cst_20 : f32 to vector<256x1xf32>
    %34 = arith.divf %32, %33 : vector<256x1xf32>
    %cst_21 = arith.constant 9.99999974E-6 : f32
    %35 = vector.broadcast %cst_21 : f32 to vector<256x1xf32>
    %36 = arith.addf %34, %35 : vector<256x1xf32>
    %37 = math.rsqrt %36 : vector<256x1xf32>
    %38 = vector.broadcast %37 : vector<256x1xf32> to vector<256x128xf32>
    %39 = arith.mulf %29, %38 : vector<256x128xf32>
    %40 = vector.broadcast %22 : vector<1x128xf32> to vector<256x128xf32>
    %41 = arith.mulf %39, %40 : vector<256x128xf32>
    %42 = vector.broadcast %23 : vector<1x128xf32> to vector<256x128xf32>
    %43 = arith.addf %41, %42 : vector<256x128xf32>
    %c0_22 = arith.constant 0 : index
    %c0_23 = arith.constant 0 : index
    %44 = vector.load %arg8[%c0_22, %c0_23] : memref<256x128xf32, #tpu.memory_space<vmem>>, vector<256x128xf32>
    tpu.vector_store %arg8[%c0_22, %c0_23], %43 {strides = array<i32>} : memref<256x128xf32, #tpu.memory_space<vmem>>, vector<256x128xf32>,
    return
  }
  func.func @transform_0(%arg0: i32) -> (i32, i32) {
    %c0_i32 = arith.constant 0 : i32
    %c0_i32_0 = arith.constant 0 : i32
    return %arg0, %c0_i32 : i32, i32
  }
  func.func @transform_1(%arg0: i32) -> (i32, i32) {
    %c0_i32 = arith.constant 0 : i32
    %c0_i32_0 = arith.constant 0 : i32
    %c0_i32_1 = arith.constant 0 : i32
    return %c0_i32, %c0_i32_0 : i32, i32
  }
  func.func @transform_2(%arg0: i32) -> (i32, i32) {
    %c0_i32 = arith.constant 0 : i32
    %c0_i32_0 = arith.constant 0 : i32
    %c0_i32_1 = arith.constant 0 : i32
    return %c0_i32, %c0_i32_0 : i32, i32
  }
  func.func @transform_3(%arg0: i32) -> (i32, i32) {
    %c0_i32 = arith.constant 0 : i32
    %c0_i32_0 = arith.constant 0 : i32
    %c0_i32_1 = arith.constant 0 : i32
    return %c0_i32, %c0_i32_0 : i32, i32
  }
  func.func @transform_4(%arg0: i32) -> (i32, i32) {
    %c0_i32 = arith.constant 0 : i32
    %c0_i32_0 = arith.constant 0 : i32
    %c0_i32_1 = arith.constant 0 : i32
    return %c0_i32, %c0_i32_0 : i32, i32
  }
  func.func @transform_5(%arg0: i32) -> (i32, i32) {
    %c0_i32 = arith.constant 0 : i32
    %c0_i32_0 = arith.constant 0 : i32
    %c0_i32_1 = arith.constant 0 : i32
    return %c0_i32, %c0_i32_0 : i32, i32
  }
  func.func @transform_6(%arg0: i32) -> (i32, i32) {
    %c0_i32 = arith.constant 0 : i32
    %c0_i32_0 = arith.constant 0 : i32
    %c0_i32_1 = arith.constant 0 : i32
    return %c0_i32, %c0_i32_0 : i32, i32
  }
  func.func @transform_7(%arg0: i32) -> (i32, i32) {
    %c0_i32 = arith.constant 0 : i32
    %c0_i32_0 = arith.constant 0 : i32
    return %arg0, %c0_i32 : i32, i32
  }
}

</mosaic_0001>

<llo_original>
// kernel: transformer_encode_block.4
$region0: #{transformer_encode_block.4}
  #allocation0 [shape = 'u32[]', space=smem, size = 0x4, offset = 0x4, fixed_abs, tag = 'smem constant byte address 0x4 - core index']
  #allocation1 [shape = 'u32[144,128]{1,0:T(1,128)}', space=vmem, size = 0x12000, scoped, tag = 'internal scratch']
  %s0 = inlined_call_operand.hbm [shape: f32[512,128], index: 0, kind: input, shape index: {}]
  %s1 = inlined_call_operand.hbm [shape: bf16[128,384], index: 1, kind: input, shape index: {}]
  %s2 = inlined_call_operand.hbm [shape: f32[1,384], index: 2, kind: input, shape index: {}]
  %s3 = inlined_call_operand.hbm [shape: f32[512,384], index: 3, kind: output, shape index: {}]
  %s4 = sld [smem:[#allocation0]]
  $region57: #{transformer_encode_block.4} parent=0
    _
  %s6 = ssub.s32 1, %s4
  %s7 = scalar_select 0, %s6, %s4
  $region1: #{transformer_encode_block.4} parent=0
    #allocation2 [shape = 'u8[262144]{0}', space=vmem, size = 0x40000, scoped, tag = 'input window, operand 0']
    #allocation3 [shape = 's32[2]{0}', space=sflag, size = 0x8, scoped, tag = 'scoped memory for transformer_encode_block.4']
    #allocation4 [shape = 's32[2]{0}', space=sflag, size = 0x8, scoped, tag = 'scoped memory for transformer_encode_block.4']
    #allocation5 [shape = 'u8[98304]{0}', space=vmem, size = 0x18000, scoped, tag = 'input window, operand 1, single buffered']
    #allocation6 [shape = 's32[1]{0}', space=sflag, size = 0x4, scoped, tag = 'scoped memory for transformer_encode_block.4']
    #allocation7 [shape = 'u8[1536]{0}', space=vmem, size = 0x800, scoped, tag = 'input window, operand 2, single buffered']
    #allocation8 [shape = 'u8[786432]{0}', space=vmem, size = 0xc0000, scoped, tag = 'output window, operand 0']
    %8 = vsyncpa [#allocation3], 0
    %s9 = scalar_lea.sflag [#allocation3], 1
    %10 = vsyncpa %s9, 0
    %11 = vsyncpa [#allocation6], 0
    %12 = vsyncpa [#allocation4], 0
    %s13 = scalar_lea.sflag [#allocation4], 1
    %14 = vsyncpa %s13, 0
    loop: start=0, step=1, limit=4
    $region2: #{transformer_encode_block.4} parent=1 // loop_pre_header
      _
    $region3: #{transformer_encode_block.4} parent=1 // loop_header
      %s16 = sphi 0, %s20
      %p17 = scmp.ge.s32.totalorder %s16, 4
      %s26 = sphi 0, %s28
      %s29 = sphi 0, %s26
      %s30 = sphi 0, %s29
      %s46 = sphi 0, %s30
      %s50 = sphi 0, %s50
      %s52 = sphi 0, %s50
      %s53 = sphi 0, %s52
      %s67 = sphi 0, %s53
      %s71 = sphi 0, %s71
      %s73 = sphi 0, %s71
      %s74 = sphi 0, %s73
      %s88 = sphi 0, %s74
      %s94 = sphi 0, %s96
      %s97 = sphi 0, %s94
      %s98 = sphi 0, %s97
      %s114 = sphi 0, %s98
    $region4: #{transformer_encode_block.4} parent=1 // loop_header_branch
      %19 = sbr.rel (%p17) target = $region8
    $region5: #{transformer_encode_block.4} parent=1 // loop_body
      %s21 = ssub.s32 %s16, 1
      %s22 = ssub.s32 %s16, 2
      %s23 = sadd.s32 %s16, 1
      %s24 = ssub.s32 %s16, %s23
      %p25 = scmp.eq.s32.totalorder %s24, 0
      %s27 = sadd.s32 %s26, 1
      %s28 = scalar_select %p25, %s26, %s27
      %p31 = pneg %p25
      %p32 = scmp.eq.s32.totalorder %s16, 1
      %p33 = por %p31, %p32
      %p34 = scmp.ne.s32.totalorder %s26, %s29
      %p35 = scmp.eq.s32.totalorder %s16, 0
      %p36 = por %p34, %p35
      %p37 = scmp.ne.s32.totalorder %s26, %s29
      %p38 = scmp.eq.s32.totalorder %s21, 1
      %p39 = por %p37, %p38
      %p40 = scmp.ne.s32.totalorder %s29, %s30
      %p41 = scmp.eq.s32.totalorder %s21, 0
      %p42 = por %p40, %p41
      %p43 = scmp.ne.s32.totalorder %s29, %s30
      %p44 = scmp.eq.s32.totalorder %s22, 1
      %p45 = por %p43, %p44
      %p47 = scmp.ne.s32.totalorder %s30, %s46
      %p48 = scmp.eq.s32.totalorder %s22, 0
      %p49 = por %p47, %p48
      %s51 = sadd.s32 %s50, 1
      %p54 = scmp.eq.s32.totalorder %s16, 1
      %p55 = scmp.ne.s32.totalorder %s50, %s52
      %p56 = scmp.eq.s32.totalorder %s16, 0
      %p57 = por %p55, %p56
      %p58 = scmp.ne.s32.totalorder %s50, %s52
      %p59 = scmp.eq.s32.totalorder %s21, 1
      %p60 = por %p58, %p59
      %p61 = scmp.ne.s32.totalorder %s52, %s53
      %p62 = scmp.eq.s32.totalorder %s21, 0
      %p63 = por %p61, %p62
      %p64 = scmp.ne.s32.totalorder %s52, %s53
      %p65 = scmp.eq.s32.totalorder %s22, 1
      %p66 = por %p64, %p65
      %p68 = scmp.ne.s32.totalorder %s53, %s67
      %p69 = scmp.eq.s32.totalorder %s22, 0
      %p70 = por %p68, %p69
      %s72 = sadd.s32 %s71, 1
      %p75 = scmp.eq.s32.totalorder %s16, 1
      %p76 = scmp.ne.s32.totalorder %s71, %s73
      %p77 = scmp.eq.s32.totalorder %s16, 0
      %p78 = por %p76, %p77
      %p79 = scmp.ne.s32.totalorder %s71, %s73
      %p80 = scmp.eq.s32.totalorder %s21, 1
      %p81 = por %p79, %p80
      %p82 = scmp.ne.s32.totalorder %s73, %s74
      %p83 = scmp.eq.s32.totalorder %s21, 0
      %p84 = por %p82, %p83
      %p85 = scmp.ne.s32.totalorder %s73, %s74
      %p86 = scmp.eq.s32.totalorder %s22, 1
      %p87 = por %p85, %p86
      %p89 = scmp.ne.s32.totalorder %s74, %s88
      %p90 = scmp.eq.s32.totalorder %s22, 0
      %p91 = por %p89, %p90
      %s92 = ssub.s32 %s16, %s23
      %p93 = scmp.eq.s32.totalorder %s92, 0
      %s95 = sadd.s32 %s94, 1
      %s96 = scalar_select %p93, %s94, %s95
      %p99 = pneg %p93
      %p100 = scmp.eq.s32.totalorder %s16, 1
      %p101 = por %p99, %p100
      %p102 = scmp.ne.s32.totalorder %s94, %s97
      %p103 = scmp.eq.s32.totalorder %s16, 0
      %p104 = por %p102, %p103
      %p105 = scmp.ne.s32.totalorder %s94, %s97
      %p106 = scmp.eq.s32.totalorder %s21, 1
      %p107 = por %p105, %p106
      %p108 = scmp.ne.s32.totalorder %s97, %s98
      %p109 = scmp.eq.s32.totalorder %s21, 0
      %p110 = por %p108, %p109
      %p111 = scmp.ne.s32.totalorder %s97, %s98
      %p112 = scmp.eq.s32.totalorder %s22, 1
      %p113 = por %p111, %p112
      %p115 = scmp.ne.s32.totalorder %s98, %s114
      %p116 = scmp.eq.s32.totalorder %s22, 0
      %p117 = por %p115, %p116
      %p118 = scmp.le.s32.totalorder 1, %s16
      %p119 = scmp.lt.s32.totalorder %s16, 3
      %p120 = pnand %p118, %p119
      %p121 = pneg %p120
      // Predicated region
      $region9: #{transformer_encode_block.4} parent=5 // pred_check
        _
      $region10: #{transformer_encode_block.4} parent=5 // pred_check_branch
        %123 = sbr.rel (%p120) target = $region12
      $region11: #{transformer_encode_block.4} parent=5 // pred_region
        %s124 = ssub.s32 %s16, 1
        // Predicated region
        $region13: #{transformer_encode_block.4} parent=11 // pred_check
          %p125 = pneg %p63
        $region14: #{transformer_encode_block.4} parent=11 // pred_check_branch
          %127 = sbr.rel (%p125) target = $region16
        $region15: #{transformer_encode_block.4} parent=11 // pred_region
          %s129 = ssub.s32 3072, 3072
          %130 = vsyncadd [#allocation6], %s129
          %s131 = sshll.u32 [#allocation5], 4
          %s132 = int_to_ptr.vmem [resolvable:$true] %s131
          %137 = dma.hbm_to_vmem [thread:$0]  %s1, 3072, %s132, [#allocation6], 192, 192, 12
        $region16: #{transformer_encode_block.4} parent=11 // pred_fallthru
          _
        // Predicated region
        $region17: #{transformer_encode_block.4} parent=11 // pred_check
          %p138 = pneg %p84
        $region18: #{transformer_encode_block.4} parent=11 // pred_check_branch
          %140 = sbr.rel (%p138) target = $region20
        $region19: #{transformer_encode_block.4} parent=11 // pred_region
          %s142 = ssub.s32 48, 48
          %143 = vsyncadd [#allocation6], %s142
          %s145 = sshll.u32 [#allocation7], 4
          %s146 = int_to_ptr.vmem [resolvable:$true] %s145
          %148 = dma.hbm_to_vmem [thread:$0]  %s2, 48, %s146, [#allocation6]
        $region20: #{transformer_encode_block.4} parent=11 // pred_fallthru
          _
      $region12: #{transformer_encode_block.4} parent=5 // pred_fallthru
        _
      %p149 = scmp.lt.s32.totalorder %s16, 2
      // Predicated region
      $region21: #{transformer_encode_block.4} parent=5 // pred_check
        %p150 = pneg %p149
      $region22: #{transformer_encode_block.4} parent=5 // pred_check_branch
        %152 = sbr.rel (%p150) target = $region24
      $region23: #{transformer_encode_block.4} parent=5 // pred_region
        // Predicated region
        $region25: #{transformer_encode_block.4} parent=23 // pred_check
          %p153 = pneg %p36
        $region26: #{transformer_encode_block.4} parent=23 // pred_check_branch
          %155 = sbr.rel (%p153) target = $region28
        $region27: #{transformer_encode_block.4} parent=23 // pred_region
          %s156 = sand.u32 %s26, 1
          %s157 = scalar_lea.sflag [#allocation3], %s156
          %s158 = sand.u32 %s26, 1
          %s159 = smul.addr %s158, 256
          %s160 = scalar_lea.vmem [#allocation2], %s159
          %s161 = smul.u32 32, %s16
          %s163 = ssub.s32 4096, 4096
          %164 = vsyncadd %s157, %s163
          %s165 = smul.addr %s161, 128
          %s166 = scalar_lea.hbm %s0, %s165
          %s167 = sshll.u32 %s160, 4
          %s168 = int_to_ptr.vmem [resolvable:$true] %s167
          %173 = dma.hbm_to_vmem [thread:$0]  %s166, 4096, %s168, %s157, 128, 128, 8
        $region28: #{transformer_encode_block.4} parent=23 // pred_fallthru
          _
      $region24: #{transformer_encode_block.4} parent=5 // pred_fallthru
        _
      %p174 = scmp.le.s32.totalorder 1, %s16
      %p175 = scmp.lt.s32.totalorder %s16, 3
      %p176 = pnand %p174, %p175
      %p177 = pneg %p176
      // Predicated region
      $region29: #{transformer_encode_block.4} parent=5 // pred_check
        _
      $region30: #{transformer_encode_block.4} parent=5 // pred_check_branch
        %179 = sbr.rel (%p176) target = $region32
      $region31: #{transformer_encode_block.4} parent=5 // pred_region
        %s180 = ssub.s32 %s16, 1
        %s181 = sand.u32 %s29, 1
        %s182 = scalar_lea.sflag [#allocation3], %s181
        %s183 = sand.u32 %s29, 1
        %s184 = smul.addr %s183, 256
        %s185 = scalar_lea.vmem [#allocation2], %s184
        // Predicated region
        $region33: #{transformer_encode_block.4} parent=31 // pred_check
          %p186 = pneg %p42
        $region34: #{transformer_encode_block.4} parent=31 // pred_check_branch
          %188 = sbr.rel (%p186) target = $region36
        $region35: #{transformer_encode_block.4} parent=31 // pred_region
          %189 = dma.done %s182, 4096
        $region36: #{transformer_encode_block.4} parent=31 // pred_fallthru
          _
        // Predicated region
        $region37: #{transformer_encode_block.4} parent=31 // pred_check
          %p190 = pneg %p63
        $region38: #{transformer_encode_block.4} parent=31 // pred_check_branch
          %192 = sbr.rel (%p190) target = $region40
        $region39: #{transformer_encode_block.4} parent=31 // pred_region
          %193 = dma.done [#allocation6], 3072
        $region40: #{transformer_encode_block.4} parent=31 // pred_fallthru
          _
        // Predicated region
        $region41: #{transformer_encode_block.4} parent=31 // pred_check
          %p194 = pneg %p84
        $region42: #{transformer_encode_block.4} parent=31 // pred_check_branch
          %196 = sbr.rel (%p194) target = $region44
        $region43: #{transformer_encode_block.4} parent=31 // pred_region
          %197 = dma.done [#allocation6], 48
        $region44: #{transformer_encode_block.4} parent=31 // pred_fallthru
          _
        %s198 = sand.u32 %s29, 1
        %s199 = scalar_lea.sflag [#allocation3], %s198
        %s200 = sand.u32 %s29, 1
        %s201 = smul.addr %s200, 256
        %s202 = scalar_lea.vmem [#allocation2], %s201
        %p203 = pneg %p42
        %p204 = pneg %p39
        %p205 = pneg %p63
        %p206 = pneg %p60
        %p207 = pneg %p84
        %p208 = pneg %p81
        %p209 = pneg %p110
        %p210 = pneg %p107
        %s211 = sand.u32 %s97, 1
        %s212 = scalar_lea.sflag [#allocation4], %s211
        %s213 = sand.u32 %s97, 1
        %s214 = smul.addr %s213, 768
        %s215 = scalar_lea.vmem [#allocation8], %s214
        %s216 = smul.u32 32, %s21
        %s217 = smul.u32 32, %s21
        %v219 = vld [vmem:[%s185] sm:$0xff]
        %v220 = vld [vmem:[%s185 + $0x8] sm:$0xff]
        %v221 = vld [vmem:[%s185 + $0x10] sm:$0xff]
        %v222 = vld [vmem:[%s185 + $0x18] sm:$0xff]
        %v223 = vld [vmem:[%s185 + $0x20] sm:$0xff]
        %v224 = vld [vmem:[%s185 + $0x28] sm:$0xff]
        %v225 = vld [vmem:[%s185 + $0x30] sm:$0xff]
        %v226 = vld [vmem:[%s185 + $0x38] sm:$0xff]
        %v227 = vld [vmem:[%s185 + $0x40] sm:$0xff]
        %v228 = vld [vmem:[%s185 + $0x48] sm:$0xff]
        %v229 = vld [vmem:[%s185 + $0x50] sm:$0xff]
        %v230 = vld [vmem:[%s185 + $0x58] sm:$0xff]
        %v231 = vld [vmem:[%s185 + $0x60] sm:$0xff]
        %v232 = vld [vmem:[%s185 + $0x68] sm:$0xff]
        %v233 = vld [vmem:[%s185 + $0x70] sm:$0xff]
        %v234 = vld [vmem:[%s185 + $0x78] sm:$0xff]
        %v235 = vld [vmem:[%s185 + $0x80] sm:$0xff]
        %v236 = vld [vmem:[%s185 + $0x88] sm:$0xff]
        %v237 = vld [vmem:[%s185 + $0x90] sm:$0xff]
        %v238 = vld [vmem:[%s185 + $0x98] sm:$0xff]
        %v239 = vld [vmem:[%s185 + $0xa0] sm:$0xff]
        %v240 = vld [vmem:[%s185 + $0xa8] sm:$0xff]
        %v241 = vld [vmem:[%s185 + $0xb0] sm:$0xff]
        %v242 = vld [vmem:[%s185 + $0xb8] sm:$0xff]
        %v243 = vld [vmem:[%s185 + $0xc0] sm:$0xff]
        %v244 = vld [vmem:[%s185 + $0xc8] sm:$0xff]
        %v245 = vld [vmem:[%s185 + $0xd0] sm:$0xff]
        %v246 = vld [vmem:[%s185 + $0xd8] sm:$0xff]
        %v247 = vld [vmem:[%s185 + $0xe0] sm:$0xff]
        %v248 = vld [vmem:[%s185 + $0xe8] sm:$0xff]
        %v249 = vld [vmem:[%s185 + $0xf0] sm:$0xff]
        %v250 = vld [vmem:[%s185 + $0xf8] sm:$0xff]
        %v251 = vpack.c.bf16 %v220, %v219
        %v252 = vpack.c.bf16 %v222, %v221
        %v253 = vpack.c.bf16 %v224, %v223
        %v254 = vpack.c.bf16 %v226, %v225
        %v255 = vpack.c.bf16 %v228, %v227
        %v256 = vpack.c.bf16 %v230, %v229
        %v257 = vpack.c.bf16 %v232, %v231
        %v258 = vpack.c.bf16 %v234, %v233
        %v259 = vpack.c.bf16 %v236, %v235
        %v260 = vpack.c.bf16 %v238, %v237
        %v261 = vpack.c.bf16 %v240, %v239
        %v262 = vpack.c.bf16 %v242, %v241
        %v263 = vpack.c.bf16 %v244, %v243
        %v264 = vpack.c.bf16 %v246, %v245
        %v265 = vpack.c.bf16 %v248, %v247
        %v266 = vpack.c.bf16 %v250, %v249
        %v267 = vld [vmem:[#allocation5] sm:$0xff]
        %v268 = vld [vmem:[#allocation5 + $0x8] sm:$0xf]
        %v269 = vld [vmem:[#allocation5 + $0xc] sm:$0xff]
        %v270 = vld [vmem:[#allocation5 + $0x14] sm:$0xf]
        %v271 = vld [vmem:[#allocation5 + $0x18] sm:$0xff]
        %v272 = vld [vmem:[#allocation5 + $0x20] sm:$0xf]
        %v273 = vld [vmem:[#allocation5 + $0x24] sm:$0xff]
        %v274 = vld [vmem:[#allocation5 + $0x2c] sm:$0xf]
        %v275 = vld [vmem:[#allocation5 + $0x30] sm:$0xff]
        %v276 = vld [vmem:[#allocation5 + $0x38] sm:$0xf]
        %v277 = vld [vmem:[#allocation5 + $0x3c] sm:$0xff]
        %v278 = vld [vmem:[#allocation5 + $0x44] sm:$0xf]
        %v279 = vld [vmem:[#allocation5 + $0x48] sm:$0xff]
        %v280 = vld [vmem:[#allocation5 + $0x50] sm:$0xf]
        %v281 = vld [vmem:[#allocation5 + $0x54] sm:$0xff]
        %v282 = vld [vmem:[#allocation5 + $0x5c] sm:$0xf]
        %v283 = vld [vmem:[#allocation5 + $0x60] sm:$0xff]
        %v284 = vld [vmem:[#allocation5 + $0x68] sm:$0xf]
        %v285 = vld [vmem:[#allocation5 + $0x6c] sm:$0xff]
        %v286 = vld [vmem:[#allocation5 + $0x74] sm:$0xf]
        %v287 = vld [vmem:[#allocation5 + $0x78] sm:$0xff]
        %v288 = vld [vmem:[#allocation5 + $0x80] sm:$0xf]
        %v289 = vld [vmem:[#allocation5 + $0x84] sm:$0xff]
        %v290 = vld [vmem:[#allocation5 + $0x8c] sm:$0xf]
        %v291 = vld [vmem:[#allocation5 + $0x90] sm:$0xff]
        %v292 = vld [vmem:[#allocation5 + $0x98] sm:$0xf]
        %v293 = vld [vmem:[#allocation5 + $0x9c] sm:$0xff]
        %v294 = vld [vmem:[#allocation5 + $0xa4] sm:$0xf]
        %v295 = vld [vmem:[#allocation5 + $0xa8] sm:$0xff]
        %v296 = vld [vmem:[#allocation5 + $0xb0] sm:$0xf]
        %v297 = vld [vmem:[#allocation5 + $0xb4] sm:$0xff]
        %v298 = vld [vmem:[#allocation5 + $0xbc] sm:$0xf]
        %v299 = vld [vmem:[#allocation7] sm:$0x7]
        %v301 = vlaneseq
        %v302 = vshrl.u32 %v301, 7
        %v303 = vsub.s32 0, %v302
        %v304 = vrot.slane %v299, %v303
        %v305 = vlaneseq
        %v306 = vshrl.u32 %v305, 7
        %v307 = vsub.s32 1, %v306
        %v308 = vrot.slane %v299, %v307
        %v309 = vlaneseq
        %v310 = vshrl.u32 %v309, 7
        %v311 = vsub.s32 2, %v310
        %v312 = vrot.slane %v299, %v311
        %v348 = vunpack.c.l.b16 %v267
        %v349 = vunpack.c.h.b16 %v267
        %v350 = vunpack.c.l.b16 %v268
        %v351 = vunpack.c.l.b16 %v269
        %v352 = vunpack.c.h.b16 %v269
        %v353 = vunpack.c.l.b16 %v270
        %v354 = vunpack.c.l.b16 %v271
        %v355 = vunpack.c.h.b16 %v271
        %v356 = vunpack.c.l.b16 %v272
        %v357 = vunpack.c.l.b16 %v273
        %v358 = vunpack.c.h.b16 %v273
        %v359 = vunpack.c.l.b16 %v274
        %v360 = vunpack.c.l.b16 %v275
        %v361 = vunpack.c.h.b16 %v275
        %v362 = vunpack.c.l.b16 %v276
        %v363 = vunpack.c.l.b16 %v277
        %v364 = vunpack.c.h.b16 %v277
        %v365 = vunpack.c.l.b16 %v278
        %v366 = vunpack.c.l.b16 %v279
        %v367 = vunpack.c.h.b16 %v279
        %v368 = vunpack.c.l.b16 %v280
        %v369 = vunpack.c.l.b16 %v281
        %v370 = vunpack.c.h.b16 %v281
        %v371 = vunpack.c.l.b16 %v282
        %v372 = vunpack.c.l.b16 %v283
        %v373 = vunpack.c.h.b16 %v283
        %v374 = vunpack.c.l.b16 %v284
        %v375 = vunpack.c.l.b16 %v285
        %v376 = vunpack.c.h.b16 %v285
        %v377 = vunpack.c.l.b16 %v286
        %v378 = vunpack.c.l.b16 %v287
        %v379 = vunpack.c.h.b16 %v287
        %v380 = vunpack.c.l.b16 %v288
        %v381 = vunpack.c.l.b16 %v289
        %v382 = vunpack.c.h.b16 %v289
        %v383 = vunpack.c.l.b16 %v290
        %v384 = vunpack.c.l.b16 %v291
        %v385 = vunpack.c.h.b16 %v291
        %v386 = vunpack.c.l.b16 %v292
        %v387 = vunpack.c.l.b16 %v293
        %v388 = vunpack.c.h.b16 %v293
        %v389 = vunpack.c.l.b16 %v294
        %v390 = vunpack.c.l.b16 %v295
        %v391 = vunpack.c.h.b16 %v295
        %v392 = vunpack.c.l.b16 %v296
        %v393 = vunpack.c.l.b16 %v297
        %v394 = vunpack.c.h.b16 %v297
        %v395 = vunpack.c.l.b16 %v298
        %v396 = vpack.c.b16 %v351, %v348
        %v397 = vpack.c.b16 %v352, %v349
        %v398 = vpack.c.b16 %v353, %v350
        %v399 = vpack.c.b16 %v357, %v354
        %v400 = vpack.c.b16 %v358, %v355
        %v401 = vpack.c.b16 %v359, %v356
        %v402 = vpack.c.b16 %v363, %v360
        %v403 = vpack.c.b16 %v364, %v361
        %v404 = vpack.c.b16 %v365, %v362
        %v405 = vpack.c.b16 %v369, %v366
        %v406 = vpack.c.b16 %v370, %v367
        %v407 = vpack.c.b16 %v371, %v368
        %v408 = vpack.c.b16 %v375, %v372
        %v409 = vpack.c.b16 %v376, %v373
        %v410 = vpack.c.b16 %v377, %v374
        %v411 = vpack.c.b16 %v381, %v378
        %v412 = vpack.c.b16 %v382, %v379
        %v413 = vpack.c.b16 %v383, %v380
        %v414 = vpack.c.b16 %v387, %v384
        %v415 = vpack.c.b16 %v388, %v385
        %v416 = vpack.c.b16 %v389, %v386
        %v417 = vpack.c.b16 %v393, %v390
        %v418 = vpack.c.b16 %v394, %v391
        %v419 = vpack.c.b16 %v395, %v392
        %444 = vmatprep.subr.bf16.mxu0 %v397
        %445 = vmatpush1.bf16.msra.mxu0 %v396
        %446 = vmatprep.subr.bf16.mxu0 %v400
        %447 = vmatpush1.bf16.msra.mxu0 %v399
        %448 = vmatprep.subr.bf16.mxu0 %v403
        %449 = vmatpush1.bf16.msra.mxu0 %v402
        %450 = vmatprep.subr.bf16.mxu0 %v406
        %451 = vmatpush1.bf16.msra.mxu0 %v405
        %452 = vmatprep.subr.bf16.mxu0 %v409
        %453 = vmatpush1.bf16.msra.mxu0 %v408
        %454 = vmatprep.subr.bf16.mxu0 %v412
        %455 = vmatpush1.bf16.msra.mxu0 %v411
        %456 = vmatprep.subr.bf16.mxu0 %v415
        %457 = vmatpush1.bf16.msra.mxu0 %v414
        %458 = vmatprep.subr.bf16.mxu0 %v418
        %459 = vmatpush1.bf16.msra.mxu0 %v417
        %460 = vmatprep.subr.bf16.mxu0 0
        %461 = vmatpush1.bf16.msra.mxu0 0
        %462 = vmatprep.subr.bf16.mxu0 0
        %463 = vmatpush1.bf16.msra.mxu0 0
        %464 = vmatprep.subr.bf16.mxu0 0
        %465 = vmatpush1.bf16.msra.mxu0 0
        %466 = vmatprep.subr.bf16.mxu0 0
        %467 = vmatpush1.bf16.msra.mxu0 0
        %468 = vmatprep.subr.bf16.mxu0 0
        %469 = vmatpush1.bf16.msra.mxu0 0
        %470 = vmatprep.subr.bf16.mxu0 0
        %471 = vmatpush1.bf16.msra.mxu0 0
        %472 = vmatprep.subr.bf16.mxu0 0
        %473 = vmatpush1.bf16.msra.mxu0 0
        %474 = vmatprep.subr.bf16.mxu0 0
        %475 = vmatpush1.bf16.msra.mxu0 0
        %476 = vmatprep.mubr.bf16.mxu0 0
        %477 = vmatmul.mubr.bf16.gmra.mrb[0].mxu0 %v251
        %v478 = vpop.f32.mrb[0].mxu0
        %v479 = vadd.f32 %v304, %v478
        %v480 = vpop.f32.mrb[0].mxu0
        %v481 = vadd.f32 %v308, %v480
        %v482 = vpop.f32.mrb[0].mxu0
        %v483 = vadd.f32 %v304, %v482
        %v484 = vpop.f32.mrb[0].mxu0
        %v485 = vadd.f32 %v308, %v484
        %486 = vmatprep.mubr.bf16.mxu0 0
        %487 = vmatmul.mubr.bf16.gmra.mrb[0].mxu0 %v252
        %v488 = vpop.f32.mrb[0].mxu0
        %v489 = vadd.f32 %v304, %v488
        %v490 = vpop.f32.mrb[0].mxu0
        %v491 = vadd.f32 %v308, %v490
        %v492 = vpop.f32.mrb[0].mxu0
        %v493 = vadd.f32 %v304, %v492
        %v494 = vpop.f32.mrb[0].mxu0
        %v495 = vadd.f32 %v308, %v494
        %496 = vmatprep.mubr.bf16.mxu0 0
        %497 = vmatmul.mubr.bf16.gmra.mrb[0].mxu0 %v253
        %v498 = vpop.f32.mrb[0].mxu0
        %v499 = vadd.f32 %v304, %v498
        %v500 = vpop.f32.mrb[0].mxu0
        %v501 = vadd.f32 %v308, %v500
        %v502 = vpop.f32.mrb[0].mxu0
        %v503 = vadd.f32 %v304, %v502
        %v504 = vpop.f32.mrb[0].mxu0
        %v505 = vadd.f32 %v308, %v504
        %506 = vmatprep.mubr.bf16.mxu0 0
        %507 = vmatmul.mubr.bf16.gmra.mrb[0].mxu0 %v254
        %v508 = vpop.f32.mrb[0].mxu0
        %v509 = vadd.f32 %v304, %v508
        %v510 = vpop.f32.mrb[0].mxu0
        %v511 = vadd.f32 %v308, %v510
        %v512 = vpop.f32.mrb[0].mxu0
        %v513 = vadd.f32 %v304, %v512
        %v514 = vpop.f32.mrb[0].mxu0
        %v515 = vadd.f32 %v308, %v514
        %516 = vmatprep.mubr.bf16.mxu0 0
        %517 = vmatmul.mubr.bf16.gmra.mrb[0].mxu0 %v255
        %v518 = vpop.f32.mrb[0].mxu0
        %v519 = vadd.f32 %v304, %v518
        %v520 = vpop.f32.mrb[0].mxu0
        %v521 = vadd.f32 %v308, %v520
        %v522 = vpop.f32.mrb[0].mxu0
        %v523 = vadd.f32 %v304, %v522
        %v524 = vpop.f32.mrb[0].mxu0
        %v525 = vadd.f32 %v308, %v524
        %526 = vmatprep.mubr.bf16.mxu0 0
        %527 = vmatmul.mubr.bf16.gmra.mrb[0].mxu0 %v256
        %v528 = vpop.f32.mrb[0].mxu0
        %v529 = vadd.f32 %v304, %v528
        %v530 = vpop.f32.mrb[0].mxu0
        %v531 = vadd.f32 %v308, %v530
        %v532 = vpop.f32.mrb[0].mxu0
        %v533 = vadd.f32 %v304, %v532
        %v534 = vpop.f32.mrb[0].mxu0
        %v535 = vadd.f32 %v308, %v534
        %536 = vmatprep.mubr.bf16.mxu0 0
        %537 = vmatmul.mubr.bf16.gmra.mrb[0].mxu0 %v257
        %v538 = vpop.f32.mrb[0].mxu0
        %v539 = vadd.f32 %v304, %v538
        %v540 = vpop.f32.mrb[0].mxu0
        %v541 = vadd.f32 %v308, %v540
        %v542 = vpop.f32.mrb[0].mxu0
        %v543 = vadd.f32 %v304, %v542
        %v544 = vpop.f32.mrb[0].mxu0
        %v545 = vadd.f32 %v308, %v544
        %546 = vmatprep.mubr.bf16.mxu0 0
        %547 = vmatmul.mubr.bf16.gmra.mrb[0].mxu0 %v258
        %v548 = vpop.f32.mrb[0].mxu0
        %v549 = vadd.f32 %v304, %v548
        %v550 = vpop.f32.mrb[0].mxu0
        %v551 = vadd.f32 %v308, %v550
        %v552 = vpop.f32.mrb[0].mxu0
        %v553 = vadd.f32 %v304, %v552
        %v554 = vpop.f32.mrb[0].mxu0
        %v555 = vadd.f32 %v308, %v554
        %556 = vmatprep.mubr.bf16.mxu0 0
        %557 = vmatmul.mubr.bf16.gmra.mrb[0].mxu0 %v259
        %v558 = vpop.f32.mrb[0].mxu0
        %v559 = vadd.f32 %v304, %v558
        %v560 = vpop.f32.mrb[0].mxu0
        %v561 = vadd.f32 %v308, %v560
        %v562 = vpop.f32.mrb[0].mxu0
        %v563 = vadd.f32 %v304, %v562
        %v564 = vpop.f32.mrb[0].mxu0
        %v565 = vadd.f32 %v308, %v564
        %566 = vmatprep.mubr.bf16.mxu0 0
        %567 = vmatmul.mubr.bf16.gmra.mrb[0].mxu0 %v260
        %v568 = vpop.f32.mrb[0].mxu0
        %v569 = vadd.f32 %v304, %v568
        %v570 = vpop.f32.mrb[0].mxu0
        %v571 = vadd.f32 %v308, %v570
        %v572 = vpop.f32.mrb[0].mxu0
        %v573 = vadd.f32 %v304, %v572
        %v574 = vpop.f32.mrb[0].mxu0
        %v575 = vadd.f32 %v308, %v574
        %576 = vmatprep.mubr.bf16.mxu0 0
        %577 = vmatmul.mubr.bf16.gmra.mrb[0].mxu0 %v261
        %v578 = vpop.f32.mrb[0].mxu0
        %v579 = vadd.f32 %v304, %v578
        %v580 = vpop.f32.mrb[0].mxu0
        %v581 = vadd.f32 %v308, %v580
        %v582 = vpop.f32.mrb[0].mxu0
        %v583 = vadd.f32 %v304, %v582
        %v584 = vpop.f32.mrb[0].mxu0
        %v585 = vadd.f32 %v308, %v584
        %586 = vmatprep.mubr.bf16.mxu0 0
        %587 = vmatmul.mubr.bf16.gmra.mrb[0].mxu0 %v262
        %v588 = vpop.f32.mrb[0].mxu0
        %v589 = vadd.f32 %v304, %v588
        %v590 = vpop.f32.mrb[0].mxu0
        %v591 = vadd.f32 %v308, %v590
        %v592 = vpop.f32.mrb[0].mxu0
        %v593 = vadd.f32 %v304, %v592
        %v594 = vpop.f32.mrb[0].mxu0
        %v595 = vadd.f32 %v308, %v594
        %596 = vmatprep.mubr.bf16.mxu0 0
        %597 = vmatmul.mubr.bf16.gmra.mrb[0].mxu0 %v263
        %v598 = vpop.f32.mrb[0].mxu0
        %v599 = vadd.f32 %v304, %v598
        %v600 = vpop.f32.mrb[0].mxu0
        %v601 = vadd.f32 %v308, %v600
        %v602 = vpop.f32.mrb[0].mxu0
        %v603 = vadd.f32 %v304, %v602
        %v604 = vpop.f32.mrb[0].mxu0
        %v605 = vadd.f32 %v308, %v604
        %606 = vmatprep.mubr.bf16.mxu0 0
        %607 = vmatmul.mubr.bf16.gmra.mrb[0].mxu0 %v264
        %v608 = vpop.f32.mrb[0].mxu0
        %v609 = vadd.f32 %v304, %v608
        %v610 = vpop.f32.mrb[0].mxu0
        %v611 = vadd.f32 %v308, %v610
        %v612 = vpop.f32.mrb[0].mxu0
        %v613 = vadd.f32 %v304, %v612
        %v614 = vpop.f32.mrb[0].mxu0
        %v615 = vadd.f32 %v308, %v614
        %616 = vmatprep.mubr.bf16.mxu0 0
        %617 = vmatmul.mubr.bf16.gmra.mrb[0].mxu0 %v265
        %v618 = vpop.f32.mrb[0].mxu0
        %v619 = vadd.f32 %v304, %v618
        %v620 = vpop.f32.mrb[0].mxu0
        %v621 = vadd.f32 %v308, %v620
        %v622 = vpop.f32.mrb[0].mxu0
        %v623 = vadd.f32 %v304, %v622
        %v624 = vpop.f32.mrb[0].mxu0
        %v625 = vadd.f32 %v308, %v624
        %626 = vmatprep.mubr.bf16.mxu0 0
        %627 = vmatmul.mubr.bf16.gmra.mrb[0].mxu0 %v266
        %v628 = vpop.f32.mrb[0].mxu0
        %v629 = vadd.f32 %v304, %v628
        %v630 = vpop.f32.mrb[0].mxu0
        %v631 = vadd.f32 %v308, %v630
        %v632 = vpop.f32.mrb[0].mxu0
        %v633 = vadd.f32 %v304, %v632
        %v634 = vpop.f32.mrb[0].mxu0
        %v635 = vadd.f32 %v308, %v634
        %636 = vdwg.mxu0
        %637 = vmatprep.subr.bf16.mxu0 0
        %638 = vmatpush1.bf16.msra.mxu0 %v398
        %639 = vmatprep.subr.bf16.mxu0 0
        %640 = vmatpush1.bf16.msra.mxu0 %v401
        %641 = vmatprep.subr.bf16.mxu0 0
        %642 = vmatpush1.bf16.msra.mxu0 %v404
        %643 = vmatprep.subr.bf16.mxu0 0
        %644 = vmatpush1.bf16.msra.mxu0 %v407
        %645 = vmatprep.subr.bf16.mxu0 0
        %646 = vmatpush1.bf16.msra.mxu0 %v410
        %647 = vmatprep.subr.bf16.mxu0 0
        %648 = vmatpush1.bf16.msra.mxu0 %v413
        %649 = vmatprep.subr.bf16.mxu0 0
        %650 = vmatpush1.bf16.msra.mxu0 %v416
        %651 = vmatprep.subr.bf16.mxu0 0
        %652 = vmatpush1.bf16.msra.mxu0 %v419
        %653 = vmatprep.subr.bf16.mxu0 0
        %654 = vmatpush1.bf16.msra.mxu0 0
        %655 = vmatprep.subr.bf16.mxu0 0
        %656 = vmatpush1.bf16.msra.mxu0 0
        %657 = vmatprep.subr.bf16.mxu0 0
        %658 = vmatpush1.bf16.msra.mxu0 0
        %659 = vmatprep.subr.bf16.mxu0 0
        %660 = vmatpush1.bf16.msra.mxu0 0
        %661 = vmatprep.subr.bf16.mxu0 0
        %662 = vmatpush1.bf16.msra.mxu0 0
        %663 = vmatprep.subr.bf16.mxu0 0
        %664 = vmatpush1.bf16.msra.mxu0 0
        %665 = vmatprep.subr.bf16.mxu0 0
        %666 = vmatpush1.bf16.msra.mxu0 0
        %667 = vmatprep.subr.bf16.mxu0 0
        %668 = vmatpush1.bf16.msra.mxu0 0
        %669 = vmatprep.mubr.bf16.mxu0 0
        %670 = vmatmul.mubr.bf16.gmra.mrb[0].mxu0 %v251
        %v671 = vpop.f32.mrb[0].mxu0
        %v672 = vadd.f32 %v312, %v671
        %v673 = vpop.f32.mrb[0].mxu0
        %v674 = vpop.f32.mrb[0].mxu0
        %v675 = vadd.f32 %v312, %v674
        %v676 = vpop.f32.mrb[0].mxu0
        %677 = vmatprep.mubr.bf16.mxu0 0
        %678 = vmatmul.mubr.bf16.gmra.mrb[0].mxu0 %v252
        %v679 = vpop.f32.mrb[0].mxu0
        %v680 = vadd.f32 %v312, %v679
        %v681 = vpop.f32.mrb[0].mxu0
        %v682 = vpop.f32.mrb[0].mxu0
        %v683 = vadd.f32 %v312, %v682
        %v684 = vpop.f32.mrb[0].mxu0
        %685 = vmatprep.mubr.bf16.mxu0 0
        %686 = vmatmul.mubr.bf16.gmra.mrb[0].mxu0 %v253
        %v687 = vpop.f32.mrb[0].mxu0
        %v688 = vadd.f32 %v312, %v687
        %v689 = vpop.f32.mrb[0].mxu0
        %v690 = vpop.f32.mrb[0].mxu0
        %v691 = vadd.f32 %v312, %v690
        %v692 = vpop.f32.mrb[0].mxu0
        %693 = vmatprep.mubr.bf16.mxu0 0
        %694 = vmatmul.mubr.bf16.gmra.mrb[0].mxu0 %v254
        %v695 = vpop.f32.mrb[0].mxu0
        %v696 = vadd.f32 %v312, %v695
        %v697 = vpop.f32.mrb[0].mxu0
        %v698 = vpop.f32.mrb[0].mxu0
        %v699 = vadd.f32 %v312, %v698
        %v700 = vpop.f32.mrb[0].mxu0
        %701 = vmatprep.mubr.bf16.mxu0 0
        %702 = vmatmul.mubr.bf16.gmra.mrb[0].mxu0 %v255
        %v703 = vpop.f32.mrb[0].mxu0
        %v704 = vadd.f32 %v312, %v703
        %v705 = vpop.f32.mrb[0].mxu0
        %v706 = vpop.f32.mrb[0].mxu0
        %v707 = vadd.f32 %v312, %v706
        %v708 = vpop.f32.mrb[0].mxu0
        %709 = vmatprep.mubr.bf16.mxu0 0
        %710 = vmatmul.mubr.bf16.gmra.mrb[0].mxu0 %v256
        %v711 = vpop.f32.mrb[0].mxu0
        %v712 = vadd.f32 %v312, %v711
        %v713 = vpop.f32.mrb[0].mxu0
        %v714 = vpop.f32.mrb[0].mxu0
        %v715 = vadd.f32 %v312, %v714
        %v716 = vpop.f32.mrb[0].mxu0
        %717 = vmatprep.mubr.bf16.mxu0 0
        %718 = vmatmul.mubr.bf16.gmra.mrb[0].mxu0 %v257
        %v719 = vpop.f32.mrb[0].mxu0
        %v720 = vadd.f32 %v312, %v719
        %v721 = vpop.f32.mrb[0].mxu0
        %v722 = vpop.f32.mrb[0].mxu0
        %v723 = vadd.f32 %v312, %v722
        %v724 = vpop.f32.mrb[0].mxu0
        %725 = vmatprep.mubr.bf16.mxu0 0
        %726 = vmatmul.mubr.bf16.gmra.mrb[0].mxu0 %v258
        %v727 = vpop.f32.mrb[0].mxu0
        %v728 = vadd.f32 %v312, %v727
        %v729 = vpop.f32.mrb[0].mxu0
        %v730 = vpop.f32.mrb[0].mxu0
        %v731 = vadd.f32 %v312, %v730
        %v732 = vpop.f32.mrb[0].mxu0
        %733 = vmatprep.mubr.bf16.mxu0 0
        %734 = vmatmul.mubr.bf16.gmra.mrb[0].mxu0 %v259
        %v735 = vpop.f32.mrb[0].mxu0
        %v736 = vadd.f32 %v312, %v735
        %v737 = vpop.f32.mrb[0].mxu0
        %v738 = vpop.f32.mrb[0].mxu0
        %v739 = vadd.f32 %v312, %v738
        %v740 = vpop.f32.mrb[0].mxu0
        %741 = vmatprep.mubr.bf16.mxu0 0
        %742 = vmatmul.mubr.bf16.gmra.mrb[0].mxu0 %v260
        %v743 = vpop.f32.mrb[0].mxu0
        %v744 = vadd.f32 %v312, %v743
        %v745 = vpop.f32.mrb[0].mxu0
        %v746 = vpop.f32.mrb[0].mxu0
        %v747 = vadd.f32 %v312, %v746
        %v748 = vpop.f32.mrb[0].mxu0
        %749 = vmatprep.mubr.bf16.mxu0 0
        %750 = vmatmul.mubr.bf16.gmra.mrb[0].mxu0 %v261
        %v751 = vpop.f32.mrb[0].mxu0
        %v752 = vadd.f32 %v312, %v751
        %v753 = vpop.f32.mrb[0].mxu0
        %v754 = vpop.f32.mrb[0].mxu0
        %v755 = vadd.f32 %v312, %v754
        %v756 = vpop.f32.mrb[0].mxu0
        %757 = vmatprep.mubr.bf16.mxu0 0
        %758 = vmatmul.mubr.bf16.gmra.mrb[0].mxu0 %v262
        %v759 = vpop.f32.mrb[0].mxu0
        %v760 = vadd.f32 %v312, %v759
        %v761 = vpop.f32.mrb[0].mxu0
        %v762 = vpop.f32.mrb[0].mxu0
        %v763 = vadd.f32 %v312, %v762
        %v764 = vpop.f32.mrb[0].mxu0
        %765 = vmatprep.mubr.bf16.mxu0 0
        %766 = vmatmul.mubr.bf16.gmra.mrb[0].mxu0 %v263
        %v767 = vpop.f32.mrb[0].mxu0
        %v768 = vadd.f32 %v312, %v767
        %v769 = vpop.f32.mrb[0].mxu0
        %v770 = vpop.f32.mrb[0].mxu0
        %v771 = vadd.f32 %v312, %v770
        %v772 = vpop.f32.mrb[0].mxu0
        %773 = vmatprep.mubr.bf16.mxu0 0
        %774 = vmatmul.mubr.bf16.gmra.mrb[0].mxu0 %v264
        %v775 = vpop.f32.mrb[0].mxu0
        %v776 = vadd.f32 %v312, %v775
        %v777 = vpop.f32.mrb[0].mxu0
        %v778 = vpop.f32.mrb[0].mxu0
        %v779 = vadd.f32 %v312, %v778
        %v780 = vpop.f32.mrb[0].mxu0
        %781 = vmatprep.mubr.bf16.mxu0 0
        %782 = vmatmul.mubr.bf16.gmra.mrb[0].mxu0 %v265
        %v783 = vpop.f32.mrb[0].mxu0
        %v784 = vadd.f32 %v312, %v783
        %v785 = vpop.f32.mrb[0].mxu0
        %v786 = vpop.f32.mrb[0].mxu0
        %v787 = vadd.f32 %v312, %v786
        %v788 = vpop.f32.mrb[0].mxu0
        %789 = vmatprep.mubr.bf16.mxu0 0
        %790 = vmatmul.mubr.bf16.gmra.mrb[0].mxu0 %v266
        %v791 = vpop.f32.mrb[0].mxu0
        %v792 = vadd.f32 %v312, %v791
        %v793 = vpop.f32.mrb[0].mxu0
        %v794 = vpop.f32.mrb[0].mxu0
        %v795 = vadd.f32 %v312, %v794
        %v796 = vpop.f32.mrb[0].mxu0
        %797 = vdwg.mxu0
        %798 = vst [vmem:[%s215] sm:$0xff] %v479
        %799 = vst [vmem:[%s215 + $0x8] sm:$0xff] %v481
        %800 = vst [vmem:[%s215 + $0x10] sm:$0xff] %v672
        %801 = vst [vmem:[%s215 + $0x18] sm:$0xff] %v483
        %802 = vst [vmem:[%s215 + $0x20] sm:$0xff] %v485
        %803 = vst [vmem:[%s215 + $0x28] sm:$0xff] %v675
        %804 = vst [vmem:[%s215 + $0x30] sm:$0xff] %v489
        %805 = vst [vmem:[%s215 + $0x38] sm:$0xff] %v491
        %806 = vst [vmem:[%s215 + $0x40] sm:$0xff] %v680
        %807 = vst [vmem:[%s215 + $0x48] sm:$0xff] %v493
        %808 = vst [vmem:[%s215 + $0x50] sm:$0xff] %v495
        %809 = vst [vmem:[%s215 + $0x58] sm:$0xff] %v683
        %810 = vst [vmem:[%s215 + $0x60] sm:$0xff] %v499
        %811 = vst [vmem:[%s215 + $0x68] sm:$0xff] %v501
        %812 = vst [vmem:[%s215 + $0x70] sm:$0xff] %v688
        %813 = vst [vmem:[%s215 + $0x78] sm:$0xff] %v503
        %814 = vst [vmem:[%s215 + $0x80] sm:$0xff] %v505
        %815 = vst [vmem:[%s215 + $0x88] sm:$0xff] %v691
        %816 = vst [vmem:[%s215 + $0x90] sm:$0xff] %v509
        %817 = vst [vmem:[%s215 + $0x98] sm:$0xff] %v511
        %818 = vst [vmem:[%s215 + $0xa0] sm:$0xff] %v696
        %819 = vst [vmem:[%s215 + $0xa8] sm:$0xff] %v513
        %820 = vst [vmem:[%s215 + $0xb0] sm:$0xff] %v515
        %821 = vst [vmem:[%s215 + $0xb8] sm:$0xff] %v699
        %822 = vst [vmem:[%s215 + $0xc0] sm:$0xff] %v519
        %823 = vst [vmem:[%s215 + $0xc8] sm:$0xff] %v521
        %824 = vst [vmem:[%s215 + $0xd0] sm:$0xff] %v704
        %825 = vst [vmem:[%s215 + $0xd8] sm:$0xff] %v523
        %826 = vst [vmem:[%s215 + $0xe0] sm:$0xff] %v525
        %827 = vst [vmem:[%s215 + $0xe8] sm:$0xff] %v707
        %828 = vst [vmem:[%s215 + $0xf0] sm:$0xff] %v529
        %829 = vst [vmem:[%s215 + $0xf8] sm:$0xff] %v531
        %830 = vst [vmem:[%s215 + $0x100] sm:$0xff] %v712
        %831 = vst [vmem:[%s215 + $0x108] sm:$0xff] %v533
        %832 = vst [vmem:[%s215 + $0x110] sm:$0xff] %v535
        %833 = vst [vmem:[%s215 + $0x118] sm:$0xff] %v715
        %834 = vst [vmem:[%s215 + $0x120] sm:$0xff] %v539
        %835 = vst [vmem:[%s215 + $0x128] sm:$0xff] %v541
        %836 = vst [vmem:[%s215 + $0x130] sm:$0xff] %v720
        %837 = vst [vmem:[%s215 + $0x138] sm:$0xff] %v543
        %838 = vst [vmem:[%s215 + $0x140] sm:$0xff] %v545
        %839 = vst [vmem:[%s215 + $0x148] sm:$0xff] %v723
        %840 = vst [vmem:[%s215 + $0x150] sm:$0xff] %v549
        %841 = vst [vmem:[%s215 + $0x158] sm:$0xff] %v551
        %842 = vst [vmem:[%s215 + $0x160] sm:$0xff] %v728
        %843 = vst [vmem:[%s215 + $0x168] sm:$0xff] %v553
        %844 = vst [vmem:[%s215 + $0x170] sm:$0xff] %v555
        %845 = vst [vmem:[%s215 + $0x178] sm:$0xff] %v731
        %846 = vst [vmem:[%s215 + $0x180] sm:$0xff] %v559
        %847 = vst [vmem:[%s215 + $0x188] sm:$0xff] %v561
        %848 = vst [vmem:[%s215 + $0x190] sm:$0xff] %v736
        %849 = vst [vmem:[%s215 + $0x198] sm:$0xff] %v563
        %850 = vst [vmem:[%s215 + $0x1a0] sm:$0xff] %v565
        %851 = vst [vmem:[%s215 + $0x1a8] sm:$0xff] %v739
        %852 = vst [vmem:[%s215 + $0x1b0] sm:$0xff] %v569
        %853 = vst [vmem:[%s215 + $0x1b8] sm:$0xff] %v571
        %854 = vst [vmem:[%s215 + $0x1c0] sm:$0xff] %v744
        %855 = vst [vmem:[%s215 + $0x1c8] sm:$0xff] %v573
        %856 = vst [vmem:[%s215 + $0x1d0] sm:$0xff] %v575
        %857 = vst [vmem:[%s215 + $0x1d8] sm:$0xff] %v747
        %858 = vst [vmem:[%s215 + $0x1e0] sm:$0xff] %v579
        %859 = vst [vmem:[%s215 + $0x1e8] sm:$0xff] %v581
        %860 = vst [vmem:[%s215 + $0x1f0] sm:$0xff] %v752
        %861 = vst [vmem:[%s215 + $0x1f8] sm:$0xff] %v583
        %862 = vst [vmem:[%s215 + $0x200] sm:$0xff] %v585
        %863 = vst [vmem:[%s215 + $0x208] sm:$0xff] %v755
        %864 = vst [vmem:[%s215 + $0x210] sm:$0xff] %v589
        %865 = vst [vmem:[%s215 + $0x218] sm:$0xff] %v591
        %866 = vst [vmem:[%s215 + $0x220] sm:$0xff] %v760
        %867 = vst [vmem:[%s215 + $0x228] sm:$0xff] %v593
        %868 = vst [vmem:[%s215 + $0x230] sm:$0xff] %v595
        %869 = vst [vmem:[%s215 + $0x238] sm:$0xff] %v763
        %870 = vst [vmem:[%s215 + $0x240] sm:$0xff] %v599
        %871 = vst [vmem:[%s215 + $0x248] sm:$0xff] %v601
        %872 = vst [vmem:[%s215 + $0x250] sm:$0xff] %v768
        %873 = vst [vmem:[%s215 + $0x258] sm:$0xff] %v603
        %874 = vst [vmem:[%s215 + $0x260] sm:$0xff] %v605
        %875 = vst [vmem:[%s215 + $0x268] sm:$0xff] %v771
        %876 = vst [vmem:[%s215 + $0x270] sm:$0xff] %v609
        %877 = vst [vmem:[%s215 + $0x278] sm:$0xff] %v611
        %878 = vst [vmem:[%s215 + $0x280] sm:$0xff] %v776
        %879 = vst [vmem:[%s215 + $0x288] sm:$0xff] %v613
        %880 = vst [vmem:[%s215 + $0x290] sm:$0xff] %v615
        %881 = vst [vmem:[%s215 + $0x298] sm:$0xff] %v779
        %882 = vst [vmem:[%s215 + $0x2a0] sm:$0xff] %v619
        %883 = vst [vmem:[%s215 + $0x2a8] sm:$0xff] %v621
        %884 = vst [vmem:[%s215 + $0x2b0] sm:$0xff] %v784
        %885 = vst [vmem:[%s215 + $0x2b8] sm:$0xff] %v623
        %886 = vst [vmem:[%s215 + $0x2c0] sm:$0xff] %v625
        %887 = vst [vmem:[%s215 + $0x2c8] sm:$0xff] %v787
        %888 = vst [vmem:[%s215 + $0x2d0] sm:$0xff] %v629
        %889 = vst [vmem:[%s215 + $0x2d8] sm:$0xff] %v631
        %890 = vst [vmem:[%s215 + $0x2e0] sm:$0xff] %v792
        %891 = vst [vmem:[%s215 + $0x2e8] sm:$0xff] %v633
        %892 = vst [vmem:[%s215 + $0x2f0] sm:$0xff] %v635
        %893 = vst [vmem:[%s215 + $0x2f8] sm:$0xff] %v795
        %s894 = sand.u32 %s97, 1
        %s895 = scalar_lea.sflag [#allocation4], %s894
        %s896 = sand.u32 %s97, 1
        %s897 = smul.addr %s896, 768
        %s898 = scalar_lea.vmem [#allocation8], %s897
        // Predicated region
        $region45: #{transformer_encode_block.4} parent=31 // pred_check
          %p899 = pneg %p107
        $region46: #{transformer_encode_block.4} parent=31 // pred_check_branch
          %901 = sbr.rel (%p899) target = $region48
        $region47: #{transformer_encode_block.4} parent=31 // pred_region
          %s902 = smul.u32 32, %s21
          %s904 = ssub.s32 12288, 12288
          %905 = vsyncadd %s895, %s904
          %s906 = smul.addr %s902, 3
          %s907 = smul.addr %s906, 128
          %s908 = scalar_lea.hbm %s3, %s907
          %s909 = sshll.u32 %s898, 4
          %s910 = int_to_ptr.vmem [resolvable:$true] %s909
          %915 = dma.vmem_to_hbm [thread:$0]  %s910, 12288, %s908, %s895, 384, 384, 24
        $region48: #{transformer_encode_block.4} parent=31 // pred_fallthru
          _
      $region32: #{transformer_encode_block.4} parent=5 // pred_fallthru
        _
      %p916 = scmp.le.s32.totalorder 2, %s16
      // Predicated region
      $region49: #{transformer_encode_block.4} parent=5 // pred_check
        %p917 = pneg %p916
      $region50: #{transformer_encode_block.4} parent=5 // pred_check_branch
        %919 = sbr.rel (%p917) target = $region52
      $region51: #{transformer_encode_block.4} parent=5 // pred_region
        %s920 = ssub.s32 %s16, 2
        // Predicated region
        $region53: #{transformer_encode_block.4} parent=51 // pred_check
          %p921 = pneg %p113
        $region54: #{transformer_encode_block.4} parent=51 // pred_check_branch
          %923 = sbr.rel (%p921) target = $region56
        $region55: #{transformer_encode_block.4} parent=51 // pred_region
          %s924 = sand.u32 %s98, 1
          %s925 = scalar_lea.sflag [#allocation4], %s924
          %s926 = sand.u32 %s98, 1
          %s927 = smul.addr %s926, 768
          %s928 = scalar_lea.vmem [#allocation8], %s927
          %929 = dma.done %s925, 12288
        $region56: #{transformer_encode_block.4} parent=51 // pred_fallthru
          _
      $region52: #{transformer_encode_block.4} parent=5 // pred_fallthru
        _
    $region6: #{transformer_encode_block.4} parent=1 // loop_footer
      %s20 = sadd.s32 1, %s16
    $region7: #{transformer_encode_block.4} parent=1 // loop_footer_branch
      %15 = sbr.rel target = $region3
    $region8: #{transformer_encode_block.4} parent=1 // loop_exit
      _
    %930 = vsyncpa [#allocation3], 1
    %s931 = scalar_lea.sflag [#allocation3], 1
    %932 = vsyncpa %s931, 1
    %933 = vsyncpa [#allocation6], 1
    %934 = vsyncpa [#allocation4], 1
    %s935 = scalar_lea.sflag [#allocation4], 1
    %936 = vsyncpa %s935, 1

// kernel: transformer_encode_block.6
$region0: #{transformer_encode_block.6}
  #allocation0 [shape = 'u32[]', space=smem, size = 0x4, offset = 0x4, fixed_abs, tag = 'smem constant byte address 0x4 - core index']
  #allocation1 [shape = 'u32[144,128]{1,0:T(1,128)}', space=vmem, size = 0x12000, scoped, tag = 'internal scratch']
  %s0 = inlined_call_operand.hbm [shape: f32[512,128], index: 0, kind: input, shape index: {}]
  %s1 = inlined_call_operand.hbm [shape: f32[512,128], index: 1, kind: input, shape index: {}]
  %s2 = inlined_call_operand.hbm [shape: bf16[128,128], index: 2, kind: input, shape index: {}]
  %s3 = inlined_call_operand.hbm [shape: f32[1,128], index: 3, kind: input, shape index: {}]
  %s4 = inlined_call_operand.hbm [shape: f32[1,128], index: 4, kind: input, shape index: {}]
  %s5 = inlined_call_operand.hbm [shape: f32[1,128], index: 5, kind: input, shape index: {}]
  %s6 = inlined_call_operand.hbm [shape: f32[512,128], index: 6, kind: output, shape index: {}]
  %s7 = sld [smem:[#allocation0]]
  $region81: #{transformer_encode_block.6} parent=0
    _
  %s9 = ssub.s32 1, %s7
  %s10 = scalar_select 0, %s9, %s7
  $region1: #{transformer_encode_block.6} parent=0
    #allocation2 [shape = 'u8[262144]{0}', space=vmem, size = 0x40000, scoped, tag = 'input window, operand 0']
    #allocation3 [shape = 's32[2]{0}', space=sflag, size = 0x8, scoped, tag = 'scoped memory for transformer_encode_block.6']
    #allocation4 [shape = 's32[2]{0}', space=sflag, size = 0x8, scoped, tag = 'scoped memory for transformer_encode_block.6']
    #allocation5 [shape = 'u8[262144]{0}', space=vmem, size = 0x40000, scoped, tag = 'input window, operand 1']
    #allocation6 [shape = 's32[2]{0}', space=sflag, size = 0x8, scoped, tag = 'scoped memory for transformer_encode_block.6']
    #allocation7 [shape = 'u8[32768]{0}', space=vmem, size = 0x8000, scoped, tag = 'input window, operand 2, single buffered']
    #allocation8 [shape = 'u8[512]{0}', space=vmem, size = 0x400, scoped, tag = 'input window, operand 3, single buffered']
    #allocation9 [shape = 's32[1]{0}', space=sflag, size = 0x4, scoped, tag = 'scoped memory for transformer_encode_block.6']
    #allocation10 [shape = 'u8[512]{0}', space=vmem, size = 0x400, scoped, tag = 'input window, operand 4, single buffered']
    #allocation11 [shape = 'u8[512]{0}', space=vmem, size = 0x400, scoped, tag = 'input window, operand 5, single buffered']
    #allocation12 [shape = 's32[1]{0}', space=sflag, size = 0x4, scoped, tag = 'scoped memory for transformer_encode_block.6']
    #allocation13 [shape = 'u8[262144]{0}', space=vmem, size = 0x40000, scoped, tag = 'output window, operand 0']
    %11 = vsyncpa [#allocation3], 0
    %s12 = scalar_lea.sflag [#allocation3], 1
    %13 = vsyncpa %s12, 0
    %14 = vsyncpa [#allocation6], 0
    %s15 = scalar_lea.sflag [#allocation6], 1
    %16 = vsyncpa %s15, 0
    %17 = vsyncpa [#allocation9], 0
    %18 = vsyncpa [#allocation12], 0
    %19 = vsyncpa [#allocation4], 0
    %s20 = scalar_lea.sflag [#allocation4], 1
    %21 = vsyncpa %s20, 0
    loop: start=0, step=1, limit=4
    $region2: #{transformer_encode_block.6} parent=1 // loop_pre_header
      _
    $region3: #{transformer_encode_block.6} parent=1 // loop_header
      %s23 = sphi 0, %s27
      %p24 = scmp.ge.s32.totalorder %s23, 4
      %s33 = sphi 0, %s35
      %s36 = sphi 0, %s33
      %s37 = sphi 0, %s36
      %s53 = sphi 0, %s37
      %s59 = sphi 0, %s61
      %s62 = sphi 0, %s59
      %s63 = sphi 0, %s62
      %s79 = sphi 0, %s63
      %s83 = sphi 0, %s83
      %s85 = sphi 0, %s83
      %s86 = sphi 0, %s85
      %s100 = sphi 0, %s86
      %s104 = sphi 0, %s104
      %s106 = sphi 0, %s104
      %s107 = sphi 0, %s106
      %s121 = sphi 0, %s107
      %s125 = sphi 0, %s125
      %s127 = sphi 0, %s125
      %s128 = sphi 0, %s127
      %s142 = sphi 0, %s128
      %s146 = sphi 0, %s146
      %s148 = sphi 0, %s146
      %s149 = sphi 0, %s148
      %s163 = sphi 0, %s149
      %s169 = sphi 0, %s171
      %s172 = sphi 0, %s169
      %s173 = sphi 0, %s172
      %s189 = sphi 0, %s173
    $region4: #{transformer_encode_block.6} parent=1 // loop_header_branch
      %26 = sbr.rel (%p24) target = $region8
    $region5: #{transformer_encode_block.6} parent=1 // loop_body
      %s28 = ssub.s32 %s23, 1
      %s29 = ssub.s32 %s23, 2
      %s30 = sadd.s32 %s23, 1
      %s31 = ssub.s32 %s23, %s30
      %p32 = scmp.eq.s32.totalorder %s31, 0
      %s34 = sadd.s32 %s33, 1
      %s35 = scalar_select %p32, %s33, %s34
      %p38 = pneg %p32
      %p39 = scmp.eq.s32.totalorder %s23, 1
      %p40 = por %p38, %p39
      %p41 = scmp.ne.s32.totalorder %s33, %s36
      %p42 = scmp.eq.s32.totalorder %s23, 0
      %p43 = por %p41, %p42
      %p44 = scmp.ne.s32.totalorder %s33, %s36
      %p45 = scmp.eq.s32.totalorder %s28, 1
      %p46 = por %p44, %p45
      %p47 = scmp.ne.s32.totalorder %s36, %s37
      %p48 = scmp.eq.s32.totalorder %s28, 0
      %p49 = por %p47, %p48
      %p50 = scmp.ne.s32.totalorder %s36, %s37
      %p51 = scmp.eq.s32.totalorder %s29, 1
      %p52 = por %p50, %p51
      %p54 = scmp.ne.s32.totalorder %s37, %s53
      %p55 = scmp.eq.s32.totalorder %s29, 0
      %p56 = por %p54, %p55
      %s57 = ssub.s32 %s23, %s30
      %p58 = scmp.eq.s32.totalorder %s57, 0
      %s60 = sadd.s32 %s59, 1
      %s61 = scalar_select %p58, %s59, %s60
      %p64 = pneg %p58
      %p65 = scmp.eq.s32.totalorder %s23, 1
      %p66 = por %p64, %p65
      %p67 = scmp.ne.s32.totalorder %s59, %s62
      %p68 = scmp.eq.s32.totalorder %s23, 0
      %p69 = por %p67, %p68
      %p70 = scmp.ne.s32.totalorder %s59, %s62
      %p71 = scmp.eq.s32.totalorder %s28, 1
      %p72 = por %p70, %p71
      %p73 = scmp.ne.s32.totalorder %s62, %s63
      %p74 = scmp.eq.s32.totalorder %s28, 0
      %p75 = por %p73, %p74
      %p76 = scmp.ne.s32.totalorder %s62, %s63
      %p77 = scmp.eq.s32.totalorder %s29, 1
      %p78 = por %p76, %p77
      %p80 = scmp.ne.s32.totalorder %s63, %s79
      %p81 = scmp.eq.s32.totalorder %s29, 0
      %p82 = por %p80, %p81
      %s84 = sadd.s32 %s83, 1
      %p87 = scmp.eq.s32.totalorder %s23, 1
      %p88 = scmp.ne.s32.totalorder %s83, %s85
      %p89 = scmp.eq.s32.totalorder %s23, 0
      %p90 = por %p88, %p89
      %p91 = scmp.ne.s32.totalorder %s83, %s85
      %p92 = scmp.eq.s32.totalorder %s28, 1
      %p93 = por %p91, %p92
      %p94 = scmp.ne.s32.totalorder %s85, %s86
      %p95 = scmp.eq.s32.totalorder %s28, 0
      %p96 = por %p94, %p95
      %p97 = scmp.ne.s32.totalorder %s85, %s86
      %p98 = scmp.eq.s32.totalorder %s29, 1
      %p99 = por %p97, %p98
      %p101 = scmp.ne.s32.totalorder %s86, %s100
      %p102 = scmp.eq.s32.totalorder %s29, 0
      %p103 = por %p101, %p102
      %s105 = sadd.s32 %s104, 1
      %p108 = scmp.eq.s32.totalorder %s23, 1
      %p109 = scmp.ne.s32.totalorder %s104, %s106
      %p110 = scmp.eq.s32.totalorder %s23, 0
      %p111 = por %p109, %p110
      %p112 = scmp.ne.s32.totalorder %s104, %s106
      %p113 = scmp.eq.s32.totalorder %s28, 1
      %p114 = por %p112, %p113
      %p115 = scmp.ne.s32.totalorder %s106, %s107
      %p116 = scmp.eq.s32.totalorder %s28, 0
      %p117 = por %p115, %p116
      %p118 = scmp.ne.s32.totalorder %s106, %s107
      %p119 = scmp.eq.s32.totalorder %s29, 1
      %p120 = por %p118, %p119
      %p122 = scmp.ne.s32.totalorder %s107, %s121
      %p123 = scmp.eq.s32.totalorder %s29, 0
      %p124 = por %p122, %p123
      %s126 = sadd.s32 %s125, 1
      %p129 = scmp.eq.s32.totalorder %s23, 1
      %p130 = scmp.ne.s32.totalorder %s125, %s127
      %p131 = scmp.eq.s32.totalorder %s23, 0
      %p132 = por %p130, %p131
      %p133 = scmp.ne.s32.totalorder %s125, %s127
      %p134 = scmp.eq.s32.totalorder %s28, 1
      %p135 = por %p133, %p134
      %p136 = scmp.ne.s32.totalorder %s127, %s128
      %p137 = scmp.eq.s32.totalorder %s28, 0
      %p138 = por %p136, %p137
      %p139 = scmp.ne.s32.totalorder %s127, %s128
      %p140 = scmp.eq.s32.totalorder %s29, 1
      %p141 = por %p139, %p140
      %p143 = scmp.ne.s32.totalorder %s128, %s142
      %p144 = scmp.eq.s32.totalorder %s29, 0
      %p145 = por %p143, %p144
      %s147 = sadd.s32 %s146, 1
      %p150 = scmp.eq.s32.totalorder %s23, 1
      %p151 = scmp.ne.s32.totalorder %s146, %s148
      %p152 = scmp.eq.s32.totalorder %s23, 0
      %p153 = por %p151, %p152
      %p154 = scmp.ne.s32.totalorder %s146, %s148
      %p155 = scmp.eq.s32.totalorder %s28, 1
      %p156 = por %p154, %p155
      %p157 = scmp.ne.s32.totalorder %s148, %s149
      %p158 = scmp.eq.s32.totalorder %s28, 0
      %p159 = por %p157, %p158
      %p160 = scmp.ne.s32.totalorder %s148, %s149
      %p161 = scmp.eq.s32.totalorder %s29, 1
      %p162 = por %p160, %p161
      %p164 = scmp.ne.s32.totalorder %s149, %s163
      %p165 = scmp.eq.s32.totalorder %s29, 0
      %p166 = por %p164, %p165
      %s167 = ssub.s32 %s23, %s30
      %p168 = scmp.eq.s32.totalorder %s167, 0
      %s170 = sadd.s32 %s169, 1
      %s171 = scalar_select %p168, %s169, %s170
      %p174 = pneg %p168
      %p175 = scmp.eq.s32.totalorder %s23, 1
      %p176 = por %p174, %p175
      %p177 = scmp.ne.s32.totalorder %s169, %s172
      %p178 = scmp.eq.s32.totalorder %s23, 0
      %p179 = por %p177, %p178
      %p180 = scmp.ne.s32.totalorder %s169, %s172
      %p181 = scmp.eq.s32.totalorder %s28, 1
      %p182 = por %p180, %p181
      %p183 = scmp.ne.s32.totalorder %s172, %s173
      %p184 = scmp.eq.s32.totalorder %s28, 0
      %p185 = por %p183, %p184
      %p186 = scmp.ne.s32.totalorder %s172, %s173
      %p187 = scmp.eq.s32.totalorder %s29, 1
      %p188 = por %p186, %p187
      %p190 = scmp.ne.s32.totalorder %s173, %s189
      %p191 = scmp.eq.s32.totalorder %s29, 0
      %p192 = por %p190, %p191
      %p193 = scmp.le.s32.totalorder 1, %s23
      %p194 = scmp.lt.s32.totalorder %s23, 3
      %p195 = pnand %p193, %p194
      %p196 = pneg %p195
      // Predicated region
      $region9: #{transformer_encode_block.6} parent=5 // pred_check
        _
      $region10: #{transformer_encode_block.6} parent=5 // pred_check_branch
        %198 = sbr.rel (%p195) target = $region12
      $region11: #{transformer_encode_block.6} parent=5 // pred_region
        %s199 = ssub.s32 %s23, 1
        // Predicated region
        $region13: #{transformer_encode_block.6} parent=11 // pred_check
          %p200 = pneg %p96
        $region14: #{transformer_encode_block.6} parent=11 // pred_check_branch
          %202 = sbr.rel (%p200) target = $region16
        $region15: #{transformer_encode_block.6} parent=11 // pred_region
          %s204 = ssub.s32 1024, 1024
          %205 = vsyncadd [#allocation6], %s204
          %s206 = sshll.u32 [#allocation7], 4
          %s207 = int_to_ptr.vmem [resolvable:$true] %s206
          %212 = dma.hbm_to_vmem [thread:$0]  %s2, 1024, %s207, [#allocation6], 64, 64, 4
        $region16: #{transformer_encode_block.6} parent=11 // pred_fallthru
          _
        // Predicated region
        $region17: #{transformer_encode_block.6} parent=11 // pred_check
          %p213 = pneg %p117
        $region18: #{transformer_encode_block.6} parent=11 // pred_check_branch
          %215 = sbr.rel (%p213) target = $region20
        $region19: #{transformer_encode_block.6} parent=11 // pred_region
          %s217 = ssub.s32 16, 16
          %218 = vsyncadd [#allocation9], %s217
          %s220 = sshll.u32 [#allocation8], 4
          %s221 = int_to_ptr.vmem [resolvable:$true] %s220
          %223 = dma.hbm_to_vmem [thread:$0]  %s3, 16, %s221, [#allocation9]
        $region20: #{transformer_encode_block.6} parent=11 // pred_fallthru
          _
        // Predicated region
        $region21: #{transformer_encode_block.6} parent=11 // pred_check
          %p224 = pneg %p138
        $region22: #{transformer_encode_block.6} parent=11 // pred_check_branch
          %226 = sbr.rel (%p224) target = $region24
        $region23: #{transformer_encode_block.6} parent=11 // pred_region
          %s228 = ssub.s32 16, 16
          %229 = vsyncadd [#allocation9], %s228
          %s231 = sshll.u32 [#allocation10], 4
          %s232 = int_to_ptr.vmem [resolvable:$true] %s231
          %234 = dma.hbm_to_vmem [thread:$0]  %s4, 16, %s232, [#allocation9]
        $region24: #{transformer_encode_block.6} parent=11 // pred_fallthru
          _
        // Predicated region
        $region25: #{transformer_encode_block.6} parent=11 // pred_check
          %p235 = pneg %p159
        $region26: #{transformer_encode_block.6} parent=11 // pred_check_branch
          %237 = sbr.rel (%p235) target = $region28
        $region27: #{transformer_encode_block.6} parent=11 // pred_region
          %s239 = ssub.s32 16, 16
          %240 = vsyncadd [#allocation12], %s239
          %s242 = sshll.u32 [#allocation11], 4
          %s243 = int_to_ptr.vmem [resolvable:$true] %s242
          %245 = dma.hbm_to_vmem [thread:$0]  %s5, 16, %s243, [#allocation12]
        $region28: #{transformer_encode_block.6} parent=11 // pred_fallthru
          _
      $region12: #{transformer_encode_block.6} parent=5 // pred_fallthru
        _
      %p246 = scmp.lt.s32.totalorder %s23, 2
      // Predicated region
      $region29: #{transformer_encode_block.6} parent=5 // pred_check
        %p247 = pneg %p246
      $region30: #{transformer_encode_block.6} parent=5 // pred_check_branch
        %249 = sbr.rel (%p247) target = $region32
      $region31: #{transformer_encode_block.6} parent=5 // pred_region
        // Predicated region
        $region33: #{transformer_encode_block.6} parent=31 // pred_check
          %p250 = pneg %p43
        $region34: #{transformer_encode_block.6} parent=31 // pred_check_branch
          %252 = sbr.rel (%p250) target = $region36
        $region35: #{transformer_encode_block.6} parent=31 // pred_region
          %s253 = sand.u32 %s33, 1
          %s254 = scalar_lea.sflag [#allocation3], %s253
          %s255 = sand.u32 %s33, 1
          %s256 = smul.addr %s255, 256
          %s257 = scalar_lea.vmem [#allocation2], %s256
          %s258 = smul.u32 32, %s23
          %s260 = ssub.s32 4096, 4096
          %261 = vsyncadd %s254, %s260
          %s262 = smul.addr %s258, 128
          %s263 = scalar_lea.hbm %s0, %s262
          %s264 = sshll.u32 %s257, 4
          %s265 = int_to_ptr.vmem [resolvable:$true] %s264
          %270 = dma.hbm_to_vmem [thread:$0]  %s263, 4096, %s265, %s254, 128, 128, 8
        $region36: #{transformer_encode_block.6} parent=31 // pred_fallthru
          _
        // Predicated region
        $region37: #{transformer_encode_block.6} parent=31 // pred_check
          %p271 = pneg %p69
        $region38: #{transformer_encode_block.6} parent=31 // pred_check_branch
          %273 = sbr.rel (%p271) target = $region40
        $region39: #{transformer_encode_block.6} parent=31 // pred_region
          %s274 = sand.u32 %s23, 1
          %s275 = scalar_lea.sflag [#allocation6], %s274
          %s276 = sand.u32 %s59, 1
          %s277 = smul.addr %s276, 256
          %s278 = scalar_lea.vmem [#allocation5], %s277
          %s279 = smul.u32 32, %s23
          %s281 = ssub.s32 4096, 4096
          %282 = vsyncadd %s275, %s281
          %s283 = smul.addr %s279, 128
          %s284 = scalar_lea.hbm %s1, %s283
          %s285 = sshll.u32 %s278, 4
          %s286 = int_to_ptr.vmem [resolvable:$true] %s285
          %291 = dma.hbm_to_vmem [thread:$0]  %s284, 4096, %s286, %s275, 128, 128, 8
        $region40: #{transformer_encode_block.6} parent=31 // pred_fallthru
          _
      $region32: #{transformer_encode_block.6} parent=5 // pred_fallthru
        _
      %p292 = scmp.le.s32.totalorder 1, %s23
      %p293 = scmp.lt.s32.totalorder %s23, 3
      %p294 = pnand %p292, %p293
      %p295 = pneg %p294
      // Predicated region
      $region41: #{transformer_encode_block.6} parent=5 // pred_check
        _
      $region42: #{transformer_encode_block.6} parent=5 // pred_check_branch
        %297 = sbr.rel (%p294) target = $region44
      $region43: #{transformer_encode_block.6} parent=5 // pred_region
        %s298 = ssub.s32 %s23, 1
        %s299 = sand.u32 %s36, 1
        %s300 = scalar_lea.sflag [#allocation3], %s299
        %s301 = sand.u32 %s36, 1
        %s302 = smul.addr %s301, 256
        %s303 = scalar_lea.vmem [#allocation2], %s302
        // Predicated region
        $region45: #{transformer_encode_block.6} parent=43 // pred_check
          %p304 = pneg %p49
        $region46: #{transformer_encode_block.6} parent=43 // pred_check_branch
          %306 = sbr.rel (%p304) target = $region48
        $region47: #{transformer_encode_block.6} parent=43 // pred_region
          %307 = dma.done %s300, 4096
        $region48: #{transformer_encode_block.6} parent=43 // pred_fallthru
          _
        %s308 = sand.u32 %s28, 1
        %s309 = scalar_lea.sflag [#allocation6], %s308
        %s310 = sand.u32 %s62, 1
        %s311 = smul.addr %s310, 256
        %s312 = scalar_lea.vmem [#allocation5], %s311
        // Predicated region
        $region49: #{transformer_encode_block.6} parent=43 // pred_check
          %p313 = pneg %p75
        $region50: #{transformer_encode_block.6} parent=43 // pred_check_branch
          %315 = sbr.rel (%p313) target = $region52
        $region51: #{transformer_encode_block.6} parent=43 // pred_region
          %316 = dma.done %s309, 4096
        $region52: #{transformer_encode_block.6} parent=43 // pred_fallthru
          _
        // Predicated region
        $region53: #{transformer_encode_block.6} parent=43 // pred_check
          %p317 = pneg %p96
        $region54: #{transformer_encode_block.6} parent=43 // pred_check_branch
          %319 = sbr.rel (%p317) target = $region56
        $region55: #{transformer_encode_block.6} parent=43 // pred_region
          %320 = dma.done [#allocation6], 1024
        $region56: #{transformer_encode_block.6} parent=43 // pred_fallthru
          _
        // Predicated region
        $region57: #{transformer_encode_block.6} parent=43 // pred_check
          %p321 = pneg %p117
        $region58: #{transformer_encode_block.6} parent=43 // pred_check_branch
          %323 = sbr.rel (%p321) target = $region60
        $region59: #{transformer_encode_block.6} parent=43 // pred_region
          %324 = dma.done [#allocation9], 16
        $region60: #{transformer_encode_block.6} parent=43 // pred_fallthru
          _
        // Predicated region
        $region61: #{transformer_encode_block.6} parent=43 // pred_check
          %p325 = pneg %p138
        $region62: #{transformer_encode_block.6} parent=43 // pred_check_branch
          %327 = sbr.rel (%p325) target = $region64
        $region63: #{transformer_encode_block.6} parent=43 // pred_region
          %328 = dma.done [#allocation9], 16
        $region64: #{transformer_encode_block.6} parent=43 // pred_fallthru
          _
        // Predicated region
        $region65: #{transformer_encode_block.6} parent=43 // pred_check
          %p329 = pneg %p159
        $region66: #{transformer_encode_block.6} parent=43 // pred_check_branch
          %331 = sbr.rel (%p329) target = $region68
        $region67: #{transformer_encode_block.6} parent=43 // pred_region
          %332 = dma.done [#allocation12], 16
        $region68: #{transformer_encode_block.6} parent=43 // pred_fallthru
          _
        %s333 = sand.u32 %s36, 1
        %s334 = scalar_lea.sflag [#allocation3], %s333
        %s335 = sand.u32 %s36, 1
        %s336 = smul.addr %s335, 256
        %s337 = scalar_lea.vmem [#allocation2], %s336
        %p338 = pneg %p49
        %p339 = pneg %p46
        %s340 = sand.u32 %s28, 1
        %s341 = scalar_lea.sflag [#allocation6], %s340
        %s342 = sand.u32 %s62, 1
        %s343 = smul.addr %s342, 256
        %s344 = scalar_lea.vmem [#allocation5], %s343
        %p345 = pneg %p75
        %p346 = pneg %p72
        %p347 = pneg %p96
        %p348 = pneg %p93
        %p349 = pneg %p117
        %p350 = pneg %p114
        %p351 = pneg %p138
        %p352 = pneg %p135
        %p353 = pneg %p159
        %p354 = pneg %p156
        %p355 = pneg %p185
        %p356 = pneg %p182
        %s357 = sand.u32 %s172, 1
        %s358 = scalar_lea.sflag [#allocation4], %s357
        %s359 = sand.u32 %s172, 1
        %s360 = smul.addr %s359, 256
        %s361 = scalar_lea.vmem [#allocation13], %s360
        %s362 = smul.u32 32, %s28
        %s363 = smul.u32 32, %s28
        %s364 = smul.u32 32, %s28
        %v366 = vld [vmem:[%s303] sm:$0xff]
        %v367 = vld [vmem:[%s303 + $0x8] sm:$0xff]
        %v368 = vld [vmem:[%s303 + $0x10] sm:$0xff]
        %v369 = vld [vmem:[%s303 + $0x18] sm:$0xff]
        %v370 = vld [vmem:[%s303 + $0x20] sm:$0xff]
        %v371 = vld [vmem:[%s303 + $0x28] sm:$0xff]
        %v372 = vld [vmem:[%s303 + $0x30] sm:$0xff]
        %v373 = vld [vmem:[%s303 + $0x38] sm:$0xff]
        %v374 = vld [vmem:[%s303 + $0x40] sm:$0xff]
        %v375 = vld [vmem:[%s303 + $0x48] sm:$0xff]
        %v376 = vld [vmem:[%s303 + $0x50] sm:$0xff]
        %v377 = vld [vmem:[%s303 + $0x58] sm:$0xff]
        %v378 = vld [vmem:[%s303 + $0x60] sm:$0xff]
        %v379 = vld [vmem:[%s303 + $0x68] sm:$0xff]
        %v380 = vld [vmem:[%s303 + $0x70] sm:$0xff]
        %v381 = vld [vmem:[%s303 + $0x78] sm:$0xff]
        %v382 = vld [vmem:[%s303 + $0x80] sm:$0xff]
        %v383 = vld [vmem:[%s303 + $0x88] sm:$0xff]
        %v384 = vld [vmem:[%s303 + $0x90] sm:$0xff]
        %v385 = vld [vmem:[%s303 + $0x98] sm:$0xff]
        %v386 = vld [vmem:[%s303 + $0xa0] sm:$0xff]
        %v387 = vld [vmem:[%s303 + $0xa8] sm:$0xff]
        %v388 = vld [vmem:[%s303 + $0xb0] sm:$0xff]
        %v389 = vld [vmem:[%s303 + $0xb8] sm:$0xff]
        %v390 = vld [vmem:[%s303 + $0xc0] sm:$0xff]
        %v391 = vld [vmem:[%s303 + $0xc8] sm:$0xff]
        %v392 = vld [vmem:[%s303 + $0xd0] sm:$0xff]
        %v393 = vld [vmem:[%s303 + $0xd8] sm:$0xff]
        %v394 = vld [vmem:[%s303 + $0xe0] sm:$0xff]
        %v395 = vld [vmem:[%s303 + $0xe8] sm:$0xff]
        %v396 = vld [vmem:[%s303 + $0xf0] sm:$0xff]
        %v397 = vld [vmem:[%s303 + $0xf8] sm:$0xff]
        %v398 = vpack.c.bf16 %v367, %v366
        %v399 = vpack.c.bf16 %v369, %v368
        %v400 = vpack.c.bf16 %v371, %v370
        %v401 = vpack.c.bf16 %v373, %v372
        %v402 = vpack.c.bf16 %v375, %v374
        %v403 = vpack.c.bf16 %v377, %v376
        %v404 = vpack.c.bf16 %v379, %v378
        %v405 = vpack.c.bf16 %v381, %v380
        %v406 = vpack.c.bf16 %v383, %v382
        %v407 = vpack.c.bf16 %v385, %v384
        %v408 = vpack.c.bf16 %v387, %v386
        %v409 = vpack.c.bf16 %v389, %v388
        %v410 = vpack.c.bf16 %v391, %v390
        %v411 = vpack.c.bf16 %v393, %v392
        %v412 = vpack.c.bf16 %v395, %v394
        %v413 = vpack.c.bf16 %v397, %v396
        %v414 = vld [vmem:[#allocation7] sm:$0xf]
        %v415 = vld [vmem:[#allocation7 + $0x4] sm:$0xf]
        %v416 = vld [vmem:[#allocation7 + $0x8] sm:$0xf]
        %v417 = vld [vmem:[#allocation7 + $0xc] sm:$0xf]
        %v418 = vld [vmem:[#allocation7 + $0x10] sm:$0xf]
        %v419 = vld [vmem:[#allocation7 + $0x14] sm:$0xf]
        %v420 = vld [vmem:[#allocation7 + $0x18] sm:$0xf]
        %v421 = vld [vmem:[#allocation7 + $0x1c] sm:$0xf]
        %v422 = vld [vmem:[#allocation7 + $0x20] sm:$0xf]
        %v423 = vld [vmem:[#allocation7 + $0x24] sm:$0xf]
        %v424 = vld [vmem:[#allocation7 + $0x28] sm:$0xf]
        %v425 = vld [vmem:[#allocation7 + $0x2c] sm:$0xf]
        %v426 = vld [vmem:[#allocation7 + $0x30] sm:$0xf]
        %v427 = vld [vmem:[#allocation7 + $0x34] sm:$0xf]
        %v428 = vld [vmem:[#allocation7 + $0x38] sm:$0xf]
        %v429 = vld [vmem:[#allocation7 + $0x3c] sm:$0xf]
        %v430 = vld [vmem:[#allocation8] sm:$0x1]
        %v432 = vlaneseq
        %v433 = vshrl.u32 %v432, 7
        %v434 = vsub.s32 0, %v433
        %v435 = vrot.slane %v430, %v434
        %v453 = vunpack.c.l.b16 %v414
        %v454 = vunpack.c.l.b16 %v415
        %v455 = vunpack.c.l.b16 %v416
        %v456 = vunpack.c.l.b16 %v417
        %v457 = vunpack.c.l.b16 %v418
        %v458 = vunpack.c.l.b16 %v419
        %v459 = vunpack.c.l.b16 %v420
        %v460 = vunpack.c.l.b16 %v421
        %v461 = vunpack.c.l.b16 %v422
        %v462 = vunpack.c.l.b16 %v423
        %v463 = vunpack.c.l.b16 %v424
        %v464 = vunpack.c.l.b16 %v425
        %v465 = vunpack.c.l.b16 %v426
        %v466 = vunpack.c.l.b16 %v427
        %v467 = vunpack.c.l.b16 %v428
        %v468 = vunpack.c.l.b16 %v429
        %v469 = vpack.c.b16 %v454, %v453
        %v470 = vpack.c.b16 %v456, %v455
        %v471 = vpack.c.b16 %v458, %v457
        %v472 = vpack.c.b16 %v460, %v459
        %v473 = vpack.c.b16 %v462, %v461
        %v474 = vpack.c.b16 %v464, %v463
        %v475 = vpack.c.b16 %v466, %v465
        %v476 = vpack.c.b16 %v468, %v467
        %485 = vmatprep.subr.bf16.mxu0 0
        %486 = vmatpush1.bf16.msra.mxu0 %v469
        %487 = vmatprep.subr.bf16.mxu0 0
        %488 = vmatpush1.bf16.msra.mxu0 %v470
        %489 = vmatprep.subr.bf16.mxu0 0
        %490 = vmatpush1.bf16.msra.mxu0 %v471
        %491 = vmatprep.subr.bf16.mxu0 0
        %492 = vmatpush1.bf16.msra.mxu0 %v472
        %493 = vmatprep.subr.bf16.mxu0 0
        %494 = vmatpush1.bf16.msra.mxu0 %v473
        %495 = vmatprep.subr.bf16.mxu0 0
        %496 = vmatpush1.bf16.msra.mxu0 %v474
        %497 = vmatprep.subr.bf16.mxu0 0
        %498 = vmatpush1.bf16.msra.mxu0 %v475
        %499 = vmatprep.subr.bf16.mxu0 0
        %500 = vmatpush1.bf16.msra.mxu0 %v476
        %501 = vmatprep.subr.bf16.mxu0 0
        %502 = vmatpush1.bf16.msra.mxu0 0
        %503 = vmatprep.subr.bf16.mxu0 0
        %504 = vmatpush1.bf16.msra.mxu0 0
        %505 = vmatprep.subr.bf16.mxu0 0
        %506 = vmatpush1.bf16.msra.mxu0 0
        %507 = vmatprep.subr.bf16.mxu0 0
        %508 = vmatpush1.bf16.msra.mxu0 0
        %509 = vmatprep.subr.bf16.mxu0 0
        %510 = vmatpush1.bf16.msra.mxu0 0
        %511 = vmatprep.subr.bf16.mxu0 0
        %512 = vmatpush1.bf16.msra.mxu0 0
        %513 = vmatprep.subr.bf16.mxu0 0
        %514 = vmatpush1.bf16.msra.mxu0 0
        %515 = vmatprep.subr.bf16.mxu0 0
        %516 = vmatpush1.bf16.msra.mxu0 0
        %517 = vmatprep.mubr.bf16.mxu0 0
        %518 = vmatmul.mubr.bf16.gmra.mrb[0].mxu0 %v398
        %v519 = vpop.f32.mrb[0].mxu0
        %v520 = vadd.f32 %v435, %v519
        %v521 = vpop.f32.mrb[0].mxu0
        %v522 = vpop.f32.mrb[0].mxu0
        %v523 = vadd.f32 %v435, %v522
        %v524 = vpop.f32.mrb[0].mxu0
        %525 = vmatprep.mubr.bf16.mxu0 0
        %526 = vmatmul.mubr.bf16.gmra.mrb[0].mxu0 %v399
        %v527 = vpop.f32.mrb[0].mxu0
        %v528 = vadd.f32 %v435, %v527
        %v529 = vpop.f32.mrb[0].mxu0
        %v530 = vpop.f32.mrb[0].mxu0
        %v531 = vadd.f32 %v435, %v530
        %v532 = vpop.f32.mrb[0].mxu0
        %533 = vmatprep.mubr.bf16.mxu0 0
        %534 = vmatmul.mubr.bf16.gmra.mrb[0].mxu0 %v400
        %v535 = vpop.f32.mrb[0].mxu0
        %v536 = vadd.f32 %v435, %v535
        %v537 = vpop.f32.mrb[0].mxu0
        %v538 = vpop.f32.mrb[0].mxu0
        %v539 = vadd.f32 %v435, %v538
        %v540 = vpop.f32.mrb[0].mxu0
        %541 = vmatprep.mubr.bf16.mxu0 0
        %542 = vmatmul.mubr.bf16.gmra.mrb[0].mxu0 %v401
        %v543 = vpop.f32.mrb[0].mxu0
        %v544 = vadd.f32 %v435, %v543
        %v545 = vpop.f32.mrb[0].mxu0
        %v546 = vpop.f32.mrb[0].mxu0
        %v547 = vadd.f32 %v435, %v546
        %v548 = vpop.f32.mrb[0].mxu0
        %549 = vmatprep.mubr.bf16.mxu0 0
        %550 = vmatmul.mubr.bf16.gmra.mrb[0].mxu0 %v402
        %v551 = vpop.f32.mrb[0].mxu0
        %v552 = vadd.f32 %v435, %v551
        %v553 = vpop.f32.mrb[0].mxu0
        %v554 = vpop.f32.mrb[0].mxu0
        %v555 = vadd.f32 %v435, %v554
        %v556 = vpop.f32.mrb[0].mxu0
        %557 = vmatprep.mubr.bf16.mxu0 0
        %558 = vmatmul.mubr.bf16.gmra.mrb[0].mxu0 %v403
        %v559 = vpop.f32.mrb[0].mxu0
        %v560 = vadd.f32 %v435, %v559
        %v561 = vpop.f32.mrb[0].mxu0
        %v562 = vpop.f32.mrb[0].mxu0
        %v563 = vadd.f32 %v435, %v562
        %v564 = vpop.f32.mrb[0].mxu0
        %565 = vmatprep.mubr.bf16.mxu0 0
        %566 = vmatmul.mubr.bf16.gmra.mrb[0].mxu0 %v404
        %v567 = vpop.f32.mrb[0].mxu0
        %v568 = vadd.f32 %v435, %v567
        %v569 = vpop.f32.mrb[0].mxu0
        %v570 = vpop.f32.mrb[0].mxu0
        %v571 = vadd.f32 %v435, %v570
        %v572 = vpop.f32.mrb[0].mxu0
        %573 = vmatprep.mubr.bf16.mxu0 0
        %574 = vmatmul.mubr.bf16.gmra.mrb[0].mxu0 %v405
        %v575 = vpop.f32.mrb[0].mxu0
        %v576 = vadd.f32 %v435, %v575
        %v577 = vpop.f32.mrb[0].mxu0
        %v578 = vpop.f32.mrb[0].mxu0
        %v579 = vadd.f32 %v435, %v578
        %v580 = vpop.f32.mrb[0].mxu0
        %581 = vmatprep.mubr.bf16.mxu0 0
        %582 = vmatmul.mubr.bf16.gmra.mrb[0].mxu0 %v406
        %v583 = vpop.f32.mrb[0].mxu0
        %v584 = vadd.f32 %v435, %v583
        %v585 = vpop.f32.mrb[0].mxu0
        %v586 = vpop.f32.mrb[0].mxu0
        %v587 = vadd.f32 %v435, %v586
        %v588 = vpop.f32.mrb[0].mxu0
        %589 = vmatprep.mubr.bf16.mxu0 0
        %590 = vmatmul.mubr.bf16.gmra.mrb[0].mxu0 %v407
        %v591 = vpop.f32.mrb[0].mxu0
        %v592 = vadd.f32 %v435, %v591
        %v593 = vpop.f32.mrb[0].mxu0
        %v594 = vpop.f32.mrb[0].mxu0
        %v595 = vadd.f32 %v435, %v594
        %v596 = vpop.f32.mrb[0].mxu0
        %597 = vmatprep.mubr.bf16.mxu0 0
        %598 = vmatmul.mubr.bf16.gmra.mrb[0].mxu0 %v408
        %v599 = vpop.f32.mrb[0].mxu0
        %v600 = vadd.f32 %v435, %v599
        %v601 = vpop.f32.mrb[0].mxu0
        %v602 = vpop.f32.mrb[0].mxu0
        %v603 = vadd.f32 %v435, %v602
        %v604 = vpop.f32.mrb[0].mxu0
        %605 = vmatprep.mubr.bf16.mxu0 0
        %606 = vmatmul.mubr.bf16.gmra.mrb[0].mxu0 %v409
        %v607 = vpop.f32.mrb[0].mxu0
        %v608 = vadd.f32 %v435, %v607
        %v609 = vpop.f32.mrb[0].mxu0
        %v610 = vpop.f32.mrb[0].mxu0
        %v611 = vadd.f32 %v435, %v610
        %v612 = vpop.f32.mrb[0].mxu0
        %613 = vmatprep.mubr.bf16.mxu0 0
        %614 = vmatmul.mubr.bf16.gmra.mrb[0].mxu0 %v410
        %v615 = vpop.f32.mrb[0].mxu0
        %v616 = vadd.f32 %v435, %v615
        %v617 = vpop.f32.mrb[0].mxu0
        %v618 = vpop.f32.mrb[0].mxu0
        %v619 = vadd.f32 %v435, %v618
        %v620 = vpop.f32.mrb[0].mxu0
        %621 = vmatprep.mubr.bf16.mxu0 0
        %622 = vmatmul.mubr.bf16.gmra.mrb[0].mxu0 %v411
        %v623 = vpop.f32.mrb[0].mxu0
        %v624 = vadd.f32 %v435, %v623
        %v625 = vpop.f32.mrb[0].mxu0
        %v626 = vpop.f32.mrb[0].mxu0
        %v627 = vadd.f32 %v435, %v626
        %v628 = vpop.f32.mrb[0].mxu0
        %629 = vmatprep.mubr.bf16.mxu0 0
        %630 = vmatmul.mubr.bf16.gmra.mrb[0].mxu0 %v412
        %v631 = vpop.f32.mrb[0].mxu0
        %v632 = vadd.f32 %v435, %v631
        %v633 = vpop.f32.mrb[0].mxu0
        %v634 = vpop.f32.mrb[0].mxu0
        %v635 = vadd.f32 %v435, %v634
        %v636 = vpop.f32.mrb[0].mxu0
        %637 = vmatprep.mubr.bf16.mxu0 0
        %638 = vmatmul.mubr.bf16.gmra.mrb[0].mxu0 %v413
        %v639 = vpop.f32.mrb[0].mxu0
        %v640 = vadd.f32 %v435, %v639
        %v641 = vpop.f32.mrb[0].mxu0
        %v642 = vpop.f32.mrb[0].mxu0
        %v643 = vadd.f32 %v435, %v642
        %v644 = vpop.f32.mrb[0].mxu0
        %645 = vdwg.mxu0
        %v646 = vld [vmem:[%s312] sm:$0xff]
        %v647 = vld [vmem:[%s312 + $0x8] sm:$0xff]
        %v648 = vld [vmem:[%s312 + $0x10] sm:$0xff]
        %v649 = vld [vmem:[%s312 + $0x18] sm:$0xff]
        %v650 = vld [vmem:[%s312 + $0x20] sm:$0xff]
        %v651 = vld [vmem:[%s312 + $0x28] sm:$0xff]
        %v652 = vld [vmem:[%s312 + $0x30] sm:$0xff]
        %v653 = vld [vmem:[%s312 + $0x38] sm:$0xff]
        %v654 = vld [vmem:[%s312 + $0x40] sm:$0xff]
        %v655 = vld [vmem:[%s312 + $0x48] sm:$0xff]
        %v656 = vld [vmem:[%s312 + $0x50] sm:$0xff]
        %v657 = vld [vmem:[%s312 + $0x58] sm:$0xff]
        %v658 = vld [vmem:[%s312 + $0x60] sm:$0xff]
        %v659 = vld [vmem:[%s312 + $0x68] sm:$0xff]
        %v660 = vld [vmem:[%s312 + $0x70] sm:$0xff]
        %v661 = vld [vmem:[%s312 + $0x78] sm:$0xff]
        %v662 = vld [vmem:[%s312 + $0x80] sm:$0xff]
        %v663 = vld [vmem:[%s312 + $0x88] sm:$0xff]
        %v664 = vld [vmem:[%s312 + $0x90] sm:$0xff]
        %v665 = vld [vmem:[%s312 + $0x98] sm:$0xff]
        %v666 = vld [vmem:[%s312 + $0xa0] sm:$0xff]
        %v667 = vld [vmem:[%s312 + $0xa8] sm:$0xff]
        %v668 = vld [vmem:[%s312 + $0xb0] sm:$0xff]
        %v669 = vld [vmem:[%s312 + $0xb8] sm:$0xff]
        %v670 = vld [vmem:[%s312 + $0xc0] sm:$0xff]
        %v671 = vld [vmem:[%s312 + $0xc8] sm:$0xff]
        %v672 = vld [vmem:[%s312 + $0xd0] sm:$0xff]
        %v673 = vld [vmem:[%s312 + $0xd8] sm:$0xff]
        %v674 = vld [vmem:[%s312 + $0xe0] sm:$0xff]
        %v675 = vld [vmem:[%s312 + $0xe8] sm:$0xff]
        %v676 = vld [vmem:[%s312 + $0xf0] sm:$0xff]
        %v677 = vld [vmem:[%s312 + $0xf8] sm:$0xff]
        %v678 = vadd.f32 %v646, %v520
        %v679 = vadd.f32 %v647, %v523
        %v680 = vadd.f32 %v648, %v528
        %v681 = vadd.f32 %v649, %v531
        %v682 = vadd.f32 %v650, %v536
        %v683 = vadd.f32 %v651, %v539
        %v684 = vadd.f32 %v652, %v544
        %v685 = vadd.f32 %v653, %v547
        %v686 = vadd.f32 %v654, %v552
        %v687 = vadd.f32 %v655, %v555
        %v688 = vadd.f32 %v656, %v560
        %v689 = vadd.f32 %v657, %v563
        %v690 = vadd.f32 %v658, %v568
        %v691 = vadd.f32 %v659, %v571
        %v692 = vadd.f32 %v660, %v576
        %v693 = vadd.f32 %v661, %v579
        %v694 = vadd.f32 %v662, %v584
        %v695 = vadd.f32 %v663, %v587
        %v696 = vadd.f32 %v664, %v592
        %v697 = vadd.f32 %v665, %v595
        %v698 = vadd.f32 %v666, %v600
        %v699 = vadd.f32 %v667, %v603
        %v700 = vadd.f32 %v668, %v608
        %v701 = vadd.f32 %v669, %v611
        %v702 = vadd.f32 %v670, %v616
        %v703 = vadd.f32 %v671, %v619
        %v704 = vadd.f32 %v672, %v624
        %v705 = vadd.f32 %v673, %v627
        %v706 = vadd.f32 %v674, %v632
        %v707 = vadd.f32 %v675, %v635
        %v708 = vadd.f32 %v676, %v640
        %v709 = vadd.f32 %v677, %v643
        %v710 = vld [vmem:[#allocation10] sm:$0x1]
        %v711 = vld [vmem:[#allocation11] sm:$0x1]
        %712 = vadd.xlane.f32.xlu0 %v678
        %v713 = vpop.xlane.xlu0 %712
        %714 = vadd.xlane.f32.xlu0 %v679
        %v715 = vpop.xlane.xlu0 %714
        %716 = vadd.xlane.f32.xlu0 %v680
        %v717 = vpop.xlane.xlu0 %716
        %718 = vadd.xlane.f32.xlu0 %v681
        %v719 = vpop.xlane.xlu0 %718
        %720 = vadd.xlane.f32.xlu0 %v682
        %v721 = vpop.xlane.xlu0 %720
        %722 = vadd.xlane.f32.xlu0 %v683
        %v723 = vpop.xlane.xlu0 %722
        %724 = vadd.xlane.f32.xlu0 %v684
        %v725 = vpop.xlane.xlu0 %724
        %726 = vadd.xlane.f32.xlu0 %v685
        %v727 = vpop.xlane.xlu0 %726
        %728 = vadd.xlane.f32.xlu0 %v686
        %v729 = vpop.xlane.xlu0 %728
        %730 = vadd.xlane.f32.xlu0 %v687
        %v731 = vpop.xlane.xlu0 %730
        %732 = vadd.xlane.f32.xlu0 %v688
        %v733 = vpop.xlane.xlu0 %732
        %734 = vadd.xlane.f32.xlu0 %v689
        %v735 = vpop.xlane.xlu0 %734
        %736 = vadd.xlane.f32.xlu0 %v690
        %v737 = vpop.xlane.xlu0 %736
        %738 = vadd.xlane.f32.xlu0 %v691
        %v739 = vpop.xlane.xlu0 %738
        %740 = vadd.xlane.f32.xlu0 %v692
        %v741 = vpop.xlane.xlu0 %740
        %742 = vadd.xlane.f32.xlu0 %v693
        %v743 = vpop.xlane.xlu0 %742
        %744 = vadd.xlane.f32.xlu0 %v694
        %v745 = vpop.xlane.xlu0 %744
        %746 = vadd.xlane.f32.xlu0 %v695
        %v747 = vpop.xlane.xlu0 %746
        %748 = vadd.xlane.f32.xlu0 %v696
        %v749 = vpop.xlane.xlu0 %748
        %750 = vadd.xlane.f32.xlu0 %v697
        %v751 = vpop.xlane.xlu0 %750
        %752 = vadd.xlane.f32.xlu0 %v698
        %v753 = vpop.xlane.xlu0 %752
        %754 = vadd.xlane.f32.xlu0 %v699
        %v755 = vpop.xlane.xlu0 %754
        %756 = vadd.xlane.f32.xlu0 %v700
        %v757 = vpop.xlane.xlu0 %756
        %758 = vadd.xlane.f32.xlu0 %v701
        %v759 = vpop.xlane.xlu0 %758
        %760 = vadd.xlane.f32.xlu0 %v702
        %v761 = vpop.xlane.xlu0 %760
        %762 = vadd.xlane.f32.xlu0 %v703
        %v763 = vpop.xlane.xlu0 %762
        %764 = vadd.xlane.f32.xlu0 %v704
        %v765 = vpop.xlane.xlu0 %764
        %766 = vadd.xlane.f32.xlu0 %v705
        %v767 = vpop.xlane.xlu0 %766
        %768 = vadd.xlane.f32.xlu0 %v706
        %v769 = vpop.xlane.xlu0 %768
        %770 = vadd.xlane.f32.xlu0 %v707
        %v771 = vpop.xlane.xlu0 %770
        %772 = vadd.xlane.f32.xlu0 %v708
        %v773 = vpop.xlane.xlu0 %772
        %774 = vadd.xlane.f32.xlu0 %v709
        %v775 = vpop.xlane.xlu0 %774
        %v776 = vrcp.pop 128.0
        %v777 = vmul.f32 %v713, %v776
        %v778 = vmul.f32 %v715, %v776
        %v779 = vmul.f32 %v717, %v776
        %v780 = vmul.f32 %v719, %v776
        %v781 = vmul.f32 %v721, %v776
        %v782 = vmul.f32 %v723, %v776
        %v783 = vmul.f32 %v725, %v776
        %v784 = vmul.f32 %v727, %v776
        %v785 = vmul.f32 %v729, %v776
        %v786 = vmul.f32 %v731, %v776
        %v787 = vmul.f32 %v733, %v776
        %v788 = vmul.f32 %v735, %v776
        %v789 = vmul.f32 %v737, %v776
        %v790 = vmul.f32 %v739, %v776
        %v791 = vmul.f32 %v741, %v776
        %v792 = vmul.f32 %v743, %v776
        %v793 = vmul.f32 %v745, %v776
        %v794 = vmul.f32 %v747, %v776
        %v795 = vmul.f32 %v749, %v776
        %v796 = vmul.f32 %v751, %v776
        %v797 = vmul.f32 %v753, %v776
        %v798 = vmul.f32 %v755, %v776
        %v799 = vmul.f32 %v757, %v776
        %v800 = vmul.f32 %v759, %v776
        %v801 = vmul.f32 %v761, %v776
        %v802 = vmul.f32 %v763, %v776
        %v803 = vmul.f32 %v765, %v776
        %v804 = vmul.f32 %v767, %v776
        %v805 = vmul.f32 %v769, %v776
        %v806 = vmul.f32 %v771, %v776
        %v807 = vmul.f32 %v773, %v776
        %v808 = vmul.f32 %v775, %v776
        %v809 = vsub.f32 %v678, %v777
        %v810 = vsub.f32 %v679, %v778
        %v811 = vsub.f32 %v680, %v779
        %v812 = vsub.f32 %v681, %v780
        %v813 = vsub.f32 %v682, %v781
        %v814 = vsub.f32 %v683, %v782
        %v815 = vsub.f32 %v684, %v783
        %v816 = vsub.f32 %v685, %v784
        %v817 = vsub.f32 %v686, %v785
        %v818 = vsub.f32 %v687, %v786
        %v819 = vsub.f32 %v688, %v787
        %v820 = vsub.f32 %v689, %v788
        %v821 = vsub.f32 %v690, %v789
        %v822 = vsub.f32 %v691, %v790
        %v823 = vsub.f32 %v692, %v791
        %v824 = vsub.f32 %v693, %v792
        %v825 = vsub.f32 %v694, %v793
        %v826 = vsub.f32 %v695, %v794
        %v827 = vsub.f32 %v696, %v795
        %v828 = vsub.f32 %v697, %v796
        %v829 = vsub.f32 %v698, %v797
        %v830 = vsub.f32 %v699, %v798
        %v831 = vsub.f32 %v700, %v799
        %v832 = vsub.f32 %v701, %v800
        %v833 = vsub.f32 %v702, %v801
        %v834 = vsub.f32 %v703, %v802
        %v835 = vsub.f32 %v704, %v803
        %v836 = vsub.f32 %v705, %v804
        %v837 = vsub.f32 %v706, %v805
        %v838 = vsub.f32 %v707, %v806
        %v839 = vsub.f32 %v708, %v807
        %v840 = vsub.f32 %v709, %v808
        %v841 = vmul.f32 %v809, %v809
        %v842 = vmul.f32 %v810, %v810
        %v843 = vmul.f32 %v811, %v811
        %v844 = vmul.f32 %v812, %v812
        %v845 = vmul.f32 %v813, %v813
        %v846 = vmul.f32 %v814, %v814
        %v847 = vmul.f32 %v815, %v815
        %v848 = vmul.f32 %v816, %v816
        %v849 = vmul.f32 %v817, %v817
        %v850 = vmul.f32 %v818, %v818
        %v851 = vmul.f32 %v819, %v819
        %v852 = vmul.f32 %v820, %v820
        %v853 = vmul.f32 %v821, %v821
        %v854 = vmul.f32 %v822, %v822
        %v855 = vmul.f32 %v823, %v823
        %v856 = vmul.f32 %v824, %v824
        %v857 = vmul.f32 %v825, %v825
        %v858 = vmul.f32 %v826, %v826
        %v859 = vmul.f32 %v827, %v827
        %v860 = vmul.f32 %v828, %v828
        %v861 = vmul.f32 %v829, %v829
        %v862 = vmul.f32 %v830, %v830
        %v863 = vmul.f32 %v831, %v831
        %v864 = vmul.f32 %v832, %v832
        %v865 = vmul.f32 %v833, %v833
        %v866 = vmul.f32 %v834, %v834
        %v867 = vmul.f32 %v835, %v835
        %v868 = vmul.f32 %v836, %v836
        %v869 = vmul.f32 %v837, %v837
        %v870 = vmul.f32 %v838, %v838
        %v871 = vmul.f32 %v839, %v839
        %v872 = vmul.f32 %v840, %v840
        %873 = vadd.xlane.f32.xlu0 %v841
        %v874 = vpop.xlane.xlu0 %873
        %875 = vadd.xlane.f32.xlu0 %v842
        %v876 = vpop.xlane.xlu0 %875
        %877 = vadd.xlane.f32.xlu0 %v843
        %v878 = vpop.xlane.xlu0 %877
        %879 = vadd.xlane.f32.xlu0 %v844
        %v880 = vpop.xlane.xlu0 %879
        %881 = vadd.xlane.f32.xlu0 %v845
        %v882 = vpop.xlane.xlu0 %881
        %883 = vadd.xlane.f32.xlu0 %v846
        %v884 = vpop.xlane.xlu0 %883
        %885 = vadd.xlane.f32.xlu0 %v847
        %v886 = vpop.xlane.xlu0 %885
        %887 = vadd.xlane.f32.xlu0 %v848
        %v888 = vpop.xlane.xlu0 %887
        %889 = vadd.xlane.f32.xlu0 %v849
        %v890 = vpop.xlane.xlu0 %889
        %891 = vadd.xlane.f32.xlu0 %v850
        %v892 = vpop.xlane.xlu0 %891
        %893 = vadd.xlane.f32.xlu0 %v851
        %v894 = vpop.xlane.xlu0 %893
        %895 = vadd.xlane.f32.xlu0 %v852
        %v896 = vpop.xlane.xlu0 %895
        %897 = vadd.xlane.f32.xlu0 %v853
        %v898 = vpop.xlane.xlu0 %897
        %899 = vadd.xlane.f32.xlu0 %v854
        %v900 = vpop.xlane.xlu0 %899
        %901 = vadd.xlane.f32.xlu0 %v855
        %v902 = vpop.xlane.xlu0 %901
        %903 = vadd.xlane.f32.xlu0 %v856
        %v904 = vpop.xlane.xlu0 %903
        %905 = vadd.xlane.f32.xlu0 %v857
        %v906 = vpop.xlane.xlu0 %905
        %907 = vadd.xlane.f32.xlu0 %v858
        %v908 = vpop.xlane.xlu0 %907
        %909 = vadd.xlane.f32.xlu0 %v859
        %v910 = vpop.xlane.xlu0 %909
        %911 = vadd.xlane.f32.xlu0 %v860
        %v912 = vpop.xlane.xlu0 %911
        %913 = vadd.xlane.f32.xlu0 %v861
        %v914 = vpop.xlane.xlu0 %913
        %915 = vadd.xlane.f32.xlu0 %v862
        %v916 = vpop.xlane.xlu0 %915
        %917 = vadd.xlane.f32.xlu0 %v863
        %v918 = vpop.xlane.xlu0 %917
        %919 = vadd.xlane.f32.xlu0 %v864
        %v920 = vpop.xlane.xlu0 %919
        %921 = vadd.xlane.f32.xlu0 %v865
        %v922 = vpop.xlane.xlu0 %921
        %923 = vadd.xlane.f32.xlu0 %v866
        %v924 = vpop.xlane.xlu0 %923
        %925 = vadd.xlane.f32.xlu0 %v867
        %v926 = vpop.xlane.xlu0 %925
        %927 = vadd.xlane.f32.xlu0 %v868
        %v928 = vpop.xlane.xlu0 %927
        %929 = vadd.xlane.f32.xlu0 %v869
        %v930 = vpop.xlane.xlu0 %929
        %931 = vadd.xlane.f32.xlu0 %v870
        %v932 = vpop.xlane.xlu0 %931
        %933 = vadd.xlane.f32.xlu0 %v871
        %v934 = vpop.xlane.xlu0 %933
        %935 = vadd.xlane.f32.xlu0 %v872
        %v936 = vpop.xlane.xlu0 %935
        %v937 = vmul.f32 %v874, %v776
        %v938 = vmul.f32 %v876, %v776
        %v939 = vmul.f32 %v878, %v776
        %v940 = vmul.f32 %v880, %v776
        %v941 = vmul.f32 %v882, %v776
        %v942 = vmul.f32 %v884, %v776
        %v943 = vmul.f32 %v886, %v776
        %v944 = vmul.f32 %v888, %v776
        %v945 = vmul.f32 %v890, %v776
        %v946 = vmul.f32 %v892, %v776
        %v947 = vmul.f32 %v894, %v776
        %v948 = vmul.f32 %v896, %v776
        %v949 = vmul.f32 %v898, %v776
        %v950 = vmul.f32 %v900, %v776
        %v951 = vmul.f32 %v902, %v776
        %v952 = vmul.f32 %v904, %v776
        %v953 = vmul.f32 %v906, %v776
        %v954 = vmul.f32 %v908, %v776
        %v955 = vmul.f32 %v910, %v776
        %v956 = vmul.f32 %v912, %v776
        %v957 = vmul.f32 %v914, %v776
        %v958 = vmul.f32 %v916, %v776
        %v959 = vmul.f32 %v918, %v776
        %v960 = vmul.f32 %v920, %v776
        %v961 = vmul.f32 %v922, %v776
        %v962 = vmul.f32 %v924, %v776
        %v963 = vmul.f32 %v926, %v776
        %v964 = vmul.f32 %v928, %v776
        %v965 = vmul.f32 %v930, %v776
        %v966 = vmul.f32 %v932, %v776
        %v967 = vmul.f32 %v934, %v776
        %v968 = vmul.f32 %v936, %v776
        %v969 = vadd.f32 %v937, 1e-05
        %v970 = vadd.f32 %v938, 1e-05
        %v971 = vadd.f32 %v939, 1e-05
        %v972 = vadd.f32 %v940, 1e-05
        %v973 = vadd.f32 %v941, 1e-05
        %v974 = vadd.f32 %v942, 1e-05
        %v975 = vadd.f32 %v943, 1e-05
        %v976 = vadd.f32 %v944, 1e-05
        %v977 = vadd.f32 %v945, 1e-05
        %v978 = vadd.f32 %v946, 1e-05
        %v979 = vadd.f32 %v947, 1e-05
        %v980 = vadd.f32 %v948, 1e-05
        %v981 = vadd.f32 %v949, 1e-05
        %v982 = vadd.f32 %v950, 1e-05
        %v983 = vadd.f32 %v951, 1e-05
        %v984 = vadd.f32 %v952, 1e-05
        %v985 = vadd.f32 %v953, 1e-05
        %v986 = vadd.f32 %v954, 1e-05
        %v987 = vadd.f32 %v955, 1e-05
        %v988 = vadd.f32 %v956, 1e-05
        %v989 = vadd.f32 %v957, 1e-05
        %v990 = vadd.f32 %v958, 1e-05
        %v991 = vadd.f32 %v959, 1e-05
        %v992 = vadd.f32 %v960, 1e-05
        %v993 = vadd.f32 %v961, 1e-05
        %v994 = vadd.f32 %v962, 1e-05
        %v995 = vadd.f32 %v963, 1e-05
        %v996 = vadd.f32 %v964, 1e-05
        %v997 = vadd.f32 %v965, 1e-05
        %v998 = vadd.f32 %v966, 1e-05
        %v999 = vadd.f32 %v967, 1e-05
        %v1000 = vadd.f32 %v968, 1e-05
        %v1001 = vrsqrt.pop %v969
        %v1002 = vrsqrt.pop %v970
        %v1003 = vrsqrt.pop %v971
        %v1004 = vrsqrt.pop %v972
        %v1005 = vrsqrt.pop %v973
        %v1006 = vrsqrt.pop %v974
        %v1007 = vrsqrt.pop %v975
        %v1008 = vrsqrt.pop %v976
        %v1009 = vrsqrt.pop %v977
        %v1010 = vrsqrt.pop %v978
        %v1011 = vrsqrt.pop %v979
        %v1012 = vrsqrt.pop %v980
        %v1013 = vrsqrt.pop %v981
        %v1014 = vrsqrt.pop %v982
        %v1015 = vrsqrt.pop %v983
        %v1016 = vrsqrt.pop %v984
        %v1017 = vrsqrt.pop %v985
        %v1018 = vrsqrt.pop %v986
        %v1019 = vrsqrt.pop %v987
        %v1020 = vrsqrt.pop %v988
        %v1021 = vrsqrt.pop %v989
        %v1022 = vrsqrt.pop %v990
        %v1023 = vrsqrt.pop %v991
        %v1024 = vrsqrt.pop %v992
        %v1025 = vrsqrt.pop %v993
        %v1026 = vrsqrt.pop %v994
        %v1027 = vrsqrt.pop %v995
        %v1028 = vrsqrt.pop %v996
        %v1029 = vrsqrt.pop %v997
        %v1030 = vrsqrt.pop %v998
        %v1031 = vrsqrt.pop %v999
        %v1032 = vrsqrt.pop %v1000
        %v1033 = vmul.f32 %v809, %v1001
        %v1034 = vmul.f32 %v810, %v1002
        %v1035 = vmul.f32 %v811, %v1003
        %v1036 = vmul.f32 %v812, %v1004
        %v1037 = vmul.f32 %v813, %v1005
        %v1038 = vmul.f32 %v814, %v1006
        %v1039 = vmul.f32 %v815, %v1007
        %v1040 = vmul.f32 %v816, %v1008
        %v1041 = vmul.f32 %v817, %v1009
        %v1042 = vmul.f32 %v818, %v1010
        %v1043 = vmul.f32 %v819, %v1011
        %v1044 = vmul.f32 %v820, %v1012
        %v1045 = vmul.f32 %v821, %v1013
        %v1046 = vmul.f32 %v822, %v1014
        %v1047 = vmul.f32 %v823, %v1015
        %v1048 = vmul.f32 %v824, %v1016
        %v1049 = vmul.f32 %v825, %v1017
        %v1050 = vmul.f32 %v826, %v1018
        %v1051 = vmul.f32 %v827, %v1019
        %v1052 = vmul.f32 %v828, %v1020
        %v1053 = vmul.f32 %v829, %v1021
        %v1054 = vmul.f32 %v830, %v1022
        %v1055 = vmul.f32 %v831, %v1023
        %v1056 = vmul.f32 %v832, %v1024
        %v1057 = vmul.f32 %v833, %v1025
        %v1058 = vmul.f32 %v834, %v1026
        %v1059 = vmul.f32 %v835, %v1027
        %v1060 = vmul.f32 %v836, %v1028
        %v1061 = vmul.f32 %v837, %v1029
        %v1062 = vmul.f32 %v838, %v1030
        %v1063 = vmul.f32 %v839, %v1031
        %v1064 = vmul.f32 %v840, %v1032
        %v1066 = vlaneseq
        %v1067 = vshrl.u32 %v1066, 7
        %v1068 = vsub.s32 0, %v1067
        %v1069 = vrot.slane %v710, %v1068
        %v1071 = vmul.f32 %v1033, %v1069
        %v1072 = vmul.f32 %v1034, %v1069
        %v1073 = vmul.f32 %v1035, %v1069
        %v1074 = vmul.f32 %v1036, %v1069
        %v1075 = vmul.f32 %v1037, %v1069
        %v1076 = vmul.f32 %v1038, %v1069
        %v1077 = vmul.f32 %v1039, %v1069
        %v1078 = vmul.f32 %v1040, %v1069
        %v1079 = vmul.f32 %v1041, %v1069
        %v1080 = vmul.f32 %v1042, %v1069
        %v1081 = vmul.f32 %v1043, %v1069
        %v1082 = vmul.f32 %v1044, %v1069
        %v1083 = vmul.f32 %v1045, %v1069
        %v1084 = vmul.f32 %v1046, %v1069
        %v1085 = vmul.f32 %v1047, %v1069
        %v1086 = vmul.f32 %v1048, %v1069
        %v1087 = vmul.f32 %v1049, %v1069
        %v1088 = vmul.f32 %v1050, %v1069
        %v1089 = vmul.f32 %v1051, %v1069
        %v1090 = vmul.f32 %v1052, %v1069
        %v1091 = vmul.f32 %v1053, %v1069
        %v1092 = vmul.f32 %v1054, %v1069
        %v1093 = vmul.f32 %v1055, %v1069
        %v1094 = vmul.f32 %v1056, %v1069
        %v1095 = vmul.f32 %v1057, %v1069
        %v1096 = vmul.f32 %v1058, %v1069
        %v1097 = vmul.f32 %v1059, %v1069
        %v1098 = vmul.f32 %v1060, %v1069
        %v1099 = vmul.f32 %v1061, %v1069
        %v1100 = vmul.f32 %v1062, %v1069
        %v1101 = vmul.f32 %v1063, %v1069
        %v1102 = vmul.f32 %v1064, %v1069
        %v1104 = vlaneseq
        %v1105 = vshrl.u32 %v1104, 7
        %v1106 = vsub.s32 0, %v1105
        %v1107 = vrot.slane %v711, %v1106
        %v1109 = vadd.f32 %v1071, %v1107
        %v1110 = vadd.f32 %v1072, %v1107
        %v1111 = vadd.f32 %v1073, %v1107
        %v1112 = vadd.f32 %v1074, %v1107
        %v1113 = vadd.f32 %v1075, %v1107
        %v1114 = vadd.f32 %v1076, %v1107
        %v1115 = vadd.f32 %v1077, %v1107
        %v1116 = vadd.f32 %v1078, %v1107
        %v1117 = vadd.f32 %v1079, %v1107
        %v1118 = vadd.f32 %v1080, %v1107
        %v1119 = vadd.f32 %v1081, %v1107
        %v1120 = vadd.f32 %v1082, %v1107
        %v1121 = vadd.f32 %v1083, %v1107
        %v1122 = vadd.f32 %v1084, %v1107
        %v1123 = vadd.f32 %v1085, %v1107
        %v1124 = vadd.f32 %v1086, %v1107
        %v1125 = vadd.f32 %v1087, %v1107
        %v1126 = vadd.f32 %v1088, %v1107
        %v1127 = vadd.f32 %v1089, %v1107
        %v1128 = vadd.f32 %v1090, %v1107
        %v1129 = vadd.f32 %v1091, %v1107
        %v1130 = vadd.f32 %v1092, %v1107
        %v1131 = vadd.f32 %v1093, %v1107
        %v1132 = vadd.f32 %v1094, %v1107
        %v1133 = vadd.f32 %v1095, %v1107
        %v1134 = vadd.f32 %v1096, %v1107
        %v1135 = vadd.f32 %v1097, %v1107
        %v1136 = vadd.f32 %v1098, %v1107
        %v1137 = vadd.f32 %v1099, %v1107
        %v1138 = vadd.f32 %v1100, %v1107
        %v1139 = vadd.f32 %v1101, %v1107
        %v1140 = vadd.f32 %v1102, %v1107
        %1141 = vst [vmem:[%s361] sm:$0xff] %v1109
        %1142 = vst [vmem:[%s361 + $0x8] sm:$0xff] %v1110
        %1143 = vst [vmem:[%s361 + $0x10] sm:$0xff] %v1111
        %1144 = vst [vmem:[%s361 + $0x18] sm:$0xff] %v1112
        %1145 = vst [vmem:[%s361 + $0x20] sm:$0xff] %v1113
        %1146 = vst [vmem:[%s361 + $0x28] sm:$0xff] %v1114
        %1147 = vst [vmem:[%s361 + $0x30] sm:$0xff] %v1115
        %1148 = vst [vmem:[%s361 + $0x38] sm:$0xff] %v1116
        %1149 = vst [vmem:[%s361 + $0x40] sm:$0xff] %v1117
        %1150 = vst [vmem:[%s361 + $0x48] sm:$0xff] %v1118
        %1151 = vst [vmem:[%s361 + $0x50] sm:$0xff] %v1119
        %1152 = vst [vmem:[%s361 + $0x58] sm:$0xff] %v1120
        %1153 = vst [vmem:[%s361 + $0x60] sm:$0xff] %v1121
        %1154 = vst [vmem:[%s361 + $0x68] sm:$0xff] %v1122
        %1155 = vst [vmem:[%s361 + $0x70] sm:$0xff] %v1123
        %1156 = vst [vmem:[%s361 + $0x78] sm:$0xff] %v1124
        %1157 = vst [vmem:[%s361 + $0x80] sm:$0xff] %v1125
        %1158 = vst [vmem:[%s361 + $0x88] sm:$0xff] %v1126
        %1159 = vst [vmem:[%s361 + $0x90] sm:$0xff] %v1127
        %1160 = vst [vmem:[%s361 + $0x98] sm:$0xff] %v1128
        %1161 = vst [vmem:[%s361 + $0xa0] sm:$0xff] %v1129
        %1162 = vst [vmem:[%s361 + $0xa8] sm:$0xff] %v1130
        %1163 = vst [vmem:[%s361 + $0xb0] sm:$0xff] %v1131
        %1164 = vst [vmem:[%s361 + $0xb8] sm:$0xff] %v1132
        %1165 = vst [vmem:[%s361 + $0xc0] sm:$0xff] %v1133
        %1166 = vst [vmem:[%s361 + $0xc8] sm:$0xff] %v1134
        %1167 = vst [vmem:[%s361 + $0xd0] sm:$0xff] %v1135
        %1168 = vst [vmem:[%s361 + $0xd8] sm:$0xff] %v1136
        %1169 = vst [vmem:[%s361 + $0xe0] sm:$0xff] %v1137
        %1170 = vst [vmem:[%s361 + $0xe8] sm:$0xff] %v1138
        %1171 = vst [vmem:[%s361 + $0xf0] sm:$0xff] %v1139
        %1172 = vst [vmem:[%s361 + $0xf8] sm:$0xff] %v1140
        %s1173 = sand.u32 %s172, 1
        %s1174 = scalar_lea.sflag [#allocation4], %s1173
        %s1175 = sand.u32 %s172, 1
        %s1176 = smul.addr %s1175, 256
        %s1177 = scalar_lea.vmem [#allocation13], %s1176
        // Predicated region
        $region69: #{transformer_encode_block.6} parent=43 // pred_check
          %p1178 = pneg %p182
        $region70: #{transformer_encode_block.6} parent=43 // pred_check_branch
          %1180 = sbr.rel (%p1178) target = $region72
        $region71: #{transformer_encode_block.6} parent=43 // pred_region
          %s1181 = smul.u32 32, %s28
          %s1183 = ssub.s32 4096, 4096
          %1184 = vsyncadd %s1174, %s1183
          %s1185 = smul.addr %s1181, 128
          %s1186 = scalar_lea.hbm %s6, %s1185
          %s1187 = sshll.u32 %s1177, 4
          %s1188 = int_to_ptr.vmem [resolvable:$true] %s1187
          %1193 = dma.vmem_to_hbm [thread:$0]  %s1188, 4096, %s1186, %s1174, 128, 128, 8
        $region72: #{transformer_encode_block.6} parent=43 // pred_fallthru
          _
      $region44: #{transformer_encode_block.6} parent=5 // pred_fallthru
        _
      %p1194 = scmp.le.s32.totalorder 2, %s23
      // Predicated region
      $region73: #{transformer_encode_block.6} parent=5 // pred_check
        %p1195 = pneg %p1194
      $region74: #{transformer_encode_block.6} parent=5 // pred_check_branch
        %1197 = sbr.rel (%p1195) target = $region76
      $region75: #{transformer_encode_block.6} parent=5 // pred_region
        %s1198 = ssub.s32 %s23, 2
        // Predicated region
        $region77: #{transformer_encode_block.6} parent=75 // pred_check
          %p1199 = pneg %p188
        $region78: #{transformer_encode_block.6} parent=75 // pred_check_branch
          %1201 = sbr.rel (%p1199) target = $region80
        $region79: #{transformer_encode_block.6} parent=75 // pred_region
          %s1202 = sand.u32 %s173, 1
          %s1203 = scalar_lea.sflag [#allocation4], %s1202
          %s1204 = sand.u32 %s173, 1
          %s1205 = smul.addr %s1204, 256
          %s1206 = scalar_lea.vmem [#allocation13], %s1205
          %1207 = dma.done %s1203, 4096
        $region80: #{transformer_encode_block.6} parent=75 // pred_fallthru
          _
      $region76: #{transformer_encode_block.6} parent=5 // pred_fallthru
        _
    $region6: #{transformer_encode_block.6} parent=1 // loop_footer
      %s27 = sadd.s32 1, %s23
    $region7: #{transformer_encode_block.6} parent=1 // loop_footer_branch
      %22 = sbr.rel target = $region3
    $region8: #{transformer_encode_block.6} parent=1 // loop_exit
      _
    %1208 = vsyncpa [#allocation3], 1
    %s1209 = scalar_lea.sflag [#allocation3], 1
    %1210 = vsyncpa %s1209, 1
    %1211 = vsyncpa [#allocation6], 1
    %s1212 = scalar_lea.sflag [#allocation6], 1
    %1213 = vsyncpa %s1212, 1
    %1214 = vsyncpa [#allocation9], 1
    %1215 = vsyncpa [#allocation12], 1
    %1216 = vsyncpa [#allocation4], 1
    %s1217 = scalar_lea.sflag [#allocation4], 1
    %1218 = vsyncpa %s1217, 1

// kernel: transformer_encode_block.5
$region0: #{transformer_encode_block.5}
  #allocation0 [shape = 'u32[]', space=smem, size = 0x4, offset = 0x4, fixed_abs, tag = 'smem constant byte address 0x4 - core index']
  #allocation1 [shape = 'u32[144,128]{1,0:T(1,128)}', space=vmem, size = 0x12000, scoped, tag = 'internal scratch']
  %s0 = inlined_call_operand.hbm [shape: f32[8,256,32], index: 0, kind: input, shape index: {}]
  %s1 = inlined_call_operand.hbm [shape: f32[8,256,32], index: 1, kind: input, shape index: {}]
  %s2 = inlined_call_operand.hbm [shape: f32[8,256,32], index: 2, kind: input, shape index: {}]
  %s3 = inlined_call_operand.hbm [shape: f32[8,256,32], index: 3, kind: output, shape index: {}]
  %s4 = sld [smem:[#allocation0]]
  $region57: #{transformer_encode_block.5} parent=0
    _
  %s6 = ssub.s32 1, %s4
  %s7 = scalar_select 0, %s6, %s4
  $region1: #{transformer_encode_block.5} parent=0
    #allocation2 [shape = 'u8[1048576]{0}', space=vmem, size = 0x100000, scoped, tag = 'input window, operand 0']
    #allocation3 [shape = 's32[2]{0}', space=sflag, size = 0x8, scoped, tag = 'scoped memory for transformer_encode_block.5']
    #allocation4 [shape = 's32[2]{0}', space=sflag, size = 0x8, scoped, tag = 'scoped memory for transformer_encode_block.5']
    #allocation5 [shape = 'u8[1048576]{0}', space=vmem, size = 0x100000, scoped, tag = 'input window, operand 1']
    #allocation6 [shape = 's32[2]{0}', space=sflag, size = 0x8, scoped, tag = 'scoped memory for transformer_encode_block.5']
    #allocation7 [shape = 'u8[1048576]{0}', space=vmem, size = 0x100000, scoped, tag = 'input window, operand 2']
    #allocation8 [shape = 'u8[1048576]{0}', space=vmem, size = 0x100000, scoped, tag = 'output window, operand 0']
    %8 = vsyncpa [#allocation3], 0
    %s9 = scalar_lea.sflag [#allocation3], 1
    %10 = vsyncpa %s9, 0
    %11 = vsyncpa [#allocation6], 0
    %s12 = scalar_lea.sflag [#allocation6], 1
    %13 = vsyncpa %s12, 0
    %14 = vsyncpa [#allocation4], 0
    %s15 = scalar_lea.sflag [#allocation4], 1
    %16 = vsyncpa %s15, 0
    loop: start=0, step=1, limit=4
    $region2: #{transformer_encode_block.5} parent=1 // loop_pre_header
      _
    $region3: #{transformer_encode_block.5} parent=1 // loop_header
      %s18 = sphi 0, %s22
      %p19 = scmp.ge.s32.totalorder %s18, 4
      %s28 = sphi 0, %s30
      %s31 = sphi 0, %s28
      %s32 = sphi 0, %s31
      %s48 = sphi 0, %s32
      %s54 = sphi 0, %s56
      %s57 = sphi 0, %s54
      %s58 = sphi 0, %s57
      %s74 = sphi 0, %s58
      %s80 = sphi 0, %s82
      %s83 = sphi 0, %s80
      %s84 = sphi 0, %s83
      %s100 = sphi 0, %s84
      %s106 = sphi 0, %s108
      %s109 = sphi 0, %s106
      %s110 = sphi 0, %s109
      %s126 = sphi 0, %s110
    $region4: #{transformer_encode_block.5} parent=1 // loop_header_branch
      %21 = sbr.rel (%p19) target = $region8
    $region5: #{transformer_encode_block.5} parent=1 // loop_body
      %s23 = ssub.s32 %s18, 1
      %s24 = ssub.s32 %s18, 2
      %s25 = sadd.s32 %s18, 1
      %s26 = ssub.s32 %s18, %s25
      %p27 = scmp.eq.s32.totalorder %s26, 0
      %s29 = sadd.s32 %s28, 1
      %s30 = scalar_select %p27, %s28, %s29
      %p33 = pneg %p27
      %p34 = scmp.eq.s32.totalorder %s18, 1
      %p35 = por %p33, %p34
      %p36 = scmp.ne.s32.totalorder %s28, %s31
      %p37 = scmp.eq.s32.totalorder %s18, 0
      %p38 = por %p36, %p37
      %p39 = scmp.ne.s32.totalorder %s28, %s31
      %p40 = scmp.eq.s32.totalorder %s23, 1
      %p41 = por %p39, %p40
      %p42 = scmp.ne.s32.totalorder %s31, %s32
      %p43 = scmp.eq.s32.totalorder %s23, 0
      %p44 = por %p42, %p43
      %p45 = scmp.ne.s32.totalorder %s31, %s32
      %p46 = scmp.eq.s32.totalorder %s24, 1
      %p47 = por %p45, %p46
      %p49 = scmp.ne.s32.totalorder %s32, %s48
      %p50 = scmp.eq.s32.totalorder %s24, 0
      %p51 = por %p49, %p50
      %s52 = ssub.s32 %s18, %s25
      %p53 = scmp.eq.s32.totalorder %s52, 0
      %s55 = sadd.s32 %s54, 1
      %s56 = scalar_select %p53, %s54, %s55
      %p59 = pneg %p53
      %p60 = scmp.eq.s32.totalorder %s18, 1
      %p61 = por %p59, %p60
      %p62 = scmp.ne.s32.totalorder %s54, %s57
      %p63 = scmp.eq.s32.totalorder %s18, 0
      %p64 = por %p62, %p63
      %p65 = scmp.ne.s32.totalorder %s54, %s57
      %p66 = scmp.eq.s32.totalorder %s23, 1
      %p67 = por %p65, %p66
      %p68 = scmp.ne.s32.totalorder %s57, %s58
      %p69 = scmp.eq.s32.totalorder %s23, 0
      %p70 = por %p68, %p69
      %p71 = scmp.ne.s32.totalorder %s57, %s58
      %p72 = scmp.eq.s32.totalorder %s24, 1
      %p73 = por %p71, %p72
      %p75 = scmp.ne.s32.totalorder %s58, %s74
      %p76 = scmp.eq.s32.totalorder %s24, 0
      %p77 = por %p75, %p76
      %s78 = ssub.s32 %s18, %s25
      %p79 = scmp.eq.s32.totalorder %s78, 0
      %s81 = sadd.s32 %s80, 1
      %s82 = scalar_select %p79, %s80, %s81
      %p85 = pneg %p79
      %p86 = scmp.eq.s32.totalorder %s18, 1
      %p87 = por %p85, %p86
      %p88 = scmp.ne.s32.totalorder %s80, %s83
      %p89 = scmp.eq.s32.totalorder %s18, 0
      %p90 = por %p88, %p89
      %p91 = scmp.ne.s32.totalorder %s80, %s83
      %p92 = scmp.eq.s32.totalorder %s23, 1
      %p93 = por %p91, %p92
      %p94 = scmp.ne.s32.totalorder %s83, %s84
      %p95 = scmp.eq.s32.totalorder %s23, 0
      %p96 = por %p94, %p95
      %p97 = scmp.ne.s32.totalorder %s83, %s84
      %p98 = scmp.eq.s32.totalorder %s24, 1
      %p99 = por %p97, %p98
      %p101 = scmp.ne.s32.totalorder %s84, %s100
      %p102 = scmp.eq.s32.totalorder %s24, 0
      %p103 = por %p101, %p102
      %s104 = ssub.s32 %s18, %s25
      %p105 = scmp.eq.s32.totalorder %s104, 0
      %s107 = sadd.s32 %s106, 1
      %s108 = scalar_select %p105, %s106, %s107
      %p111 = pneg %p105
      %p112 = scmp.eq.s32.totalorder %s18, 1
      %p113 = por %p111, %p112
      %p114 = scmp.ne.s32.totalorder %s106, %s109
      %p115 = scmp.eq.s32.totalorder %s18, 0
      %p116 = por %p114, %p115
      %p117 = scmp.ne.s32.totalorder %s106, %s109
      %p118 = scmp.eq.s32.totalorder %s23, 1
      %p119 = por %p117, %p118
      %p120 = scmp.ne.s32.totalorder %s109, %s110
      %p121 = scmp.eq.s32.totalorder %s23, 0
      %p122 = por %p120, %p121
      %p123 = scmp.ne.s32.totalorder %s109, %s110
      %p124 = scmp.eq.s32.totalorder %s24, 1
      %p125 = por %p123, %p124
      %p127 = scmp.ne.s32.totalorder %s110, %s126
      %p128 = scmp.eq.s32.totalorder %s24, 0
      %p129 = por %p127, %p128
      %p130 = scmp.le.s32.totalorder 1, %s18
      %p131 = scmp.lt.s32.totalorder %s18, 3
      %p132 = pnand %p130, %p131
      %p133 = pneg %p132
      // Predicated region
      $region9: #{transformer_encode_block.5} parent=5 // pred_check
        _
      $region10: #{transformer_encode_block.5} parent=5 // pred_check_branch
        %135 = sbr.rel (%p132) target = $region12
      $region11: #{transformer_encode_block.5} parent=5 // pred_region
        %s136 = ssub.s32 %s18, 1
      $region12: #{transformer_encode_block.5} parent=5 // pred_fallthru
        _
      %p137 = scmp.lt.s32.totalorder %s18, 2
      // Predicated region
      $region13: #{transformer_encode_block.5} parent=5 // pred_check
        %p138 = pneg %p137
      $region14: #{transformer_encode_block.5} parent=5 // pred_check_branch
        %140 = sbr.rel (%p138) target = $region16
      $region15: #{transformer_encode_block.5} parent=5 // pred_region
        // Predicated region
        $region17: #{transformer_encode_block.5} parent=15 // pred_check
          %p141 = pneg %p38
        $region18: #{transformer_encode_block.5} parent=15 // pred_check_branch
          %143 = sbr.rel (%p141) target = $region20
        $region19: #{transformer_encode_block.5} parent=15 // pred_region
          %s144 = sand.u32 %s28, 1
          %s145 = scalar_lea.sflag [#allocation3], %s144
          %s146 = sand.u32 %s28, 1
          %s147 = smul.addr %s146, 1024
          %s148 = scalar_lea.vmem [#allocation2], %s147
          %s149 = smul.u32 4, %s18
          %s151 = ssub.s32 16384, 16384
          %152 = vsyncadd %s145, %s151
          %s153 = smul.addr %s149, 32
          %s154 = smul.addr %s153, 128
          %s155 = scalar_lea.hbm %s0, %s154
          %s156 = sshll.u32 %s148, 4
          %s157 = int_to_ptr.vmem [resolvable:$true] %s156
          %162 = dma.hbm_to_vmem [thread:$0]  %s155, 16384, %s157, %s145, 128, 128, 8
        $region20: #{transformer_encode_block.5} parent=15 // pred_fallthru
          _
        // Predicated region
        $region21: #{transformer_encode_block.5} parent=15 // pred_check
          %p163 = pneg %p64
        $region22: #{transformer_encode_block.5} parent=15 // pred_check_branch
          %165 = sbr.rel (%p163) target = $region24
        $region23: #{transformer_encode_block.5} parent=15 // pred_region
          %s166 = sand.u32 %s18, 1
          %s167 = scalar_lea.sflag [#allocation6], %s166
          %s168 = sand.u32 %s54, 1
          %s169 = smul.addr %s168, 1024
          %s170 = scalar_lea.vmem [#allocation5], %s169
          %s171 = smul.u32 4, %s18
          %s173 = ssub.s32 16384, 16384
          %174 = vsyncadd %s167, %s173
          %s175 = smul.addr %s171, 32
          %s176 = smul.addr %s175, 128
          %s177 = scalar_lea.hbm %s1, %s176
          %s178 = sshll.u32 %s170, 4
          %s179 = int_to_ptr.vmem [resolvable:$true] %s178
          %184 = dma.hbm_to_vmem [thread:$0]  %s177, 16384, %s179, %s167, 128, 128, 8
        $region24: #{transformer_encode_block.5} parent=15 // pred_fallthru
          _
        // Predicated region
        $region25: #{transformer_encode_block.5} parent=15 // pred_check
          %p185 = pneg %p90
        $region26: #{transformer_encode_block.5} parent=15 // pred_check_branch
          %187 = sbr.rel (%p185) target = $region28
        $region27: #{transformer_encode_block.5} parent=15 // pred_region
          %s188 = sand.u32 %s18, 1
          %s189 = scalar_lea.sflag [#allocation6], %s188
          %s190 = sand.u32 %s80, 1
          %s191 = smul.addr %s190, 1024
          %s192 = scalar_lea.vmem [#allocation7], %s191
          %s193 = smul.u32 4, %s18
          %s195 = ssub.s32 16384, 16384
          %196 = vsyncadd %s189, %s195
          %s197 = smul.addr %s193, 32
          %s198 = smul.addr %s197, 128
          %s199 = scalar_lea.hbm %s2, %s198
          %s200 = sshll.u32 %s192, 4
          %s201 = int_to_ptr.vmem [resolvable:$true] %s200
          %206 = dma.hbm_to_vmem [thread:$0]  %s199, 16384, %s201, %s189, 128, 128, 8
        $region28: #{transformer_encode_block.5} parent=15 // pred_fallthru
          _
      $region16: #{transformer_encode_block.5} parent=5 // pred_fallthru
        _
      %p207 = scmp.le.s32.totalorder 1, %s18
      %p208 = scmp.lt.s32.totalorder %s18, 3
      %p209 = pnand %p207, %p208
      %p210 = pneg %p209
      // Predicated region
      $region29: #{transformer_encode_block.5} parent=5 // pred_check
        _
      $region30: #{transformer_encode_block.5} parent=5 // pred_check_branch
        %212 = sbr.rel (%p209) target = $region32
      $region31: #{transformer_encode_block.5} parent=5 // pred_region
        %s213 = ssub.s32 %s18, 1
        %s214 = sand.u32 %s31, 1
        %s215 = scalar_lea.sflag [#allocation3], %s214
        %s216 = sand.u32 %s31, 1
        %s217 = smul.addr %s216, 1024
        %s218 = scalar_lea.vmem [#allocation2], %s217
        // Predicated region
        $region33: #{transformer_encode_block.5} parent=31 // pred_check
          %p219 = pneg %p44
        $region34: #{transformer_encode_block.5} parent=31 // pred_check_branch
          %221 = sbr.rel (%p219) target = $region36
        $region35: #{transformer_encode_block.5} parent=31 // pred_region
          %222 = dma.done %s215, 16384
        $region36: #{transformer_encode_block.5} parent=31 // pred_fallthru
          _
        %s223 = sand.u32 %s23, 1
        %s224 = scalar_lea.sflag [#allocation6], %s223
        %s225 = sand.u32 %s57, 1
        %s226 = smul.addr %s225, 1024
        %s227 = scalar_lea.vmem [#allocation5], %s226
        // Predicated region
        $region37: #{transformer_encode_block.5} parent=31 // pred_check
          %p228 = pneg %p70
        $region38: #{transformer_encode_block.5} parent=31 // pred_check_branch
          %230 = sbr.rel (%p228) target = $region40
        $region39: #{transformer_encode_block.5} parent=31 // pred_region
          %231 = dma.done %s224, 16384
        $region40: #{transformer_encode_block.5} parent=31 // pred_fallthru
          _
        %s232 = sand.u32 %s23, 1
        %s233 = scalar_lea.sflag [#allocation6], %s232
        %s234 = sand.u32 %s83, 1
        %s235 = smul.addr %s234, 1024
        %s236 = scalar_lea.vmem [#allocation7], %s235
        // Predicated region
        $region41: #{transformer_encode_block.5} parent=31 // pred_check
          %p237 = pneg %p96
        $region42: #{transformer_encode_block.5} parent=31 // pred_check_branch
          %239 = sbr.rel (%p237) target = $region44
        $region43: #{transformer_encode_block.5} parent=31 // pred_region
          %240 = dma.done %s233, 16384
        $region44: #{transformer_encode_block.5} parent=31 // pred_fallthru
          _
        %s241 = sand.u32 %s31, 1
        %s242 = scalar_lea.sflag [#allocation3], %s241
        %s243 = sand.u32 %s31, 1
        %s244 = smul.addr %s243, 1024
        %s245 = scalar_lea.vmem [#allocation2], %s244
        %p246 = pneg %p44
        %p247 = pneg %p41
        %s248 = sand.u32 %s23, 1
        %s249 = scalar_lea.sflag [#allocation6], %s248
        %s250 = sand.u32 %s57, 1
        %s251 = smul.addr %s250, 1024
        %s252 = scalar_lea.vmem [#allocation5], %s251
        %p253 = pneg %p70
        %p254 = pneg %p67
        %s255 = sand.u32 %s23, 1
        %s256 = scalar_lea.sflag [#allocation6], %s255
        %s257 = sand.u32 %s83, 1
        %s258 = smul.addr %s257, 1024
        %s259 = scalar_lea.vmem [#allocation7], %s258
        %p260 = pneg %p96
        %p261 = pneg %p93
        %p262 = pneg %p122
        %p263 = pneg %p119
        %s264 = sand.u32 %s109, 1
        %s265 = scalar_lea.sflag [#allocation4], %s264
        %s266 = sand.u32 %s109, 1
        %s267 = smul.addr %s266, 1024
        %s268 = scalar_lea.vmem [#allocation8], %s267
        %s269 = smul.u32 4, %s23
        %s270 = smul.u32 4, %s23
        %s271 = smul.u32 4, %s23
        %s272 = smul.u32 4, %s23
        %v274 = vld [vmem:[%s218] sm:$0xff]
        %v275 = vld [vmem:[%s218 + $0x8] sm:$0xff]
        %v276 = vld [vmem:[%s218 + $0x10] sm:$0xff]
        %v277 = vld [vmem:[%s218 + $0x18] sm:$0xff]
        %v278 = vld [vmem:[%s218 + $0x20] sm:$0xff]
        %v279 = vld [vmem:[%s218 + $0x28] sm:$0xff]
        %v280 = vld [vmem:[%s218 + $0x30] sm:$0xff]
        %v281 = vld [vmem:[%s218 + $0x38] sm:$0xff]
        %v282 = vld [vmem:[%s218 + $0x40] sm:$0xff]
        %v283 = vld [vmem:[%s218 + $0x48] sm:$0xff]
        %v284 = vld [vmem:[%s218 + $0x50] sm:$0xff]
        %v285 = vld [vmem:[%s218 + $0x58] sm:$0xff]
        %v286 = vld [vmem:[%s218 + $0x60] sm:$0xff]
        %v287 = vld [vmem:[%s218 + $0x68] sm:$0xff]
        %v288 = vld [vmem:[%s218 + $0x70] sm:$0xff]
        %v289 = vld [vmem:[%s218 + $0x78] sm:$0xff]
        %v290 = vld [vmem:[%s218 + $0x80] sm:$0xff]
        %v291 = vld [vmem:[%s218 + $0x88] sm:$0xff]
        %v292 = vld [vmem:[%s218 + $0x90] sm:$0xff]
        %v293 = vld [vmem:[%s218 + $0x98] sm:$0xff]
        %v294 = vld [vmem:[%s218 + $0xa0] sm:$0xff]
        %v295 = vld [vmem:[%s218 + $0xa8] sm:$0xff]
        %v296 = vld [vmem:[%s218 + $0xb0] sm:$0xff]
        %v297 = vld [vmem:[%s218 + $0xb8] sm:$0xff]
        %v298 = vld [vmem:[%s218 + $0xc0] sm:$0xff]
        %v299 = vld [vmem:[%s218 + $0xc8] sm:$0xff]
        %v300 = vld [vmem:[%s218 + $0xd0] sm:$0xff]
        %v301 = vld [vmem:[%s218 + $0xd8] sm:$0xff]
        %v302 = vld [vmem:[%s218 + $0xe0] sm:$0xff]
        %v303 = vld [vmem:[%s218 + $0xe8] sm:$0xff]
        %v304 = vld [vmem:[%s218 + $0xf0] sm:$0xff]
        %v305 = vld [vmem:[%s218 + $0xf8] sm:$0xff]
        %v306 = vld [vmem:[%s218 + $0x100] sm:$0xff]
        %v307 = vld [vmem:[%s218 + $0x108] sm:$0xff]
        %v308 = vld [vmem:[%s218 + $0x110] sm:$0xff]
        %v309 = vld [vmem:[%s218 + $0x118] sm:$0xff]
        %v310 = vld [vmem:[%s218 + $0x120] sm:$0xff]
        %v311 = vld [vmem:[%s218 + $0x128] sm:$0xff]
        %v312 = vld [vmem:[%s218 + $0x130] sm:$0xff]
        %v313 = vld [vmem:[%s218 + $0x138] sm:$0xff]
        %v314 = vld [vmem:[%s218 + $0x140] sm:$0xff]
        %v315 = vld [vmem:[%s218 + $0x148] sm:$0xff]
        %v316 = vld [vmem:[%s218 + $0x150] sm:$0xff]
        %v317 = vld [vmem:[%s218 + $0x158] sm:$0xff]
        %v318 = vld [vmem:[%s218 + $0x160] sm:$0xff]
        %v319 = vld [vmem:[%s218 + $0x168] sm:$0xff]
        %v320 = vld [vmem:[%s218 + $0x170] sm:$0xff]
        %v321 = vld [vmem:[%s218 + $0x178] sm:$0xff]
        %v322 = vld [vmem:[%s218 + $0x180] sm:$0xff]
        %v323 = vld [vmem:[%s218 + $0x188] sm:$0xff]
        %v324 = vld [vmem:[%s218 + $0x190] sm:$0xff]
        %v325 = vld [vmem:[%s218 + $0x198] sm:$0xff]
        %v326 = vld [vmem:[%s218 + $0x1a0] sm:$0xff]
        %v327 = vld [vmem:[%s218 + $0x1a8] sm:$0xff]
        %v328 = vld [vmem:[%s218 + $0x1b0] sm:$0xff]
        %v329 = vld [vmem:[%s218 + $0x1b8] sm:$0xff]
        %v330 = vld [vmem:[%s218 + $0x1c0] sm:$0xff]
        %v331 = vld [vmem:[%s218 + $0x1c8] sm:$0xff]
        %v332 = vld [vmem:[%s218 + $0x1d0] sm:$0xff]
        %v333 = vld [vmem:[%s218 + $0x1d8] sm:$0xff]
        %v334 = vld [vmem:[%s218 + $0x1e0] sm:$0xff]
        %v335 = vld [vmem:[%s218 + $0x1e8] sm:$0xff]
        %v336 = vld [vmem:[%s218 + $0x1f0] sm:$0xff]
        %v337 = vld [vmem:[%s218 + $0x1f8] sm:$0xff]
        %v338 = vld [vmem:[%s218 + $0x200] sm:$0xff]
        %v339 = vld [vmem:[%s218 + $0x208] sm:$0xff]
        %v340 = vld [vmem:[%s218 + $0x210] sm:$0xff]
        %v341 = vld [vmem:[%s218 + $0x218] sm:$0xff]
        %v342 = vld [vmem:[%s218 + $0x220] sm:$0xff]
        %v343 = vld [vmem:[%s218 + $0x228] sm:$0xff]
        %v344 = vld [vmem:[%s218 + $0x230] sm:$0xff]
        %v345 = vld [vmem:[%s218 + $0x238] sm:$0xff]
        %v346 = vld [vmem:[%s218 + $0x240] sm:$0xff]
        %v347 = vld [vmem:[%s218 + $0x248] sm:$0xff]
        %v348 = vld [vmem:[%s218 + $0x250] sm:$0xff]
        %v349 = vld [vmem:[%s218 + $0x258] sm:$0xff]
        %v350 = vld [vmem:[%s218 + $0x260] sm:$0xff]
        %v351 = vld [vmem:[%s218 + $0x268] sm:$0xff]
        %v352 = vld [vmem:[%s218 + $0x270] sm:$0xff]
        %v353 = vld [vmem:[%s218 + $0x278] sm:$0xff]
        %v354 = vld [vmem:[%s218 + $0x280] sm:$0xff]
        %v355 = vld [vmem:[%s218 + $0x288] sm:$0xff]
        %v356 = vld [vmem:[%s218 + $0x290] sm:$0xff]
        %v357 = vld [vmem:[%s218 + $0x298] sm:$0xff]
        %v358 = vld [vmem:[%s218 + $0x2a0] sm:$0xff]
        %v359 = vld [vmem:[%s218 + $0x2a8] sm:$0xff]
        %v360 = vld [vmem:[%s218 + $0x2b0] sm:$0xff]
        %v361 = vld [vmem:[%s218 + $0x2b8] sm:$0xff]
        %v362 = vld [vmem:[%s218 + $0x2c0] sm:$0xff]
        %v363 = vld [vmem:[%s218 + $0x2c8] sm:$0xff]
        %v364 = vld [vmem:[%s218 + $0x2d0] sm:$0xff]
        %v365 = vld [vmem:[%s218 + $0x2d8] sm:$0xff]
        %v366 = vld [vmem:[%s218 + $0x2e0] sm:$0xff]
        %v367 = vld [vmem:[%s218 + $0x2e8] sm:$0xff]
        %v368 = vld [vmem:[%s218 + $0x2f0] sm:$0xff]
        %v369 = vld [vmem:[%s218 + $0x2f8] sm:$0xff]
        %v370 = vld [vmem:[%s218 + $0x300] sm:$0xff]
        %v371 = vld [vmem:[%s218 + $0x308] sm:$0xff]
        %v372 = vld [vmem:[%s218 + $0x310] sm:$0xff]
        %v373 = vld [vmem:[%s218 + $0x318] sm:$0xff]
        %v374 = vld [vmem:[%s218 + $0x320] sm:$0xff]
        %v375 = vld [vmem:[%s218 + $0x328] sm:$0xff]
        %v376 = vld [vmem:[%s218 + $0x330] sm:$0xff]
        %v377 = vld [vmem:[%s218 + $0x338] sm:$0xff]
        %v378 = vld [vmem:[%s218 + $0x340] sm:$0xff]
        %v379 = vld [vmem:[%s218 + $0x348] sm:$0xff]
        %v380 = vld [vmem:[%s218 + $0x350] sm:$0xff]
        %v381 = vld [vmem:[%s218 + $0x358] sm:$0xff]
        %v382 = vld [vmem:[%s218 + $0x360] sm:$0xff]
        %v383 = vld [vmem:[%s218 + $0x368] sm:$0xff]
        %v384 = vld [vmem:[%s218 + $0x370] sm:$0xff]
        %v385 = vld [vmem:[%s218 + $0x378] sm:$0xff]
        %v386 = vld [vmem:[%s218 + $0x380] sm:$0xff]
        %v387 = vld [vmem:[%s218 + $0x388] sm:$0xff]
        %v388 = vld [vmem:[%s218 + $0x390] sm:$0xff]
        %v389 = vld [vmem:[%s218 + $0x398] sm:$0xff]
        %v390 = vld [vmem:[%s218 + $0x3a0] sm:$0xff]
        %v391 = vld [vmem:[%s218 + $0x3a8] sm:$0xff]
        %v392 = vld [vmem:[%s218 + $0x3b0] sm:$0xff]
        %v393 = vld [vmem:[%s218 + $0x3b8] sm:$0xff]
        %v394 = vld [vmem:[%s218 + $0x3c0] sm:$0xff]
        %v395 = vld [vmem:[%s218 + $0x3c8] sm:$0xff]
        %v396 = vld [vmem:[%s218 + $0x3d0] sm:$0xff]
        %v397 = vld [vmem:[%s218 + $0x3d8] sm:$0xff]
        %v398 = vld [vmem:[%s218 + $0x3e0] sm:$0xff]
        %v399 = vld [vmem:[%s218 + $0x3e8] sm:$0xff]
        %v400 = vld [vmem:[%s218 + $0x3f0] sm:$0xff]
        %v401 = vld [vmem:[%s218 + $0x3f8] sm:$0xff]
        %v402 = vmul.f32 %v274, 0.17677669
        %v403 = vmul.f32 %v275, 0.17677669
        %v404 = vmul.f32 %v276, 0.17677669
        %v405 = vmul.f32 %v277, 0.17677669
        %v406 = vmul.f32 %v278, 0.17677669
        %v407 = vmul.f32 %v279, 0.17677669
        %v408 = vmul.f32 %v280, 0.17677669
        %v409 = vmul.f32 %v281, 0.17677669
        %v410 = vmul.f32 %v282, 0.17677669
        %v411 = vmul.f32 %v283, 0.17677669
        %v412 = vmul.f32 %v284, 0.17677669
        %v413 = vmul.f32 %v285, 0.17677669
        %v414 = vmul.f32 %v286, 0.17677669
        %v415 = vmul.f32 %v287, 0.17677669
        %v416 = vmul.f32 %v288, 0.17677669
        %v417 = vmul.f32 %v289, 0.17677669
        %v418 = vmul.f32 %v290, 0.17677669
        %v419 = vmul.f32 %v291, 0.17677669
        %v420 = vmul.f32 %v292, 0.17677669
        %v421 = vmul.f32 %v293, 0.17677669
        %v422 = vmul.f32 %v294, 0.17677669
        %v423 = vmul.f32 %v295, 0.17677669
        %v424 = vmul.f32 %v296, 0.17677669
        %v425 = vmul.f32 %v297, 0.17677669
        %v426 = vmul.f32 %v298, 0.17677669
        %v427 = vmul.f32 %v299, 0.17677669
        %v428 = vmul.f32 %v300, 0.17677669
        %v429 = vmul.f32 %v301, 0.17677669
        %v430 = vmul.f32 %v302, 0.17677669
        %v431 = vmul.f32 %v303, 0.17677669
        %v432 = vmul.f32 %v304, 0.17677669
        %v433 = vmul.f32 %v305, 0.17677669
        %v434 = vmul.f32 %v306, 0.17677669
        %v435 = vmul.f32 %v307, 0.17677669
        %v436 = vmul.f32 %v308, 0.17677669
        %v437 = vmul.f32 %v309, 0.17677669
        %v438 = vmul.f32 %v310, 0.17677669
        %v439 = vmul.f32 %v311, 0.17677669
        %v440 = vmul.f32 %v312, 0.17677669
        %v441 = vmul.f32 %v313, 0.17677669
        %v442 = vmul.f32 %v314, 0.17677669
        %v443 = vmul.f32 %v315, 0.17677669
        %v444 = vmul.f32 %v316, 0.17677669
        %v445 = vmul.f32 %v317, 0.17677669
        %v446 = vmul.f32 %v318, 0.17677669
        %v447 = vmul.f32 %v319, 0.17677669
        %v448 = vmul.f32 %v320, 0.17677669
        %v449 = vmul.f32 %v321, 0.17677669
        %v450 = vmul.f32 %v322, 0.17677669
        %v451 = vmul.f32 %v323, 0.17677669
        %v452 = vmul.f32 %v324, 0.17677669
        %v453 = vmul.f32 %v325, 0.17677669
        %v454 = vmul.f32 %v326, 0.17677669
        %v455 = vmul.f32 %v327, 0.17677669
        %v456 = vmul.f32 %v328, 0.17677669
        %v457 = vmul.f32 %v329, 0.17677669
        %v458 = vmul.f32 %v330, 0.17677669
        %v459 = vmul.f32 %v331, 0.17677669
        %v460 = vmul.f32 %v332, 0.17677669
        %v461 = vmul.f32 %v333, 0.17677669
        %v462 = vmul.f32 %v334, 0.17677669
        %v463 = vmul.f32 %v335, 0.17677669
        %v464 = vmul.f32 %v336, 0.17677669
        %v465 = vmul.f32 %v337, 0.17677669
        %v466 = vmul.f32 %v338, 0.17677669
        %v467 = vmul.f32 %v339, 0.17677669
        %v468 = vmul.f32 %v340, 0.17677669
        %v469 = vmul.f32 %v341, 0.17677669
        %v470 = vmul.f32 %v342, 0.17677669
        %v471 = vmul.f32 %v343, 0.17677669
        %v472 = vmul.f32 %v344, 0.17677669
        %v473 = vmul.f32 %v345, 0.17677669
        %v474 = vmul.f32 %v346, 0.17677669
        %v475 = vmul.f32 %v347, 0.17677669
        %v476 = vmul.f32 %v348, 0.17677669
        %v477 = vmul.f32 %v349, 0.17677669
        %v478 = vmul.f32 %v350, 0.17677669
        %v479 = vmul.f32 %v351, 0.17677669
        %v480 = vmul.f32 %v352, 0.17677669
        %v481 = vmul.f32 %v353, 0.17677669
        %v482 = vmul.f32 %v354, 0.17677669
        %v483 = vmul.f32 %v355, 0.17677669
        %v484 = vmul.f32 %v356, 0.17677669
        %v485 = vmul.f32 %v357, 0.17677669
        %v486 = vmul.f32 %v358, 0.17677669
        %v487 = vmul.f32 %v359, 0.17677669
        %v488 = vmul.f32 %v360, 0.17677669
        %v489 = vmul.f32 %v361, 0.17677669
        %v490 = vmul.f32 %v362, 0.17677669
        %v491 = vmul.f32 %v363, 0.17677669
        %v492 = vmul.f32 %v364, 0.17677669
        %v493 = vmul.f32 %v365, 0.17677669
        %v494 = vmul.f32 %v366, 0.17677669
        %v495 = vmul.f32 %v367, 0.17677669
        %v496 = vmul.f32 %v368, 0.17677669
        %v497 = vmul.f32 %v369, 0.17677669
        %v498 = vmul.f32 %v370, 0.17677669
        %v499 = vmul.f32 %v371, 0.17677669
        %v500 = vmul.f32 %v372, 0.17677669
        %v501 = vmul.f32 %v373, 0.17677669
        %v502 = vmul.f32 %v374, 0.17677669
        %v503 = vmul.f32 %v375, 0.17677669
        %v504 = vmul.f32 %v376, 0.17677669
        %v505 = vmul.f32 %v377, 0.17677669
        %v506 = vmul.f32 %v378, 0.17677669
        %v507 = vmul.f32 %v379, 0.17677669
        %v508 = vmul.f32 %v380, 0.17677669
        %v509 = vmul.f32 %v381, 0.17677669
        %v510 = vmul.f32 %v382, 0.17677669
        %v511 = vmul.f32 %v383, 0.17677669
        %v512 = vmul.f32 %v384, 0.17677669
        %v513 = vmul.f32 %v385, 0.17677669
        %v514 = vmul.f32 %v386, 0.17677669
        %v515 = vmul.f32 %v387, 0.17677669
        %v516 = vmul.f32 %v388, 0.17677669
        %v517 = vmul.f32 %v389, 0.17677669
        %v518 = vmul.f32 %v390, 0.17677669
        %v519 = vmul.f32 %v391, 0.17677669
        %v520 = vmul.f32 %v392, 0.17677669
        %v521 = vmul.f32 %v393, 0.17677669
        %v522 = vmul.f32 %v394, 0.17677669
        %v523 = vmul.f32 %v395, 0.17677669
        %v524 = vmul.f32 %v396, 0.17677669
        %v525 = vmul.f32 %v397, 0.17677669
        %v526 = vmul.f32 %v398, 0.17677669
        %v527 = vmul.f32 %v399, 0.17677669
        %v528 = vmul.f32 %v400, 0.17677669
        %v529 = vmul.f32 %v401, 0.17677669
        %v530 = vpack.c.bf16 %v403, %v402
        %v531 = vpack.c.bf16 %v405, %v404
        %v532 = vpack.c.bf16 %v407, %v406
        %v533 = vpack.c.bf16 %v409, %v408
        %v534 = vpack.c.bf16 %v411, %v410
        %v535 = vpack.c.bf16 %v413, %v412
        %v536 = vpack.c.bf16 %v415, %v414
        %v537 = vpack.c.bf16 %v417, %v416
        %v538 = vpack.c.bf16 %v419, %v418
        %v539 = vpack.c.bf16 %v421, %v420
        %v540 = vpack.c.bf16 %v423, %v422
        %v541 = vpack.c.bf16 %v425, %v424
        %v542 = vpack.c.bf16 %v427, %v426
        %v543 = vpack.c.bf16 %v429, %v428
        %v544 = vpack.c.bf16 %v431, %v430
        %v545 = vpack.c.bf16 %v433, %v432
        %v546 = vpack.c.bf16 %v435, %v434
        %v547 = vpack.c.bf16 %v437, %v436
        %v548 = vpack.c.bf16 %v439, %v438
        %v549 = vpack.c.bf16 %v441, %v440
        %v550 = vpack.c.bf16 %v443, %v442
        %v551 = vpack.c.bf16 %v445, %v444
        %v552 = vpack.c.bf16 %v447, %v446
        %v553 = vpack.c.bf16 %v449, %v448
        %v554 = vpack.c.bf16 %v451, %v450
        %v555 = vpack.c.bf16 %v453, %v452
        %v556 = vpack.c.bf16 %v455, %v454
        %v557 = vpack.c.bf16 %v457, %v456
        %v558 = vpack.c.bf16 %v459, %v458
        %v559 = vpack.c.bf16 %v461, %v460
        %v560 = vpack.c.bf16 %v463, %v462
        %v561 = vpack.c.bf16 %v465, %v464
        %v562 = vpack.c.bf16 %v467, %v466
        %v563 = vpack.c.bf16 %v469, %v468
        %v564 = vpack.c.bf16 %v471, %v470
        %v565 = vpack.c.bf16 %v473, %v472
        %v566 = vpack.c.bf16 %v475, %v474
        %v567 = vpack.c.bf16 %v477, %v476
        %v568 = vpack.c.bf16 %v479, %v478
        %v569 = vpack.c.bf16 %v481, %v480
        %v570 = vpack.c.bf16 %v483, %v482
        %v571 = vpack.c.bf16 %v485, %v484
        %v572 = vpack.c.bf16 %v487, %v486
        %v573 = vpack.c.bf16 %v489, %v488
        %v574 = vpack.c.bf16 %v491, %v490
        %v575 = vpack.c.bf16 %v493, %v492
        %v576 = vpack.c.bf16 %v495, %v494
        %v577 = vpack.c.bf16 %v497, %v496
        %v578 = vpack.c.bf16 %v499, %v498
        %v579 = vpack.c.bf16 %v501, %v500
        %v580 = vpack.c.bf16 %v503, %v502
        %v581 = vpack.c.bf16 %v505, %v504
        %v582 = vpack.c.bf16 %v507, %v506
        %v583 = vpack.c.bf16 %v509, %v508
        %v584 = vpack.c.bf16 %v511, %v510
        %v585 = vpack.c.bf16 %v513, %v512
        %v586 = vpack.c.bf16 %v515, %v514
        %v587 = vpack.c.bf16 %v517, %v516
        %v588 = vpack.c.bf16 %v519, %v518
        %v589 = vpack.c.bf16 %v521, %v520
        %v590 = vpack.c.bf16 %v523, %v522
        %v591 = vpack.c.bf16 %v525, %v524
        %v592 = vpack.c.bf16 %v527, %v526
        %v593 = vpack.c.bf16 %v529, %v528
        %v594 = vld [vmem:[%s227] sm:$0xff]
        %v595 = vld [vmem:[%s227 + $0x8] sm:$0xff]
        %v596 = vld [vmem:[%s227 + $0x10] sm:$0xff]
        %v597 = vld [vmem:[%s227 + $0x18] sm:$0xff]
        %v598 = vld [vmem:[%s227 + $0x20] sm:$0xff]
        %v599 = vld [vmem:[%s227 + $0x28] sm:$0xff]
        %v600 = vld [vmem:[%s227 + $0x30] sm:$0xff]
        %v601 = vld [vmem:[%s227 + $0x38] sm:$0xff]
        %v602 = vld [vmem:[%s227 + $0x40] sm:$0xff]
        %v603 = vld [vmem:[%s227 + $0x48] sm:$0xff]
        %v604 = vld [vmem:[%s227 + $0x50] sm:$0xff]
        %v605 = vld [vmem:[%s227 + $0x58] sm:$0xff]
        %v606 = vld [vmem:[%s227 + $0x60] sm:$0xff]
        %v607 = vld [vmem:[%s227 + $0x68] sm:$0xff]
        %v608 = vld [vmem:[%s227 + $0x70] sm:$0xff]
        %v609 = vld [vmem:[%s227 + $0x78] sm:$0xff]
        %v610 = vld [vmem:[%s227 + $0x80] sm:$0xff]
        %v611 = vld [vmem:[%s227 + $0x88] sm:$0xff]
        %v612 = vld [vmem:[%s227 + $0x90] sm:$0xff]
        %v613 = vld [vmem:[%s227 + $0x98] sm:$0xff]
        %v614 = vld [vmem:[%s227 + $0xa0] sm:$0xff]
        %v615 = vld [vmem:[%s227 + $0xa8] sm:$0xff]
        %v616 = vld [vmem:[%s227 + $0xb0] sm:$0xff]
        %v617 = vld [vmem:[%s227 + $0xb8] sm:$0xff]
        %v618 = vld [vmem:[%s227 + $0xc0] sm:$0xff]
        %v619 = vld [vmem:[%s227 + $0xc8] sm:$0xff]
        %v620 = vld [vmem:[%s227 + $0xd0] sm:$0xff]
        %v621 = vld [vmem:[%s227 + $0xd8] sm:$0xff]
        %v622 = vld [vmem:[%s227 + $0xe0] sm:$0xff]
        %v623 = vld [vmem:[%s227 + $0xe8] sm:$0xff]
        %v624 = vld [vmem:[%s227 + $0xf0] sm:$0xff]
        %v625 = vld [vmem:[%s227 + $0xf8] sm:$0xff]
        %v626 = vld [vmem:[%s227 + $0x100] sm:$0xff]
        %v627 = vld [vmem:[%s227 + $0x108] sm:$0xff]
        %v628 = vld [vmem:[%s227 + $0x110] sm:$0xff]
        %v629 = vld [vmem:[%s227 + $0x118] sm:$0xff]
        %v630 = vld [vmem:[%s227 + $0x120] sm:$0xff]
        %v631 = vld [vmem:[%s227 + $0x128] sm:$0xff]
        %v632 = vld [vmem:[%s227 + $0x130] sm:$0xff]
        %v633 = vld [vmem:[%s227 + $0x138] sm:$0xff]
        %v634 = vld [vmem:[%s227 + $0x140] sm:$0xff]
        %v635 = vld [vmem:[%s227 + $0x148] sm:$0xff]
        %v636 = vld [vmem:[%s227 + $0x150] sm:$0xff]
        %v637 = vld [vmem:[%s227 + $0x158] sm:$0xff]
        %v638 = vld [vmem:[%s227 + $0x160] sm:$0xff]
        %v639 = vld [vmem:[%s227 + $0x168] sm:$0xff]
        %v640 = vld [vmem:[%s227 + $0x170] sm:$0xff]
        %v641 = vld [vmem:[%s227 + $0x178] sm:$0xff]
        %v642 = vld [vmem:[%s227 + $0x180] sm:$0xff]
        %v643 = vld [vmem:[%s227 + $0x188] sm:$0xff]
        %v644 = vld [vmem:[%s227 + $0x190] sm:$0xff]
        %v645 = vld [vmem:[%s227 + $0x198] sm:$0xff]
        %v646 = vld [vmem:[%s227 + $0x1a0] sm:$0xff]
        %v647 = vld [vmem:[%s227 + $0x1a8] sm:$0xff]
        %v648 = vld [vmem:[%s227 + $0x1b0] sm:$0xff]
        %v649 = vld [vmem:[%s227 + $0x1b8] sm:$0xff]
        %v650 = vld [vmem:[%s227 + $0x1c0] sm:$0xff]
        %v651 = vld [vmem:[%s227 + $0x1c8] sm:$0xff]
        %v652 = vld [vmem:[%s227 + $0x1d0] sm:$0xff]
        %v653 = vld [vmem:[%s227 + $0x1d8] sm:$0xff]
        %v654 = vld [vmem:[%s227 + $0x1e0] sm:$0xff]
        %v655 = vld [vmem:[%s227 + $0x1e8] sm:$0xff]
        %v656 = vld [vmem:[%s227 + $0x1f0] sm:$0xff]
        %v657 = vld [vmem:[%s227 + $0x1f8] sm:$0xff]
        %v658 = vld [vmem:[%s227 + $0x200] sm:$0xff]
        %v659 = vld [vmem:[%s227 + $0x208] sm:$0xff]
        %v660 = vld [vmem:[%s227 + $0x210] sm:$0xff]
        %v661 = vld [vmem:[%s227 + $0x218] sm:$0xff]
        %v662 = vld [vmem:[%s227 + $0x220] sm:$0xff]
        %v663 = vld [vmem:[%s227 + $0x228] sm:$0xff]
        %v664 = vld [vmem:[%s227 + $0x230] sm:$0xff]
        %v665 = vld [vmem:[%s227 + $0x238] sm:$0xff]
        %v666 = vld [vmem:[%s227 + $0x240] sm:$0xff]
        %v667 = vld [vmem:[%s227 + $0x248] sm:$0xff]
        %v668 = vld [vmem:[%s227 + $0x250] sm:$0xff]
        %v669 = vld [vmem:[%s227 + $0x258] sm:$0xff]
        %v670 = vld [vmem:[%s227 + $0x260] sm:$0xff]
        %v671 = vld [vmem:[%s227 + $0x268] sm:$0xff]
        %v672 = vld [vmem:[%s227 + $0x270] sm:$0xff]
        %v673 = vld [vmem:[%s227 + $0x278] sm:$0xff]
        %v674 = vld [vmem:[%s227 + $0x280] sm:$0xff]
        %v675 = vld [vmem:[%s227 + $0x288] sm:$0xff]
        %v676 = vld [vmem:[%s227 + $0x290] sm:$0xff]
        %v677 = vld [vmem:[%s227 + $0x298] sm:$0xff]
        %v678 = vld [vmem:[%s227 + $0x2a0] sm:$0xff]
        %v679 = vld [vmem:[%s227 + $0x2a8] sm:$0xff]
        %v680 = vld [vmem:[%s227 + $0x2b0] sm:$0xff]
        %v681 = vld [vmem:[%s227 + $0x2b8] sm:$0xff]
        %v682 = vld [vmem:[%s227 + $0x2c0] sm:$0xff]
        %v683 = vld [vmem:[%s227 + $0x2c8] sm:$0xff]
        %v684 = vld [vmem:[%s227 + $0x2d0] sm:$0xff]
        %v685 = vld [vmem:[%s227 + $0x2d8] sm:$0xff]
        %v686 = vld [vmem:[%s227 + $0x2e0] sm:$0xff]
        %v687 = vld [vmem:[%s227 + $0x2e8] sm:$0xff]
        %v688 = vld [vmem:[%s227 + $0x2f0] sm:$0xff]
        %v689 = vld [vmem:[%s227 + $0x2f8] sm:$0xff]
        %v690 = vld [vmem:[%s227 + $0x300] sm:$0xff]
        %v691 = vld [vmem:[%s227 + $0x308] sm:$0xff]
        %v692 = vld [vmem:[%s227 + $0x310] sm:$0xff]
        %v693 = vld [vmem:[%s227 + $0x318] sm:$0xff]
        %v694 = vld [vmem:[%s227 + $0x320] sm:$0xff]
        %v695 = vld [vmem:[%s227 + $0x328] sm:$0xff]
        %v696 = vld [vmem:[%s227 + $0x330] sm:$0xff]
        %v697 = vld [vmem:[%s227 + $0x338] sm:$0xff]
        %v698 = vld [vmem:[%s227 + $0x340] sm:$0xff]
        %v699 = vld [vmem:[%s227 + $0x348] sm:$0xff]
        %v700 = vld [vmem:[%s227 + $0x350] sm:$0xff]
        %v701 = vld [vmem:[%s227 + $0x358] sm:$0xff]
        %v702 = vld [vmem:[%s227 + $0x360] sm:$0xff]
        %v703 = vld [vmem:[%s227 + $0x368] sm:$0xff]
        %v704 = vld [vmem:[%s227 + $0x370] sm:$0xff]
        %v705 = vld [vmem:[%s227 + $0x378] sm:$0xff]
        %v706 = vld [vmem:[%s227 + $0x380] sm:$0xff]
        %v707 = vld [vmem:[%s227 + $0x388] sm:$0xff]
        %v708 = vld [vmem:[%s227 + $0x390] sm:$0xff]
        %v709 = vld [vmem:[%s227 + $0x398] sm:$0xff]
        %v710 = vld [vmem:[%s227 + $0x3a0] sm:$0xff]
        %v711 = vld [vmem:[%s227 + $0x3a8] sm:$0xff]
        %v712 = vld [vmem:[%s227 + $0x3b0] sm:$0xff]
        %v713 = vld [vmem:[%s227 + $0x3b8] sm:$0xff]
        %v714 = vld [vmem:[%s227 + $0x3c0] sm:$0xff]
        %v715 = vld [vmem:[%s227 + $0x3c8] sm:$0xff]
        %v716 = vld [vmem:[%s227 + $0x3d0] sm:$0xff]
        %v717 = vld [vmem:[%s227 + $0x3d8] sm:$0xff]
        %v718 = vld [vmem:[%s227 + $0x3e0] sm:$0xff]
        %v719 = vld [vmem:[%s227 + $0x3e8] sm:$0xff]
        %v720 = vld [vmem:[%s227 + $0x3f0] sm:$0xff]
        %v721 = vld [vmem:[%s227 + $0x3f8] sm:$0xff]
        %v722 = vpack.c.bf16 %v595, %v594
        %v723 = vpack.c.bf16 %v597, %v596
        %v724 = vpack.c.bf16 %v599, %v598
        %v725 = vpack.c.bf16 %v601, %v600
        %v726 = vpack.c.bf16 %v603, %v602
        %v727 = vpack.c.bf16 %v605, %v604
        %v728 = vpack.c.bf16 %v607, %v606
        %v729 = vpack.c.bf16 %v609, %v608
        %v730 = vpack.c.bf16 %v611, %v610
        %v731 = vpack.c.bf16 %v613, %v612
        %v732 = vpack.c.bf16 %v615, %v614
        %v733 = vpack.c.bf16 %v617, %v616
        %v734 = vpack.c.bf16 %v619, %v618
        %v735 = vpack.c.bf16 %v621, %v620
        %v736 = vpack.c.bf16 %v623, %v622
        %v737 = vpack.c.bf16 %v625, %v624
        %v738 = vpack.c.bf16 %v627, %v626
        %v739 = vpack.c.bf16 %v629, %v628
        %v740 = vpack.c.bf16 %v631, %v630
        %v741 = vpack.c.bf16 %v633, %v632
        %v742 = vpack.c.bf16 %v635, %v634
        %v743 = vpack.c.bf16 %v637, %v636
        %v744 = vpack.c.bf16 %v639, %v638
        %v745 = vpack.c.bf16 %v641, %v640
        %v746 = vpack.c.bf16 %v643, %v642
        %v747 = vpack.c.bf16 %v645, %v644
        %v748 = vpack.c.bf16 %v647, %v646
        %v749 = vpack.c.bf16 %v649, %v648
        %v750 = vpack.c.bf16 %v651, %v650
        %v751 = vpack.c.bf16 %v653, %v652
        %v752 = vpack.c.bf16 %v655, %v654
        %v753 = vpack.c.bf16 %v657, %v656
        %v754 = vpack.c.bf16 %v659, %v658
        %v755 = vpack.c.bf16 %v661, %v660
        %v756 = vpack.c.bf16 %v663, %v662
        %v757 = vpack.c.bf16 %v665, %v664
        %v758 = vpack.c.bf16 %v667, %v666
        %v759 = vpack.c.bf16 %v669, %v668
        %v760 = vpack.c.bf16 %v671, %v670
        %v761 = vpack.c.bf16 %v673, %v672
        %v762 = vpack.c.bf16 %v675, %v674
        %v763 = vpack.c.bf16 %v677, %v676
        %v764 = vpack.c.bf16 %v679, %v678
        %v765 = vpack.c.bf16 %v681, %v680
        %v766 = vpack.c.bf16 %v683, %v682
        %v767 = vpack.c.bf16 %v685, %v684
        %v768 = vpack.c.bf16 %v687, %v686
        %v769 = vpack.c.bf16 %v689, %v688
        %v770 = vpack.c.bf16 %v691, %v690
        %v771 = vpack.c.bf16 %v693, %v692
        %v772 = vpack.c.bf16 %v695, %v694
        %v773 = vpack.c.bf16 %v697, %v696
        %v774 = vpack.c.bf16 %v699, %v698
        %v775 = vpack.c.bf16 %v701, %v700
        %v776 = vpack.c.bf16 %v703, %v702
        %v777 = vpack.c.bf16 %v705, %v704
        %v778 = vpack.c.bf16 %v707, %v706
        %v779 = vpack.c.bf16 %v709, %v708
        %v780 = vpack.c.bf16 %v711, %v710
        %v781 = vpack.c.bf16 %v713, %v712
        %v782 = vpack.c.bf16 %v715, %v714
        %v783 = vpack.c.bf16 %v717, %v716
        %v784 = vpack.c.bf16 %v719, %v718
        %v785 = vpack.c.bf16 %v721, %v720
        %v786 = vld [vmem:[%s236] sm:$0xff]
        %v787 = vld [vmem:[%s236 + $0x8] sm:$0xff]
        %v788 = vld [vmem:[%s236 + $0x10] sm:$0xff]
        %v789 = vld [vmem:[%s236 + $0x18] sm:$0xff]
        %v790 = vld [vmem:[%s236 + $0x20] sm:$0xff]
        %v791 = vld [vmem:[%s236 + $0x28] sm:$0xff]
        %v792 = vld [vmem:[%s236 + $0x30] sm:$0xff]
        %v793 = vld [vmem:[%s236 + $0x38] sm:$0xff]
        %v794 = vld [vmem:[%s236 + $0x40] sm:$0xff]
        %v795 = vld [vmem:[%s236 + $0x48] sm:$0xff]
        %v796 = vld [vmem:[%s236 + $0x50] sm:$0xff]
        %v797 = vld [vmem:[%s236 + $0x58] sm:$0xff]
        %v798 = vld [vmem:[%s236 + $0x60] sm:$0xff]
        %v799 = vld [vmem:[%s236 + $0x68] sm:$0xff]
        %v800 = vld [vmem:[%s236 + $0x70] sm:$0xff]
        %v801 = vld [vmem:[%s236 + $0x78] sm:$0xff]
        %v802 = vld [vmem:[%s236 + $0x80] sm:$0xff]
        %v803 = vld [vmem:[%s236 + $0x88] sm:$0xff]
        %v804 = vld [vmem:[%s236 + $0x90] sm:$0xff]
        %v805 = vld [vmem:[%s236 + $0x98] sm:$0xff]
        %v806 = vld [vmem:[%s236 + $0xa0] sm:$0xff]
        %v807 = vld [vmem:[%s236 + $0xa8] sm:$0xff]
        %v808 = vld [vmem:[%s236 + $0xb0] sm:$0xff]
        %v809 = vld [vmem:[%s236 + $0xb8] sm:$0xff]
        %v810 = vld [vmem:[%s236 + $0xc0] sm:$0xff]
        %v811 = vld [vmem:[%s236 + $0xc8] sm:$0xff]
        %v812 = vld [vmem:[%s236 + $0xd0] sm:$0xff]
        %v813 = vld [vmem:[%s236 + $0xd8] sm:$0xff]
        %v814 = vld [vmem:[%s236 + $0xe0] sm:$0xff]
        %v815 = vld [vmem:[%s236 + $0xe8] sm:$0xff]
        %v816 = vld [vmem:[%s236 + $0xf0] sm:$0xff]
        %v817 = vld [vmem:[%s236 + $0xf8] sm:$0xff]
        %v818 = vld [vmem:[%s236 + $0x100] sm:$0xff]
        %v819 = vld [vmem:[%s236 + $0x108] sm:$0xff]
        %v820 = vld [vmem:[%s236 + $0x110] sm:$0xff]
        %v821 = vld [vmem:[%s236 + $0x118] sm:$0xff]
        %v822 = vld [vmem:[%s236 + $0x120] sm:$0xff]
        %v823 = vld [vmem:[%s236 + $0x128] sm:$0xff]
        %v824 = vld [vmem:[%s236 + $0x130] sm:$0xff]
        %v825 = vld [vmem:[%s236 + $0x138] sm:$0xff]
        %v826 = vld [vmem:[%s236 + $0x140] sm:$0xff]
        %v827 = vld [vmem:[%s236 + $0x148] sm:$0xff]
        %v828 = vld [vmem:[%s236 + $0x150] sm:$0xff]
        %v829 = vld [vmem:[%s236 + $0x158] sm:$0xff]
        %v830 = vld [vmem:[%s236 + $0x160] sm:$0xff]
        %v831 = vld [vmem:[%s236 + $0x168] sm:$0xff]
        %v832 = vld [vmem:[%s236 + $0x170] sm:$0xff]
        %v833 = vld [vmem:[%s236 + $0x178] sm:$0xff]
        %v834 = vld [vmem:[%s236 + $0x180] sm:$0xff]
        %v835 = vld [vmem:[%s236 + $0x188] sm:$0xff]
        %v836 = vld [vmem:[%s236 + $0x190] sm:$0xff]
        %v837 = vld [vmem:[%s236 + $0x198] sm:$0xff]
        %v838 = vld [vmem:[%s236 + $0x1a0] sm:$0xff]
        %v839 = vld [vmem:[%s236 + $0x1a8] sm:$0xff]
        %v840 = vld [vmem:[%s236 + $0x1b0] sm:$0xff]
        %v841 = vld [vmem:[%s236 + $0x1b8] sm:$0xff]
        %v842 = vld [vmem:[%s236 + $0x1c0] sm:$0xff]
        %v843 = vld [vmem:[%s236 + $0x1c8] sm:$0xff]
        %v844 = vld [vmem:[%s236 + $0x1d0] sm:$0xff]
        %v845 = vld [vmem:[%s236 + $0x1d8] sm:$0xff]
        %v846 = vld [vmem:[%s236 + $0x1e0] sm:$0xff]
        %v847 = vld [vmem:[%s236 + $0x1e8] sm:$0xff]
        %v848 = vld [vmem:[%s236 + $0x1f0] sm:$0xff]
        %v849 = vld [vmem:[%s236 + $0x1f8] sm:$0xff]
        %v850 = vld [vmem:[%s236 + $0x200] sm:$0xff]
        %v851 = vld [vmem:[%s236 + $0x208] sm:$0xff]
        %v852 = vld [vmem:[%s236 + $0x210] sm:$0xff]
        %v853 = vld [vmem:[%s236 + $0x218] sm:$0xff]
        %v854 = vld [vmem:[%s236 + $0x220] sm:$0xff]
        %v855 = vld [vmem:[%s236 + $0x228] sm:$0xff]
        %v856 = vld [vmem:[%s236 + $0x230] sm:$0xff]
        %v857 = vld [vmem:[%s236 + $0x238] sm:$0xff]
        %v858 = vld [vmem:[%s236 + $0x240] sm:$0xff]
        %v859 = vld [vmem:[%s236 + $0x248] sm:$0xff]
        %v860 = vld [vmem:[%s236 + $0x250] sm:$0xff]
        %v861 = vld [vmem:[%s236 + $0x258] sm:$0xff]
        %v862 = vld [vmem:[%s236 + $0x260] sm:$0xff]
        %v863 = vld [vmem:[%s236 + $0x268] sm:$0xff]
        %v864 = vld [vmem:[%s236 + $0x270] sm:$0xff]
        %v865 = vld [vmem:[%s236 + $0x278] sm:$0xff]
        %v866 = vld [vmem:[%s236 + $0x280] sm:$0xff]
        %v867 = vld [vmem:[%s236 + $0x288] sm:$0xff]
        %v868 = vld [vmem:[%s236 + $0x290] sm:$0xff]
        %v869 = vld [vmem:[%s236 + $0x298] sm:$0xff]
        %v870 = vld [vmem:[%s236 + $0x2a0] sm:$0xff]
        %v871 = vld [vmem:[%s236 + $0x2a8] sm:$0xff]
        %v872 = vld [vmem:[%s236 + $0x2b0] sm:$0xff]
        %v873 = vld [vmem:[%s236 + $0x2b8] sm:$0xff]
        %v874 = vld [vmem:[%s236 + $0x2c0] sm:$0xff]
        %v875 = vld [vmem:[%s236 + $0x2c8] sm:$0xff]
        %v876 = vld [vmem:[%s236 + $0x2d0] sm:$0xff]
        %v877 = vld [vmem:[%s236 + $0x2d8] sm:$0xff]
        %v878 = vld [vmem:[%s236 + $0x2e0] sm:$0xff]
        %v879 = vld [vmem:[%s236 + $0x2e8] sm:$0xff]
        %v880 = vld [vmem:[%s236 + $0x2f0] sm:$0xff]
        %v881 = vld [vmem:[%s236 + $0x2f8] sm:$0xff]
        %v882 = vld [vmem:[%s236 + $0x300] sm:$0xff]
        %v883 = vld [vmem:[%s236 + $0x308] sm:$0xff]
        %v884 = vld [vmem:[%s236 + $0x310] sm:$0xff]
        %v885 = vld [vmem:[%s236 + $0x318] sm:$0xff]
        %v886 = vld [vmem:[%s236 + $0x320] sm:$0xff]
        %v887 = vld [vmem:[%s236 + $0x328] sm:$0xff]
        %v888 = vld [vmem:[%s236 + $0x330] sm:$0xff]
        %v889 = vld [vmem:[%s236 + $0x338] sm:$0xff]
        %v890 = vld [vmem:[%s236 + $0x340] sm:$0xff]
        %v891 = vld [vmem:[%s236 + $0x348] sm:$0xff]
        %v892 = vld [vmem:[%s236 + $0x350] sm:$0xff]
        %v893 = vld [vmem:[%s236 + $0x358] sm:$0xff]
        %v894 = vld [vmem:[%s236 + $0x360] sm:$0xff]
        %v895 = vld [vmem:[%s236 + $0x368] sm:$0xff]
        %v896 = vld [vmem:[%s236 + $0x370] sm:$0xff]
        %v897 = vld [vmem:[%s236 + $0x378] sm:$0xff]
        %v898 = vld [vmem:[%s236 + $0x380] sm:$0xff]
        %v899 = vld [vmem:[%s236 + $0x388] sm:$0xff]
        %v900 = vld [vmem:[%s236 + $0x390] sm:$0xff]
        %v901 = vld [vmem:[%s236 + $0x398] sm:$0xff]
        %v902 = vld [vmem:[%s236 + $0x3a0] sm:$0xff]
        %v903 = vld [vmem:[%s236 + $0x3a8] sm:$0xff]
        %v904 = vld [vmem:[%s236 + $0x3b0] sm:$0xff]
        %v905 = vld [vmem:[%s236 + $0x3b8] sm:$0xff]
        %v906 = vld [vmem:[%s236 + $0x3c0] sm:$0xff]
        %v907 = vld [vmem:[%s236 + $0x3c8] sm:$0xff]
        %v908 = vld [vmem:[%s236 + $0x3d0] sm:$0xff]
        %v909 = vld [vmem:[%s236 + $0x3d8] sm:$0xff]
        %v910 = vld [vmem:[%s236 + $0x3e0] sm:$0xff]
        %v911 = vld [vmem:[%s236 + $0x3e8] sm:$0xff]
        %v912 = vld [vmem:[%s236 + $0x3f0] sm:$0xff]
        %v913 = vld [vmem:[%s236 + $0x3f8] sm:$0xff]
        %v914 = vpack.c.bf16 %v787, %v786
        %v915 = vpack.c.bf16 %v789, %v788
        %v916 = vpack.c.bf16 %v791, %v790
        %v917 = vpack.c.bf16 %v793, %v792
        %v918 = vpack.c.bf16 %v795, %v794
        %v919 = vpack.c.bf16 %v797, %v796
        %v920 = vpack.c.bf16 %v799, %v798
        %v921 = vpack.c.bf16 %v801, %v800
        %v922 = vpack.c.bf16 %v803, %v802
        %v923 = vpack.c.bf16 %v805, %v804
        %v924 = vpack.c.bf16 %v807, %v806
        %v925 = vpack.c.bf16 %v809, %v808
        %v926 = vpack.c.bf16 %v811, %v810
        %v927 = vpack.c.bf16 %v813, %v812
        %v928 = vpack.c.bf16 %v815, %v814
        %v929 = vpack.c.bf16 %v817, %v816
        %v930 = vpack.c.bf16 %v819, %v818
        %v931 = vpack.c.bf16 %v821, %v820
        %v932 = vpack.c.bf16 %v823, %v822
        %v933 = vpack.c.bf16 %v825, %v824
        %v934 = vpack.c.bf16 %v827, %v826
        %v935 = vpack.c.bf16 %v829, %v828
        %v936 = vpack.c.bf16 %v831, %v830
        %v937 = vpack.c.bf16 %v833, %v832
        %v938 = vpack.c.bf16 %v835, %v834
        %v939 = vpack.c.bf16 %v837, %v836
        %v940 = vpack.c.bf16 %v839, %v838
        %v941 = vpack.c.bf16 %v841, %v840
        %v942 = vpack.c.bf16 %v843, %v842
        %v943 = vpack.c.bf16 %v845, %v844
        %v944 = vpack.c.bf16 %v847, %v846
        %v945 = vpack.c.bf16 %v849, %v848
        %v946 = vpack.c.bf16 %v851, %v850
        %v947 = vpack.c.bf16 %v853, %v852
        %v948 = vpack.c.bf16 %v855, %v854
        %v949 = vpack.c.bf16 %v857, %v856
        %v950 = vpack.c.bf16 %v859, %v858
        %v951 = vpack.c.bf16 %v861, %v860
        %v952 = vpack.c.bf16 %v863, %v862
        %v953 = vpack.c.bf16 %v865, %v864
        %v954 = vpack.c.bf16 %v867, %v866
        %v955 = vpack.c.bf16 %v869, %v868
        %v956 = vpack.c.bf16 %v871, %v870
        %v957 = vpack.c.bf16 %v873, %v872
        %v958 = vpack.c.bf16 %v875, %v874
        %v959 = vpack.c.bf16 %v877, %v876
        %v960 = vpack.c.bf16 %v879, %v878
        %v961 = vpack.c.bf16 %v881, %v880
        %v962 = vpack.c.bf16 %v883, %v882
        %v963 = vpack.c.bf16 %v885, %v884
        %v964 = vpack.c.bf16 %v887, %v886
        %v965 = vpack.c.bf16 %v889, %v888
        %v966 = vpack.c.bf16 %v891, %v890
        %v967 = vpack.c.bf16 %v893, %v892
        %v968 = vpack.c.bf16 %v895, %v894
        %v969 = vpack.c.bf16 %v897, %v896
        %v970 = vpack.c.bf16 %v899, %v898
        %v971 = vpack.c.bf16 %v901, %v900
        %v972 = vpack.c.bf16 %v903, %v902
        %v973 = vpack.c.bf16 %v905, %v904
        %v974 = vpack.c.bf16 %v907, %v906
        %v975 = vpack.c.bf16 %v909, %v908
        %v976 = vpack.c.bf16 %v911, %v910
        %v977 = vpack.c.bf16 %v913, %v912
        %vm978 = vcmask 261120
        %v980 = vsel %vm978, %v530, 0
        %v983 = vsel %vm978, %v531, 0
        %v986 = vsel %vm978, %v532, 0
        %v989 = vsel %vm978, %v533, 0
        %v992 = vsel %vm978, %v534, 0
        %v995 = vsel %vm978, %v535, 0
        %v998 = vsel %vm978, %v536, 0
        %v1001 = vsel %vm978, %v537, 0
        %v1004 = vsel %vm978, %v538, 0
        %v1007 = vsel %vm978, %v539, 0
        %v1010 = vsel %vm978, %v540, 0
        %v1013 = vsel %vm978, %v541, 0
        %v1016 = vsel %vm978, %v542, 0
        %v1019 = vsel %vm978, %v543, 0
        %v1022 = vsel %vm978, %v544, 0
        %v1025 = vsel %vm978, %v545, 0
        %v1028 = vsel %vm978, %v722, 0
        %v1031 = vsel %vm978, %v723, 0
        %v1034 = vsel %vm978, %v724, 0
        %v1037 = vsel %vm978, %v725, 0
        %v1040 = vsel %vm978, %v726, 0
        %v1043 = vsel %vm978, %v727, 0
        %v1046 = vsel %vm978, %v728, 0
        %v1049 = vsel %vm978, %v729, 0
        %v1052 = vsel %vm978, %v730, 0
        %v1055 = vsel %vm978, %v731, 0
        %v1058 = vsel %vm978, %v732, 0
        %v1061 = vsel %vm978, %v733, 0
        %v1064 = vsel %vm978, %v734, 0
        %v1067 = vsel %vm978, %v735, 0
        %v1070 = vsel %vm978, %v736, 0
        %v1073 = vsel %vm978, %v737, 0
        %1075 = vmatprep.subr.bf16.mxu0 0
        %1076 = vmatpush1.bf16.xpose.msra.mxu0 %v1028
        %1077 = vmatprep.subr.bf16.mxu0 0
        %1078 = vmatpush1.bf16.xpose.msra.mxu0 %v1031
        %1079 = vmatprep.subr.bf16.mxu0 0
        %1080 = vmatpush1.bf16.xpose.msra.mxu0 %v1034
        %1081 = vmatprep.subr.bf16.mxu0 0
        %1082 = vmatpush1.bf16.xpose.msra.mxu0 %v1037
        %1083 = vmatprep.subr.bf16.mxu0 0
        %1084 = vmatpush1.bf16.xpose.msra.mxu0 %v1040
        %1085 = vmatprep.subr.bf16.mxu0 0
        %1086 = vmatpush1.bf16.xpose.msra.mxu0 %v1043
        %1087 = vmatprep.subr.bf16.mxu0 0
        %1088 = vmatpush1.bf16.xpose.msra.mxu0 %v1046
        %1089 = vmatprep.subr.bf16.mxu0 0
        %1090 = vmatpush1.bf16.xpose.msra.mxu0 %v1049
        %1091 = vmatprep.subr.bf16.mxu0 0
        %1092 = vmatpush1.bf16.xpose.msra.mxu0 %v1052
        %1093 = vmatprep.subr.bf16.mxu0 0
        %1094 = vmatpush1.bf16.xpose.msra.mxu0 %v1055
        %1095 = vmatprep.subr.bf16.mxu0 0
        %1096 = vmatpush1.bf16.xpose.msra.mxu0 %v1058
        %1097 = vmatprep.subr.bf16.mxu0 0
        %1098 = vmatpush1.bf16.xpose.msra.mxu0 %v1061
        %1099 = vmatprep.subr.bf16.mxu0 0
        %1100 = vmatpush1.bf16.xpose.msra.mxu0 %v1064
        %1101 = vmatprep.subr.bf16.mxu0 0
        %1102 = vmatpush1.bf16.xpose.msra.mxu0 %v1067
        %1103 = vmatprep.subr.bf16.mxu0 0
        %1104 = vmatpush1.bf16.xpose.msra.mxu0 %v1070
        %1105 = vmatprep.subr.bf16.mxu0 0
        %1106 = vmatpush1.bf16.xpose.msra.mxu0 %v1073
        %1107 = vmatprep.mubr.bf16.mxu0 0
        %1108 = vmatmul.mubr.bf16.gmra.mrb[0].mxu0 %v980
        %v1109 = vpop.f32.mrb[0].mxu0
        %v1110 = vadd.f32 0.0, %v1109
        %v1111 = vpop.f32.mrb[0].mxu0
        %v1112 = vadd.f32 0.0, %v1111
        %v1113 = vpop.f32.mrb[0].mxu0
        %v1114 = vadd.f32 0.0, %v1113
        %v1115 = vpop.f32.mrb[0].mxu0
        %v1116 = vadd.f32 0.0, %v1115
        %1117 = vmatprep.mubr.bf16.mxu0 0
        %1118 = vmatmul.mubr.bf16.gmra.mrb[0].mxu0 %v983
        %v1119 = vpop.f32.mrb[0].mxu0
        %v1120 = vadd.f32 0.0, %v1119
        %v1121 = vpop.f32.mrb[0].mxu0
        %v1122 = vadd.f32 0.0, %v1121
        %v1123 = vpop.f32.mrb[0].mxu0
        %v1124 = vadd.f32 0.0, %v1123
        %v1125 = vpop.f32.mrb[0].mxu0
        %v1126 = vadd.f32 0.0, %v1125
        %1127 = vmatprep.mubr.bf16.mxu0 0
        %1128 = vmatmul.mubr.bf16.gmra.mrb[0].mxu0 %v986
        %v1129 = vpop.f32.mrb[0].mxu0
        %v1130 = vadd.f32 0.0, %v1129
        %v1131 = vpop.f32.mrb[0].mxu0
        %v1132 = vadd.f32 0.0, %v1131
        %v1133 = vpop.f32.mrb[0].mxu0
        %v1134 = vadd.f32 0.0, %v1133
        %v1135 = vpop.f32.mrb[0].mxu0
        %v1136 = vadd.f32 0.0, %v1135
        %1137 = vmatprep.mubr.bf16.mxu0 0
        %1138 = vmatmul.mubr.bf16.gmra.mrb[0].mxu0 %v989
        %v1139 = vpop.f32.mrb[0].mxu0
        %v1140 = vadd.f32 0.0, %v1139
        %v1141 = vpop.f32.mrb[0].mxu0
        %v1142 = vadd.f32 0.0, %v1141
        %v1143 = vpop.f32.mrb[0].mxu0
        %v1144 = vadd.f32 0.0, %v1143
        %v1145 = vpop.f32.mrb[0].mxu0
        %v1146 = vadd.f32 0.0, %v1145
        %1147 = vmatprep.mubr.bf16.mxu0 0
        %1148 = vmatmul.mubr.bf16.gmra.mrb[0].mxu0 %v992
        %v1149 = vpop.f32.mrb[0].mxu0
        %v1150 = vadd.f32 0.0, %v1149
        %v1151 = vpop.f32.mrb[0].mxu0
        %v1152 = vadd.f32 0.0, %v1151
        %v1153 = vpop.f32.mrb[0].mxu0
        %v1154 = vadd.f32 0.0, %v1153
        %v1155 = vpop.f32.mrb[0].mxu0
        %v1156 = vadd.f32 0.0, %v1155
        %1157 = vmatprep.mubr.bf16.mxu0 0
        %1158 = vmatmul.mubr.bf16.gmra.mrb[0].mxu0 %v995
        %v1159 = vpop.f32.mrb[0].mxu0
        %v1160 = vadd.f32 0.0, %v1159
        %v1161 = vpop.f32.mrb[0].mxu0
        %v1162 = vadd.f32 0.0, %v1161
        %v1163 = vpop.f32.mrb[0].mxu0
        %v1164 = vadd.f32 0.0, %v1163
        %v1165 = vpop.f32.mrb[0].mxu0
        %v1166 = vadd.f32 0.0, %v1165
        %1167 = vmatprep.mubr.bf16.mxu0 0
        %1168 = vmatmul.mubr.bf16.gmra.mrb[0].mxu0 %v998
        %v1169 = vpop.f32.mrb[0].mxu0
        %v1170 = vadd.f32 0.0, %v1169
        %v1171 = vpop.f32.mrb[0].mxu0
        %v1172 = vadd.f32 0.0, %v1171
        %v1173 = vpop.f32.mrb[0].mxu0
        %v1174 = vadd.f32 0.0, %v1173
        %v1175 = vpop.f32.mrb[0].mxu0
        %v1176 = vadd.f32 0.0, %v1175
        %1177 = vmatprep.mubr.bf16.mxu0 0
        %1178 = vmatmul.mubr.bf16.gmra.mrb[0].mxu0 %v1001
        %v1179 = vpop.f32.mrb[0].mxu0
        %v1180 = vadd.f32 0.0, %v1179
        %v1181 = vpop.f32.mrb[0].mxu0
        %v1182 = vadd.f32 0.0, %v1181
        %v1183 = vpop.f32.mrb[0].mxu0
        %v1184 = vadd.f32 0.0, %v1183
        %v1185 = vpop.f32.mrb[0].mxu0
        %v1186 = vadd.f32 0.0, %v1185
        %1187 = vmatprep.mubr.bf16.mxu0 0
        %1188 = vmatmul.mubr.bf16.gmra.mrb[0].mxu0 %v1004
        %v1189 = vpop.f32.mrb[0].mxu0
        %v1190 = vadd.f32 0.0, %v1189
        %v1191 = vpop.f32.mrb[0].mxu0
        %v1192 = vadd.f32 0.0, %v1191
        %v1193 = vpop.f32.mrb[0].mxu0
        %v1194 = vadd.f32 0.0, %v1193
        %v1195 = vpop.f32.mrb[0].mxu0
        %v1196 = vadd.f32 0.0, %v1195
        %1197 = vmatprep.mubr.bf16.mxu0 0
        %1198 = vmatmul.mubr.bf16.gmra.mrb[0].mxu0 %v1007
        %v1199 = vpop.f32.mrb[0].mxu0
        %v1200 = vadd.f32 0.0, %v1199
        %v1201 = vpop.f32.mrb[0].mxu0
        %v1202 = vadd.f32 0.0, %v1201
        %v1203 = vpop.f32.mrb[0].mxu0
        %v1204 = vadd.f32 0.0, %v1203
        %v1205 = vpop.f32.mrb[0].mxu0
        %v1206 = vadd.f32 0.0, %v1205
        %1207 = vmatprep.mubr.bf16.mxu0 0
        %1208 = vmatmul.mubr.bf16.gmra.mrb[0].mxu0 %v1010
        %v1209 = vpop.f32.mrb[0].mxu0
        %v1210 = vadd.f32 0.0, %v1209
        %v1211 = vpop.f32.mrb[0].mxu0
        %v1212 = vadd.f32 0.0, %v1211
        %v1213 = vpop.f32.mrb[0].mxu0
        %v1214 = vadd.f32 0.0, %v1213
        %v1215 = vpop.f32.mrb[0].mxu0
        %v1216 = vadd.f32 0.0, %v1215
        %1217 = vmatprep.mubr.bf16.mxu0 0
        %1218 = vmatmul.mubr.bf16.gmra.mrb[0].mxu0 %v1013
        %v1219 = vpop.f32.mrb[0].mxu0
        %v1220 = vadd.f32 0.0, %v1219
        %v1221 = vpop.f32.mrb[0].mxu0
        %v1222 = vadd.f32 0.0, %v1221
        %v1223 = vpop.f32.mrb[0].mxu0
        %v1224 = vadd.f32 0.0, %v1223
        %v1225 = vpop.f32.mrb[0].mxu0
        %v1226 = vadd.f32 0.0, %v1225
        %1227 = vmatprep.mubr.bf16.mxu0 0
        %1228 = vmatmul.mubr.bf16.gmra.mrb[0].mxu0 %v1016
        %v1229 = vpop.f32.mrb[0].mxu0
        %v1230 = vadd.f32 0.0, %v1229
        %v1231 = vpop.f32.mrb[0].mxu0
        %v1232 = vadd.f32 0.0, %v1231
        %v1233 = vpop.f32.mrb[0].mxu0
        %v1234 = vadd.f32 0.0, %v1233
        %v1235 = vpop.f32.mrb[0].mxu0
        %v1236 = vadd.f32 0.0, %v1235
        %1237 = vmatprep.mubr.bf16.mxu0 0
        %1238 = vmatmul.mubr.bf16.gmra.mrb[0].mxu0 %v1019
        %v1239 = vpop.f32.mrb[0].mxu0
        %v1240 = vadd.f32 0.0, %v1239
        %v1241 = vpop.f32.mrb[0].mxu0
        %v1242 = vadd.f32 0.0, %v1241
        %v1243 = vpop.f32.mrb[0].mxu0
        %v1244 = vadd.f32 0.0, %v1243
        %v1245 = vpop.f32.mrb[0].mxu0
        %v1246 = vadd.f32 0.0, %v1245
        %1247 = vmatprep.mubr.bf16.mxu0 0
        %1248 = vmatmul.mubr.bf16.gmra.mrb[0].mxu0 %v1022
        %v1249 = vpop.f32.mrb[0].mxu0
        %v1250 = vadd.f32 0.0, %v1249
        %v1251 = vpop.f32.mrb[0].mxu0
        %v1252 = vadd.f32 0.0, %v1251
        %v1253 = vpop.f32.mrb[0].mxu0
        %v1254 = vadd.f32 0.0, %v1253
        %v1255 = vpop.f32.mrb[0].mxu0
        %v1256 = vadd.f32 0.0, %v1255
        %1257 = vmatprep.mubr.bf16.mxu0 0
        %1258 = vmatmul.mubr.bf16.gmra.mrb[0].mxu0 %v1025
        %v1259 = vpop.f32.mrb[0].mxu0
        %v1260 = vadd.f32 0.0, %v1259
        %v1261 = vpop.f32.mrb[0].mxu0
        %v1262 = vadd.f32 0.0, %v1261
        %v1263 = vpop.f32.mrb[0].mxu0
        %v1264 = vadd.f32 0.0, %v1263
        %v1265 = vpop.f32.mrb[0].mxu0
        %v1266 = vadd.f32 0.0, %v1265
        %1267 = vdwg.mxu0
        %v1269 = vsel %vm978, %v546, 0
        %v1272 = vsel %vm978, %v547, 0
        %v1275 = vsel %vm978, %v548, 0
        %v1278 = vsel %vm978, %v549, 0
        %v1281 = vsel %vm978, %v550, 0
        %v1284 = vsel %vm978, %v551, 0
        %v1287 = vsel %vm978, %v552, 0
        %v1290 = vsel %vm978, %v553, 0
        %v1293 = vsel %vm978, %v554, 0
        %v1296 = vsel %vm978, %v555, 0
        %v1299 = vsel %vm978, %v556, 0
        %v1302 = vsel %vm978, %v557, 0
        %v1305 = vsel %vm978, %v558, 0
        %v1308 = vsel %vm978, %v559, 0
        %v1311 = vsel %vm978, %v560, 0
        %v1314 = vsel %vm978, %v561, 0
        %v1317 = vsel %vm978, %v738, 0
        %v1320 = vsel %vm978, %v739, 0
        %v1323 = vsel %vm978, %v740, 0
        %v1326 = vsel %vm978, %v741, 0
        %v1329 = vsel %vm978, %v742, 0
        %v1332 = vsel %vm978, %v743, 0
        %v1335 = vsel %vm978, %v744, 0
        %v1338 = vsel %vm978, %v745, 0
        %v1341 = vsel %vm978, %v746, 0
        %v1344 = vsel %vm978, %v747, 0
        %v1347 = vsel %vm978, %v748, 0
        %v1350 = vsel %vm978, %v749, 0
        %v1353 = vsel %vm978, %v750, 0
        %v1356 = vsel %vm978, %v751, 0
        %v1359 = vsel %vm978, %v752, 0
        %v1362 = vsel %vm978, %v753, 0
        %1364 = vmatprep.subr.bf16.mxu0 0
        %1365 = vmatpush1.bf16.xpose.msra.mxu0 %v1317
        %1366 = vmatprep.subr.bf16.mxu0 0
        %1367 = vmatpush1.bf16.xpose.msra.mxu0 %v1320
        %1368 = vmatprep.subr.bf16.mxu0 0
        %1369 = vmatpush1.bf16.xpose.msra.mxu0 %v1323
        %1370 = vmatprep.subr.bf16.mxu0 0
        %1371 = vmatpush1.bf16.xpose.msra.mxu0 %v1326
        %1372 = vmatprep.subr.bf16.mxu0 0
        %1373 = vmatpush1.bf16.xpose.msra.mxu0 %v1329
        %1374 = vmatprep.subr.bf16.mxu0 0
        %1375 = vmatpush1.bf16.xpose.msra.mxu0 %v1332
        %1376 = vmatprep.subr.bf16.mxu0 0
        %1377 = vmatpush1.bf16.xpose.msra.mxu0 %v1335
        %1378 = vmatprep.subr.bf16.mxu0 0
        %1379 = vmatpush1.bf16.xpose.msra.mxu0 %v1338
        %1380 = vmatprep.subr.bf16.mxu0 0
        %1381 = vmatpush1.bf16.xpose.msra.mxu0 %v1341
        %1382 = vmatprep.subr.bf16.mxu0 0
        %1383 = vmatpush1.bf16.xpose.msra.mxu0 %v1344
        %1384 = vmatprep.subr.bf16.mxu0 0
        %1385 = vmatpush1.bf16.xpose.msra.mxu0 %v1347
        %1386 = vmatprep.subr.bf16.mxu0 0
        %1387 = vmatpush1.bf16.xpose.msra.mxu0 %v1350
        %1388 = vmatprep.subr.bf16.mxu0 0
        %1389 = vmatpush1.bf16.xpose.msra.mxu0 %v1353
        %1390 = vmatprep.subr.bf16.mxu0 0
        %1391 = vmatpush1.bf16.xpose.msra.mxu0 %v1356
        %1392 = vmatprep.subr.bf16.mxu0 0
        %1393 = vmatpush1.bf16.xpose.msra.mxu0 %v1359
        %1394 = vmatprep.subr.bf16.mxu0 0
        %1395 = vmatpush1.bf16.xpose.msra.mxu0 %v1362
        %1396 = vmatprep.mubr.bf16.mxu0 0
        %1397 = vmatmul.mubr.bf16.gmra.mrb[0].mxu0 %v1269
        %v1398 = vpop.f32.mrb[0].mxu0
        %v1399 = vadd.f32 0.0, %v1398
        %v1400 = vpop.f32.mrb[0].mxu0
        %v1401 = vadd.f32 0.0, %v1400
        %v1402 = vpop.f32.mrb[0].mxu0
        %v1403 = vadd.f32 0.0, %v1402
        %v1404 = vpop.f32.mrb[0].mxu0
        %v1405 = vadd.f32 0.0, %v1404
        %1406 = vmatprep.mubr.bf16.mxu0 0
        %1407 = vmatmul.mubr.bf16.gmra.mrb[0].mxu0 %v1272
        %v1408 = vpop.f32.mrb[0].mxu0
        %v1409 = vadd.f32 0.0, %v1408
        %v1410 = vpop.f32.mrb[0].mxu0
        %v1411 = vadd.f32 0.0, %v1410
        %v1412 = vpop.f32.mrb[0].mxu0
        %v1413 = vadd.f32 0.0, %v1412
        %v1414 = vpop.f32.mrb[0].mxu0
        %v1415 = vadd.f32 0.0, %v1414
        %1416 = vmatprep.mubr.bf16.mxu0 0
        %1417 = vmatmul.mubr.bf16.gmra.mrb[0].mxu0 %v1275
        %v1418 = vpop.f32.mrb[0].mxu0
        %v1419 = vadd.f32 0.0, %v1418
        %v1420 = vpop.f32.mrb[0].mxu0
        %v1421 = vadd.f32 0.0, %v1420
        %v1422 = vpop.f32.mrb[0].mxu0
        %v1423 = vadd.f32 0.0, %v1422
        %v1424 = vpop.f32.mrb[0].mxu0
        %v1425 = vadd.f32 0.0, %v1424
        %1426 = vmatprep.mubr.bf16.mxu0 0
        %1427 = vmatmul.mubr.bf16.gmra.mrb[0].mxu0 %v1278
        %v1428 = vpop.f32.mrb[0].mxu0
        %v1429 = vadd.f32 0.0, %v1428
        %v1430 = vpop.f32.mrb[0].mxu0
        %v1431 = vadd.f32 0.0, %v1430
        %v1432 = vpop.f32.mrb[0].mxu0
        %v1433 = vadd.f32 0.0, %v1432
        %v1434 = vpop.f32.mrb[0].mxu0
        %v1435 = vadd.f32 0.0, %v1434
        %1436 = vmatprep.mubr.bf16.mxu0 0
        %1437 = vmatmul.mubr.bf16.gmra.mrb[0].mxu0 %v1281
        %v1438 = vpop.f32.mrb[0].mxu0
        %v1439 = vadd.f32 0.0, %v1438
        %v1440 = vpop.f32.mrb[0].mxu0
        %v1441 = vadd.f32 0.0, %v1440
        %v1442 = vpop.f32.mrb[0].mxu0
        %v1443 = vadd.f32 0.0, %v1442
        %v1444 = vpop.f32.mrb[0].mxu0
        %v1445 = vadd.f32 0.0, %v1444
        %1446 = vmatprep.mubr.bf16.mxu0 0
        %1447 = vmatmul.mubr.bf16.gmra.mrb[0].mxu0 %v1284
        %v1448 = vpop.f32.mrb[0].mxu0
        %v1449 = vadd.f32 0.0, %v1448
        %v1450 = vpop.f32.mrb[0].mxu0
        %v1451 = vadd.f32 0.0, %v1450
        %v1452 = vpop.f32.mrb[0].mxu0
        %v1453 = vadd.f32 0.0, %v1452
        %v1454 = vpop.f32.mrb[0].mxu0
        %v1455 = vadd.f32 0.0, %v1454
        %1456 = vmatprep.mubr.bf16.mxu0 0
        %1457 = vmatmul.mubr.bf16.gmra.mrb[0].mxu0 %v1287
        %v1458 = vpop.f32.mrb[0].mxu0
        %v1459 = vadd.f32 0.0, %v1458
        %v1460 = vpop.f32.mrb[0].mxu0
        %v1461 = vadd.f32 0.0, %v1460
        %v1462 = vpop.f32.mrb[0].mxu0
        %v1463 = vadd.f32 0.0, %v1462
        %v1464 = vpop.f32.mrb[0].mxu0
        %v1465 = vadd.f32 0.0, %v1464
        %1466 = vmatprep.mubr.bf16.mxu0 0
        %1467 = vmatmul.mubr.bf16.gmra.mrb[0].mxu0 %v1290
        %v1468 = vpop.f32.mrb[0].mxu0
        %v1469 = vadd.f32 0.0, %v1468
        %v1470 = vpop.f32.mrb[0].mxu0
        %v1471 = vadd.f32 0.0, %v1470
        %v1472 = vpop.f32.mrb[0].mxu0
        %v1473 = vadd.f32 0.0, %v1472
        %v1474 = vpop.f32.mrb[0].mxu0
        %v1475 = vadd.f32 0.0, %v1474
        %1476 = vmatprep.mubr.bf16.mxu0 0
        %1477 = vmatmul.mubr.bf16.gmra.mrb[0].mxu0 %v1293
        %v1478 = vpop.f32.mrb[0].mxu0
        %v1479 = vadd.f32 0.0, %v1478
        %v1480 = vpop.f32.mrb[0].mxu0
        %v1481 = vadd.f32 0.0, %v1480
        %v1482 = vpop.f32.mrb[0].mxu0
        %v1483 = vadd.f32 0.0, %v1482
        %v1484 = vpop.f32.mrb[0].mxu0
        %v1485 = vadd.f32 0.0, %v1484
        %1486 = vmatprep.mubr.bf16.mxu0 0
        %1487 = vmatmul.mubr.bf16.gmra.mrb[0].mxu0 %v1296
        %v1488 = vpop.f32.mrb[0].mxu0
        %v1489 = vadd.f32 0.0, %v1488
        %v1490 = vpop.f32.mrb[0].mxu0
        %v1491 = vadd.f32 0.0, %v1490
        %v1492 = vpop.f32.mrb[0].mxu0
        %v1493 = vadd.f32 0.0, %v1492
        %v1494 = vpop.f32.mrb[0].mxu0
        %v1495 = vadd.f32 0.0, %v1494
        %1496 = vmatprep.mubr.bf16.mxu0 0
        %1497 = vmatmul.mubr.bf16.gmra.mrb[0].mxu0 %v1299
        %v1498 = vpop.f32.mrb[0].mxu0
        %v1499 = vadd.f32 0.0, %v1498
        %v1500 = vpop.f32.mrb[0].mxu0
        %v1501 = vadd.f32 0.0, %v1500
        %v1502 = vpop.f32.mrb[0].mxu0
        %v1503 = vadd.f32 0.0, %v1502
        %v1504 = vpop.f32.mrb[0].mxu0
        %v1505 = vadd.f32 0.0, %v1504
        %1506 = vmatprep.mubr.bf16.mxu0 0
        %1507 = vmatmul.mubr.bf16.gmra.mrb[0].mxu0 %v1302
        %v1508 = vpop.f32.mrb[0].mxu0
        %v1509 = vadd.f32 0.0, %v1508
        %v1510 = vpop.f32.mrb[0].mxu0
        %v1511 = vadd.f32 0.0, %v1510
        %v1512 = vpop.f32.mrb[0].mxu0
        %v1513 = vadd.f32 0.0, %v1512
        %v1514 = vpop.f32.mrb[0].mxu0
        %v1515 = vadd.f32 0.0, %v1514
        %1516 = vmatprep.mubr.bf16.mxu0 0
        %1517 = vmatmul.mubr.bf16.gmra.mrb[0].mxu0 %v1305
        %v1518 = vpop.f32.mrb[0].mxu0
        %v1519 = vadd.f32 0.0, %v1518
        %v1520 = vpop.f32.mrb[0].mxu0
        %v1521 = vadd.f32 0.0, %v1520
        %v1522 = vpop.f32.mrb[0].mxu0
        %v1523 = vadd.f32 0.0, %v1522
        %v1524 = vpop.f32.mrb[0].mxu0
        %v1525 = vadd.f32 0.0, %v1524
        %1526 = vmatprep.mubr.bf16.mxu0 0
        %1527 = vmatmul.mubr.bf16.gmra.mrb[0].mxu0 %v1308
        %v1528 = vpop.f32.mrb[0].mxu0
        %v1529 = vadd.f32 0.0, %v1528
        %v1530 = vpop.f32.mrb[0].mxu0
        %v1531 = vadd.f32 0.0, %v1530
        %v1532 = vpop.f32.mrb[0].mxu0
        %v1533 = vadd.f32 0.0, %v1532
        %v1534 = vpop.f32.mrb[0].mxu0
        %v1535 = vadd.f32 0.0, %v1534
        %1536 = vmatprep.mubr.bf16.mxu0 0
        %1537 = vmatmul.mubr.bf16.gmra.mrb[0].mxu0 %v1311
        %v1538 = vpop.f32.mrb[0].mxu0
        %v1539 = vadd.f32 0.0, %v1538
        %v1540 = vpop.f32.mrb[0].mxu0
        %v1541 = vadd.f32 0.0, %v1540
        %v1542 = vpop.f32.mrb[0].mxu0
        %v1543 = vadd.f32 0.0, %v1542
        %v1544 = vpop.f32.mrb[0].mxu0
        %v1545 = vadd.f32 0.0, %v1544
        %1546 = vmatprep.mubr.bf16.mxu0 0
        %1547 = vmatmul.mubr.bf16.gmra.mrb[0].mxu0 %v1314
        %v1548 = vpop.f32.mrb[0].mxu0
        %v1549 = vadd.f32 0.0, %v1548
        %v1550 = vpop.f32.mrb[0].mxu0
        %v1551 = vadd.f32 0.0, %v1550
        %v1552 = vpop.f32.mrb[0].mxu0
        %v1553 = vadd.f32 0.0, %v1552
        %v1554 = vpop.f32.mrb[0].mxu0
        %v1555 = vadd.f32 0.0, %v1554
        %1556 = vdwg.mxu0
        %v1558 = vsel %vm978, %v562, 0
        %v1561 = vsel %vm978, %v563, 0
        %v1564 = vsel %vm978, %v564, 0
        %v1567 = vsel %vm978, %v565, 0
        %v1570 = vsel %vm978, %v566, 0
        %v1573 = vsel %vm978, %v567, 0
        %v1576 = vsel %vm978, %v568, 0
        %v1579 = vsel %vm978, %v569, 0
        %v1582 = vsel %vm978, %v570, 0
        %v1585 = vsel %vm978, %v571, 0
        %v1588 = vsel %vm978, %v572, 0
        %v1591 = vsel %vm978, %v573, 0
        %v1594 = vsel %vm978, %v574, 0
        %v1597 = vsel %vm978, %v575, 0
        %v1600 = vsel %vm978, %v576, 0
        %v1603 = vsel %vm978, %v577, 0
        %v1606 = vsel %vm978, %v754, 0
        %v1609 = vsel %vm978, %v755, 0
        %v1612 = vsel %vm978, %v756, 0
        %v1615 = vsel %vm978, %v757, 0
        %v1618 = vsel %vm978, %v758, 0
        %v1621 = vsel %vm978, %v759, 0
        %v1624 = vsel %vm978, %v760, 0
        %v1627 = vsel %vm978, %v761, 0
        %v1630 = vsel %vm978, %v762, 0
        %v1633 = vsel %vm978, %v763, 0
        %v1636 = vsel %vm978, %v764, 0
        %v1639 = vsel %vm978, %v765, 0
        %v1642 = vsel %vm978, %v766, 0
        %v1645 = vsel %vm978, %v767, 0
        %v1648 = vsel %vm978, %v768, 0
        %v1651 = vsel %vm978, %v769, 0
        %1653 = vmatprep.subr.bf16.mxu0 0
        %1654 = vmatpush1.bf16.xpose.msra.mxu0 %v1606
        %1655 = vmatprep.subr.bf16.mxu0 0
        %1656 = vmatpush1.bf16.xpose.msra.mxu0 %v1609
        %1657 = vmatprep.subr.bf16.mxu0 0
        %1658 = vmatpush1.bf16.xpose.msra.mxu0 %v1612
        %1659 = vmatprep.subr.bf16.mxu0 0
        %1660 = vmatpush1.bf16.xpose.msra.mxu0 %v1615
        %1661 = vmatprep.subr.bf16.mxu0 0
        %1662 = vmatpush1.bf16.xpose.msra.mxu0 %v1618
        %1663 = vmatprep.subr.bf16.mxu0 0
        %1664 = vmatpush1.bf16.xpose.msra.mxu0 %v1621
        %1665 = vmatprep.subr.bf16.mxu0 0
        %1666 = vmatpush1.bf16.xpose.msra.mxu0 %v1624
        %1667 = vmatprep.subr.bf16.mxu0 0
        %1668 = vmatpush1.bf16.xpose.msra.mxu0 %v1627
        %1669 = vmatprep.subr.bf16.mxu0 0
        %1670 = vmatpush1.bf16.xpose.msra.mxu0 %v1630
        %1671 = vmatprep.subr.bf16.mxu0 0
        %1672 = vmatpush1.bf16.xpose.msra.mxu0 %v1633
        %1673 = vmatprep.subr.bf16.mxu0 0
        %1674 = vmatpush1.bf16.xpose.msra.mxu0 %v1636
        %1675 = vmatprep.subr.bf16.mxu0 0
        %1676 = vmatpush1.bf16.xpose.msra.mxu0 %v1639
        %1677 = vmatprep.subr.bf16.mxu0 0
        %1678 = vmatpush1.bf16.xpose.msra.mxu0 %v1642
        %1679 = vmatprep.subr.bf16.mxu0 0
        %1680 = vmatpush1.bf16.xpose.msra.mxu0 %v1645
        %1681 = vmatprep.subr.bf16.mxu0 0
        %1682 = vmatpush1.bf16.xpose.msra.mxu0 %v1648
        %1683 = vmatprep.subr.bf16.mxu0 0
        %1684 = vmatpush1.bf16.xpose.msra.mxu0 %v1651
        %1685 = vmatprep.mubr.bf16.mxu0 0
        %1686 = vmatmul.mubr.bf16.gmra.mrb[0].mxu0 %v1558
        %v1687 = vpop.f32.mrb[0].mxu0
        %v1688 = vadd.f32 0.0, %v1687
        %v1689 = vpop.f32.mrb[0].mxu0
        %v1690 = vadd.f32 0.0, %v1689
        %v1691 = vpop.f32.mrb[0].mxu0
        %v1692 = vadd.f32 0.0, %v1691
        %v1693 = vpop.f32.mrb[0].mxu0
        %v1694 = vadd.f32 0.0, %v1693
        %1695 = vmatprep.mubr.bf16.mxu0 0
        %1696 = vmatmul.mubr.bf16.gmra.mrb[0].mxu0 %v1561
        %v1697 = vpop.f32.mrb[0].mxu0
        %v1698 = vadd.f32 0.0, %v1697
        %v1699 = vpop.f32.mrb[0].mxu0
        %v1700 = vadd.f32 0.0, %v1699
        %v1701 = vpop.f32.mrb[0].mxu0
        %v1702 = vadd.f32 0.0, %v1701
        %v1703 = vpop.f32.mrb[0].mxu0
        %v1704 = vadd.f32 0.0, %v1703
        %1705 = vmatprep.mubr.bf16.mxu0 0
        %1706 = vmatmul.mubr.bf16.gmra.mrb[0].mxu0 %v1564
        %v1707 = vpop.f32.mrb[0].mxu0
        %v1708 = vadd.f32 0.0, %v1707
        %v1709 = vpop.f32.mrb[0].mxu0
        %v1710 = vadd.f32 0.0, %v1709
        %v1711 = vpop.f32.mrb[0].mxu0
        %v1712 = vadd.f32 0.0, %v1711
        %v1713 = vpop.f32.mrb[0].mxu0
        %v1714 = vadd.f32 0.0, %v1713
        %1715 = vmatprep.mubr.bf16.mxu0 0
        %1716 = vmatmul.mubr.bf16.gmra.mrb[0].mxu0 %v1567
        %v1717 = vpop.f32.mrb[0].mxu0
        %v1718 = vadd.f32 0.0, %v1717
        %v1719 = vpop.f32.mrb[0].mxu0
        %v1720 = vadd.f32 0.0, %v1719
        %v1721 = vpop.f32.mrb[0].mxu0
        %v1722 = vadd.f32 0.0, %v1721
        %v1723 = vpop.f32.mrb[0].mxu0
        %v1724 = vadd.f32 0.0, %v1723
        %1725 = vmatprep.mubr.bf16.mxu0 0
        %1726 = vmatmul.mubr.bf16.gmra.mrb[0].mxu0 %v1570
        %v1727 = vpop.f32.mrb[0].mxu0
        %v1728 = vadd.f32 0.0, %v1727
        %v1729 = vpop.f32.mrb[0].mxu0
        %v1730 = vadd.f32 0.0, %v1729
        %v1731 = vpop.f32.mrb[0].mxu0
        %v1732 = vadd.f32 0.0, %v1731
        %v1733 = vpop.f32.mrb[0].mxu0
        %v1734 = vadd.f32 0.0, %v1733
        %1735 = vmatprep.mubr.bf16.mxu0 0
        %1736 = vmatmul.mubr.bf16.gmra.mrb[0].mxu0 %v1573
        %v1737 = vpop.f32.mrb[0].mxu0
        %v1738 = vadd.f32 0.0, %v1737
        %v1739 = vpop.f32.mrb[0].mxu0
        %v1740 = vadd.f32 0.0, %v1739
        %v1741 = vpop.f32.mrb[0].mxu0
        %v1742 = vadd.f32 0.0, %v1741
        %v1743 = vpop.f32.mrb[0].mxu0
        %v1744 = vadd.f32 0.0, %v1743
        %1745 = vmatprep.mubr.bf16.mxu0 0
        %1746 = vmatmul.mubr.bf16.gmra.mrb[0].mxu0 %v1576
        %v1747 = vpop.f32.mrb[0].mxu0
        %v1748 = vadd.f32 0.0, %v1747
        %v1749 = vpop.f32.mrb[0].mxu0
        %v1750 = vadd.f32 0.0, %v1749
        %v1751 = vpop.f32.mrb[0].mxu0
        %v1752 = vadd.f32 0.0, %v1751
        %v1753 = vpop.f32.mrb[0].mxu0
        %v1754 = vadd.f32 0.0, %v1753
        %1755 = vmatprep.mubr.bf16.mxu0 0
        %1756 = vmatmul.mubr.bf16.gmra.mrb[0].mxu0 %v1579
        %v1757 = vpop.f32.mrb[0].mxu0
        %v1758 = vadd.f32 0.0, %v1757
        %v1759 = vpop.f32.mrb[0].mxu0
        %v1760 = vadd.f32 0.0, %v1759
        %v1761 = vpop.f32.mrb[0].mxu0
        %v1762 = vadd.f32 0.0, %v1761
        %v1763 = vpop.f32.mrb[0].mxu0
        %v1764 = vadd.f32 0.0, %v1763
        %1765 = vmatprep.mubr.bf16.mxu0 0
        %1766 = vmatmul.mubr.bf16.gmra.mrb[0].mxu0 %v1582
        %v1767 = vpop.f32.mrb[0].mxu0
        %v1768 = vadd.f32 0.0, %v1767
        %v1769 = vpop.f32.mrb[0].mxu0
        %v1770 = vadd.f32 0.0, %v1769
        %v1771 = vpop.f32.mrb[0].mxu0
        %v1772 = vadd.f32 0.0, %v1771
        %v1773 = vpop.f32.mrb[0].mxu0
        %v1774 = vadd.f32 0.0, %v1773
        %1775 = vmatprep.mubr.bf16.mxu0 0
        %1776 = vmatmul.mubr.bf16.gmra.mrb[0].mxu0 %v1585
        %v1777 = vpop.f32.mrb[0].mxu0
        %v1778 = vadd.f32 0.0, %v1777
        %v1779 = vpop.f32.mrb[0].mxu0
        %v1780 = vadd.f32 0.0, %v1779
        %v1781 = vpop.f32.mrb[0].mxu0
        %v1782 = vadd.f32 0.0, %v1781
        %v1783 = vpop.f32.mrb[0].mxu0
        %v1784 = vadd.f32 0.0, %v1783
        %1785 = vmatprep.mubr.bf16.mxu0 0
        %1786 = vmatmul.mubr.bf16.gmra.mrb[0].mxu0 %v1588
        %v1787 = vpop.f32.mrb[0].mxu0
        %v1788 = vadd.f32 0.0, %v1787
        %v1789 = vpop.f32.mrb[0].mxu0
        %v1790 = vadd.f32 0.0, %v1789
        %v1791 = vpop.f32.mrb[0].mxu0
        %v1792 = vadd.f32 0.0, %v1791
        %v1793 = vpop.f32.mrb[0].mxu0
        %v1794 = vadd.f32 0.0, %v1793
        %1795 = vmatprep.mubr.bf16.mxu0 0
        %1796 = vmatmul.mubr.bf16.gmra.mrb[0].mxu0 %v1591
        %v1797 = vpop.f32.mrb[0].mxu0
        %v1798 = vadd.f32 0.0, %v1797
        %v1799 = vpop.f32.mrb[0].mxu0
        %v1800 = vadd.f32 0.0, %v1799
        %v1801 = vpop.f32.mrb[0].mxu0
        %v1802 = vadd.f32 0.0, %v1801
        %v1803 = vpop.f32.mrb[0].mxu0
        %v1804 = vadd.f32 0.0, %v1803
        %1805 = vmatprep.mubr.bf16.mxu0 0
        %1806 = vmatmul.mubr.bf16.gmra.mrb[0].mxu0 %v1594
        %v1807 = vpop.f32.mrb[0].mxu0
        %v1808 = vadd.f32 0.0, %v1807
        %v1809 = vpop.f32.mrb[0].mxu0
        %v1810 = vadd.f32 0.0, %v1809
        %v1811 = vpop.f32.mrb[0].mxu0
        %v1812 = vadd.f32 0.0, %v1811
        %v1813 = vpop.f32.mrb[0].mxu0
        %v1814 = vadd.f32 0.0, %v1813
        %1815 = vmatprep.mubr.bf16.mxu0 0
        %1816 = vmatmul.mubr.bf16.gmra.mrb[0].mxu0 %v1597
        %v1817 = vpop.f32.mrb[0].mxu0
        %v1818 = vadd.f32 0.0, %v1817
        %v1819 = vpop.f32.mrb[0].mxu0
        %v1820 = vadd.f32 0.0, %v1819
        %v1821 = vpop.f32.mrb[0].mxu0
        %v1822 = vadd.f32 0.0, %v1821
        %v1823 = vpop.f32.mrb[0].mxu0
        %v1824 = vadd.f32 0.0, %v1823
        %1825 = vmatprep.mubr.bf16.mxu0 0
        %1826 = vmatmul.mubr.bf16.gmra.mrb[0].mxu0 %v1600
        %v1827 = vpop.f32.mrb[0].mxu0
        %v1828 = vadd.f32 0.0, %v1827
        %v1829 = vpop.f32.mrb[0].mxu0
        %v1830 = vadd.f32 0.0, %v1829
        %v1831 = vpop.f32.mrb[0].mxu0
        %v1832 = vadd.f32 0.0, %v1831
        %v1833 = vpop.f32.mrb[0].mxu0
        %v1834 = vadd.f32 0.0, %v1833
        %1835 = vmatprep.mubr.bf16.mxu0 0
        %1836 = vmatmul.mubr.bf16.gmra.mrb[0].mxu0 %v1603
        %v1837 = vpop.f32.mrb[0].mxu0
        %v1838 = vadd.f32 0.0, %v1837
        %v1839 = vpop.f32.mrb[0].mxu0
        %v1840 = vadd.f32 0.0, %v1839
        %v1841 = vpop.f32.mrb[0].mxu0
        %v1842 = vadd.f32 0.0, %v1841
        %v1843 = vpop.f32.mrb[0].mxu0
        %v1844 = vadd.f32 0.0, %v1843
        %1845 = vdwg.mxu0
        %v1847 = vsel %vm978, %v578, 0
        %v1850 = vsel %vm978, %v579, 0
        %v1853 = vsel %vm978, %v580, 0
        %v1856 = vsel %vm978, %v581, 0
        %v1859 = vsel %vm978, %v582, 0
        %v1862 = vsel %vm978, %v583, 0
        %v1865 = vsel %vm978, %v584, 0
        %v1868 = vsel %vm978, %v585, 0
        %v1871 = vsel %vm978, %v586, 0
        %v1874 = vsel %vm978, %v587, 0
        %v1877 = vsel %vm978, %v588, 0
        %v1880 = vsel %vm978, %v589, 0
        %v1883 = vsel %vm978, %v590, 0
        %v1886 = vsel %vm978, %v591, 0
        %v1889 = vsel %vm978, %v592, 0
        %v1892 = vsel %vm978, %v593, 0
        %v1895 = vsel %vm978, %v770, 0
        %v1898 = vsel %vm978, %v771, 0
        %v1901 = vsel %vm978, %v772, 0
        %v1904 = vsel %vm978, %v773, 0
        %v1907 = vsel %vm978, %v774, 0
        %v1910 = vsel %vm978, %v775, 0
        %v1913 = vsel %vm978, %v776, 0
        %v1916 = vsel %vm978, %v777, 0
        %v1919 = vsel %vm978, %v778, 0
        %v1922 = vsel %vm978, %v779, 0
        %v1925 = vsel %vm978, %v780, 0
        %v1928 = vsel %vm978, %v781, 0
        %v1931 = vsel %vm978, %v782, 0
        %v1934 = vsel %vm978, %v783, 0
        %v1937 = vsel %vm978, %v784, 0
        %v1940 = vsel %vm978, %v785, 0
        %1942 = vmatprep.subr.bf16.mxu0 0
        %1943 = vmatpush1.bf16.xpose.msra.mxu0 %v1895
        %1944 = vmatprep.subr.bf16.mxu0 0
        %1945 = vmatpush1.bf16.xpose.msra.mxu0 %v1898
        %1946 = vmatprep.subr.bf16.mxu0 0
        %1947 = vmatpush1.bf16.xpose.msra.mxu0 %v1901
        %1948 = vmatprep.subr.bf16.mxu0 0
        %1949 = vmatpush1.bf16.xpose.msra.mxu0 %v1904
        %1950 = vmatprep.subr.bf16.mxu0 0
        %1951 = vmatpush1.bf16.xpose.msra.mxu0 %v1907
        %1952 = vmatprep.subr.bf16.mxu0 0
        %1953 = vmatpush1.bf16.xpose.msra.mxu0 %v1910
        %1954 = vmatprep.subr.bf16.mxu0 0
        %1955 = vmatpush1.bf16.xpose.msra.mxu0 %v1913
        %1956 = vmatprep.subr.bf16.mxu0 0
        %1957 = vmatpush1.bf16.xpose.msra.mxu0 %v1916
        %1958 = vmatprep.subr.bf16.mxu0 0
        %1959 = vmatpush1.bf16.xpose.msra.mxu0 %v1919
        %1960 = vmatprep.subr.bf16.mxu0 0
        %1961 = vmatpush1.bf16.xpose.msra.mxu0 %v1922
        %1962 = vmatprep.subr.bf16.mxu0 0
        %1963 = vmatpush1.bf16.xpose.msra.mxu0 %v1925
        %1964 = vmatprep.subr.bf16.mxu0 0
        %1965 = vmatpush1.bf16.xpose.msra.mxu0 %v1928
        %1966 = vmatprep.subr.bf16.mxu0 0
        %1967 = vmatpush1.bf16.xpose.msra.mxu0 %v1931
        %1968 = vmatprep.subr.bf16.mxu0 0
        %1969 = vmatpush1.bf16.xpose.msra.mxu0 %v1934
        %1970 = vmatprep.subr.bf16.mxu0 0
        %1971 = vmatpush1.bf16.xpose.msra.mxu0 %v1937
        %1972 = vmatprep.subr.bf16.mxu0 0
        %1973 = vmatpush1.bf16.xpose.msra.mxu0 %v1940
        %1974 = vmatprep.mubr.bf16.mxu0 0
        %1975 = vmatmul.mubr.bf16.gmra.mrb[0].mxu0 %v1847
        %v1976 = vpop.f32.mrb[0].mxu0
        %v1977 = vadd.f32 0.0, %v1976
        %v1978 = vpop.f32.mrb[0].mxu0
        %v1979 = vadd.f32 0.0, %v1978
        %v1980 = vpop.f32.mrb[0].mxu0
        %v1981 = vadd.f32 0.0, %v1980
        %v1982 = vpop.f32.mrb[0].mxu0
        %v1983 = vadd.f32 0.0, %v1982
        %1984 = vmatprep.mubr.bf16.mxu0 0
        %1985 = vmatmul.mubr.bf16.gmra.mrb[0].mxu0 %v1850
        %v1986 = vpop.f32.mrb[0].mxu0
        %v1987 = vadd.f32 0.0, %v1986
        %v1988 = vpop.f32.mrb[0].mxu0
        %v1989 = vadd.f32 0.0, %v1988
        %v1990 = vpop.f32.mrb[0].mxu0
        %v1991 = vadd.f32 0.0, %v1990
        %v1992 = vpop.f32.mrb[0].mxu0
        %v1993 = vadd.f32 0.0, %v1992
        %1994 = vmatprep.mubr.bf16.mxu0 0
        %1995 = vmatmul.mubr.bf16.gmra.mrb[0].mxu0 %v1853
        %v1996 = vpop.f32.mrb[0].mxu0
        %v1997 = vadd.f32 0.0, %v1996
        %v1998 = vpop.f32.mrb[0].mxu0
        %v1999 = vadd.f32 0.0, %v1998
        %v2000 = vpop.f32.mrb[0].mxu0
        %v2001 = vadd.f32 0.0, %v2000
        %v2002 = vpop.f32.mrb[0].mxu0
        %v2003 = vadd.f32 0.0, %v2002
        %2004 = vmatprep.mubr.bf16.mxu0 0
        %2005 = vmatmul.mubr.bf16.gmra.mrb[0].mxu0 %v1856
        %v2006 = vpop.f32.mrb[0].mxu0
        %v2007 = vadd.f32 0.0, %v2006
        %v2008 = vpop.f32.mrb[0].mxu0
        %v2009 = vadd.f32 0.0, %v2008
        %v2010 = vpop.f32.mrb[0].mxu0
        %v2011 = vadd.f32 0.0, %v2010
        %v2012 = vpop.f32.mrb[0].mxu0
        %v2013 = vadd.f32 0.0, %v2012
        %2014 = vmatprep.mubr.bf16.mxu0 0
        %2015 = vmatmul.mubr.bf16.gmra.mrb[0].mxu0 %v1859
        %v2016 = vpop.f32.mrb[0].mxu0
        %v2017 = vadd.f32 0.0, %v2016
        %v2018 = vpop.f32.mrb[0].mxu0
        %v2019 = vadd.f32 0.0, %v2018
        %v2020 = vpop.f32.mrb[0].mxu0
        %v2021 = vadd.f32 0.0, %v2020
        %v2022 = vpop.f32.mrb[0].mxu0
        %v2023 = vadd.f32 0.0, %v2022
        %2024 = vmatprep.mubr.bf16.mxu0 0
        %2025 = vmatmul.mubr.bf16.gmra.mrb[0].mxu0 %v1862
        %v2026 = vpop.f32.mrb[0].mxu0
        %v2027 = vadd.f32 0.0, %v2026
        %v2028 = vpop.f32.mrb[0].mxu0
        %v2029 = vadd.f32 0.0, %v2028
        %v2030 = vpop.f32.mrb[0].mxu0
        %v2031 = vadd.f32 0.0, %v2030
        %v2032 = vpop.f32.mrb[0].mxu0
        %v2033 = vadd.f32 0.0, %v2032
        %2034 = vmatprep.mubr.bf16.mxu0 0
        %2035 = vmatmul.mubr.bf16.gmra.mrb[0].mxu0 %v1865
        %v2036 = vpop.f32.mrb[0].mxu0
        %v2037 = vadd.f32 0.0, %v2036
        %v2038 = vpop.f32.mrb[0].mxu0
        %v2039 = vadd.f32 0.0, %v2038
        %v2040 = vpop.f32.mrb[0].mxu0
        %v2041 = vadd.f32 0.0, %v2040
        %v2042 = vpop.f32.mrb[0].mxu0
        %v2043 = vadd.f32 0.0, %v2042
        %2044 = vmatprep.mubr.bf16.mxu0 0
        %2045 = vmatmul.mubr.bf16.gmra.mrb[0].mxu0 %v1868
        %v2046 = vpop.f32.mrb[0].mxu0
        %v2047 = vadd.f32 0.0, %v2046
        %v2048 = vpop.f32.mrb[0].mxu0
        %v2049 = vadd.f32 0.0, %v2048
        %v2050 = vpop.f32.mrb[0].mxu0
        %v2051 = vadd.f32 0.0, %v2050
        %v2052 = vpop.f32.mrb[0].mxu0
        %v2053 = vadd.f32 0.0, %v2052
        %2054 = vmatprep.mubr.bf16.mxu0 0
        %2055 = vmatmul.mubr.bf16.gmra.mrb[0].mxu0 %v1871
        %v2056 = vpop.f32.mrb[0].mxu0
        %v2057 = vadd.f32 0.0, %v2056
        %v2058 = vpop.f32.mrb[0].mxu0
        %v2059 = vadd.f32 0.0, %v2058
        %v2060 = vpop.f32.mrb[0].mxu0
        %v2061 = vadd.f32 0.0, %v2060
        %v2062 = vpop.f32.mrb[0].mxu0
        %v2063 = vadd.f32 0.0, %v2062
        %2064 = vmatprep.mubr.bf16.mxu0 0
        %2065 = vmatmul.mubr.bf16.gmra.mrb[0].mxu0 %v1874
        %v2066 = vpop.f32.mrb[0].mxu0
        %v2067 = vadd.f32 0.0, %v2066
        %v2068 = vpop.f32.mrb[0].mxu0
        %v2069 = vadd.f32 0.0, %v2068
        %v2070 = vpop.f32.mrb[0].mxu0
        %v2071 = vadd.f32 0.0, %v2070
        %v2072 = vpop.f32.mrb[0].mxu0
        %v2073 = vadd.f32 0.0, %v2072
        %2074 = vmatprep.mubr.bf16.mxu0 0
        %2075 = vmatmul.mubr.bf16.gmra.mrb[0].mxu0 %v1877
        %v2076 = vpop.f32.mrb[0].mxu0
        %v2077 = vadd.f32 0.0, %v2076
        %v2078 = vpop.f32.mrb[0].mxu0
        %v2079 = vadd.f32 0.0, %v2078
        %v2080 = vpop.f32.mrb[0].mxu0
        %v2081 = vadd.f32 0.0, %v2080
        %v2082 = vpop.f32.mrb[0].mxu0
        %v2083 = vadd.f32 0.0, %v2082
        %2084 = vmatprep.mubr.bf16.mxu0 0
        %2085 = vmatmul.mubr.bf16.gmra.mrb[0].mxu0 %v1880
        %v2086 = vpop.f32.mrb[0].mxu0
        %v2087 = vadd.f32 0.0, %v2086
        %v2088 = vpop.f32.mrb[0].mxu0
        %v2089 = vadd.f32 0.0, %v2088
        %v2090 = vpop.f32.mrb[0].mxu0
        %v2091 = vadd.f32 0.0, %v2090
        %v2092 = vpop.f32.mrb[0].mxu0
        %v2093 = vadd.f32 0.0, %v2092
        %2094 = vmatprep.mubr.bf16.mxu0 0
        %2095 = vmatmul.mubr.bf16.gmra.mrb[0].mxu0 %v1883
        %v2096 = vpop.f32.mrb[0].mxu0
        %v2097 = vadd.f32 0.0, %v2096
        %v2098 = vpop.f32.mrb[0].mxu0
        %v2099 = vadd.f32 0.0, %v2098
        %v2100 = vpop.f32.mrb[0].mxu0
        %v2101 = vadd.f32 0.0, %v2100
        %v2102 = vpop.f32.mrb[0].mxu0
        %v2103 = vadd.f32 0.0, %v2102
        %2104 = vmatprep.mubr.bf16.mxu0 0
        %2105 = vmatmul.mubr.bf16.gmra.mrb[0].mxu0 %v1886
        %v2106 = vpop.f32.mrb[0].mxu0
        %v2107 = vadd.f32 0.0, %v2106
        %v2108 = vpop.f32.mrb[0].mxu0
        %v2109 = vadd.f32 0.0, %v2108
        %v2110 = vpop.f32.mrb[0].mxu0
        %v2111 = vadd.f32 0.0, %v2110
        %v2112 = vpop.f32.mrb[0].mxu0
        %v2113 = vadd.f32 0.0, %v2112
        %2114 = vmatprep.mubr.bf16.mxu0 0
        %2115 = vmatmul.mubr.bf16.gmra.mrb[0].mxu0 %v1889
        %v2116 = vpop.f32.mrb[0].mxu0
        %v2117 = vadd.f32 0.0, %v2116
        %v2118 = vpop.f32.mrb[0].mxu0
        %v2119 = vadd.f32 0.0, %v2118
        %v2120 = vpop.f32.mrb[0].mxu0
        %v2121 = vadd.f32 0.0, %v2120
        %v2122 = vpop.f32.mrb[0].mxu0
        %v2123 = vadd.f32 0.0, %v2122
        %2124 = vmatprep.mubr.bf16.mxu0 0
        %2125 = vmatmul.mubr.bf16.gmra.mrb[0].mxu0 %v1892
        %v2126 = vpop.f32.mrb[0].mxu0
        %v2127 = vadd.f32 0.0, %v2126
        %v2128 = vpop.f32.mrb[0].mxu0
        %v2129 = vadd.f32 0.0, %v2128
        %v2130 = vpop.f32.mrb[0].mxu0
        %v2131 = vadd.f32 0.0, %v2130
        %v2132 = vpop.f32.mrb[0].mxu0
        %v2133 = vadd.f32 0.0, %v2132
        %2134 = vdwg.mxu0
        %v2135 = vmax.f32 %v1110, %v1112
        %2136 = vmax.xlane.f32.xlu0 %v2135
        %v2137 = vpop.xlane.xlu0 %2136
        %v2138 = vmax.f32 %v1114, %v1116
        %2139 = vmax.xlane.f32.xlu0 %v2138
        %v2140 = vpop.xlane.xlu0 %2139
        %v2141 = vmax.f32 %v1120, %v1122
        %2142 = vmax.xlane.f32.xlu0 %v2141
        %v2143 = vpop.xlane.xlu0 %2142
        %v2144 = vmax.f32 %v1124, %v1126
        %2145 = vmax.xlane.f32.xlu0 %v2144
        %v2146 = vpop.xlane.xlu0 %2145
        %v2147 = vmax.f32 %v1130, %v1132
        %2148 = vmax.xlane.f32.xlu0 %v2147
        %v2149 = vpop.xlane.xlu0 %2148
        %v2150 = vmax.f32 %v1134, %v1136
        %2151 = vmax.xlane.f32.xlu0 %v2150
        %v2152 = vpop.xlane.xlu0 %2151
        %v2153 = vmax.f32 %v1140, %v1142
        %2154 = vmax.xlane.f32.xlu0 %v2153
        %v2155 = vpop.xlane.xlu0 %2154
        %v2156 = vmax.f32 %v1144, %v1146
        %2157 = vmax.xlane.f32.xlu0 %v2156
        %v2158 = vpop.xlane.xlu0 %2157
        %v2159 = vmax.f32 %v1150, %v1152
        %2160 = vmax.xlane.f32.xlu0 %v2159
        %v2161 = vpop.xlane.xlu0 %2160
        %v2162 = vmax.f32 %v1154, %v1156
        %2163 = vmax.xlane.f32.xlu0 %v2162
        %v2164 = vpop.xlane.xlu0 %2163
        %v2165 = vmax.f32 %v1160, %v1162
        %2166 = vmax.xlane.f32.xlu0 %v2165
        %v2167 = vpop.xlane.xlu0 %2166
        %v2168 = vmax.f32 %v1164, %v1166
        %2169 = vmax.xlane.f32.xlu0 %v2168
        %v2170 = vpop.xlane.xlu0 %2169
        %v2171 = vmax.f32 %v1170, %v1172
        %2172 = vmax.xlane.f32.xlu0 %v2171
        %v2173 = vpop.xlane.xlu0 %2172
        %v2174 = vmax.f32 %v1174, %v1176
        %2175 = vmax.xlane.f32.xlu0 %v2174
        %v2176 = vpop.xlane.xlu0 %2175
        %v2177 = vmax.f32 %v1180, %v1182
        %2178 = vmax.xlane.f32.xlu0 %v2177
        %v2179 = vpop.xlane.xlu0 %2178
        %v2180 = vmax.f32 %v1184, %v1186
        %2181 = vmax.xlane.f32.xlu0 %v2180
        %v2182 = vpop.xlane.xlu0 %2181
        %v2183 = vmax.f32 %v1190, %v1192
        %2184 = vmax.xlane.f32.xlu0 %v2183
        %v2185 = vpop.xlane.xlu0 %2184
        %v2186 = vmax.f32 %v1194, %v1196
        %2187 = vmax.xlane.f32.xlu0 %v2186
        %v2188 = vpop.xlane.xlu0 %2187
        %v2189 = vmax.f32 %v1200, %v1202
        %2190 = vmax.xlane.f32.xlu0 %v2189
        %v2191 = vpop.xlane.xlu0 %2190
        %v2192 = vmax.f32 %v1204, %v1206
        %2193 = vmax.xlane.f32.xlu0 %v2192
        %v2194 = vpop.xlane.xlu0 %2193
        %v2195 = vmax.f32 %v1210, %v1212
        %2196 = vmax.xlane.f32.xlu0 %v2195
        %v2197 = vpop.xlane.xlu0 %2196
        %v2198 = vmax.f32 %v1214, %v1216
        %2199 = vmax.xlane.f32.xlu0 %v2198
        %v2200 = vpop.xlane.xlu0 %2199
        %v2201 = vmax.f32 %v1220, %v1222
        %2202 = vmax.xlane.f32.xlu0 %v2201
        %v2203 = vpop.xlane.xlu0 %2202
        %v2204 = vmax.f32 %v1224, %v1226
        %2205 = vmax.xlane.f32.xlu0 %v2204
        %v2206 = vpop.xlane.xlu0 %2205
        %v2207 = vmax.f32 %v1230, %v1232
        %2208 = vmax.xlane.f32.xlu0 %v2207
        %v2209 = vpop.xlane.xlu0 %2208
        %v2210 = vmax.f32 %v1234, %v1236
        %2211 = vmax.xlane.f32.xlu0 %v2210
        %v2212 = vpop.xlane.xlu0 %2211
        %v2213 = vmax.f32 %v1240, %v1242
        %2214 = vmax.xlane.f32.xlu0 %v2213
        %v2215 = vpop.xlane.xlu0 %2214
        %v2216 = vmax.f32 %v1244, %v1246
        %2217 = vmax.xlane.f32.xlu0 %v2216
        %v2218 = vpop.xlane.xlu0 %2217
        %v2219 = vmax.f32 %v1250, %v1252
        %2220 = vmax.xlane.f32.xlu0 %v2219
        %v2221 = vpop.xlane.xlu0 %2220
        %v2222 = vmax.f32 %v1254, %v1256
        %2223 = vmax.xlane.f32.xlu0 %v2222
        %v2224 = vpop.xlane.xlu0 %2223
        %v2225 = vmax.f32 %v1260, %v1262
        %2226 = vmax.xlane.f32.xlu0 %v2225
        %v2227 = vpop.xlane.xlu0 %2226
        %v2228 = vmax.f32 %v1264, %v1266
        %2229 = vmax.xlane.f32.xlu0 %v2228
        %v2230 = vpop.xlane.xlu0 %2229
        %v2231 = vmax.f32 %v1399, %v1401
        %2232 = vmax.xlane.f32.xlu0 %v2231
        %v2233 = vpop.xlane.xlu0 %2232
        %v2234 = vmax.f32 %v1403, %v1405
        %2235 = vmax.xlane.f32.xlu0 %v2234
        %v2236 = vpop.xlane.xlu0 %2235
        %v2237 = vmax.f32 %v1409, %v1411
        %2238 = vmax.xlane.f32.xlu0 %v2237
        %v2239 = vpop.xlane.xlu0 %2238
        %v2240 = vmax.f32 %v1413, %v1415
        %2241 = vmax.xlane.f32.xlu0 %v2240
        %v2242 = vpop.xlane.xlu0 %2241
        %v2243 = vmax.f32 %v1419, %v1421
        %2244 = vmax.xlane.f32.xlu0 %v2243
        %v2245 = vpop.xlane.xlu0 %2244
        %v2246 = vmax.f32 %v1423, %v1425
        %2247 = vmax.xlane.f32.xlu0 %v2246
        %v2248 = vpop.xlane.xlu0 %2247
        %v2249 = vmax.f32 %v1429, %v1431
        %2250 = vmax.xlane.f32.xlu0 %v2249
        %v2251 = vpop.xlane.xlu0 %2250
        %v2252 = vmax.f32 %v1433, %v1435
        %2253 = vmax.xlane.f32.xlu0 %v2252
        %v2254 = vpop.xlane.xlu0 %2253
        %v2255 = vmax.f32 %v1439, %v1441
        %2256 = vmax.xlane.f32.xlu0 %v2255
        %v2257 = vpop.xlane.xlu0 %2256
        %v2258 = vmax.f32 %v1443, %v1445
        %2259 = vmax.xlane.f32.xlu0 %v2258
        %v2260 = vpop.xlane.xlu0 %2259
        %v2261 = vmax.f32 %v1449, %v1451
        %2262 = vmax.xlane.f32.xlu0 %v2261
        %v2263 = vpop.xlane.xlu0 %2262
        %v2264 = vmax.f32 %v1453, %v1455
        %2265 = vmax.xlane.f32.xlu0 %v2264
        %v2266 = vpop.xlane.xlu0 %2265
        %v2267 = vmax.f32 %v1459, %v1461
        %2268 = vmax.xlane.f32.xlu0 %v2267
        %v2269 = vpop.xlane.xlu0 %2268
        %v2270 = vmax.f32 %v1463, %v1465
        %2271 = vmax.xlane.f32.xlu0 %v2270
        %v2272 = vpop.xlane.xlu0 %2271
        %v2273 = vmax.f32 %v1469, %v1471
        %2274 = vmax.xlane.f32.xlu0 %v2273
        %v2275 = vpop.xlane.xlu0 %2274
        %v2276 = vmax.f32 %v1473, %v1475
        %2277 = vmax.xlane.f32.xlu0 %v2276
        %v2278 = vpop.xlane.xlu0 %2277
        %v2279 = vmax.f32 %v1479, %v1481
        %2280 = vmax.xlane.f32.xlu0 %v2279
        %v2281 = vpop.xlane.xlu0 %2280
        %v2282 = vmax.f32 %v1483, %v1485
        %2283 = vmax.xlane.f32.xlu0 %v2282
        %v2284 = vpop.xlane.xlu0 %2283
        %v2285 = vmax.f32 %v1489, %v1491
        %2286 = vmax.xlane.f32.xlu0 %v2285
        %v2287 = vpop.xlane.xlu0 %2286
        %v2288 = vmax.f32 %v1493, %v1495
        %2289 = vmax.xlane.f32.xlu0 %v2288
        %v2290 = vpop.xlane.xlu0 %2289
        %v2291 = vmax.f32 %v1499, %v1501
        %2292 = vmax.xlane.f32.xlu0 %v2291
        %v2293 = vpop.xlane.xlu0 %2292
        %v2294 = vmax.f32 %v1503, %v1505
        %2295 = vmax.xlane.f32.xlu0 %v2294
        %v2296 = vpop.xlane.xlu0 %2295
        %v2297 = vmax.f32 %v1509, %v1511
        %2298 = vmax.xlane.f32.xlu0 %v2297
        %v2299 = vpop.xlane.xlu0 %2298
        %v2300 = vmax.f32 %v1513, %v1515
        %2301 = vmax.xlane.f32.xlu0 %v2300
        %v2302 = vpop.xlane.xlu0 %2301
        %v2303 = vmax.f32 %v1519, %v1521
        %2304 = vmax.xlane.f32.xlu0 %v2303
        %v2305 = vpop.xlane.xlu0 %2304
        %v2306 = vmax.f32 %v1523, %v1525
        %2307 = vmax.xlane.f32.xlu0 %v2306
        %v2308 = vpop.xlane.xlu0 %2307
        %v2309 = vmax.f32 %v1529, %v1531
        %2310 = vmax.xlane.f32.xlu0 %v2309
        %v2311 = vpop.xlane.xlu0 %2310
        %v2312 = vmax.f32 %v1533, %v1535
        %2313 = vmax.xlane.f32.xlu0 %v2312
        %v2314 = vpop.xlane.xlu0 %2313
        %v2315 = vmax.f32 %v1539, %v1541
        %2316 = vmax.xlane.f32.xlu0 %v2315
        %v2317 = vpop.xlane.xlu0 %2316
        %v2318 = vmax.f32 %v1543, %v1545
        %2319 = vmax.xlane.f32.xlu0 %v2318
        %v2320 = vpop.xlane.xlu0 %2319
        %v2321 = vmax.f32 %v1549, %v1551
        %2322 = vmax.xlane.f32.xlu0 %v2321
        %v2323 = vpop.xlane.xlu0 %2322
        %v2324 = vmax.f32 %v1553, %v1555
        %2325 = vmax.xlane.f32.xlu0 %v2324
        %v2326 = vpop.xlane.xlu0 %2325
        %v2327 = vmax.f32 %v1688, %v1690
        %2328 = vmax.xlane.f32.xlu0 %v2327
        %v2329 = vpop.xlane.xlu0 %2328
        %v2330 = vmax.f32 %v1692, %v1694
        %2331 = vmax.xlane.f32.xlu0 %v2330
        %v2332 = vpop.xlane.xlu0 %2331
        %v2333 = vmax.f32 %v1698, %v1700
        %2334 = vmax.xlane.f32.xlu0 %v2333
        %v2335 = vpop.xlane.xlu0 %2334
        %v2336 = vmax.f32 %v1702, %v1704
        %2337 = vmax.xlane.f32.xlu0 %v2336
        %v2338 = vpop.xlane.xlu0 %2337
        %v2339 = vmax.f32 %v1708, %v1710
        %2340 = vmax.xlane.f32.xlu0 %v2339
        %v2341 = vpop.xlane.xlu0 %2340
        %v2342 = vmax.f32 %v1712, %v1714
        %2343 = vmax.xlane.f32.xlu0 %v2342
        %v2344 = vpop.xlane.xlu0 %2343
        %v2345 = vmax.f32 %v1718, %v1720
        %2346 = vmax.xlane.f32.xlu0 %v2345
        %v2347 = vpop.xlane.xlu0 %2346
        %v2348 = vmax.f32 %v1722, %v1724
        %2349 = vmax.xlane.f32.xlu0 %v2348
        %v2350 = vpop.xlane.xlu0 %2349
        %v2351 = vmax.f32 %v1728, %v1730
        %2352 = vmax.xlane.f32.xlu0 %v2351
        %v2353 = vpop.xlane.xlu0 %2352
        %v2354 = vmax.f32 %v1732, %v1734
        %2355 = vmax.xlane.f32.xlu0 %v2354
        %v2356 = vpop.xlane.xlu0 %2355
        %v2357 = vmax.f32 %v1738, %v1740
        %2358 = vmax.xlane.f32.xlu0 %v2357
        %v2359 = vpop.xlane.xlu0 %2358
        %v2360 = vmax.f32 %v1742, %v1744
        %2361 = vmax.xlane.f32.xlu0 %v2360
        %v2362 = vpop.xlane.xlu0 %2361
        %v2363 = vmax.f32 %v1748, %v1750
        %2364 = vmax.xlane.f32.xlu0 %v2363
        %v2365 = vpop.xlane.xlu0 %2364
        %v2366 = vmax.f32 %v1752, %v1754
        %2367 = vmax.xlane.f32.xlu0 %v2366
        %v2368 = vpop.xlane.xlu0 %2367
        %v2369 = vmax.f32 %v1758, %v1760
        %2370 = vmax.xlane.f32.xlu0 %v2369
        %v2371 = vpop.xlane.xlu0 %2370
        %v2372 = vmax.f32 %v1762, %v1764
        %2373 = vmax.xlane.f32.xlu0 %v2372
        %v2374 = vpop.xlane.xlu0 %2373
        %v2375 = vmax.f32 %v1768, %v1770
        %2376 = vmax.xlane.f32.xlu0 %v2375
        %v2377 = vpop.xlane.xlu0 %2376
        %v2378 = vmax.f32 %v1772, %v1774
        %2379 = vmax.xlane.f32.xlu0 %v2378
        %v2380 = vpop.xlane.xlu0 %2379
        %v2381 = vmax.f32 %v1778, %v1780
        %2382 = vmax.xlane.f32.xlu0 %v2381
        %v2383 = vpop.xlane.xlu0 %2382
        %v2384 = vmax.f32 %v1782, %v1784
        %2385 = vmax.xlane.f32.xlu0 %v2384
        %v2386 = vpop.xlane.xlu0 %2385
        %v2387 = vmax.f32 %v1788, %v1790
        %2388 = vmax.xlane.f32.xlu0 %v2387
        %v2389 = vpop.xlane.xlu0 %2388
        %v2390 = vmax.f32 %v1792, %v1794
        %2391 = vmax.xlane.f32.xlu0 %v2390
        %v2392 = vpop.xlane.xlu0 %2391
        %v2393 = vmax.f32 %v1798, %v1800
        %2394 = vmax.xlane.f32.xlu0 %v2393
        %v2395 = vpop.xlane.xlu0 %2394
        %v2396 = vmax.f32 %v1802, %v1804
        %2397 = vmax.xlane.f32.xlu0 %v2396
        %v2398 = vpop.xlane.xlu0 %2397
        %v2399 = vmax.f32 %v1808, %v1810
        %2400 = vmax.xlane.f32.xlu0 %v2399
        %v2401 = vpop.xlane.xlu0 %2400
        %v2402 = vmax.f32 %v1812, %v1814
        %2403 = vmax.xlane.f32.xlu0 %v2402
        %v2404 = vpop.xlane.xlu0 %2403
        %v2405 = vmax.f32 %v1818, %v1820
        %2406 = vmax.xlane.f32.xlu0 %v2405
        %v2407 = vpop.xlane.xlu0 %2406
        %v2408 = vmax.f32 %v1822, %v1824
        %2409 = vmax.xlane.f32.xlu0 %v2408
        %v2410 = vpop.xlane.xlu0 %2409
        %v2411 = vmax.f32 %v1828, %v1830
        %2412 = vmax.xlane.f32.xlu0 %v2411
        %v2413 = vpop.xlane.xlu0 %2412
        %v2414 = vmax.f32 %v1832, %v1834
        %2415 = vmax.xlane.f32.xlu0 %v2414
        %v2416 = vpop.xlane.xlu0 %2415
        %v2417 = vmax.f32 %v1838, %v1840
        %2418 = vmax.xlane.f32.xlu0 %v2417
        %v2419 = vpop.xlane.xlu0 %2418
        %v2420 = vmax.f32 %v1842, %v1844
        %2421 = vmax.xlane.f32.xlu0 %v2420
        %v2422 = vpop.xlane.xlu0 %2421
        %v2423 = vmax.f32 %v1977, %v1979
        %2424 = vmax.xlane.f32.xlu0 %v2423
        %v2425 = vpop.xlane.xlu0 %2424
        %v2426 = vmax.f32 %v1981, %v1983
        %2427 = vmax.xlane.f32.xlu0 %v2426
        %v2428 = vpop.xlane.xlu0 %2427
        %v2429 = vmax.f32 %v1987, %v1989
        %2430 = vmax.xlane.f32.xlu0 %v2429
        %v2431 = vpop.xlane.xlu0 %2430
        %v2432 = vmax.f32 %v1991, %v1993
        %2433 = vmax.xlane.f32.xlu0 %v2432
        %v2434 = vpop.xlane.xlu0 %2433
        %v2435 = vmax.f32 %v1997, %v1999
        %2436 = vmax.xlane.f32.xlu0 %v2435
        %v2437 = vpop.xlane.xlu0 %2436
        %v2438 = vmax.f32 %v2001, %v2003
        %2439 = vmax.xlane.f32.xlu0 %v2438
        %v2440 = vpop.xlane.xlu0 %2439
        %v2441 = vmax.f32 %v2007, %v2009
        %2442 = vmax.xlane.f32.xlu0 %v2441
        %v2443 = vpop.xlane.xlu0 %2442
        %v2444 = vmax.f32 %v2011, %v2013
        %2445 = vmax.xlane.f32.xlu0 %v2444
        %v2446 = vpop.xlane.xlu0 %2445
        %v2447 = vmax.f32 %v2017, %v2019
        %2448 = vmax.xlane.f32.xlu0 %v2447
        %v2449 = vpop.xlane.xlu0 %2448
        %v2450 = vmax.f32 %v2021, %v2023
        %2451 = vmax.xlane.f32.xlu0 %v2450
        %v2452 = vpop.xlane.xlu0 %2451
        %v2453 = vmax.f32 %v2027, %v2029
        %2454 = vmax.xlane.f32.xlu0 %v2453
        %v2455 = vpop.xlane.xlu0 %2454
        %v2456 = vmax.f32 %v2031, %v2033
        %2457 = vmax.xlane.f32.xlu0 %v2456
        %v2458 = vpop.xlane.xlu0 %2457
        %v2459 = vmax.f32 %v2037, %v2039
        %2460 = vmax.xlane.f32.xlu0 %v2459
        %v2461 = vpop.xlane.xlu0 %2460
        %v2462 = vmax.f32 %v2041, %v2043
        %2463 = vmax.xlane.f32.xlu0 %v2462
        %v2464 = vpop.xlane.xlu0 %2463
        %v2465 = vmax.f32 %v2047, %v2049
        %2466 = vmax.xlane.f32.xlu0 %v2465
        %v2467 = vpop.xlane.xlu0 %2466
        %v2468 = vmax.f32 %v2051, %v2053
        %2469 = vmax.xlane.f32.xlu0 %v2468
        %v2470 = vpop.xlane.xlu0 %2469
        %v2471 = vmax.f32 %v2057, %v2059
        %2472 = vmax.xlane.f32.xlu0 %v2471
        %v2473 = vpop.xlane.xlu0 %2472
        %v2474 = vmax.f32 %v2061, %v2063
        %2475 = vmax.xlane.f32.xlu0 %v2474
        %v2476 = vpop.xlane.xlu0 %2475
        %v2477 = vmax.f32 %v2067, %v2069
        %2478 = vmax.xlane.f32.xlu0 %v2477
        %v2479 = vpop.xlane.xlu0 %2478
        %v2480 = vmax.f32 %v2071, %v2073
        %2481 = vmax.xlane.f32.xlu0 %v2480
        %v2482 = vpop.xlane.xlu0 %2481
        %v2483 = vmax.f32 %v2077, %v2079
        %2484 = vmax.xlane.f32.xlu0 %v2483
        %v2485 = vpop.xlane.xlu0 %2484
        %v2486 = vmax.f32 %v2081, %v2083
        %2487 = vmax.xlane.f32.xlu0 %v2486
        %v2488 = vpop.xlane.xlu0 %2487
        %v2489 = vmax.f32 %v2087, %v2089
        %2490 = vmax.xlane.f32.xlu0 %v2489
        %v2491 = vpop.xlane.xlu0 %2490
        %v2492 = vmax.f32 %v2091, %v2093
        %2493 = vmax.xlane.f32.xlu0 %v2492
        %v2494 = vpop.xlane.xlu0 %2493
        %v2495 = vmax.f32 %v2097, %v2099
        %2496 = vmax.xlane.f32.xlu0 %v2495
        %v2497 = vpop.xlane.xlu0 %2496
        %v2498 = vmax.f32 %v2101, %v2103
        %2499 = vmax.xlane.f32.xlu0 %v2498
        %v2500 = vpop.xlane.xlu0 %2499
        %v2501 = vmax.f32 %v2107, %v2109
        %2502 = vmax.xlane.f32.xlu0 %v2501
        %v2503 = vpop.xlane.xlu0 %2502
        %v2504 = vmax.f32 %v2111, %v2113
        %2505 = vmax.xlane.f32.xlu0 %v2504
        %v2506 = vpop.xlane.xlu0 %2505
        %v2507 = vmax.f32 %v2117, %v2119
        %2508 = vmax.xlane.f32.xlu0 %v2507
        %v2509 = vpop.xlane.xlu0 %2508
        %v2510 = vmax.f32 %v2121, %v2123
        %2511 = vmax.xlane.f32.xlu0 %v2510
        %v2512 = vpop.xlane.xlu0 %2511
        %v2513 = vmax.f32 %v2127, %v2129
        %2514 = vmax.xlane.f32.xlu0 %v2513
        %v2515 = vpop.xlane.xlu0 %2514
        %v2516 = vmax.f32 %v2131, %v2133
        %2517 = vmax.xlane.f32.xlu0 %v2516
        %v2518 = vpop.xlane.xlu0 %2517
        %v2519 = vsub.f32 %v1110, %v2137
        %v2520 = vsub.f32 %v1112, %v2137
        %v2521 = vsub.f32 %v1114, %v2140
        %v2522 = vsub.f32 %v1116, %v2140
        %v2523 = vsub.f32 %v1120, %v2143
        %v2524 = vsub.f32 %v1122, %v2143
        %v2525 = vsub.f32 %v1124, %v2146
        %v2526 = vsub.f32 %v1126, %v2146
        %v2527 = vsub.f32 %v1130, %v2149
        %v2528 = vsub.f32 %v1132, %v2149
        %v2529 = vsub.f32 %v1134, %v2152
        %v2530 = vsub.f32 %v1136, %v2152
        %v2531 = vsub.f32 %v1140, %v2155
        %v2532 = vsub.f32 %v1142, %v2155
        %v2533 = vsub.f32 %v1144, %v2158
        %v2534 = vsub.f32 %v1146, %v2158
        %v2535 = vsub.f32 %v1150, %v2161
        %v2536 = vsub.f32 %v1152, %v2161
        %v2537 = vsub.f32 %v1154, %v2164
        %v2538 = vsub.f32 %v1156, %v2164
        %v2539 = vsub.f32 %v1160, %v2167
        %v2540 = vsub.f32 %v1162, %v2167
        %v2541 = vsub.f32 %v1164, %v2170
        %v2542 = vsub.f32 %v1166, %v2170
        %v2543 = vsub.f32 %v1170, %v2173
        %v2544 = vsub.f32 %v1172, %v2173
        %v2545 = vsub.f32 %v1174, %v2176
        %v2546 = vsub.f32 %v1176, %v2176
        %v2547 = vsub.f32 %v1180, %v2179
        %v2548 = vsub.f32 %v1182, %v2179
        %v2549 = vsub.f32 %v1184, %v2182
        %v2550 = vsub.f32 %v1186, %v2182
        %v2551 = vsub.f32 %v1190, %v2185
        %v2552 = vsub.f32 %v1192, %v2185
        %v2553 = vsub.f32 %v1194, %v2188
        %v2554 = vsub.f32 %v1196, %v2188
        %v2555 = vsub.f32 %v1200, %v2191
        %v2556 = vsub.f32 %v1202, %v2191
        %v2557 = vsub.f32 %v1204, %v2194
        %v2558 = vsub.f32 %v1206, %v2194
        %v2559 = vsub.f32 %v1210, %v2197
        %v2560 = vsub.f32 %v1212, %v2197
        %v2561 = vsub.f32 %v1214, %v2200
        %v2562 = vsub.f32 %v1216, %v2200
        %v2563 = vsub.f32 %v1220, %v2203
        %v2564 = vsub.f32 %v1222, %v2203
        %v2565 = vsub.f32 %v1224, %v2206
        %v2566 = vsub.f32 %v1226, %v2206
        %v2567 = vsub.f32 %v1230, %v2209
        %v2568 = vsub.f32 %v1232, %v2209
        %v2569 = vsub.f32 %v1234, %v2212
        %v2570 = vsub.f32 %v1236, %v2212
        %v2571 = vsub.f32 %v1240, %v2215
        %v2572 = vsub.f32 %v1242, %v2215
        %v2573 = vsub.f32 %v1244, %v2218
        %v2574 = vsub.f32 %v1246, %v2218
        %v2575 = vsub.f32 %v1250, %v2221
        %v2576 = vsub.f32 %v1252, %v2221
        %v2577 = vsub.f32 %v1254, %v2224
        %v2578 = vsub.f32 %v1256, %v2224
        %v2579 = vsub.f32 %v1260, %v2227
        %v2580 = vsub.f32 %v1262, %v2227
        %v2581 = vsub.f32 %v1264, %v2230
        %v2582 = vsub.f32 %v1266, %v2230
        %v2583 = vsub.f32 %v1399, %v2233
        %v2584 = vsub.f32 %v1401, %v2233
        %v2585 = vsub.f32 %v1403, %v2236
        %v2586 = vsub.f32 %v1405, %v2236
        %v2587 = vsub.f32 %v1409, %v2239
        %v2588 = vsub.f32 %v1411, %v2239
        %v2589 = vsub.f32 %v1413, %v2242
        %v2590 = vsub.f32 %v1415, %v2242
        %v2591 = vsub.f32 %v1419, %v2245
        %v2592 = vsub.f32 %v1421, %v2245
        %v2593 = vsub.f32 %v1423, %v2248
        %v2594 = vsub.f32 %v1425, %v2248
        %v2595 = vsub.f32 %v1429, %v2251
        %v2596 = vsub.f32 %v1431, %v2251
        %v2597 = vsub.f32 %v1433, %v2254
        %v2598 = vsub.f32 %v1435, %v2254
        %v2599 = vsub.f32 %v1439, %v2257
        %v2600 = vsub.f32 %v1441, %v2257
        %v2601 = vsub.f32 %v1443, %v2260
        %v2602 = vsub.f32 %v1445, %v2260
        %v2603 = vsub.f32 %v1449, %v2263
        %v2604 = vsub.f32 %v1451, %v2263
        %v2605 = vsub.f32 %v1453, %v2266
        %v2606 = vsub.f32 %v1455, %v2266
        %v2607 = vsub.f32 %v1459, %v2269
        %v2608 = vsub.f32 %v1461, %v2269
        %v2609 = vsub.f32 %v1463, %v2272
        %v2610 = vsub.f32 %v1465, %v2272
        %v2611 = vsub.f32 %v1469, %v2275
        %v2612 = vsub.f32 %v1471, %v2275
        %v2613 = vsub.f32 %v1473, %v2278
        %v2614 = vsub.f32 %v1475, %v2278
        %v2615 = vsub.f32 %v1479, %v2281
        %v2616 = vsub.f32 %v1481, %v2281
        %v2617 = vsub.f32 %v1483, %v2284
        %v2618 = vsub.f32 %v1485, %v2284
        %v2619 = vsub.f32 %v1489, %v2287
        %v2620 = vsub.f32 %v1491, %v2287
        %v2621 = vsub.f32 %v1493, %v2290
        %v2622 = vsub.f32 %v1495, %v2290
        %v2623 = vsub.f32 %v1499, %v2293
        %v2624 = vsub.f32 %v1501, %v2293
        %v2625 = vsub.f32 %v1503, %v2296
        %v2626 = vsub.f32 %v1505, %v2296
        %v2627 = vsub.f32 %v1509, %v2299
        %v2628 = vsub.f32 %v1511, %v2299
        %v2629 = vsub.f32 %v1513, %v2302
        %v2630 = vsub.f32 %v1515, %v2302
        %v2631 = vsub.f32 %v1519, %v2305
        %v2632 = vsub.f32 %v1521, %v2305
        %v2633 = vsub.f32 %v1523, %v2308
        %v2634 = vsub.f32 %v1525, %v2308
        %v2635 = vsub.f32 %v1529, %v2311
        %v2636 = vsub.f32 %v1531, %v2311
        %v2637 = vsub.f32 %v1533, %v2314
        %v2638 = vsub.f32 %v1535, %v2314
        %v2639 = vsub.f32 %v1539, %v2317
        %v2640 = vsub.f32 %v1541, %v2317
        %v2641 = vsub.f32 %v1543, %v2320
        %v2642 = vsub.f32 %v1545, %v2320
        %v2643 = vsub.f32 %v1549, %v2323
        %v2644 = vsub.f32 %v1551, %v2323
        %v2645 = vsub.f32 %v1553, %v2326
        %v2646 = vsub.f32 %v1555, %v2326
        %v2647 = vsub.f32 %v1688, %v2329
        %v2648 = vsub.f32 %v1690, %v2329
        %v2649 = vsub.f32 %v1692, %v2332
        %v2650 = vsub.f32 %v1694, %v2332
        %v2651 = vsub.f32 %v1698, %v2335
        %v2652 = vsub.f32 %v1700, %v2335
        %v2653 = vsub.f32 %v1702, %v2338
        %v2654 = vsub.f32 %v1704, %v2338
        %v2655 = vsub.f32 %v1708, %v2341
        %v2656 = vsub.f32 %v1710, %v2341
        %v2657 = vsub.f32 %v1712, %v2344
        %v2658 = vsub.f32 %v1714, %v2344
        %v2659 = vsub.f32 %v1718, %v2347
        %v2660 = vsub.f32 %v1720, %v2347
        %v2661 = vsub.f32 %v1722, %v2350
        %v2662 = vsub.f32 %v1724, %v2350
        %v2663 = vsub.f32 %v1728, %v2353
        %v2664 = vsub.f32 %v1730, %v2353
        %v2665 = vsub.f32 %v1732, %v2356
        %v2666 = vsub.f32 %v1734, %v2356
        %v2667 = vsub.f32 %v1738, %v2359
        %v2668 = vsub.f32 %v1740, %v2359
        %v2669 = vsub.f32 %v1742, %v2362
        %v2670 = vsub.f32 %v1744, %v2362
        %v2671 = vsub.f32 %v1748, %v2365
        %v2672 = vsub.f32 %v1750, %v2365
        %v2673 = vsub.f32 %v1752, %v2368
        %v2674 = vsub.f32 %v1754, %v2368
        %v2675 = vsub.f32 %v1758, %v2371
        %v2676 = vsub.f32 %v1760, %v2371
        %v2677 = vsub.f32 %v1762, %v2374
        %v2678 = vsub.f32 %v1764, %v2374
        %v2679 = vsub.f32 %v1768, %v2377
        %v2680 = vsub.f32 %v1770, %v2377
        %v2681 = vsub.f32 %v1772, %v2380
        %v2682 = vsub.f32 %v1774, %v2380
        %v2683 = vsub.f32 %v1778, %v2383
        %v2684 = vsub.f32 %v1780, %v2383
        %v2685 = vsub.f32 %v1782, %v2386
        %v2686 = vsub.f32 %v1784, %v2386
        %v2687 = vsub.f32 %v1788, %v2389
        %v2688 = vsub.f32 %v1790, %v2389
        %v2689 = vsub.f32 %v1792, %v2392
        %v2690 = vsub.f32 %v1794, %v2392
        %v2691 = vsub.f32 %v1798, %v2395
        %v2692 = vsub.f32 %v1800, %v2395
        %v2693 = vsub.f32 %v1802, %v2398
        %v2694 = vsub.f32 %v1804, %v2398
        %v2695 = vsub.f32 %v1808, %v2401
        %v2696 = vsub.f32 %v1810, %v2401
        %v2697 = vsub.f32 %v1812, %v2404
        %v2698 = vsub.f32 %v1814, %v2404
        %v2699 = vsub.f32 %v1818, %v2407
        %v2700 = vsub.f32 %v1820, %v2407
        %v2701 = vsub.f32 %v1822, %v2410
        %v2702 = vsub.f32 %v1824, %v2410
        %v2703 = vsub.f32 %v1828, %v2413
        %v2704 = vsub.f32 %v1830, %v2413
        %v2705 = vsub.f32 %v1832, %v2416
        %v2706 = vsub.f32 %v1834, %v2416
        %v2707 = vsub.f32 %v1838, %v2419
        %v2708 = vsub.f32 %v1840, %v2419
        %v2709 = vsub.f32 %v1842, %v2422
        %v2710 = vsub.f32 %v1844, %v2422
        %v2711 = vsub.f32 %v1977, %v2425
        %v2712 = vsub.f32 %v1979, %v2425
        %v2713 = vsub.f32 %v1981, %v2428
        %v2714 = vsub.f32 %v1983, %v2428
        %v2715 = vsub.f32 %v1987, %v2431
        %v2716 = vsub.f32 %v1989, %v2431
        %v2717 = vsub.f32 %v1991, %v2434
        %v2718 = vsub.f32 %v1993, %v2434
        %v2719 = vsub.f32 %v1997, %v2437
        %v2720 = vsub.f32 %v1999, %v2437
        %v2721 = vsub.f32 %v2001, %v2440
        %v2722 = vsub.f32 %v2003, %v2440
        %v2723 = vsub.f32 %v2007, %v2443
        %v2724 = vsub.f32 %v2009, %v2443
        %v2725 = vsub.f32 %v2011, %v2446
        %v2726 = vsub.f32 %v2013, %v2446
        %v2727 = vsub.f32 %v2017, %v2449
        %v2728 = vsub.f32 %v2019, %v2449
        %v2729 = vsub.f32 %v2021, %v2452
        %v2730 = vsub.f32 %v2023, %v2452
        %v2731 = vsub.f32 %v2027, %v2455
        %v2732 = vsub.f32 %v2029, %v2455
        %v2733 = vsub.f32 %v2031, %v2458
        %v2734 = vsub.f32 %v2033, %v2458
        %v2735 = vsub.f32 %v2037, %v2461
        %v2736 = vsub.f32 %v2039, %v2461
        %v2737 = vsub.f32 %v2041, %v2464
        %v2738 = vsub.f32 %v2043, %v2464
        %v2739 = vsub.f32 %v2047, %v2467
        %v2740 = vsub.f32 %v2049, %v2467
        %v2741 = vsub.f32 %v2051, %v2470
        %v2742 = vsub.f32 %v2053, %v2470
        %v2743 = vsub.f32 %v2057, %v2473
        %v2744 = vsub.f32 %v2059, %v2473
        %v2745 = vsub.f32 %v2061, %v2476
        %v2746 = vsub.f32 %v2063, %v2476
        %v2747 = vsub.f32 %v2067, %v2479
        %v2748 = vsub.f32 %v2069, %v2479
        %v2749 = vsub.f32 %v2071, %v2482
        %v2750 = vsub.f32 %v2073, %v2482
        %v2751 = vsub.f32 %v2077, %v2485
        %v2752 = vsub.f32 %v2079, %v2485
        %v2753 = vsub.f32 %v2081, %v2488
        %v2754 = vsub.f32 %v2083, %v2488
        %v2755 = vsub.f32 %v2087, %v2491
        %v2756 = vsub.f32 %v2089, %v2491
        %v2757 = vsub.f32 %v2091, %v2494
        %v2758 = vsub.f32 %v2093, %v2494
        %v2759 = vsub.f32 %v2097, %v2497
        %v2760 = vsub.f32 %v2099, %v2497
        %v2761 = vsub.f32 %v2101, %v2500
        %v2762 = vsub.f32 %v2103, %v2500
        %v2763 = vsub.f32 %v2107, %v2503
        %v2764 = vsub.f32 %v2109, %v2503
        %v2765 = vsub.f32 %v2111, %v2506
        %v2766 = vsub.f32 %v2113, %v2506
        %v2767 = vsub.f32 %v2117, %v2509
        %v2768 = vsub.f32 %v2119, %v2509
        %v2769 = vsub.f32 %v2121, %v2512
        %v2770 = vsub.f32 %v2123, %v2512
        %v2771 = vsub.f32 %v2127, %v2515
        %v2772 = vsub.f32 %v2129, %v2515
        %v2773 = vsub.f32 %v2131, %v2518
        %v2774 = vsub.f32 %v2133, %v2518
        %v2775 = vmul.f32 %v2519, 1.442695
        %v2776 = vpow.pop %v2775
        %v2777 = vmul.f32 %v2520, 1.442695
        %v2778 = vpow.pop %v2777
        %v2779 = vmul.f32 %v2521, 1.442695
        %v2780 = vpow.pop %v2779
        %v2781 = vmul.f32 %v2522, 1.442695
        %v2782 = vpow.pop %v2781
        %v2783 = vmul.f32 %v2523, 1.442695
        %v2784 = vpow.pop %v2783
        %v2785 = vmul.f32 %v2524, 1.442695
        %v2786 = vpow.pop %v2785
        %v2787 = vmul.f32 %v2525, 1.442695
        %v2788 = vpow.pop %v2787
        %v2789 = vmul.f32 %v2526, 1.442695
        %v2790 = vpow.pop %v2789
        %v2791 = vmul.f32 %v2527, 1.442695
        %v2792 = vpow.pop %v2791
        %v2793 = vmul.f32 %v2528, 1.442695
        %v2794 = vpow.pop %v2793
        %v2795 = vmul.f32 %v2529, 1.442695
        %v2796 = vpow.pop %v2795
        %v2797 = vmul.f32 %v2530, 1.442695
        %v2798 = vpow.pop %v2797
        %v2799 = vmul.f32 %v2531, 1.442695
        %v2800 = vpow.pop %v2799
        %v2801 = vmul.f32 %v2532, 1.442695
        %v2802 = vpow.pop %v2801
        %v2803 = vmul.f32 %v2533, 1.442695
        %v2804 = vpow.pop %v2803
        %v2805 = vmul.f32 %v2534, 1.442695
        %v2806 = vpow.pop %v2805
        %v2807 = vmul.f32 %v2535, 1.442695
        %v2808 = vpow.pop %v2807
        %v2809 = vmul.f32 %v2536, 1.442695
        %v2810 = vpow.pop %v2809
        %v2811 = vmul.f32 %v2537, 1.442695
        %v2812 = vpow.pop %v2811
        %v2813 = vmul.f32 %v2538, 1.442695
        %v2814 = vpow.pop %v2813
        %v2815 = vmul.f32 %v2539, 1.442695
        %v2816 = vpow.pop %v2815
        %v2817 = vmul.f32 %v2540, 1.442695
        %v2818 = vpow.pop %v2817
        %v2819 = vmul.f32 %v2541, 1.442695
        %v2820 = vpow.pop %v2819
        %v2821 = vmul.f32 %v2542, 1.442695
        %v2822 = vpow.pop %v2821
        %v2823 = vmul.f32 %v2543, 1.442695
        %v2824 = vpow.pop %v2823
        %v2825 = vmul.f32 %v2544, 1.442695
        %v2826 = vpow.pop %v2825
        %v2827 = vmul.f32 %v2545, 1.442695
        %v2828 = vpow.pop %v2827
        %v2829 = vmul.f32 %v2546, 1.442695
        %v2830 = vpow.pop %v2829
        %v2831 = vmul.f32 %v2547, 1.442695
        %v2832 = vpow.pop %v2831
        %v2833 = vmul.f32 %v2548, 1.442695
        %v2834 = vpow.pop %v2833
        %v2835 = vmul.f32 %v2549, 1.442695
        %v2836 = vpow.pop %v2835
        %v2837 = vmul.f32 %v2550, 1.442695
        %v2838 = vpow.pop %v2837
        %v2839 = vmul.f32 %v2551, 1.442695
        %v2840 = vpow.pop %v2839
        %v2841 = vmul.f32 %v2552, 1.442695
        %v2842 = vpow.pop %v2841
        %v2843 = vmul.f32 %v2553, 1.442695
        %v2844 = vpow.pop %v2843
        %v2845 = vmul.f32 %v2554, 1.442695
        %v2846 = vpow.pop %v2845
        %v2847 = vmul.f32 %v2555, 1.442695
        %v2848 = vpow.pop %v2847
        %v2849 = vmul.f32 %v2556, 1.442695
        %v2850 = vpow.pop %v2849
        %v2851 = vmul.f32 %v2557, 1.442695
        %v2852 = vpow.pop %v2851
        %v2853 = vmul.f32 %v2558, 1.442695
        %v2854 = vpow.pop %v2853
        %v2855 = vmul.f32 %v2559, 1.442695
        %v2856 = vpow.pop %v2855
        %v2857 = vmul.f32 %v2560, 1.442695
        %v2858 = vpow.pop %v2857
        %v2859 = vmul.f32 %v2561, 1.442695
        %v2860 = vpow.pop %v2859
        %v2861 = vmul.f32 %v2562, 1.442695
        %v2862 = vpow.pop %v2861
        %v2863 = vmul.f32 %v2563, 1.442695
        %v2864 = vpow.pop %v2863
        %v2865 = vmul.f32 %v2564, 1.442695
        %v2866 = vpow.pop %v2865
        %v2867 = vmul.f32 %v2565, 1.442695
        %v2868 = vpow.pop %v2867
        %v2869 = vmul.f32 %v2566, 1.442695
        %v2870 = vpow.pop %v2869
        %v2871 = vmul.f32 %v2567, 1.442695
        %v2872 = vpow.pop %v2871
        %v2873 = vmul.f32 %v2568, 1.442695
        %v2874 = vpow.pop %v2873
        %v2875 = vmul.f32 %v2569, 1.442695
        %v2876 = vpow.pop %v2875
        %v2877 = vmul.f32 %v2570, 1.442695
        %v2878 = vpow.pop %v2877
        %v2879 = vmul.f32 %v2571, 1.442695
        %v2880 = vpow.pop %v2879
        %v2881 = vmul.f32 %v2572, 1.442695
        %v2882 = vpow.pop %v2881
        %v2883 = vmul.f32 %v2573, 1.442695
        %v2884 = vpow.pop %v2883
        %v2885 = vmul.f32 %v2574, 1.442695
        %v2886 = vpow.pop %v2885
        %v2887 = vmul.f32 %v2575, 1.442695
        %v2888 = vpow.pop %v2887
        %v2889 = vmul.f32 %v2576, 1.442695
        %v2890 = vpow.pop %v2889
        %v2891 = vmul.f32 %v2577, 1.442695
        %v2892 = vpow.pop %v2891
        %v2893 = vmul.f32 %v2578, 1.442695
        %v2894 = vpow.pop %v2893
        %v2895 = vmul.f32 %v2579, 1.442695
        %v2896 = vpow.pop %v2895
        %v2897 = vmul.f32 %v2580, 1.442695
        %v2898 = vpow.pop %v2897
        %v2899 = vmul.f32 %v2581, 1.442695
        %v2900 = vpow.pop %v2899
        %v2901 = vmul.f32 %v2582, 1.442695
        %v2902 = vpow.pop %v2901
        %v2903 = vmul.f32 %v2583, 1.442695
        %v2904 = vpow.pop %v2903
        %v2905 = vmul.f32 %v2584, 1.442695
        %v2906 = vpow.pop %v2905
        %v2907 = vmul.f32 %v2585, 1.442695
        %v2908 = vpow.pop %v2907
        %v2909 = vmul.f32 %v2586, 1.442695
        %v2910 = vpow.pop %v2909
        %v2911 = vmul.f32 %v2587, 1.442695
        %v2912 = vpow.pop %v2911
        %v2913 = vmul.f32 %v2588, 1.442695
        %v2914 = vpow.pop %v2913
        %v2915 = vmul.f32 %v2589, 1.442695
        %v2916 = vpow.pop %v2915
        %v2917 = vmul.f32 %v2590, 1.442695
        %v2918 = vpow.pop %v2917
        %v2919 = vmul.f32 %v2591, 1.442695
        %v2920 = vpow.pop %v2919
        %v2921 = vmul.f32 %v2592, 1.442695
        %v2922 = vpow.pop %v2921
        %v2923 = vmul.f32 %v2593, 1.442695
        %v2924 = vpow.pop %v2923
        %v2925 = vmul.f32 %v2594, 1.442695
        %v2926 = vpow.pop %v2925
        %v2927 = vmul.f32 %v2595, 1.442695
        %v2928 = vpow.pop %v2927
        %v2929 = vmul.f32 %v2596, 1.442695
        %v2930 = vpow.pop %v2929
        %v2931 = vmul.f32 %v2597, 1.442695
        %v2932 = vpow.pop %v2931
        %v2933 = vmul.f32 %v2598, 1.442695
        %v2934 = vpow.pop %v2933
        %v2935 = vmul.f32 %v2599, 1.442695
        %v2936 = vpow.pop %v2935
        %v2937 = vmul.f32 %v2600, 1.442695
        %v2938 = vpow.pop %v2937
        %v2939 = vmul.f32 %v2601, 1.442695
        %v2940 = vpow.pop %v2939
        %v2941 = vmul.f32 %v2602, 1.442695
        %v2942 = vpow.pop %v2941
        %v2943 = vmul.f32 %v2603, 1.442695
        %v2944 = vpow.pop %v2943
        %v2945 = vmul.f32 %v2604, 1.442695
        %v2946 = vpow.pop %v2945
        %v2947 = vmul.f32 %v2605, 1.442695
        %v2948 = vpow.pop %v2947
        %v2949 = vmul.f32 %v2606, 1.442695
        %v2950 = vpow.pop %v2949
        %v2951 = vmul.f32 %v2607, 1.442695
        %v2952 = vpow.pop %v2951
        %v2953 = vmul.f32 %v2608, 1.442695
        %v2954 = vpow.pop %v2953
        %v2955 = vmul.f32 %v2609, 1.442695
        %v2956 = vpow.pop %v2955
        %v2957 = vmul.f32 %v2610, 1.442695
        %v2958 = vpow.pop %v2957
        %v2959 = vmul.f32 %v2611, 1.442695
        %v2960 = vpow.pop %v2959
        %v2961 = vmul.f32 %v2612, 1.442695
        %v2962 = vpow.pop %v2961
        %v2963 = vmul.f32 %v2613, 1.442695
        %v2964 = vpow.pop %v2963
        %v2965 = vmul.f32 %v2614, 1.442695
        %v2966 = vpow.pop %v2965
        %v2967 = vmul.f32 %v2615, 1.442695
        %v2968 = vpow.pop %v2967
        %v2969 = vmul.f32 %v2616, 1.442695
        %v2970 = vpow.pop %v2969
        %v2971 = vmul.f32 %v2617, 1.442695
        %v2972 = vpow.pop %v2971
        %v2973 = vmul.f32 %v2618, 1.442695
        %v2974 = vpow.pop %v2973
        %v2975 = vmul.f32 %v2619, 1.442695
        %v2976 = vpow.pop %v2975
        %v2977 = vmul.f32 %v2620, 1.442695
        %v2978 = vpow.pop %v2977
        %v2979 = vmul.f32 %v2621, 1.442695
        %v2980 = vpow.pop %v2979
        %v2981 = vmul.f32 %v2622, 1.442695
        %v2982 = vpow.pop %v2981
        %v2983 = vmul.f32 %v2623, 1.442695
        %v2984 = vpow.pop %v2983
        %v2985 = vmul.f32 %v2624, 1.442695
        %v2986 = vpow.pop %v2985
        %v2987 = vmul.f32 %v2625, 1.442695
        %v2988 = vpow.pop %v2987
        %v2989 = vmul.f32 %v2626, 1.442695
        %v2990 = vpow.pop %v2989
        %v2991 = vmul.f32 %v2627, 1.442695
        %v2992 = vpow.pop %v2991
        %v2993 = vmul.f32 %v2628, 1.442695
        %v2994 = vpow.pop %v2993
        %v2995 = vmul.f32 %v2629, 1.442695
        %v2996 = vpow.pop %v2995
        %v2997 = vmul.f32 %v2630, 1.442695
        %v2998 = vpow.pop %v2997
        %v2999 = vmul.f32 %v2631, 1.442695
        %v3000 = vpow.pop %v2999
        %v3001 = vmul.f32 %v2632, 1.442695
        %v3002 = vpow.pop %v3001
        %v3003 = vmul.f32 %v2633, 1.442695
        %v3004 = vpow.pop %v3003
        %v3005 = vmul.f32 %v2634, 1.442695
        %v3006 = vpow.pop %v3005
        %v3007 = vmul.f32 %v2635, 1.442695
        %v3008 = vpow.pop %v3007
        %v3009 = vmul.f32 %v2636, 1.442695
        %v3010 = vpow.pop %v3009
        %v3011 = vmul.f32 %v2637, 1.442695
        %v3012 = vpow.pop %v3011
        %v3013 = vmul.f32 %v2638, 1.442695
        %v3014 = vpow.pop %v3013
        %v3015 = vmul.f32 %v2639, 1.442695
        %v3016 = vpow.pop %v3015
        %v3017 = vmul.f32 %v2640, 1.442695
        %v3018 = vpow.pop %v3017
        %v3019 = vmul.f32 %v2641, 1.442695
        %v3020 = vpow.pop %v3019
        %v3021 = vmul.f32 %v2642, 1.442695
        %v3022 = vpow.pop %v3021
        %v3023 = vmul.f32 %v2643, 1.442695
        %v3024 = vpow.pop %v3023
        %v3025 = vmul.f32 %v2644, 1.442695
        %v3026 = vpow.pop %v3025
        %v3027 = vmul.f32 %v2645, 1.442695
        %v3028 = vpow.pop %v3027
        %v3029 = vmul.f32 %v2646, 1.442695
        %v3030 = vpow.pop %v3029
        %v3031 = vmul.f32 %v2647, 1.442695
        %v3032 = vpow.pop %v3031
        %v3033 = vmul.f32 %v2648, 1.442695
        %v3034 = vpow.pop %v3033
        %v3035 = vmul.f32 %v2649, 1.442695
        %v3036 = vpow.pop %v3035
        %v3037 = vmul.f32 %v2650, 1.442695
        %v3038 = vpow.pop %v3037
        %v3039 = vmul.f32 %v2651, 1.442695
        %v3040 = vpow.pop %v3039
        %v3041 = vmul.f32 %v2652, 1.442695
        %v3042 = vpow.pop %v3041
        %v3043 = vmul.f32 %v2653, 1.442695
        %v3044 = vpow.pop %v3043
        %v3045 = vmul.f32 %v2654, 1.442695
        %v3046 = vpow.pop %v3045
        %v3047 = vmul.f32 %v2655, 1.442695
        %v3048 = vpow.pop %v3047
        %v3049 = vmul.f32 %v2656, 1.442695
        %v3050 = vpow.pop %v3049
        %v3051 = vmul.f32 %v2657, 1.442695
        %v3052 = vpow.pop %v3051
        %v3053 = vmul.f32 %v2658, 1.442695
        %v3054 = vpow.pop %v3053
        %v3055 = vmul.f32 %v2659, 1.442695
        %v3056 = vpow.pop %v3055
        %v3057 = vmul.f32 %v2660, 1.442695
        %v3058 = vpow.pop %v3057
        %v3059 = vmul.f32 %v2661, 1.442695
        %v3060 = vpow.pop %v3059
        %v3061 = vmul.f32 %v2662, 1.442695
        %v3062 = vpow.pop %v3061
        %v3063 = vmul.f32 %v2663, 1.442695
        %v3064 = vpow.pop %v3063
        %v3065 = vmul.f32 %v2664, 1.442695
        %v3066 = vpow.pop %v3065
        %v3067 = vmul.f32 %v2665, 1.442695
        %v3068 = vpow.pop %v3067
        %v3069 = vmul.f32 %v2666, 1.442695
        %v3070 = vpow.pop %v3069
        %v3071 = vmul.f32 %v2667, 1.442695
        %v3072 = vpow.pop %v3071
        %v3073 = vmul.f32 %v2668, 1.442695
        %v3074 = vpow.pop %v3073
        %v3075 = vmul.f32 %v2669, 1.442695
        %v3076 = vpow.pop %v3075
        %v3077 = vmul.f32 %v2670, 1.442695
        %v3078 = vpow.pop %v3077
        %v3079 = vmul.f32 %v2671, 1.442695
        %v3080 = vpow.pop %v3079
        %v3081 = vmul.f32 %v2672, 1.442695
        %v3082 = vpow.pop %v3081
        %v3083 = vmul.f32 %v2673, 1.442695
        %v3084 = vpow.pop %v3083
        %v3085 = vmul.f32 %v2674, 1.442695
        %v3086 = vpow.pop %v3085
        %v3087 = vmul.f32 %v2675, 1.442695
        %v3088 = vpow.pop %v3087
        %v3089 = vmul.f32 %v2676, 1.442695
        %v3090 = vpow.pop %v3089
        %v3091 = vmul.f32 %v2677, 1.442695
        %v3092 = vpow.pop %v3091
        %v3093 = vmul.f32 %v2678, 1.442695
        %v3094 = vpow.pop %v3093
        %v3095 = vmul.f32 %v2679, 1.442695
        %v3096 = vpow.pop %v3095
        %v3097 = vmul.f32 %v2680, 1.442695
        %v3098 = vpow.pop %v3097
        %v3099 = vmul.f32 %v2681, 1.442695
        %v3100 = vpow.pop %v3099
        %v3101 = vmul.f32 %v2682, 1.442695
        %v3102 = vpow.pop %v3101
        %v3103 = vmul.f32 %v2683, 1.442695
        %v3104 = vpow.pop %v3103
        %v3105 = vmul.f32 %v2684, 1.442695
        %v3106 = vpow.pop %v3105
        %v3107 = vmul.f32 %v2685, 1.442695
        %v3108 = vpow.pop %v3107
        %v3109 = vmul.f32 %v2686, 1.442695
        %v3110 = vpow.pop %v3109
        %v3111 = vmul.f32 %v2687, 1.442695
        %v3112 = vpow.pop %v3111
        %v3113 = vmul.f32 %v2688, 1.442695
        %v3114 = vpow.pop %v3113
        %v3115 = vmul.f32 %v2689, 1.442695
        %v3116 = vpow.pop %v3115
        %v3117 = vmul.f32 %v2690, 1.442695
        %v3118 = vpow.pop %v3117
        %v3119 = vmul.f32 %v2691, 1.442695
        %v3120 = vpow.pop %v3119
        %v3121 = vmul.f32 %v2692, 1.442695
        %v3122 = vpow.pop %v3121
        %v3123 = vmul.f32 %v2693, 1.442695
        %v3124 = vpow.pop %v3123
        %v3125 = vmul.f32 %v2694, 1.442695
        %v3126 = vpow.pop %v3125
        %v3127 = vmul.f32 %v2695, 1.442695
        %v3128 = vpow.pop %v3127
        %v3129 = vmul.f32 %v2696, 1.442695
        %v3130 = vpow.pop %v3129
        %v3131 = vmul.f32 %v2697, 1.442695
        %v3132 = vpow.pop %v3131
        %v3133 = vmul.f32 %v2698, 1.442695
        %v3134 = vpow.pop %v3133
        %v3135 = vmul.f32 %v2699, 1.442695
        %v3136 = vpow.pop %v3135
        %v3137 = vmul.f32 %v2700, 1.442695
        %v3138 = vpow.pop %v3137
        %v3139 = vmul.f32 %v2701, 1.442695
        %v3140 = vpow.pop %v3139
        %v3141 = vmul.f32 %v2702, 1.442695
        %v3142 = vpow.pop %v3141
        %v3143 = vmul.f32 %v2703, 1.442695
        %v3144 = vpow.pop %v3143
        %v3145 = vmul.f32 %v2704, 1.442695
        %v3146 = vpow.pop %v3145
        %v3147 = vmul.f32 %v2705, 1.442695
        %v3148 = vpow.pop %v3147
        %v3149 = vmul.f32 %v2706, 1.442695
        %v3150 = vpow.pop %v3149
        %v3151 = vmul.f32 %v2707, 1.442695
        %v3152 = vpow.pop %v3151
        %v3153 = vmul.f32 %v2708, 1.442695
        %v3154 = vpow.pop %v3153
        %v3155 = vmul.f32 %v2709, 1.442695
        %v3156 = vpow.pop %v3155
        %v3157 = vmul.f32 %v2710, 1.442695
        %v3158 = vpow.pop %v3157
        %v3159 = vmul.f32 %v2711, 1.442695
        %v3160 = vpow.pop %v3159
        %v3161 = vmul.f32 %v2712, 1.442695
        %v3162 = vpow.pop %v3161
        %v3163 = vmul.f32 %v2713, 1.442695
        %v3164 = vpow.pop %v3163
        %v3165 = vmul.f32 %v2714, 1.442695
        %v3166 = vpow.pop %v3165
        %v3167 = vmul.f32 %v2715, 1.442695
        %v3168 = vpow.pop %v3167
        %v3169 = vmul.f32 %v2716, 1.442695
        %v3170 = vpow.pop %v3169
        %v3171 = vmul.f32 %v2717, 1.442695
        %v3172 = vpow.pop %v3171
        %v3173 = vmul.f32 %v2718, 1.442695
        %v3174 = vpow.pop %v3173
        %v3175 = vmul.f32 %v2719, 1.442695
        %v3176 = vpow.pop %v3175
        %v3177 = vmul.f32 %v2720, 1.442695
        %v3178 = vpow.pop %v3177
        %v3179 = vmul.f32 %v2721, 1.442695
        %v3180 = vpow.pop %v3179
        %v3181 = vmul.f32 %v2722, 1.442695
        %v3182 = vpow.pop %v3181
        %v3183 = vmul.f32 %v2723, 1.442695
        %v3184 = vpow.pop %v3183
        %v3185 = vmul.f32 %v2724, 1.442695
        %v3186 = vpow.pop %v3185
        %v3187 = vmul.f32 %v2725, 1.442695
        %v3188 = vpow.pop %v3187
        %v3189 = vmul.f32 %v2726, 1.442695
        %v3190 = vpow.pop %v3189
        %v3191 = vmul.f32 %v2727, 1.442695
        %v3192 = vpow.pop %v3191
        %v3193 = vmul.f32 %v2728, 1.442695
        %v3194 = vpow.pop %v3193
        %v3195 = vmul.f32 %v2729, 1.442695
        %v3196 = vpow.pop %v3195
        %v3197 = vmul.f32 %v2730, 1.442695
        %v3198 = vpow.pop %v3197
        %v3199 = vmul.f32 %v2731, 1.442695
        %v3200 = vpow.pop %v3199
        %v3201 = vmul.f32 %v2732, 1.442695
        %v3202 = vpow.pop %v3201
        %v3203 = vmul.f32 %v2733, 1.442695
        %v3204 = vpow.pop %v3203
        %v3205 = vmul.f32 %v2734, 1.442695
        %v3206 = vpow.pop %v3205
        %v3207 = vmul.f32 %v2735, 1.442695
        %v3208 = vpow.pop %v3207
        %v3209 = vmul.f32 %v2736, 1.442695
        %v3210 = vpow.pop %v3209
        %v3211 = vmul.f32 %v2737, 1.442695
        %v3212 = vpow.pop %v3211
        %v3213 = vmul.f32 %v2738, 1.442695
        %v3214 = vpow.pop %v3213
        %v3215 = vmul.f32 %v2739, 1.442695
        %v3216 = vpow.pop %v3215
        %v3217 = vmul.f32 %v2740, 1.442695
        %v3218 = vpow.pop %v3217
        %v3219 = vmul.f32 %v2741, 1.442695
        %v3220 = vpow.pop %v3219
        %v3221 = vmul.f32 %v2742, 1.442695
        %v3222 = vpow.pop %v3221
        %v3223 = vmul.f32 %v2743, 1.442695
        %v3224 = vpow.pop %v3223
        %v3225 = vmul.f32 %v2744, 1.442695
        %v3226 = vpow.pop %v3225
        %v3227 = vmul.f32 %v2745, 1.442695
        %v3228 = vpow.pop %v3227
        %v3229 = vmul.f32 %v2746, 1.442695
        %v3230 = vpow.pop %v3229
        %v3231 = vmul.f32 %v2747, 1.442695
        %v3232 = vpow.pop %v3231
        %v3233 = vmul.f32 %v2748, 1.442695
        %v3234 = vpow.pop %v3233
        %v3235 = vmul.f32 %v2749, 1.442695
        %v3236 = vpow.pop %v3235
        %v3237 = vmul.f32 %v2750, 1.442695
        %v3238 = vpow.pop %v3237
        %v3239 = vmul.f32 %v2751, 1.442695
        %v3240 = vpow.pop %v3239
        %v3241 = vmul.f32 %v2752, 1.442695
        %v3242 = vpow.pop %v3241
        %v3243 = vmul.f32 %v2753, 1.442695
        %v3244 = vpow.pop %v3243
        %v3245 = vmul.f32 %v2754, 1.442695
        %v3246 = vpow.pop %v3245
        %v3247 = vmul.f32 %v2755, 1.442695
        %v3248 = vpow.pop %v3247
        %v3249 = vmul.f32 %v2756, 1.442695
        %v3250 = vpow.pop %v3249
        %v3251 = vmul.f32 %v2757, 1.442695
        %v3252 = vpow.pop %v3251
        %v3253 = vmul.f32 %v2758, 1.442695
        %v3254 = vpow.pop %v3253
        %v3255 = vmul.f32 %v2759, 1.442695
        %v3256 = vpow.pop %v3255
        %v3257 = vmul.f32 %v2760, 1.442695
        %v3258 = vpow.pop %v3257
        %v3259 = vmul.f32 %v2761, 1.442695
        %v3260 = vpow.pop %v3259
        %v3261 = vmul.f32 %v2762, 1.442695
        %v3262 = vpow.pop %v3261
        %v3263 = vmul.f32 %v2763, 1.442695
        %v3264 = vpow.pop %v3263
        %v3265 = vmul.f32 %v2764, 1.442695
        %v3266 = vpow.pop %v3265
        %v3267 = vmul.f32 %v2765, 1.442695
        %v3268 = vpow.pop %v3267
        %v3269 = vmul.f32 %v2766, 1.442695
        %v3270 = vpow.pop %v3269
        %v3271 = vmul.f32 %v2767, 1.442695
        %v3272 = vpow.pop %v3271
        %v3273 = vmul.f32 %v2768, 1.442695
        %v3274 = vpow.pop %v3273
        %v3275 = vmul.f32 %v2769, 1.442695
        %v3276 = vpow.pop %v3275
        %v3277 = vmul.f32 %v2770, 1.442695
        %v3278 = vpow.pop %v3277
        %v3279 = vmul.f32 %v2771, 1.442695
        %v3280 = vpow.pop %v3279
        %v3281 = vmul.f32 %v2772, 1.442695
        %v3282 = vpow.pop %v3281
        %v3283 = vmul.f32 %v2773, 1.442695
        %v3284 = vpow.pop %v3283
        %v3285 = vmul.f32 %v2774, 1.442695
        %v3286 = vpow.pop %v3285
        %v3287 = vadd.f32 %v2776, %v2778
        %3288 = vadd.xlane.f32.xlu0 %v3287
        %v3289 = vpop.xlane.xlu0 %3288
        %v3290 = vadd.f32 %v2780, %v2782
        %3291 = vadd.xlane.f32.xlu0 %v3290
        %v3292 = vpop.xlane.xlu0 %3291
        %v3293 = vadd.f32 %v2784, %v2786
        %3294 = vadd.xlane.f32.xlu0 %v3293
        %v3295 = vpop.xlane.xlu0 %3294
        %v3296 = vadd.f32 %v2788, %v2790
        %3297 = vadd.xlane.f32.xlu0 %v3296
        %v3298 = vpop.xlane.xlu0 %3297
        %v3299 = vadd.f32 %v2792, %v2794
        %3300 = vadd.xlane.f32.xlu0 %v3299
        %v3301 = vpop.xlane.xlu0 %3300
        %v3302 = vadd.f32 %v2796, %v2798
        %3303 = vadd.xlane.f32.xlu0 %v3302
        %v3304 = vpop.xlane.xlu0 %3303
        %v3305 = vadd.f32 %v2800, %v2802
        %3306 = vadd.xlane.f32.xlu0 %v3305
        %v3307 = vpop.xlane.xlu0 %3306
        %v3308 = vadd.f32 %v2804, %v2806
        %3309 = vadd.xlane.f32.xlu0 %v3308
        %v3310 = vpop.xlane.xlu0 %3309
        %v3311 = vadd.f32 %v2808, %v2810
        %3312 = vadd.xlane.f32.xlu0 %v3311
        %v3313 = vpop.xlane.xlu0 %3312
        %v3314 = vadd.f32 %v2812, %v2814
        %3315 = vadd.xlane.f32.xlu0 %v3314
        %v3316 = vpop.xlane.xlu0 %3315
        %v3317 = vadd.f32 %v2816, %v2818
        %3318 = vadd.xlane.f32.xlu0 %v3317
        %v3319 = vpop.xlane.xlu0 %3318
        %v3320 = vadd.f32 %v2820, %v2822
        %3321 = vadd.xlane.f32.xlu0 %v3320
        %v3322 = vpop.xlane.xlu0 %3321
        %v3323 = vadd.f32 %v2824, %v2826
        %3324 = vadd.xlane.f32.xlu0 %v3323
        %v3325 = vpop.xlane.xlu0 %3324
        %v3326 = vadd.f32 %v2828, %v2830
        %3327 = vadd.xlane.f32.xlu0 %v3326
        %v3328 = vpop.xlane.xlu0 %3327
        %v3329 = vadd.f32 %v2832, %v2834
        %3330 = vadd.xlane.f32.xlu0 %v3329
        %v3331 = vpop.xlane.xlu0 %3330
        %v3332 = vadd.f32 %v2836, %v2838
        %3333 = vadd.xlane.f32.xlu0 %v3332
        %v3334 = vpop.xlane.xlu0 %3333
        %v3335 = vadd.f32 %v2840, %v2842
        %3336 = vadd.xlane.f32.xlu0 %v3335
        %v3337 = vpop.xlane.xlu0 %3336
        %v3338 = vadd.f32 %v2844, %v2846
        %3339 = vadd.xlane.f32.xlu0 %v3338
        %v3340 = vpop.xlane.xlu0 %3339
        %v3341 = vadd.f32 %v2848, %v2850
        %3342 = vadd.xlane.f32.xlu0 %v3341
        %v3343 = vpop.xlane.xlu0 %3342
        %v3344 = vadd.f32 %v2852, %v2854
        %3345 = vadd.xlane.f32.xlu0 %v3344
        %v3346 = vpop.xlane.xlu0 %3345
        %v3347 = vadd.f32 %v2856, %v2858
        %3348 = vadd.xlane.f32.xlu0 %v3347
        %v3349 = vpop.xlane.xlu0 %3348
        %v3350 = vadd.f32 %v2860, %v2862
        %3351 = vadd.xlane.f32.xlu0 %v3350
        %v3352 = vpop.xlane.xlu0 %3351
        %v3353 = vadd.f32 %v2864, %v2866
        %3354 = vadd.xlane.f32.xlu0 %v3353
        %v3355 = vpop.xlane.xlu0 %3354
        %v3356 = vadd.f32 %v2868, %v2870
        %3357 = vadd.xlane.f32.xlu0 %v3356
        %v3358 = vpop.xlane.xlu0 %3357
        %v3359 = vadd.f32 %v2872, %v2874
        %3360 = vadd.xlane.f32.xlu0 %v3359
        %v3361 = vpop.xlane.xlu0 %3360
        %v3362 = vadd.f32 %v2876, %v2878
        %3363 = vadd.xlane.f32.xlu0 %v3362
        %v3364 = vpop.xlane.xlu0 %3363
        %v3365 = vadd.f32 %v2880, %v2882
        %3366 = vadd.xlane.f32.xlu0 %v3365
        %v3367 = vpop.xlane.xlu0 %3366
        %v3368 = vadd.f32 %v2884, %v2886
        %3369 = vadd.xlane.f32.xlu0 %v3368
        %v3370 = vpop.xlane.xlu0 %3369
        %v3371 = vadd.f32 %v2888, %v2890
        %3372 = vadd.xlane.f32.xlu0 %v3371
        %v3373 = vpop.xlane.xlu0 %3372
        %v3374 = vadd.f32 %v2892, %v2894
        %3375 = vadd.xlane.f32.xlu0 %v3374
        %v3376 = vpop.xlane.xlu0 %3375
        %v3377 = vadd.f32 %v2896, %v2898
        %3378 = vadd.xlane.f32.xlu0 %v3377
        %v3379 = vpop.xlane.xlu0 %3378
        %v3380 = vadd.f32 %v2900, %v2902
        %3381 = vadd.xlane.f32.xlu0 %v3380
        %v3382 = vpop.xlane.xlu0 %3381
        %v3383 = vadd.f32 %v2904, %v2906
        %3384 = vadd.xlane.f32.xlu0 %v3383
        %v3385 = vpop.xlane.xlu0 %3384
        %v3386 = vadd.f32 %v2908, %v2910
        %3387 = vadd.xlane.f32.xlu0 %v3386
        %v3388 = vpop.xlane.xlu0 %3387
        %v3389 = vadd.f32 %v2912, %v2914
        %3390 = vadd.xlane.f32.xlu0 %v3389
        %v3391 = vpop.xlane.xlu0 %3390
        %v3392 = vadd.f32 %v2916, %v2918
        %3393 = vadd.xlane.f32.xlu0 %v3392
        %v3394 = vpop.xlane.xlu0 %3393
        %v3395 = vadd.f32 %v2920, %v2922
        %3396 = vadd.xlane.f32.xlu0 %v3395
        %v3397 = vpop.xlane.xlu0 %3396
        %v3398 = vadd.f32 %v2924, %v2926
        %3399 = vadd.xlane.f32.xlu0 %v3398
        %v3400 = vpop.xlane.xlu0 %3399
        %v3401 = vadd.f32 %v2928, %v2930
        %3402 = vadd.xlane.f32.xlu0 %v3401
        %v3403 = vpop.xlane.xlu0 %3402
        %v3404 = vadd.f32 %v2932, %v2934
        %3405 = vadd.xlane.f32.xlu0 %v3404
        %v3406 = vpop.xlane.xlu0 %3405
        %v3407 = vadd.f32 %v2936, %v2938
        %3408 = vadd.xlane.f32.xlu0 %v3407
        %v3409 = vpop.xlane.xlu0 %3408
        %v3410 = vadd.f32 %v2940, %v2942
        %3411 = vadd.xlane.f32.xlu0 %v3410
        %v3412 = vpop.xlane.xlu0 %3411
        %v3413 = vadd.f32 %v2944, %v2946
        %3414 = vadd.xlane.f32.xlu0 %v3413
        %v3415 = vpop.xlane.xlu0 %3414
        %v3416 = vadd.f32 %v2948, %v2950
        %3417 = vadd.xlane.f32.xlu0 %v3416
        %v3418 = vpop.xlane.xlu0 %3417
        %v3419 = vadd.f32 %v2952, %v2954
        %3420 = vadd.xlane.f32.xlu0 %v3419
        %v3421 = vpop.xlane.xlu0 %3420
        %v3422 = vadd.f32 %v2956, %v2958
        %3423 = vadd.xlane.f32.xlu0 %v3422
        %v3424 = vpop.xlane.xlu0 %3423
        %v3425 = vadd.f32 %v2960, %v2962
        %3426 = vadd.xlane.f32.xlu0 %v3425
        %v3427 = vpop.xlane.xlu0 %3426
        %v3428 = vadd.f32 %v2964, %v2966
        %3429 = vadd.xlane.f32.xlu0 %v3428
        %v3430 = vpop.xlane.xlu0 %3429
        %v3431 = vadd.f32 %v2968, %v2970
        %3432 = vadd.xlane.f32.xlu0 %v3431
        %v3433 = vpop.xlane.xlu0 %3432
        %v3434 = vadd.f32 %v2972, %v2974
        %3435 = vadd.xlane.f32.xlu0 %v3434
        %v3436 = vpop.xlane.xlu0 %3435
        %v3437 = vadd.f32 %v2976, %v2978
        %3438 = vadd.xlane.f32.xlu0 %v3437
        %v3439 = vpop.xlane.xlu0 %3438
        %v3440 = vadd.f32 %v2980, %v2982
        %3441 = vadd.xlane.f32.xlu0 %v3440
        %v3442 = vpop.xlane.xlu0 %3441
        %v3443 = vadd.f32 %v2984, %v2986
        %3444 = vadd.xlane.f32.xlu0 %v3443
        %v3445 = vpop.xlane.xlu0 %3444
        %v3446 = vadd.f32 %v2988, %v2990
        %3447 = vadd.xlane.f32.xlu0 %v3446
        %v3448 = vpop.xlane.xlu0 %3447
        %v3449 = vadd.f32 %v2992, %v2994
        %3450 = vadd.xlane.f32.xlu0 %v3449
        %v3451 = vpop.xlane.xlu0 %3450
        %v3452 = vadd.f32 %v2996, %v2998
        %3453 = vadd.xlane.f32.xlu0 %v3452
        %v3454 = vpop.xlane.xlu0 %3453
        %v3455 = vadd.f32 %v3000, %v3002
        %3456 = vadd.xlane.f32.xlu0 %v3455
        %v3457 = vpop.xlane.xlu0 %3456
        %v3458 = vadd.f32 %v3004, %v3006
        %3459 = vadd.xlane.f32.xlu0 %v3458
        %v3460 = vpop.xlane.xlu0 %3459
        %v3461 = vadd.f32 %v3008, %v3010
        %3462 = vadd.xlane.f32.xlu0 %v3461
        %v3463 = vpop.xlane.xlu0 %3462
        %v3464 = vadd.f32 %v3012, %v3014
        %3465 = vadd.xlane.f32.xlu0 %v3464
        %v3466 = vpop.xlane.xlu0 %3465
        %v3467 = vadd.f32 %v3016, %v3018
        %3468 = vadd.xlane.f32.xlu0 %v3467
        %v3469 = vpop.xlane.xlu0 %3468
        %v3470 = vadd.f32 %v3020, %v3022
        %3471 = vadd.xlane.f32.xlu0 %v3470
        %v3472 = vpop.xlane.xlu0 %3471
        %v3473 = vadd.f32 %v3024, %v3026
        %3474 = vadd.xlane.f32.xlu0 %v3473
        %v3475 = vpop.xlane.xlu0 %3474
        %v3476 = vadd.f32 %v3028, %v3030
        %3477 = vadd.xlane.f32.xlu0 %v3476
        %v3478 = vpop.xlane.xlu0 %3477
        %v3479 = vadd.f32 %v3032, %v3034
        %3480 = vadd.xlane.f32.xlu0 %v3479
        %v3481 = vpop.xlane.xlu0 %3480
        %v3482 = vadd.f32 %v3036, %v3038
        %3483 = vadd.xlane.f32.xlu0 %v3482
        %v3484 = vpop.xlane.xlu0 %3483
        %v3485 = vadd.f32 %v3040, %v3042
        %3486 = vadd.xlane.f32.xlu0 %v3485
        %v3487 = vpop.xlane.xlu0 %3486
        %v3488 = vadd.f32 %v3044, %v3046
        %3489 = vadd.xlane.f32.xlu0 %v3488
        %v3490 = vpop.xlane.xlu0 %3489
        %v3491 = vadd.f32 %v3048, %v3050
        %3492 = vadd.xlane.f32.xlu0 %v3491
        %v3493 = vpop.xlane.xlu0 %3492
        %v3494 = vadd.f32 %v3052, %v3054
        %3495 = vadd.xlane.f32.xlu0 %v3494
        %v3496 = vpop.xlane.xlu0 %3495
        %v3497 = vadd.f32 %v3056, %v3058
        %3498 = vadd.xlane.f32.xlu0 %v3497
        %v3499 = vpop.xlane.xlu0 %3498
        %v3500 = vadd.f32 %v3060, %v3062
        %3501 = vadd.xlane.f32.xlu0 %v3500
        %v3502 = vpop.xlane.xlu0 %3501
        %v3503 = vadd.f32 %v3064, %v3066
        %3504 = vadd.xlane.f32.xlu0 %v3503
        %v3505 = vpop.xlane.xlu0 %3504
        %v3506 = vadd.f32 %v3068, %v3070
        %3507 = vadd.xlane.f32.xlu0 %v3506
        %v3508 = vpop.xlane.xlu0 %3507
        %v3509 = vadd.f32 %v3072, %v3074
        %3510 = vadd.xlane.f32.xlu0 %v3509
        %v3511 = vpop.xlane.xlu0 %3510
        %v3512 = vadd.f32 %v3076, %v3078
        %3513 = vadd.xlane.f32.xlu0 %v3512
        %v3514 = vpop.xlane.xlu0 %3513
        %v3515 = vadd.f32 %v3080, %v3082
        %3516 = vadd.xlane.f32.xlu0 %v3515
        %v3517 = vpop.xlane.xlu0 %3516
        %v3518 = vadd.f32 %v3084, %v3086
        %3519 = vadd.xlane.f32.xlu0 %v3518
        %v3520 = vpop.xlane.xlu0 %3519
        %v3521 = vadd.f32 %v3088, %v3090
        %3522 = vadd.xlane.f32.xlu0 %v3521
        %v3523 = vpop.xlane.xlu0 %3522
        %v3524 = vadd.f32 %v3092, %v3094
        %3525 = vadd.xlane.f32.xlu0 %v3524
        %v3526 = vpop.xlane.xlu0 %3525
        %v3527 = vadd.f32 %v3096, %v3098
        %3528 = vadd.xlane.f32.xlu0 %v3527
        %v3529 = vpop.xlane.xlu0 %3528
        %v3530 = vadd.f32 %v3100, %v3102
        %3531 = vadd.xlane.f32.xlu0 %v3530
        %v3532 = vpop.xlane.xlu0 %3531
        %v3533 = vadd.f32 %v3104, %v3106
        %3534 = vadd.xlane.f32.xlu0 %v3533
        %v3535 = vpop.xlane.xlu0 %3534
        %v3536 = vadd.f32 %v3108, %v3110
        %3537 = vadd.xlane.f32.xlu0 %v3536
        %v3538 = vpop.xlane.xlu0 %3537
        %v3539 = vadd.f32 %v3112, %v3114
        %3540 = vadd.xlane.f32.xlu0 %v3539
        %v3541 = vpop.xlane.xlu0 %3540
        %v3542 = vadd.f32 %v3116, %v3118
        %3543 = vadd.xlane.f32.xlu0 %v3542
        %v3544 = vpop.xlane.xlu0 %3543
        %v3545 = vadd.f32 %v3120, %v3122
        %3546 = vadd.xlane.f32.xlu0 %v3545
        %v3547 = vpop.xlane.xlu0 %3546
        %v3548 = vadd.f32 %v3124, %v3126
        %3549 = vadd.xlane.f32.xlu0 %v3548
        %v3550 = vpop.xlane.xlu0 %3549
        %v3551 = vadd.f32 %v3128, %v3130
        %3552 = vadd.xlane.f32.xlu0 %v3551
        %v3553 = vpop.xlane.xlu0 %3552
        %v3554 = vadd.f32 %v3132, %v3134
        %3555 = vadd.xlane.f32.xlu0 %v3554
        %v3556 = vpop.xlane.xlu0 %3555
        %v3557 = vadd.f32 %v3136, %v3138
        %3558 = vadd.xlane.f32.xlu0 %v3557
        %v3559 = vpop.xlane.xlu0 %3558
        %v3560 = vadd.f32 %v3140, %v3142
        %3561 = vadd.xlane.f32.xlu0 %v3560
        %v3562 = vpop.xlane.xlu0 %3561
        %v3563 = vadd.f32 %v3144, %v3146
        %3564 = vadd.xlane.f32.xlu0 %v3563
        %v3565 = vpop.xlane.xlu0 %3564
        %v3566 = vadd.f32 %v3148, %v3150
        %3567 = vadd.xlane.f32.xlu0 %v3566
        %v3568 = vpop.xlane.xlu0 %3567
        %v3569 = vadd.f32 %v3152, %v3154
        %3570 = vadd.xlane.f32.xlu0 %v3569
        %v3571 = vpop.xlane.xlu0 %3570
        %v3572 = vadd.f32 %v3156, %v3158
        %3573 = vadd.xlane.f32.xlu0 %v3572
        %v3574 = vpop.xlane.xlu0 %3573
        %v3575 = vadd.f32 %v3160, %v3162
        %3576 = vadd.xlane.f32.xlu0 %v3575
        %v3577 = vpop.xlane.xlu0 %3576
        %v3578 = vadd.f32 %v3164, %v3166
        %3579 = vadd.xlane.f32.xlu0 %v3578
        %v3580 = vpop.xlane.xlu0 %3579
        %v3581 = vadd.f32 %v3168, %v3170
        %3582 = vadd.xlane.f32.xlu0 %v3581
        %v3583 = vpop.xlane.xlu0 %3582
        %v3584 = vadd.f32 %v3172, %v3174
        %3585 = vadd.xlane.f32.xlu0 %v3584
        %v3586 = vpop.xlane.xlu0 %3585
        %v3587 = vadd.f32 %v3176, %v3178
        %3588 = vadd.xlane.f32.xlu0 %v3587
        %v3589 = vpop.xlane.xlu0 %3588
        %v3590 = vadd.f32 %v3180, %v3182
        %3591 = vadd.xlane.f32.xlu0 %v3590
        %v3592 = vpop.xlane.xlu0 %3591
        %v3593 = vadd.f32 %v3184, %v3186
        %3594 = vadd.xlane.f32.xlu0 %v3593
        %v3595 = vpop.xlane.xlu0 %3594
        %v3596 = vadd.f32 %v3188, %v3190
        %3597 = vadd.xlane.f32.xlu0 %v3596
        %v3598 = vpop.xlane.xlu0 %3597
        %v3599 = vadd.f32 %v3192, %v3194
        %3600 = vadd.xlane.f32.xlu0 %v3599
        %v3601 = vpop.xlane.xlu0 %3600
        %v3602 = vadd.f32 %v3196, %v3198
        %3603 = vadd.xlane.f32.xlu0 %v3602
        %v3604 = vpop.xlane.xlu0 %3603
        %v3605 = vadd.f32 %v3200, %v3202
        %3606 = vadd.xlane.f32.xlu0 %v3605
        %v3607 = vpop.xlane.xlu0 %3606
        %v3608 = vadd.f32 %v3204, %v3206
        %3609 = vadd.xlane.f32.xlu0 %v3608
        %v3610 = vpop.xlane.xlu0 %3609
        %v3611 = vadd.f32 %v3208, %v3210
        %3612 = vadd.xlane.f32.xlu0 %v3611
        %v3613 = vpop.xlane.xlu0 %3612
        %v3614 = vadd.f32 %v3212, %v3214
        %3615 = vadd.xlane.f32.xlu0 %v3614
        %v3616 = vpop.xlane.xlu0 %3615
        %v3617 = vadd.f32 %v3216, %v3218
        %3618 = vadd.xlane.f32.xlu0 %v3617
        %v3619 = vpop.xlane.xlu0 %3618
        %v3620 = vadd.f32 %v3220, %v3222
        %3621 = vadd.xlane.f32.xlu0 %v3620
        %v3622 = vpop.xlane.xlu0 %3621
        %v3623 = vadd.f32 %v3224, %v3226
        %3624 = vadd.xlane.f32.xlu0 %v3623
        %v3625 = vpop.xlane.xlu0 %3624
        %v3626 = vadd.f32 %v3228, %v3230
        %3627 = vadd.xlane.f32.xlu0 %v3626
        %v3628 = vpop.xlane.xlu0 %3627
        %v3629 = vadd.f32 %v3232, %v3234
        %3630 = vadd.xlane.f32.xlu0 %v3629
        %v3631 = vpop.xlane.xlu0 %3630
        %v3632 = vadd.f32 %v3236, %v3238
        %3633 = vadd.xlane.f32.xlu0 %v3632
        %v3634 = vpop.xlane.xlu0 %3633
        %v3635 = vadd.f32 %v3240, %v3242
        %3636 = vadd.xlane.f32.xlu0 %v3635
        %v3637 = vpop.xlane.xlu0 %3636
        %v3638 = vadd.f32 %v3244, %v3246
        %3639 = vadd.xlane.f32.xlu0 %v3638
        %v3640 = vpop.xlane.xlu0 %3639
        %v3641 = vadd.f32 %v3248, %v3250
        %3642 = vadd.xlane.f32.xlu0 %v3641
        %v3643 = vpop.xlane.xlu0 %3642
        %v3644 = vadd.f32 %v3252, %v3254
        %3645 = vadd.xlane.f32.xlu0 %v3644
        %v3646 = vpop.xlane.xlu0 %3645
        %v3647 = vadd.f32 %v3256, %v3258
        %3648 = vadd.xlane.f32.xlu0 %v3647
        %v3649 = vpop.xlane.xlu0 %3648
        %v3650 = vadd.f32 %v3260, %v3262
        %3651 = vadd.xlane.f32.xlu0 %v3650
        %v3652 = vpop.xlane.xlu0 %3651
        %v3653 = vadd.f32 %v3264, %v3266
        %3654 = vadd.xlane.f32.xlu0 %v3653
        %v3655 = vpop.xlane.xlu0 %3654
        %v3656 = vadd.f32 %v3268, %v3270
        %3657 = vadd.xlane.f32.xlu0 %v3656
        %v3658 = vpop.xlane.xlu0 %3657
        %v3659 = vadd.f32 %v3272, %v3274
        %3660 = vadd.xlane.f32.xlu0 %v3659
        %v3661 = vpop.xlane.xlu0 %3660
        %v3662 = vadd.f32 %v3276, %v3278
        %3663 = vadd.xlane.f32.xlu0 %v3662
        %v3664 = vpop.xlane.xlu0 %3663
        %v3665 = vadd.f32 %v3280, %v3282
        %3666 = vadd.xlane.f32.xlu0 %v3665
        %v3667 = vpop.xlane.xlu0 %3666
        %v3668 = vadd.f32 %v3284, %v3286
        %3669 = vadd.xlane.f32.xlu0 %v3668
        %v3670 = vpop.xlane.xlu0 %3669
        %v3671 = vrcp.pop %v3289
        %v3672 = vrcp.pop %v3292
        %v3673 = vrcp.pop %v3295
        %v3674 = vrcp.pop %v3298
        %v3675 = vrcp.pop %v3301
        %v3676 = vrcp.pop %v3304
        %v3677 = vrcp.pop %v3307
        %v3678 = vrcp.pop %v3310
        %v3679 = vrcp.pop %v3313
        %v3680 = vrcp.pop %v3316
        %v3681 = vrcp.pop %v3319
        %v3682 = vrcp.pop %v3322
        %v3683 = vrcp.pop %v3325
        %v3684 = vrcp.pop %v3328
        %v3685 = vrcp.pop %v3331
        %v3686 = vrcp.pop %v3334
        %v3687 = vrcp.pop %v3337
        %v3688 = vrcp.pop %v3340
        %v3689 = vrcp.pop %v3343
        %v3690 = vrcp.pop %v3346
        %v3691 = vrcp.pop %v3349
        %v3692 = vrcp.pop %v3352
        %v3693 = vrcp.pop %v3355
        %v3694 = vrcp.pop %v3358
        %v3695 = vrcp.pop %v3361
        %v3696 = vrcp.pop %v3364
        %v3697 = vrcp.pop %v3367
        %v3698 = vrcp.pop %v3370
        %v3699 = vrcp.pop %v3373
        %v3700 = vrcp.pop %v3376
        %v3701 = vrcp.pop %v3379
        %v3702 = vrcp.pop %v3382
        %v3703 = vrcp.pop %v3385
        %v3704 = vrcp.pop %v3388
        %v3705 = vrcp.pop %v3391
        %v3706 = vrcp.pop %v3394
        %v3707 = vrcp.pop %v3397
        %v3708 = vrcp.pop %v3400
        %v3709 = vrcp.pop %v3403
        %v3710 = vrcp.pop %v3406
        %v3711 = vrcp.pop %v3409
        %v3712 = vrcp.pop %v3412
        %v3713 = vrcp.pop %v3415
        %v3714 = vrcp.pop %v3418
        %v3715 = vrcp.pop %v3421
        %v3716 = vrcp.pop %v3424
        %v3717 = vrcp.pop %v3427
        %v3718 = vrcp.pop %v3430
        %v3719 = vrcp.pop %v3433
        %v3720 = vrcp.pop %v3436
        %v3721 = vrcp.pop %v3439
        %v3722 = vrcp.pop %v3442
        %v3723 = vrcp.pop %v3445
        %v3724 = vrcp.pop %v3448
        %v3725 = vrcp.pop %v3451
        %v3726 = vrcp.pop %v3454
        %v3727 = vrcp.pop %v3457
        %v3728 = vrcp.pop %v3460
        %v3729 = vrcp.pop %v3463
        %v3730 = vrcp.pop %v3466
        %v3731 = vrcp.pop %v3469
        %v3732 = vrcp.pop %v3472
        %v3733 = vrcp.pop %v3475
        %v3734 = vrcp.pop %v3478
        %v3735 = vrcp.pop %v3481
        %v3736 = vrcp.pop %v3484
        %v3737 = vrcp.pop %v3487
        %v3738 = vrcp.pop %v3490
        %v3739 = vrcp.pop %v3493
        %v3740 = vrcp.pop %v3496
        %v3741 = vrcp.pop %v3499
        %v3742 = vrcp.pop %v3502
        %v3743 = vrcp.pop %v3505
        %v3744 = vrcp.pop %v3508
        %v3745 = vrcp.pop %v3511
        %v3746 = vrcp.pop %v3514
        %v3747 = vrcp.pop %v3517
        %v3748 = vrcp.pop %v3520
        %v3749 = vrcp.pop %v3523
        %v3750 = vrcp.pop %v3526
        %v3751 = vrcp.pop %v3529
        %v3752 = vrcp.pop %v3532
        %v3753 = vrcp.pop %v3535
        %v3754 = vrcp.pop %v3538
        %v3755 = vrcp.pop %v3541
        %v3756 = vrcp.pop %v3544
        %v3757 = vrcp.pop %v3547
        %v3758 = vrcp.pop %v3550
        %v3759 = vrcp.pop %v3553
        %v3760 = vrcp.pop %v3556
        %v3761 = vrcp.pop %v3559
        %v3762 = vrcp.pop %v3562
        %v3763 = vrcp.pop %v3565
        %v3764 = vrcp.pop %v3568
        %v3765 = vrcp.pop %v3571
        %v3766 = vrcp.pop %v3574
        %v3767 = vrcp.pop %v3577
        %v3768 = vrcp.pop %v3580
        %v3769 = vrcp.pop %v3583
        %v3770 = vrcp.pop %v3586
        %v3771 = vrcp.pop %v3589
        %v3772 = vrcp.pop %v3592
        %v3773 = vrcp.pop %v3595
        %v3774 = vrcp.pop %v3598
        %v3775 = vrcp.pop %v3601
        %v3776 = vrcp.pop %v3604
        %v3777 = vrcp.pop %v3607
        %v3778 = vrcp.pop %v3610
        %v3779 = vrcp.pop %v3613
        %v3780 = vrcp.pop %v3616
        %v3781 = vrcp.pop %v3619
        %v3782 = vrcp.pop %v3622
        %v3783 = vrcp.pop %v3625
        %v3784 = vrcp.pop %v3628
        %v3785 = vrcp.pop %v3631
        %v3786 = vrcp.pop %v3634
        %v3787 = vrcp.pop %v3637
        %v3788 = vrcp.pop %v3640
        %v3789 = vrcp.pop %v3643
        %v3790 = vrcp.pop %v3646
        %v3791 = vrcp.pop %v3649
        %v3792 = vrcp.pop %v3652
        %v3793 = vrcp.pop %v3655
        %v3794 = vrcp.pop %v3658
        %v3795 = vrcp.pop %v3661
        %v3796 = vrcp.pop %v3664
        %v3797 = vrcp.pop %v3667
        %v3798 = vrcp.pop %v3670
        %v3799 = vmul.f32 %v2776, %v3671
        %v3800 = vmul.f32 %v2778, %v3671
        %v3801 = vmul.f32 %v2780, %v3672
        %v3802 = vmul.f32 %v2782, %v3672
        %v3803 = vmul.f32 %v2784, %v3673
        %v3804 = vmul.f32 %v2786, %v3673
        %v3805 = vmul.f32 %v2788, %v3674
        %v3806 = vmul.f32 %v2790, %v3674
        %v3807 = vmul.f32 %v2792, %v3675
        %v3808 = vmul.f32 %v2794, %v3675
        %v3809 = vmul.f32 %v2796, %v3676
        %v3810 = vmul.f32 %v2798, %v3676
        %v3811 = vmul.f32 %v2800, %v3677
        %v3812 = vmul.f32 %v2802, %v3677
        %v3813 = vmul.f32 %v2804, %v3678
        %v3814 = vmul.f32 %v2806, %v3678
        %v3815 = vmul.f32 %v2808, %v3679
        %v3816 = vmul.f32 %v2810, %v3679
        %v3817 = vmul.f32 %v2812, %v3680
        %v3818 = vmul.f32 %v2814, %v3680
        %v3819 = vmul.f32 %v2816, %v3681
        %v3820 = vmul.f32 %v2818, %v3681
        %v3821 = vmul.f32 %v2820, %v3682
        %v3822 = vmul.f32 %v2822, %v3682
        %v3823 = vmul.f32 %v2824, %v3683
        %v3824 = vmul.f32 %v2826, %v3683
        %v3825 = vmul.f32 %v2828, %v3684
        %v3826 = vmul.f32 %v2830, %v3684
        %v3827 = vmul.f32 %v2832, %v3685
        %v3828 = vmul.f32 %v2834, %v3685
        %v3829 = vmul.f32 %v2836, %v3686
        %v3830 = vmul.f32 %v2838, %v3686
        %v3831 = vmul.f32 %v2840, %v3687
        %v3832 = vmul.f32 %v2842, %v3687
        %v3833 = vmul.f32 %v2844, %v3688
        %v3834 = vmul.f32 %v2846, %v3688
        %v3835 = vmul.f32 %v2848, %v3689
        %v3836 = vmul.f32 %v2850, %v3689
        %v3837 = vmul.f32 %v2852, %v3690
        %v3838 = vmul.f32 %v2854, %v3690
        %v3839 = vmul.f32 %v2856, %v3691
        %v3840 = vmul.f32 %v2858, %v3691
        %v3841 = vmul.f32 %v2860, %v3692
        %v3842 = vmul.f32 %v2862, %v3692
        %v3843 = vmul.f32 %v2864, %v3693
        %v3844 = vmul.f32 %v2866, %v3693
        %v3845 = vmul.f32 %v2868, %v3694
        %v3846 = vmul.f32 %v2870, %v3694
        %v3847 = vmul.f32 %v2872, %v3695
        %v3848 = vmul.f32 %v2874, %v3695
        %v3849 = vmul.f32 %v2876, %v3696
        %v3850 = vmul.f32 %v2878, %v3696
        %v3851 = vmul.f32 %v2880, %v3697
        %v3852 = vmul.f32 %v2882, %v3697
        %v3853 = vmul.f32 %v2884, %v3698
        %v3854 = vmul.f32 %v2886, %v3698
        %v3855 = vmul.f32 %v2888, %v3699
        %v3856 = vmul.f32 %v2890, %v3699
        %v3857 = vmul.f32 %v2892, %v3700
        %v3858 = vmul.f32 %v2894, %v3700
        %v3859 = vmul.f32 %v2896, %v3701
        %v3860 = vmul.f32 %v2898, %v3701
        %v3861 = vmul.f32 %v2900, %v3702
        %v3862 = vmul.f32 %v2902, %v3702
        %v3863 = vmul.f32 %v2904, %v3703
        %v3864 = vmul.f32 %v2906, %v3703
        %v3865 = vmul.f32 %v2908, %v3704
        %v3866 = vmul.f32 %v2910, %v3704
        %v3867 = vmul.f32 %v2912, %v3705
        %v3868 = vmul.f32 %v2914, %v3705
        %v3869 = vmul.f32 %v2916, %v3706
        %v3870 = vmul.f32 %v2918, %v3706
        %v3871 = vmul.f32 %v2920, %v3707
        %v3872 = vmul.f32 %v2922, %v3707
        %v3873 = vmul.f32 %v2924, %v3708
        %v3874 = vmul.f32 %v2926, %v3708
        %v3875 = vmul.f32 %v2928, %v3709
        %v3876 = vmul.f32 %v2930, %v3709
        %v3877 = vmul.f32 %v2932, %v3710
        %v3878 = vmul.f32 %v2934, %v3710
        %v3879 = vmul.f32 %v2936, %v3711
        %v3880 = vmul.f32 %v2938, %v3711
        %v3881 = vmul.f32 %v2940, %v3712
        %v3882 = vmul.f32 %v2942, %v3712
        %v3883 = vmul.f32 %v2944, %v3713
        %v3884 = vmul.f32 %v2946, %v3713
        %v3885 = vmul.f32 %v2948, %v3714
        %v3886 = vmul.f32 %v2950, %v3714
        %v3887 = vmul.f32 %v2952, %v3715
        %v3888 = vmul.f32 %v2954, %v3715
        %v3889 = vmul.f32 %v2956, %v3716
        %v3890 = vmul.f32 %v2958, %v3716
        %v3891 = vmul.f32 %v2960, %v3717
        %v3892 = vmul.f32 %v2962, %v3717
        %v3893 = vmul.f32 %v2964, %v3718
        %v3894 = vmul.f32 %v2966, %v3718
        %v3895 = vmul.f32 %v2968, %v3719
        %v3896 = vmul.f32 %v2970, %v3719
        %v3897 = vmul.f32 %v2972, %v3720
        %v3898 = vmul.f32 %v2974, %v3720
        %v3899 = vmul.f32 %v2976, %v3721
        %v3900 = vmul.f32 %v2978, %v3721
        %v3901 = vmul.f32 %v2980, %v3722
        %v3902 = vmul.f32 %v2982, %v3722
        %v3903 = vmul.f32 %v2984, %v3723
        %v3904 = vmul.f32 %v2986, %v3723
        %v3905 = vmul.f32 %v2988, %v3724
        %v3906 = vmul.f32 %v2990, %v3724
        %v3907 = vmul.f32 %v2992, %v3725
        %v3908 = vmul.f32 %v2994, %v3725
        %v3909 = vmul.f32 %v2996, %v3726
        %v3910 = vmul.f32 %v2998, %v3726
        %v3911 = vmul.f32 %v3000, %v3727
        %v3912 = vmul.f32 %v3002, %v3727
        %v3913 = vmul.f32 %v3004, %v3728
        %v3914 = vmul.f32 %v3006, %v3728
        %v3915 = vmul.f32 %v3008, %v3729
        %v3916 = vmul.f32 %v3010, %v3729
        %v3917 = vmul.f32 %v3012, %v3730
        %v3918 = vmul.f32 %v3014, %v3730
        %v3919 = vmul.f32 %v3016, %v3731
        %v3920 = vmul.f32 %v3018, %v3731
        %v3921 = vmul.f32 %v3020, %v3732
        %v3922 = vmul.f32 %v3022, %v3732
        %v3923 = vmul.f32 %v3024, %v3733
        %v3924 = vmul.f32 %v3026, %v3733
        %v3925 = vmul.f32 %v3028, %v3734
        %v3926 = vmul.f32 %v3030, %v3734
        %v3927 = vmul.f32 %v3032, %v3735
        %v3928 = vmul.f32 %v3034, %v3735
        %v3929 = vmul.f32 %v3036, %v3736
        %v3930 = vmul.f32 %v3038, %v3736
        %v3931 = vmul.f32 %v3040, %v3737
        %v3932 = vmul.f32 %v3042, %v3737
        %v3933 = vmul.f32 %v3044, %v3738
        %v3934 = vmul.f32 %v3046, %v3738
        %v3935 = vmul.f32 %v3048, %v3739
        %v3936 = vmul.f32 %v3050, %v3739
        %v3937 = vmul.f32 %v3052, %v3740
        %v3938 = vmul.f32 %v3054, %v3740
        %v3939 = vmul.f32 %v3056, %v3741
        %v3940 = vmul.f32 %v3058, %v3741
        %v3941 = vmul.f32 %v3060, %v3742
        %v3942 = vmul.f32 %v3062, %v3742
        %v3943 = vmul.f32 %v3064, %v3743
        %v3944 = vmul.f32 %v3066, %v3743
        %v3945 = vmul.f32 %v3068, %v3744
        %v3946 = vmul.f32 %v3070, %v3744
        %v3947 = vmul.f32 %v3072, %v3745
        %v3948 = vmul.f32 %v3074, %v3745
        %v3949 = vmul.f32 %v3076, %v3746
        %v3950 = vmul.f32 %v3078, %v3746
        %v3951 = vmul.f32 %v3080, %v3747
        %v3952 = vmul.f32 %v3082, %v3747
        %v3953 = vmul.f32 %v3084, %v3748
        %v3954 = vmul.f32 %v3086, %v3748
        %v3955 = vmul.f32 %v3088, %v3749
        %v3956 = vmul.f32 %v3090, %v3749
        %v3957 = vmul.f32 %v3092, %v3750
        %v3958 = vmul.f32 %v3094, %v3750
        %v3959 = vmul.f32 %v3096, %v3751
        %v3960 = vmul.f32 %v3098, %v3751
        %v3961 = vmul.f32 %v3100, %v3752
        %v3962 = vmul.f32 %v3102, %v3752
        %v3963 = vmul.f32 %v3104, %v3753
        %v3964 = vmul.f32 %v3106, %v3753
        %v3965 = vmul.f32 %v3108, %v3754
        %v3966 = vmul.f32 %v3110, %v3754
        %v3967 = vmul.f32 %v3112, %v3755
        %v3968 = vmul.f32 %v3114, %v3755
        %v3969 = vmul.f32 %v3116, %v3756
        %v3970 = vmul.f32 %v3118, %v3756
        %v3971 = vmul.f32 %v3120, %v3757
        %v3972 = vmul.f32 %v3122, %v3757
        %v3973 = vmul.f32 %v3124, %v3758
        %v3974 = vmul.f32 %v3126, %v3758
        %v3975 = vmul.f32 %v3128, %v3759
        %v3976 = vmul.f32 %v3130, %v3759
        %v3977 = vmul.f32 %v3132, %v3760
        %v3978 = vmul.f32 %v3134, %v3760
        %v3979 = vmul.f32 %v3136, %v3761
        %v3980 = vmul.f32 %v3138, %v3761
        %v3981 = vmul.f32 %v3140, %v3762
        %v3982 = vmul.f32 %v3142, %v3762
        %v3983 = vmul.f32 %v3144, %v3763
        %v3984 = vmul.f32 %v3146, %v3763
        %v3985 = vmul.f32 %v3148, %v3764
        %v3986 = vmul.f32 %v3150, %v3764
        %v3987 = vmul.f32 %v3152, %v3765
        %v3988 = vmul.f32 %v3154, %v3765
        %v3989 = vmul.f32 %v3156, %v3766
        %v3990 = vmul.f32 %v3158, %v3766
        %v3991 = vmul.f32 %v3160, %v3767
        %v3992 = vmul.f32 %v3162, %v3767
        %v3993 = vmul.f32 %v3164, %v3768
        %v3994 = vmul.f32 %v3166, %v3768
        %v3995 = vmul.f32 %v3168, %v3769
        %v3996 = vmul.f32 %v3170, %v3769
        %v3997 = vmul.f32 %v3172, %v3770
        %v3998 = vmul.f32 %v3174, %v3770
        %v3999 = vmul.f32 %v3176, %v3771
        %v4000 = vmul.f32 %v3178, %v3771
        %v4001 = vmul.f32 %v3180, %v3772
        %v4002 = vmul.f32 %v3182, %v3772
        %v4003 = vmul.f32 %v3184, %v3773
        %v4004 = vmul.f32 %v3186, %v3773
        %v4005 = vmul.f32 %v3188, %v3774
        %v4006 = vmul.f32 %v3190, %v3774
        %v4007 = vmul.f32 %v3192, %v3775
        %v4008 = vmul.f32 %v3194, %v3775
        %v4009 = vmul.f32 %v3196, %v3776
        %v4010 = vmul.f32 %v3198, %v3776
        %v4011 = vmul.f32 %v3200, %v3777
        %v4012 = vmul.f32 %v3202, %v3777
        %v4013 = vmul.f32 %v3204, %v3778
        %v4014 = vmul.f32 %v3206, %v3778
        %v4015 = vmul.f32 %v3208, %v3779
        %v4016 = vmul.f32 %v3210, %v3779
        %v4017 = vmul.f32 %v3212, %v3780
        %v4018 = vmul.f32 %v3214, %v3780
        %v4019 = vmul.f32 %v3216, %v3781
        %v4020 = vmul.f32 %v3218, %v3781
        %v4021 = vmul.f32 %v3220, %v3782
        %v4022 = vmul.f32 %v3222, %v3782
        %v4023 = vmul.f32 %v3224, %v3783
        %v4024 = vmul.f32 %v3226, %v3783
        %v4025 = vmul.f32 %v3228, %v3784
        %v4026 = vmul.f32 %v3230, %v3784
        %v4027 = vmul.f32 %v3232, %v3785
        %v4028 = vmul.f32 %v3234, %v3785
        %v4029 = vmul.f32 %v3236, %v3786
        %v4030 = vmul.f32 %v3238, %v3786
        %v4031 = vmul.f32 %v3240, %v3787
        %v4032 = vmul.f32 %v3242, %v3787
        %v4033 = vmul.f32 %v3244, %v3788
        %v4034 = vmul.f32 %v3246, %v3788
        %v4035 = vmul.f32 %v3248, %v3789
        %v4036 = vmul.f32 %v3250, %v3789
        %v4037 = vmul.f32 %v3252, %v3790
        %v4038 = vmul.f32 %v3254, %v3790
        %v4039 = vmul.f32 %v3256, %v3791
        %v4040 = vmul.f32 %v3258, %v3791
        %v4041 = vmul.f32 %v3260, %v3792
        %v4042 = vmul.f32 %v3262, %v3792
        %v4043 = vmul.f32 %v3264, %v3793
        %v4044 = vmul.f32 %v3266, %v3793
        %v4045 = vmul.f32 %v3268, %v3794
        %v4046 = vmul.f32 %v3270, %v3794
        %v4047 = vmul.f32 %v3272, %v3795
        %v4048 = vmul.f32 %v3274, %v3795
        %v4049 = vmul.f32 %v3276, %v3796
        %v4050 = vmul.f32 %v3278, %v3796
        %v4051 = vmul.f32 %v3280, %v3797
        %v4052 = vmul.f32 %v3282, %v3797
        %v4053 = vmul.f32 %v3284, %v3798
        %v4054 = vmul.f32 %v3286, %v3798
        %v4055 = vpack.c.bf16 %v3801, %v3799
        %v4056 = vpack.c.bf16 %v3802, %v3800
        %v4057 = vpack.c.bf16 %v3805, %v3803
        %v4058 = vpack.c.bf16 %v3806, %v3804
        %v4059 = vpack.c.bf16 %v3809, %v3807
        %v4060 = vpack.c.bf16 %v3810, %v3808
        %v4061 = vpack.c.bf16 %v3813, %v3811
        %v4062 = vpack.c.bf16 %v3814, %v3812
        %v4063 = vpack.c.bf16 %v3817, %v3815
        %v4064 = vpack.c.bf16 %v3818, %v3816
        %v4065 = vpack.c.bf16 %v3821, %v3819
        %v4066 = vpack.c.bf16 %v3822, %v3820
        %v4067 = vpack.c.bf16 %v3825, %v3823
        %v4068 = vpack.c.bf16 %v3826, %v3824
        %v4069 = vpack.c.bf16 %v3829, %v3827
        %v4070 = vpack.c.bf16 %v3830, %v3828
        %v4071 = vpack.c.bf16 %v3833, %v3831
        %v4072 = vpack.c.bf16 %v3834, %v3832
        %v4073 = vpack.c.bf16 %v3837, %v3835
        %v4074 = vpack.c.bf16 %v3838, %v3836
        %v4075 = vpack.c.bf16 %v3841, %v3839
        %v4076 = vpack.c.bf16 %v3842, %v3840
        %v4077 = vpack.c.bf16 %v3845, %v3843
        %v4078 = vpack.c.bf16 %v3846, %v3844
        %v4079 = vpack.c.bf16 %v3849, %v3847
        %v4080 = vpack.c.bf16 %v3850, %v3848
        %v4081 = vpack.c.bf16 %v3853, %v3851
        %v4082 = vpack.c.bf16 %v3854, %v3852
        %v4083 = vpack.c.bf16 %v3857, %v3855
        %v4084 = vpack.c.bf16 %v3858, %v3856
        %v4085 = vpack.c.bf16 %v3861, %v3859
        %v4086 = vpack.c.bf16 %v3862, %v3860
        %v4087 = vpack.c.bf16 %v3865, %v3863
        %v4088 = vpack.c.bf16 %v3866, %v3864
        %v4089 = vpack.c.bf16 %v3869, %v3867
        %v4090 = vpack.c.bf16 %v3870, %v3868
        %v4091 = vpack.c.bf16 %v3873, %v3871
        %v4092 = vpack.c.bf16 %v3874, %v3872
        %v4093 = vpack.c.bf16 %v3877, %v3875
        %v4094 = vpack.c.bf16 %v3878, %v3876
        %v4095 = vpack.c.bf16 %v3881, %v3879
        %v4096 = vpack.c.bf16 %v3882, %v3880
        %v4097 = vpack.c.bf16 %v3885, %v3883
        %v4098 = vpack.c.bf16 %v3886, %v3884
        %v4099 = vpack.c.bf16 %v3889, %v3887
        %v4100 = vpack.c.bf16 %v3890, %v3888
        %v4101 = vpack.c.bf16 %v3893, %v3891
        %v4102 = vpack.c.bf16 %v3894, %v3892
        %v4103 = vpack.c.bf16 %v3897, %v3895
        %v4104 = vpack.c.bf16 %v3898, %v3896
        %v4105 = vpack.c.bf16 %v3901, %v3899
        %v4106 = vpack.c.bf16 %v3902, %v3900
        %v4107 = vpack.c.bf16 %v3905, %v3903
        %v4108 = vpack.c.bf16 %v3906, %v3904
        %v4109 = vpack.c.bf16 %v3909, %v3907
        %v4110 = vpack.c.bf16 %v3910, %v3908
        %v4111 = vpack.c.bf16 %v3913, %v3911
        %v4112 = vpack.c.bf16 %v3914, %v3912
        %v4113 = vpack.c.bf16 %v3917, %v3915
        %v4114 = vpack.c.bf16 %v3918, %v3916
        %v4115 = vpack.c.bf16 %v3921, %v3919
        %v4116 = vpack.c.bf16 %v3922, %v3920
        %v4117 = vpack.c.bf16 %v3925, %v3923
        %v4118 = vpack.c.bf16 %v3926, %v3924
        %v4119 = vpack.c.bf16 %v3929, %v3927
        %v4120 = vpack.c.bf16 %v3930, %v3928
        %v4121 = vpack.c.bf16 %v3933, %v3931
        %v4122 = vpack.c.bf16 %v3934, %v3932
        %v4123 = vpack.c.bf16 %v3937, %v3935
        %v4124 = vpack.c.bf16 %v3938, %v3936
        %v4125 = vpack.c.bf16 %v3941, %v3939
        %v4126 = vpack.c.bf16 %v3942, %v3940
        %v4127 = vpack.c.bf16 %v3945, %v3943
        %v4128 = vpack.c.bf16 %v3946, %v3944
        %v4129 = vpack.c.bf16 %v3949, %v3947
        %v4130 = vpack.c.bf16 %v3950, %v3948
        %v4131 = vpack.c.bf16 %v3953, %v3951
        %v4132 = vpack.c.bf16 %v3954, %v3952
        %v4133 = vpack.c.bf16 %v3957, %v3955
        %v4134 = vpack.c.bf16 %v3958, %v3956
        %v4135 = vpack.c.bf16 %v3961, %v3959
        %v4136 = vpack.c.bf16 %v3962, %v3960
        %v4137 = vpack.c.bf16 %v3965, %v3963
        %v4138 = vpack.c.bf16 %v3966, %v3964
        %v4139 = vpack.c.bf16 %v3969, %v3967
        %v4140 = vpack.c.bf16 %v3970, %v3968
        %v4141 = vpack.c.bf16 %v3973, %v3971
        %v4142 = vpack.c.bf16 %v3974, %v3972
        %v4143 = vpack.c.bf16 %v3977, %v3975
        %v4144 = vpack.c.bf16 %v3978, %v3976
        %v4145 = vpack.c.bf16 %v3981, %v3979
        %v4146 = vpack.c.bf16 %v3982, %v3980
        %v4147 = vpack.c.bf16 %v3985, %v3983
        %v4148 = vpack.c.bf16 %v3986, %v3984
        %v4149 = vpack.c.bf16 %v3989, %v3987
        %v4150 = vpack.c.bf16 %v3990, %v3988
        %v4151 = vpack.c.bf16 %v3993, %v3991
        %v4152 = vpack.c.bf16 %v3994, %v3992
        %v4153 = vpack.c.bf16 %v3997, %v3995
        %v4154 = vpack.c.bf16 %v3998, %v3996
        %v4155 = vpack.c.bf16 %v4001, %v3999
        %v4156 = vpack.c.bf16 %v4002, %v4000
        %v4157 = vpack.c.bf16 %v4005, %v4003
        %v4158 = vpack.c.bf16 %v4006, %v4004
        %v4159 = vpack.c.bf16 %v4009, %v4007
        %v4160 = vpack.c.bf16 %v4010, %v4008
        %v4161 = vpack.c.bf16 %v4013, %v4011
        %v4162 = vpack.c.bf16 %v4014, %v4012
        %v4163 = vpack.c.bf16 %v4017, %v4015
        %v4164 = vpack.c.bf16 %v4018, %v4016
        %v4165 = vpack.c.bf16 %v4021, %v4019
        %v4166 = vpack.c.bf16 %v4022, %v4020
        %v4167 = vpack.c.bf16 %v4025, %v4023
        %v4168 = vpack.c.bf16 %v4026, %v4024
        %v4169 = vpack.c.bf16 %v4029, %v4027
        %v4170 = vpack.c.bf16 %v4030, %v4028
        %v4171 = vpack.c.bf16 %v4033, %v4031
        %v4172 = vpack.c.bf16 %v4034, %v4032
        %v4173 = vpack.c.bf16 %v4037, %v4035
        %v4174 = vpack.c.bf16 %v4038, %v4036
        %v4175 = vpack.c.bf16 %v4041, %v4039
        %v4176 = vpack.c.bf16 %v4042, %v4040
        %v4177 = vpack.c.bf16 %v4045, %v4043
        %v4178 = vpack.c.bf16 %v4046, %v4044
        %v4179 = vpack.c.bf16 %v4049, %v4047
        %v4180 = vpack.c.bf16 %v4050, %v4048
        %v4181 = vpack.c.bf16 %v4053, %v4051
        %v4182 = vpack.c.bf16 %v4054, %v4052
        %4183 = vmatprep.subr.bf16.mxu0 0
        %4184 = vmatpush1.bf16.msra.mxu0 %v914
        %4185 = vmatprep.subr.bf16.mxu0 0
        %4186 = vmatpush1.bf16.msra.mxu0 %v915
        %4187 = vmatprep.subr.bf16.mxu0 0
        %4188 = vmatpush1.bf16.msra.mxu0 %v916
        %4189 = vmatprep.subr.bf16.mxu0 0
        %4190 = vmatpush1.bf16.msra.mxu0 %v917
        %4191 = vmatprep.subr.bf16.mxu0 0
        %4192 = vmatpush1.bf16.msra.mxu0 %v918
        %4193 = vmatprep.subr.bf16.mxu0 0
        %4194 = vmatpush1.bf16.msra.mxu0 %v919
        %4195 = vmatprep.subr.bf16.mxu0 0
        %4196 = vmatpush1.bf16.msra.mxu0 %v920
        %4197 = vmatprep.subr.bf16.mxu0 0
        %4198 = vmatpush1.bf16.msra.mxu0 %v921
        %4199 = vmatprep.subr.bf16.mxu0 0
        %4200 = vmatpush1.bf16.msra.mxu0 %v922
        %4201 = vmatprep.subr.bf16.mxu0 0
        %4202 = vmatpush1.bf16.msra.mxu0 %v923
        %4203 = vmatprep.subr.bf16.mxu0 0
        %4204 = vmatpush1.bf16.msra.mxu0 %v924
        %4205 = vmatprep.subr.bf16.mxu0 0
        %4206 = vmatpush1.bf16.msra.mxu0 %v925
        %4207 = vmatprep.subr.bf16.mxu0 0
        %4208 = vmatpush1.bf16.msra.mxu0 %v926
        %4209 = vmatprep.subr.bf16.mxu0 0
        %4210 = vmatpush1.bf16.msra.mxu0 %v927
        %4211 = vmatprep.subr.bf16.mxu0 0
        %4212 = vmatpush1.bf16.msra.mxu0 %v928
        %4213 = vmatprep.subr.bf16.mxu0 0
        %4214 = vmatpush1.bf16.msra.mxu0 %v929
        %4215 = vmatprep.mubr.bf16.mxu0 %v4056
        %4216 = vmatmul.mubr.bf16.gmra.mrb[0].mxu0 %v4055
        %v4217 = vpop.f32.mrb[0].mxu0
        %v4218 = vadd.f32 0.0, %v4217
        %v4219 = vpop.f32.mrb[0].mxu0
        %v4220 = vpop.f32.mrb[0].mxu0
        %v4221 = vadd.f32 0.0, %v4220
        %v4222 = vpop.f32.mrb[0].mxu0
        %4223 = vmatprep.mubr.bf16.mxu0 %v4058
        %4224 = vmatmul.mubr.bf16.gmra.mrb[0].mxu0 %v4057
        %v4225 = vpop.f32.mrb[0].mxu0
        %v4226 = vadd.f32 0.0, %v4225
        %v4227 = vpop.f32.mrb[0].mxu0
        %v4228 = vpop.f32.mrb[0].mxu0
        %v4229 = vadd.f32 0.0, %v4228
        %v4230 = vpop.f32.mrb[0].mxu0
        %4231 = vmatprep.mubr.bf16.mxu0 %v4060
        %4232 = vmatmul.mubr.bf16.gmra.mrb[0].mxu0 %v4059
        %v4233 = vpop.f32.mrb[0].mxu0
        %v4234 = vadd.f32 0.0, %v4233
        %v4235 = vpop.f32.mrb[0].mxu0
        %v4236 = vpop.f32.mrb[0].mxu0
        %v4237 = vadd.f32 0.0, %v4236
        %v4238 = vpop.f32.mrb[0].mxu0
        %4239 = vmatprep.mubr.bf16.mxu0 %v4062
        %4240 = vmatmul.mubr.bf16.gmra.mrb[0].mxu0 %v4061
        %v4241 = vpop.f32.mrb[0].mxu0
        %v4242 = vadd.f32 0.0, %v4241
        %v4243 = vpop.f32.mrb[0].mxu0
        %v4244 = vpop.f32.mrb[0].mxu0
        %v4245 = vadd.f32 0.0, %v4244
        %v4246 = vpop.f32.mrb[0].mxu0
        %4247 = vmatprep.mubr.bf16.mxu0 %v4064
        %4248 = vmatmul.mubr.bf16.gmra.mrb[0].mxu0 %v4063
        %v4249 = vpop.f32.mrb[0].mxu0
        %v4250 = vadd.f32 0.0, %v4249
        %v4251 = vpop.f32.mrb[0].mxu0
        %v4252 = vpop.f32.mrb[0].mxu0
        %v4253 = vadd.f32 0.0, %v4252
        %v4254 = vpop.f32.mrb[0].mxu0
        %4255 = vmatprep.mubr.bf16.mxu0 %v4066
        %4256 = vmatmul.mubr.bf16.gmra.mrb[0].mxu0 %v4065
        %v4257 = vpop.f32.mrb[0].mxu0
        %v4258 = vadd.f32 0.0, %v4257
        %v4259 = vpop.f32.mrb[0].mxu0
        %v4260 = vpop.f32.mrb[0].mxu0
        %v4261 = vadd.f32 0.0, %v4260
        %v4262 = vpop.f32.mrb[0].mxu0
        %4263 = vmatprep.mubr.bf16.mxu0 %v4068
        %4264 = vmatmul.mubr.bf16.gmra.mrb[0].mxu0 %v4067
        %v4265 = vpop.f32.mrb[0].mxu0
        %v4266 = vadd.f32 0.0, %v4265
        %v4267 = vpop.f32.mrb[0].mxu0
        %v4268 = vpop.f32.mrb[0].mxu0
        %v4269 = vadd.f32 0.0, %v4268
        %v4270 = vpop.f32.mrb[0].mxu0
        %4271 = vmatprep.mubr.bf16.mxu0 %v4070
        %4272 = vmatmul.mubr.bf16.gmra.mrb[0].mxu0 %v4069
        %v4273 = vpop.f32.mrb[0].mxu0
        %v4274 = vadd.f32 0.0, %v4273
        %v4275 = vpop.f32.mrb[0].mxu0
        %v4276 = vpop.f32.mrb[0].mxu0
        %v4277 = vadd.f32 0.0, %v4276
        %v4278 = vpop.f32.mrb[0].mxu0
        %4279 = vmatprep.mubr.bf16.mxu0 %v4072
        %4280 = vmatmul.mubr.bf16.gmra.mrb[0].mxu0 %v4071
        %v4281 = vpop.f32.mrb[0].mxu0
        %v4282 = vadd.f32 0.0, %v4281
        %v4283 = vpop.f32.mrb[0].mxu0
        %v4284 = vpop.f32.mrb[0].mxu0
        %v4285 = vadd.f32 0.0, %v4284
        %v4286 = vpop.f32.mrb[0].mxu0
        %4287 = vmatprep.mubr.bf16.mxu0 %v4074
        %4288 = vmatmul.mubr.bf16.gmra.mrb[0].mxu0 %v4073
        %v4289 = vpop.f32.mrb[0].mxu0
        %v4290 = vadd.f32 0.0, %v4289
        %v4291 = vpop.f32.mrb[0].mxu0
        %v4292 = vpop.f32.mrb[0].mxu0
        %v4293 = vadd.f32 0.0, %v4292
        %v4294 = vpop.f32.mrb[0].mxu0
        %4295 = vmatprep.mubr.bf16.mxu0 %v4076
        %4296 = vmatmul.mubr.bf16.gmra.mrb[0].mxu0 %v4075
        %v4297 = vpop.f32.mrb[0].mxu0
        %v4298 = vadd.f32 0.0, %v4297
        %v4299 = vpop.f32.mrb[0].mxu0
        %v4300 = vpop.f32.mrb[0].mxu0
        %v4301 = vadd.f32 0.0, %v4300
        %v4302 = vpop.f32.mrb[0].mxu0
        %4303 = vmatprep.mubr.bf16.mxu0 %v4078
        %4304 = vmatmul.mubr.bf16.gmra.mrb[0].mxu0 %v4077
        %v4305 = vpop.f32.mrb[0].mxu0
        %v4306 = vadd.f32 0.0, %v4305
        %v4307 = vpop.f32.mrb[0].mxu0
        %v4308 = vpop.f32.mrb[0].mxu0
        %v4309 = vadd.f32 0.0, %v4308
        %v4310 = vpop.f32.mrb[0].mxu0
        %4311 = vmatprep.mubr.bf16.mxu0 %v4080
        %4312 = vmatmul.mubr.bf16.gmra.mrb[0].mxu0 %v4079
        %v4313 = vpop.f32.mrb[0].mxu0
        %v4314 = vadd.f32 0.0, %v4313
        %v4315 = vpop.f32.mrb[0].mxu0
        %v4316 = vpop.f32.mrb[0].mxu0
        %v4317 = vadd.f32 0.0, %v4316
        %v4318 = vpop.f32.mrb[0].mxu0
        %4319 = vmatprep.mubr.bf16.mxu0 %v4082
        %4320 = vmatmul.mubr.bf16.gmra.mrb[0].mxu0 %v4081
        %v4321 = vpop.f32.mrb[0].mxu0
        %v4322 = vadd.f32 0.0, %v4321
        %v4323 = vpop.f32.mrb[0].mxu0
        %v4324 = vpop.f32.mrb[0].mxu0
        %v4325 = vadd.f32 0.0, %v4324
        %v4326 = vpop.f32.mrb[0].mxu0
        %4327 = vmatprep.mubr.bf16.mxu0 %v4084
        %4328 = vmatmul.mubr.bf16.gmra.mrb[0].mxu0 %v4083
        %v4329 = vpop.f32.mrb[0].mxu0
        %v4330 = vadd.f32 0.0, %v4329
        %v4331 = vpop.f32.mrb[0].mxu0
        %v4332 = vpop.f32.mrb[0].mxu0
        %v4333 = vadd.f32 0.0, %v4332
        %v4334 = vpop.f32.mrb[0].mxu0
        %4335 = vmatprep.mubr.bf16.mxu0 %v4086
        %4336 = vmatmul.mubr.bf16.gmra.mrb[0].mxu0 %v4085
        %v4337 = vpop.f32.mrb[0].mxu0
        %v4338 = vadd.f32 0.0, %v4337
        %v4339 = vpop.f32.mrb[0].mxu0
        %v4340 = vpop.f32.mrb[0].mxu0
        %v4341 = vadd.f32 0.0, %v4340
        %v4342 = vpop.f32.mrb[0].mxu0
        %4343 = vdwg.mxu0
        %4344 = vmatprep.subr.bf16.mxu0 0
        %4345 = vmatpush1.bf16.msra.mxu0 %v930
        %4346 = vmatprep.subr.bf16.mxu0 0
        %4347 = vmatpush1.bf16.msra.mxu0 %v931
        %4348 = vmatprep.subr.bf16.mxu0 0
        %4349 = vmatpush1.bf16.msra.mxu0 %v932
        %4350 = vmatprep.subr.bf16.mxu0 0
        %4351 = vmatpush1.bf16.msra.mxu0 %v933
        %4352 = vmatprep.subr.bf16.mxu0 0
        %4353 = vmatpush1.bf16.msra.mxu0 %v934
        %4354 = vmatprep.subr.bf16.mxu0 0
        %4355 = vmatpush1.bf16.msra.mxu0 %v935
        %4356 = vmatprep.subr.bf16.mxu0 0
        %4357 = vmatpush1.bf16.msra.mxu0 %v936
        %4358 = vmatprep.subr.bf16.mxu0 0
        %4359 = vmatpush1.bf16.msra.mxu0 %v937
        %4360 = vmatprep.subr.bf16.mxu0 0
        %4361 = vmatpush1.bf16.msra.mxu0 %v938
        %4362 = vmatprep.subr.bf16.mxu0 0
        %4363 = vmatpush1.bf16.msra.mxu0 %v939
        %4364 = vmatprep.subr.bf16.mxu0 0
        %4365 = vmatpush1.bf16.msra.mxu0 %v940
        %4366 = vmatprep.subr.bf16.mxu0 0
        %4367 = vmatpush1.bf16.msra.mxu0 %v941
        %4368 = vmatprep.subr.bf16.mxu0 0
        %4369 = vmatpush1.bf16.msra.mxu0 %v942
        %4370 = vmatprep.subr.bf16.mxu0 0
        %4371 = vmatpush1.bf16.msra.mxu0 %v943
        %4372 = vmatprep.subr.bf16.mxu0 0
        %4373 = vmatpush1.bf16.msra.mxu0 %v944
        %4374 = vmatprep.subr.bf16.mxu0 0
        %4375 = vmatpush1.bf16.msra.mxu0 %v945
        %4376 = vmatprep.mubr.bf16.mxu0 %v4088
        %4377 = vmatmul.mubr.bf16.gmra.mrb[0].mxu0 %v4087
        %v4378 = vpop.f32.mrb[0].mxu0
        %v4379 = vadd.f32 0.0, %v4378
        %v4380 = vpop.f32.mrb[0].mxu0
        %v4381 = vpop.f32.mrb[0].mxu0
        %v4382 = vadd.f32 0.0, %v4381
        %v4383 = vpop.f32.mrb[0].mxu0
        %4384 = vmatprep.mubr.bf16.mxu0 %v4090
        %4385 = vmatmul.mubr.bf16.gmra.mrb[0].mxu0 %v4089
        %v4386 = vpop.f32.mrb[0].mxu0
        %v4387 = vadd.f32 0.0, %v4386
        %v4388 = vpop.f32.mrb[0].mxu0
        %v4389 = vpop.f32.mrb[0].mxu0
        %v4390 = vadd.f32 0.0, %v4389
        %v4391 = vpop.f32.mrb[0].mxu0
        %4392 = vmatprep.mubr.bf16.mxu0 %v4092
        %4393 = vmatmul.mubr.bf16.gmra.mrb[0].mxu0 %v4091
        %v4394 = vpop.f32.mrb[0].mxu0
        %v4395 = vadd.f32 0.0, %v4394
        %v4396 = vpop.f32.mrb[0].mxu0
        %v4397 = vpop.f32.mrb[0].mxu0
        %v4398 = vadd.f32 0.0, %v4397
        %v4399 = vpop.f32.mrb[0].mxu0
        %4400 = vmatprep.mubr.bf16.mxu0 %v4094
        %4401 = vmatmul.mubr.bf16.gmra.mrb[0].mxu0 %v4093
        %v4402 = vpop.f32.mrb[0].mxu0
        %v4403 = vadd.f32 0.0, %v4402
        %v4404 = vpop.f32.mrb[0].mxu0
        %v4405 = vpop.f32.mrb[0].mxu0
        %v4406 = vadd.f32 0.0, %v4405
        %v4407 = vpop.f32.mrb[0].mxu0
        %4408 = vmatprep.mubr.bf16.mxu0 %v4096
        %4409 = vmatmul.mubr.bf16.gmra.mrb[0].mxu0 %v4095
        %v4410 = vpop.f32.mrb[0].mxu0
        %v4411 = vadd.f32 0.0, %v4410
        %v4412 = vpop.f32.mrb[0].mxu0
        %v4413 = vpop.f32.mrb[0].mxu0
        %v4414 = vadd.f32 0.0, %v4413
        %v4415 = vpop.f32.mrb[0].mxu0
        %4416 = vmatprep.mubr.bf16.mxu0 %v4098
        %4417 = vmatmul.mubr.bf16.gmra.mrb[0].mxu0 %v4097
        %v4418 = vpop.f32.mrb[0].mxu0
        %v4419 = vadd.f32 0.0, %v4418
        %v4420 = vpop.f32.mrb[0].mxu0
        %v4421 = vpop.f32.mrb[0].mxu0
        %v4422 = vadd.f32 0.0, %v4421
        %v4423 = vpop.f32.mrb[0].mxu0
        %4424 = vmatprep.mubr.bf16.mxu0 %v4100
        %4425 = vmatmul.mubr.bf16.gmra.mrb[0].mxu0 %v4099
        %v4426 = vpop.f32.mrb[0].mxu0
        %v4427 = vadd.f32 0.0, %v4426
        %v4428 = vpop.f32.mrb[0].mxu0
        %v4429 = vpop.f32.mrb[0].mxu0
        %v4430 = vadd.f32 0.0, %v4429
        %v4431 = vpop.f32.mrb[0].mxu0
        %4432 = vmatprep.mubr.bf16.mxu0 %v4102
        %4433 = vmatmul.mubr.bf16.gmra.mrb[0].mxu0 %v4101
        %v4434 = vpop.f32.mrb[0].mxu0
        %v4435 = vadd.f32 0.0, %v4434
        %v4436 = vpop.f32.mrb[0].mxu0
        %v4437 = vpop.f32.mrb[0].mxu0
        %v4438 = vadd.f32 0.0, %v4437
        %v4439 = vpop.f32.mrb[0].mxu0
        %4440 = vmatprep.mubr.bf16.mxu0 %v4104
        %4441 = vmatmul.mubr.bf16.gmra.mrb[0].mxu0 %v4103
        %v4442 = vpop.f32.mrb[0].mxu0
        %v4443 = vadd.f32 0.0, %v4442
        %v4444 = vpop.f32.mrb[0].mxu0
        %v4445 = vpop.f32.mrb[0].mxu0
        %v4446 = vadd.f32 0.0, %v4445
        %v4447 = vpop.f32.mrb[0].mxu0
        %4448 = vmatprep.mubr.bf16.mxu0 %v4106
        %4449 = vmatmul.mubr.bf16.gmra.mrb[0].mxu0 %v4105
        %v4450 = vpop.f32.mrb[0].mxu0
        %v4451 = vadd.f32 0.0, %v4450
        %v4452 = vpop.f32.mrb[0].mxu0
        %v4453 = vpop.f32.mrb[0].mxu0
        %v4454 = vadd.f32 0.0, %v4453
        %v4455 = vpop.f32.mrb[0].mxu0
        %4456 = vmatprep.mubr.bf16.mxu0 %v4108
        %4457 = vmatmul.mubr.bf16.gmra.mrb[0].mxu0 %v4107
        %v4458 = vpop.f32.mrb[0].mxu0
        %v4459 = vadd.f32 0.0, %v4458
        %v4460 = vpop.f32.mrb[0].mxu0
        %v4461 = vpop.f32.mrb[0].mxu0
        %v4462 = vadd.f32 0.0, %v4461
        %v4463 = vpop.f32.mrb[0].mxu0
        %4464 = vmatprep.mubr.bf16.mxu0 %v4110
        %4465 = vmatmul.mubr.bf16.gmra.mrb[0].mxu0 %v4109
        %v4466 = vpop.f32.mrb[0].mxu0
        %v4467 = vadd.f32 0.0, %v4466
        %v4468 = vpop.f32.mrb[0].mxu0
        %v4469 = vpop.f32.mrb[0].mxu0
        %v4470 = vadd.f32 0.0, %v4469
        %v4471 = vpop.f32.mrb[0].mxu0
        %4472 = vmatprep.mubr.bf16.mxu0 %v4112
        %4473 = vmatmul.mubr.bf16.gmra.mrb[0].mxu0 %v4111
        %v4474 = vpop.f32.mrb[0].mxu0
        %v4475 = vadd.f32 0.0, %v4474
        %v4476 = vpop.f32.mrb[0].mxu0
        %v4477 = vpop.f32.mrb[0].mxu0
        %v4478 = vadd.f32 0.0, %v4477
        %v4479 = vpop.f32.mrb[0].mxu0
        %4480 = vmatprep.mubr.bf16.mxu0 %v4114
        %4481 = vmatmul.mubr.bf16.gmra.mrb[0].mxu0 %v4113
        %v4482 = vpop.f32.mrb[0].mxu0
        %v4483 = vadd.f32 0.0, %v4482
        %v4484 = vpop.f32.mrb[0].mxu0
        %v4485 = vpop.f32.mrb[0].mxu0
        %v4486 = vadd.f32 0.0, %v4485
        %v4487 = vpop.f32.mrb[0].mxu0
        %4488 = vmatprep.mubr.bf16.mxu0 %v4116
        %4489 = vmatmul.mubr.bf16.gmra.mrb[0].mxu0 %v4115
        %v4490 = vpop.f32.mrb[0].mxu0
        %v4491 = vadd.f32 0.0, %v4490
        %v4492 = vpop.f32.mrb[0].mxu0
        %v4493 = vpop.f32.mrb[0].mxu0
        %v4494 = vadd.f32 0.0, %v4493
        %v4495 = vpop.f32.mrb[0].mxu0
        %4496 = vmatprep.mubr.bf16.mxu0 %v4118
        %4497 = vmatmul.mubr.bf16.gmra.mrb[0].mxu0 %v4117
        %v4498 = vpop.f32.mrb[0].mxu0
        %v4499 = vadd.f32 0.0, %v4498
        %v4500 = vpop.f32.mrb[0].mxu0
        %v4501 = vpop.f32.mrb[0].mxu0
        %v4502 = vadd.f32 0.0, %v4501
        %v4503 = vpop.f32.mrb[0].mxu0
        %4504 = vdwg.mxu0
        %4505 = vmatprep.subr.bf16.mxu0 0
        %4506 = vmatpush1.bf16.msra.mxu0 %v946
        %4507 = vmatprep.subr.bf16.mxu0 0
        %4508 = vmatpush1.bf16.msra.mxu0 %v947
        %4509 = vmatprep.subr.bf16.mxu0 0
        %4510 = vmatpush1.bf16.msra.mxu0 %v948
        %4511 = vmatprep.subr.bf16.mxu0 0
        %4512 = vmatpush1.bf16.msra.mxu0 %v949
        %4513 = vmatprep.subr.bf16.mxu0 0
        %4514 = vmatpush1.bf16.msra.mxu0 %v950
        %4515 = vmatprep.subr.bf16.mxu0 0
        %4516 = vmatpush1.bf16.msra.mxu0 %v951
        %4517 = vmatprep.subr.bf16.mxu0 0
        %4518 = vmatpush1.bf16.msra.mxu0 %v952
        %4519 = vmatprep.subr.bf16.mxu0 0
        %4520 = vmatpush1.bf16.msra.mxu0 %v953
        %4521 = vmatprep.subr.bf16.mxu0 0
        %4522 = vmatpush1.bf16.msra.mxu0 %v954
        %4523 = vmatprep.subr.bf16.mxu0 0
        %4524 = vmatpush1.bf16.msra.mxu0 %v955
        %4525 = vmatprep.subr.bf16.mxu0 0
        %4526 = vmatpush1.bf16.msra.mxu0 %v956
        %4527 = vmatprep.subr.bf16.mxu0 0
        %4528 = vmatpush1.bf16.msra.mxu0 %v957
        %4529 = vmatprep.subr.bf16.mxu0 0
        %4530 = vmatpush1.bf16.msra.mxu0 %v958
        %4531 = vmatprep.subr.bf16.mxu0 0
        %4532 = vmatpush1.bf16.msra.mxu0 %v959
        %4533 = vmatprep.subr.bf16.mxu0 0
        %4534 = vmatpush1.bf16.msra.mxu0 %v960
        %4535 = vmatprep.subr.bf16.mxu0 0
        %4536 = vmatpush1.bf16.msra.mxu0 %v961
        %4537 = vmatprep.mubr.bf16.mxu0 %v4120
        %4538 = vmatmul.mubr.bf16.gmra.mrb[0].mxu0 %v4119
        %v4539 = vpop.f32.mrb[0].mxu0
        %v4540 = vadd.f32 0.0, %v4539
        %v4541 = vpop.f32.mrb[0].mxu0
        %v4542 = vpop.f32.mrb[0].mxu0
        %v4543 = vadd.f32 0.0, %v4542
        %v4544 = vpop.f32.mrb[0].mxu0
        %4545 = vmatprep.mubr.bf16.mxu0 %v4122
        %4546 = vmatmul.mubr.bf16.gmra.mrb[0].mxu0 %v4121
        %v4547 = vpop.f32.mrb[0].mxu0
        %v4548 = vadd.f32 0.0, %v4547
        %v4549 = vpop.f32.mrb[0].mxu0
        %v4550 = vpop.f32.mrb[0].mxu0
        %v4551 = vadd.f32 0.0, %v4550
        %v4552 = vpop.f32.mrb[0].mxu0
        %4553 = vmatprep.mubr.bf16.mxu0 %v4124
        %4554 = vmatmul.mubr.bf16.gmra.mrb[0].mxu0 %v4123
        %v4555 = vpop.f32.mrb[0].mxu0
        %v4556 = vadd.f32 0.0, %v4555
        %v4557 = vpop.f32.mrb[0].mxu0
        %v4558 = vpop.f32.mrb[0].mxu0
        %v4559 = vadd.f32 0.0, %v4558
        %v4560 = vpop.f32.mrb[0].mxu0
        %4561 = vmatprep.mubr.bf16.mxu0 %v4126
        %4562 = vmatmul.mubr.bf16.gmra.mrb[0].mxu0 %v4125
        %v4563 = vpop.f32.mrb[0].mxu0
        %v4564 = vadd.f32 0.0, %v4563
        %v4565 = vpop.f32.mrb[0].mxu0
        %v4566 = vpop.f32.mrb[0].mxu0
        %v4567 = vadd.f32 0.0, %v4566
        %v4568 = vpop.f32.mrb[0].mxu0
        %4569 = vmatprep.mubr.bf16.mxu0 %v4128
        %4570 = vmatmul.mubr.bf16.gmra.mrb[0].mxu0 %v4127
        %v4571 = vpop.f32.mrb[0].mxu0
        %v4572 = vadd.f32 0.0, %v4571
        %v4573 = vpop.f32.mrb[0].mxu0
        %v4574 = vpop.f32.mrb[0].mxu0
        %v4575 = vadd.f32 0.0, %v4574
        %v4576 = vpop.f32.mrb[0].mxu0
        %4577 = vmatprep.mubr.bf16.mxu0 %v4130
        %4578 = vmatmul.mubr.bf16.gmra.mrb[0].mxu0 %v4129
        %v4579 = vpop.f32.mrb[0].mxu0
        %v4580 = vadd.f32 0.0, %v4579
        %v4581 = vpop.f32.mrb[0].mxu0
        %v4582 = vpop.f32.mrb[0].mxu0
        %v4583 = vadd.f32 0.0, %v4582
        %v4584 = vpop.f32.mrb[0].mxu0
        %4585 = vmatprep.mubr.bf16.mxu0 %v4132
        %4586 = vmatmul.mubr.bf16.gmra.mrb[0].mxu0 %v4131
        %v4587 = vpop.f32.mrb[0].mxu0
        %v4588 = vadd.f32 0.0, %v4587
        %v4589 = vpop.f32.mrb[0].mxu0
        %v4590 = vpop.f32.mrb[0].mxu0
        %v4591 = vadd.f32 0.0, %v4590
        %v4592 = vpop.f32.mrb[0].mxu0
        %4593 = vmatprep.mubr.bf16.mxu0 %v4134
        %4594 = vmatmul.mubr.bf16.gmra.mrb[0].mxu0 %v4133
        %v4595 = vpop.f32.mrb[0].mxu0
        %v4596 = vadd.f32 0.0, %v4595
        %v4597 = vpop.f32.mrb[0].mxu0
        %v4598 = vpop.f32.mrb[0].mxu0
        %v4599 = vadd.f32 0.0, %v4598
        %v4600 = vpop.f32.mrb[0].mxu0
        %4601 = vmatprep.mubr.bf16.mxu0 %v4136
        %4602 = vmatmul.mubr.bf16.gmra.mrb[0].mxu0 %v4135
        %v4603 = vpop.f32.mrb[0].mxu0
        %v4604 = vadd.f32 0.0, %v4603
        %v4605 = vpop.f32.mrb[0].mxu0
        %v4606 = vpop.f32.mrb[0].mxu0
        %v4607 = vadd.f32 0.0, %v4606
        %v4608 = vpop.f32.mrb[0].mxu0
        %4609 = vmatprep.mubr.bf16.mxu0 %v4138
        %4610 = vmatmul.mubr.bf16.gmra.mrb[0].mxu0 %v4137
        %v4611 = vpop.f32.mrb[0].mxu0
        %v4612 = vadd.f32 0.0, %v4611
        %v4613 = vpop.f32.mrb[0].mxu0
        %v4614 = vpop.f32.mrb[0].mxu0
        %v4615 = vadd.f32 0.0, %v4614
        %v4616 = vpop.f32.mrb[0].mxu0
        %4617 = vmatprep.mubr.bf16.mxu0 %v4140
        %4618 = vmatmul.mubr.bf16.gmra.mrb[0].mxu0 %v4139
        %v4619 = vpop.f32.mrb[0].mxu0
        %v4620 = vadd.f32 0.0, %v4619
        %v4621 = vpop.f32.mrb[0].mxu0
        %v4622 = vpop.f32.mrb[0].mxu0
        %v4623 = vadd.f32 0.0, %v4622
        %v4624 = vpop.f32.mrb[0].mxu0
        %4625 = vmatprep.mubr.bf16.mxu0 %v4142
        %4626 = vmatmul.mubr.bf16.gmra.mrb[0].mxu0 %v4141
        %v4627 = vpop.f32.mrb[0].mxu0
        %v4628 = vadd.f32 0.0, %v4627
        %v4629 = vpop.f32.mrb[0].mxu0
        %v4630 = vpop.f32.mrb[0].mxu0
        %v4631 = vadd.f32 0.0, %v4630
        %v4632 = vpop.f32.mrb[0].mxu0
        %4633 = vmatprep.mubr.bf16.mxu0 %v4144
        %4634 = vmatmul.mubr.bf16.gmra.mrb[0].mxu0 %v4143
        %v4635 = vpop.f32.mrb[0].mxu0
        %v4636 = vadd.f32 0.0, %v4635
        %v4637 = vpop.f32.mrb[0].mxu0
        %v4638 = vpop.f32.mrb[0].mxu0
        %v4639 = vadd.f32 0.0, %v4638
        %v4640 = vpop.f32.mrb[0].mxu0
        %4641 = vmatprep.mubr.bf16.mxu0 %v4146
        %4642 = vmatmul.mubr.bf16.gmra.mrb[0].mxu0 %v4145
        %v4643 = vpop.f32.mrb[0].mxu0
        %v4644 = vadd.f32 0.0, %v4643
        %v4645 = vpop.f32.mrb[0].mxu0
        %v4646 = vpop.f32.mrb[0].mxu0
        %v4647 = vadd.f32 0.0, %v4646
        %v4648 = vpop.f32.mrb[0].mxu0
        %4649 = vmatprep.mubr.bf16.mxu0 %v4148
        %4650 = vmatmul.mubr.bf16.gmra.mrb[0].mxu0 %v4147
        %v4651 = vpop.f32.mrb[0].mxu0
        %v4652 = vadd.f32 0.0, %v4651
        %v4653 = vpop.f32.mrb[0].mxu0
        %v4654 = vpop.f32.mrb[0].mxu0
        %v4655 = vadd.f32 0.0, %v4654
        %v4656 = vpop.f32.mrb[0].mxu0
        %4657 = vmatprep.mubr.bf16.mxu0 %v4150
        %4658 = vmatmul.mubr.bf16.gmra.mrb[0].mxu0 %v4149
        %v4659 = vpop.f32.mrb[0].mxu0
        %v4660 = vadd.f32 0.0, %v4659
        %v4661 = vpop.f32.mrb[0].mxu0
        %v4662 = vpop.f32.mrb[0].mxu0
        %v4663 = vadd.f32 0.0, %v4662
        %v4664 = vpop.f32.mrb[0].mxu0
        %4665 = vdwg.mxu0
        %4666 = vmatprep.subr.bf16.mxu0 0
        %4667 = vmatpush1.bf16.msra.mxu0 %v962
        %4668 = vmatprep.subr.bf16.mxu0 0
        %4669 = vmatpush1.bf16.msra.mxu0 %v963
        %4670 = vmatprep.subr.bf16.mxu0 0
        %4671 = vmatpush1.bf16.msra.mxu0 %v964
        %4672 = vmatprep.subr.bf16.mxu0 0
        %4673 = vmatpush1.bf16.msra.mxu0 %v965
        %4674 = vmatprep.subr.bf16.mxu0 0
        %4675 = vmatpush1.bf16.msra.mxu0 %v966
        %4676 = vmatprep.subr.bf16.mxu0 0
        %4677 = vmatpush1.bf16.msra.mxu0 %v967
        %4678 = vmatprep.subr.bf16.mxu0 0
        %4679 = vmatpush1.bf16.msra.mxu0 %v968
        %4680 = vmatprep.subr.bf16.mxu0 0
        %4681 = vmatpush1.bf16.msra.mxu0 %v969
        %4682 = vmatprep.subr.bf16.mxu0 0
        %4683 = vmatpush1.bf16.msra.mxu0 %v970
        %4684 = vmatprep.subr.bf16.mxu0 0
        %4685 = vmatpush1.bf16.msra.mxu0 %v971
        %4686 = vmatprep.subr.bf16.mxu0 0
        %4687 = vmatpush1.bf16.msra.mxu0 %v972
        %4688 = vmatprep.subr.bf16.mxu0 0
        %4689 = vmatpush1.bf16.msra.mxu0 %v973
        %4690 = vmatprep.subr.bf16.mxu0 0
        %4691 = vmatpush1.bf16.msra.mxu0 %v974
        %4692 = vmatprep.subr.bf16.mxu0 0
        %4693 = vmatpush1.bf16.msra.mxu0 %v975
        %4694 = vmatprep.subr.bf16.mxu0 0
        %4695 = vmatpush1.bf16.msra.mxu0 %v976
        %4696 = vmatprep.subr.bf16.mxu0 0
        %4697 = vmatpush1.bf16.msra.mxu0 %v977
        %4698 = vmatprep.mubr.bf16.mxu0 %v4152
        %4699 = vmatmul.mubr.bf16.gmra.mrb[0].mxu0 %v4151
        %v4700 = vpop.f32.mrb[0].mxu0
        %v4701 = vadd.f32 0.0, %v4700
        %v4702 = vpop.f32.mrb[0].mxu0
        %v4703 = vpop.f32.mrb[0].mxu0
        %v4704 = vadd.f32 0.0, %v4703
        %v4705 = vpop.f32.mrb[0].mxu0
        %4706 = vmatprep.mubr.bf16.mxu0 %v4154
        %4707 = vmatmul.mubr.bf16.gmra.mrb[0].mxu0 %v4153
        %v4708 = vpop.f32.mrb[0].mxu0
        %v4709 = vadd.f32 0.0, %v4708
        %v4710 = vpop.f32.mrb[0].mxu0
        %v4711 = vpop.f32.mrb[0].mxu0
        %v4712 = vadd.f32 0.0, %v4711
        %v4713 = vpop.f32.mrb[0].mxu0
        %4714 = vmatprep.mubr.bf16.mxu0 %v4156
        %4715 = vmatmul.mubr.bf16.gmra.mrb[0].mxu0 %v4155
        %v4716 = vpop.f32.mrb[0].mxu0
        %v4717 = vadd.f32 0.0, %v4716
        %v4718 = vpop.f32.mrb[0].mxu0
        %v4719 = vpop.f32.mrb[0].mxu0
        %v4720 = vadd.f32 0.0, %v4719
        %v4721 = vpop.f32.mrb[0].mxu0
        %4722 = vmatprep.mubr.bf16.mxu0 %v4158
        %4723 = vmatmul.mubr.bf16.gmra.mrb[0].mxu0 %v4157
        %v4724 = vpop.f32.mrb[0].mxu0
        %v4725 = vadd.f32 0.0, %v4724
        %v4726 = vpop.f32.mrb[0].mxu0
        %v4727 = vpop.f32.mrb[0].mxu0
        %v4728 = vadd.f32 0.0, %v4727
        %v4729 = vpop.f32.mrb[0].mxu0
        %4730 = vmatprep.mubr.bf16.mxu0 %v4160
        %4731 = vmatmul.mubr.bf16.gmra.mrb[0].mxu0 %v4159
        %v4732 = vpop.f32.mrb[0].mxu0
        %v4733 = vadd.f32 0.0, %v4732
        %v4734 = vpop.f32.mrb[0].mxu0
        %v4735 = vpop.f32.mrb[0].mxu0
        %v4736 = vadd.f32 0.0, %v4735
        %v4737 = vpop.f32.mrb[0].mxu0
        %4738 = vmatprep.mubr.bf16.mxu0 %v4162
        %4739 = vmatmul.mubr.bf16.gmra.mrb[0].mxu0 %v4161
        %v4740 = vpop.f32.mrb[0].mxu0
        %v4741 = vadd.f32 0.0, %v4740
        %v4742 = vpop.f32.mrb[0].mxu0
        %v4743 = vpop.f32.mrb[0].mxu0
        %v4744 = vadd.f32 0.0, %v4743
        %v4745 = vpop.f32.mrb[0].mxu0
        %4746 = vmatprep.mubr.bf16.mxu0 %v4164
        %4747 = vmatmul.mubr.bf16.gmra.mrb[0].mxu0 %v4163
        %v4748 = vpop.f32.mrb[0].mxu0
        %v4749 = vadd.f32 0.0, %v4748
        %v4750 = vpop.f32.mrb[0].mxu0
        %v4751 = vpop.f32.mrb[0].mxu0
        %v4752 = vadd.f32 0.0, %v4751
        %v4753 = vpop.f32.mrb[0].mxu0
        %4754 = vmatprep.mubr.bf16.mxu0 %v4166
        %4755 = vmatmul.mubr.bf16.gmra.mrb[0].mxu0 %v4165
        %v4756 = vpop.f32.mrb[0].mxu0
        %v4757 = vadd.f32 0.0, %v4756
        %v4758 = vpop.f32.mrb[0].mxu0
        %v4759 = vpop.f32.mrb[0].mxu0
        %v4760 = vadd.f32 0.0, %v4759
        %v4761 = vpop.f32.mrb[0].mxu0
        %4762 = vmatprep.mubr.bf16.mxu0 %v4168
        %4763 = vmatmul.mubr.bf16.gmra.mrb[0].mxu0 %v4167
        %v4764 = vpop.f32.mrb[0].mxu0
        %v4765 = vadd.f32 0.0, %v4764
        %v4766 = vpop.f32.mrb[0].mxu0
        %v4767 = vpop.f32.mrb[0].mxu0
        %v4768 = vadd.f32 0.0, %v4767
        %v4769 = vpop.f32.mrb[0].mxu0
        %4770 = vmatprep.mubr.bf16.mxu0 %v4170
        %4771 = vmatmul.mubr.bf16.gmra.mrb[0].mxu0 %v4169
        %v4772 = vpop.f32.mrb[0].mxu0
        %v4773 = vadd.f32 0.0, %v4772
        %v4774 = vpop.f32.mrb[0].mxu0
        %v4775 = vpop.f32.mrb[0].mxu0
        %v4776 = vadd.f32 0.0, %v4775
        %v4777 = vpop.f32.mrb[0].mxu0
        %4778 = vmatprep.mubr.bf16.mxu0 %v4172
        %4779 = vmatmul.mubr.bf16.gmra.mrb[0].mxu0 %v4171
        %v4780 = vpop.f32.mrb[0].mxu0
        %v4781 = vadd.f32 0.0, %v4780
        %v4782 = vpop.f32.mrb[0].mxu0
        %v4783 = vpop.f32.mrb[0].mxu0
        %v4784 = vadd.f32 0.0, %v4783
        %v4785 = vpop.f32.mrb[0].mxu0
        %4786 = vmatprep.mubr.bf16.mxu0 %v4174
        %4787 = vmatmul.mubr.bf16.gmra.mrb[0].mxu0 %v4173
        %v4788 = vpop.f32.mrb[0].mxu0
        %v4789 = vadd.f32 0.0, %v4788
        %v4790 = vpop.f32.mrb[0].mxu0
        %v4791 = vpop.f32.mrb[0].mxu0
        %v4792 = vadd.f32 0.0, %v4791
        %v4793 = vpop.f32.mrb[0].mxu0
        %4794 = vmatprep.mubr.bf16.mxu0 %v4176
        %4795 = vmatmul.mubr.bf16.gmra.mrb[0].mxu0 %v4175
        %v4796 = vpop.f32.mrb[0].mxu0
        %v4797 = vadd.f32 0.0, %v4796
        %v4798 = vpop.f32.mrb[0].mxu0
        %v4799 = vpop.f32.mrb[0].mxu0
        %v4800 = vadd.f32 0.0, %v4799
        %v4801 = vpop.f32.mrb[0].mxu0
        %4802 = vmatprep.mubr.bf16.mxu0 %v4178
        %4803 = vmatmul.mubr.bf16.gmra.mrb[0].mxu0 %v4177
        %v4804 = vpop.f32.mrb[0].mxu0
        %v4805 = vadd.f32 0.0, %v4804
        %v4806 = vpop.f32.mrb[0].mxu0
        %v4807 = vpop.f32.mrb[0].mxu0
        %v4808 = vadd.f32 0.0, %v4807
        %v4809 = vpop.f32.mrb[0].mxu0
        %4810 = vmatprep.mubr.bf16.mxu0 %v4180
        %4811 = vmatmul.mubr.bf16.gmra.mrb[0].mxu0 %v4179
        %v4812 = vpop.f32.mrb[0].mxu0
        %v4813 = vadd.f32 0.0, %v4812
        %v4814 = vpop.f32.mrb[0].mxu0
        %v4815 = vpop.f32.mrb[0].mxu0
        %v4816 = vadd.f32 0.0, %v4815
        %v4817 = vpop.f32.mrb[0].mxu0
        %4818 = vmatprep.mubr.bf16.mxu0 %v4182
        %4819 = vmatmul.mubr.bf16.gmra.mrb[0].mxu0 %v4181
        %v4820 = vpop.f32.mrb[0].mxu0
        %v4821 = vadd.f32 0.0, %v4820
        %v4822 = vpop.f32.mrb[0].mxu0
        %v4823 = vpop.f32.mrb[0].mxu0
        %v4824 = vadd.f32 0.0, %v4823
        %v4825 = vpop.f32.mrb[0].mxu0
        %4826 = vdwg.mxu0
        %4827 = vst.msk [vmem:[%s268] sm:$0xff] %vm978, %v4218
        %4828 = vst.msk [vmem:[%s268 + $0x8] sm:$0xff] %vm978, %v4221
        %4829 = vst.msk [vmem:[%s268 + $0x10] sm:$0xff] %vm978, %v4226
        %4830 = vst.msk [vmem:[%s268 + $0x18] sm:$0xff] %vm978, %v4229
        %4831 = vst.msk [vmem:[%s268 + $0x20] sm:$0xff] %vm978, %v4234
        %4832 = vst.msk [vmem:[%s268 + $0x28] sm:$0xff] %vm978, %v4237
        %4833 = vst.msk [vmem:[%s268 + $0x30] sm:$0xff] %vm978, %v4242
        %4834 = vst.msk [vmem:[%s268 + $0x38] sm:$0xff] %vm978, %v4245
        %4835 = vst.msk [vmem:[%s268 + $0x40] sm:$0xff] %vm978, %v4250
        %4836 = vst.msk [vmem:[%s268 + $0x48] sm:$0xff] %vm978, %v4253
        %4837 = vst.msk [vmem:[%s268 + $0x50] sm:$0xff] %vm978, %v4258
        %4838 = vst.msk [vmem:[%s268 + $0x58] sm:$0xff] %vm978, %v4261
        %4839 = vst.msk [vmem:[%s268 + $0x60] sm:$0xff] %vm978, %v4266
        %4840 = vst.msk [vmem:[%s268 + $0x68] sm:$0xff] %vm978, %v4269
        %4841 = vst.msk [vmem:[%s268 + $0x70] sm:$0xff] %vm978, %v4274
        %4842 = vst.msk [vmem:[%s268 + $0x78] sm:$0xff] %vm978, %v4277
        %4843 = vst.msk [vmem:[%s268 + $0x80] sm:$0xff] %vm978, %v4282
        %4844 = vst.msk [vmem:[%s268 + $0x88] sm:$0xff] %vm978, %v4285
        %4845 = vst.msk [vmem:[%s268 + $0x90] sm:$0xff] %vm978, %v4290
        %4846 = vst.msk [vmem:[%s268 + $0x98] sm:$0xff] %vm978, %v4293
        %4847 = vst.msk [vmem:[%s268 + $0xa0] sm:$0xff] %vm978, %v4298
        %4848 = vst.msk [vmem:[%s268 + $0xa8] sm:$0xff] %vm978, %v4301
        %4849 = vst.msk [vmem:[%s268 + $0xb0] sm:$0xff] %vm978, %v4306
        %4850 = vst.msk [vmem:[%s268 + $0xb8] sm:$0xff] %vm978, %v4309
        %4851 = vst.msk [vmem:[%s268 + $0xc0] sm:$0xff] %vm978, %v4314
        %4852 = vst.msk [vmem:[%s268 + $0xc8] sm:$0xff] %vm978, %v4317
        %4853 = vst.msk [vmem:[%s268 + $0xd0] sm:$0xff] %vm978, %v4322
        %4854 = vst.msk [vmem:[%s268 + $0xd8] sm:$0xff] %vm978, %v4325
        %4855 = vst.msk [vmem:[%s268 + $0xe0] sm:$0xff] %vm978, %v4330
        %4856 = vst.msk [vmem:[%s268 + $0xe8] sm:$0xff] %vm978, %v4333
        %4857 = vst.msk [vmem:[%s268 + $0xf0] sm:$0xff] %vm978, %v4338
        %4858 = vst.msk [vmem:[%s268 + $0xf8] sm:$0xff] %vm978, %v4341
        %4859 = vst.msk [vmem:[%s268 + $0x100] sm:$0xff] %vm978, %v4379
        %4860 = vst.msk [vmem:[%s268 + $0x108] sm:$0xff] %vm978, %v4382
        %4861 = vst.msk [vmem:[%s268 + $0x110] sm:$0xff] %vm978, %v4387
        %4862 = vst.msk [vmem:[%s268 + $0x118] sm:$0xff] %vm978, %v4390
        %4863 = vst.msk [vmem:[%s268 + $0x120] sm:$0xff] %vm978, %v4395
        %4864 = vst.msk [vmem:[%s268 + $0x128] sm:$0xff] %vm978, %v4398
        %4865 = vst.msk [vmem:[%s268 + $0x130] sm:$0xff] %vm978, %v4403
        %4866 = vst.msk [vmem:[%s268 + $0x138] sm:$0xff] %vm978, %v4406
        %4867 = vst.msk [vmem:[%s268 + $0x140] sm:$0xff] %vm978, %v4411
        %4868 = vst.msk [vmem:[%s268 + $0x148] sm:$0xff] %vm978, %v4414
        %4869 = vst.msk [vmem:[%s268 + $0x150] sm:$0xff] %vm978, %v4419
        %4870 = vst.msk [vmem:[%s268 + $0x158] sm:$0xff] %vm978, %v4422
        %4871 = vst.msk [vmem:[%s268 + $0x160] sm:$0xff] %vm978, %v4427
        %4872 = vst.msk [vmem:[%s268 + $0x168] sm:$0xff] %vm978, %v4430
        %4873 = vst.msk [vmem:[%s268 + $0x170] sm:$0xff] %vm978, %v4435
        %4874 = vst.msk [vmem:[%s268 + $0x178] sm:$0xff] %vm978, %v4438
        %4875 = vst.msk [vmem:[%s268 + $0x180] sm:$0xff] %vm978, %v4443
        %4876 = vst.msk [vmem:[%s268 + $0x188] sm:$0xff] %vm978, %v4446
        %4877 = vst.msk [vmem:[%s268 + $0x190] sm:$0xff] %vm978, %v4451
        %4878 = vst.msk [vmem:[%s268 + $0x198] sm:$0xff] %vm978, %v4454
        %4879 = vst.msk [vmem:[%s268 + $0x1a0] sm:$0xff] %vm978, %v4459
        %4880 = vst.msk [vmem:[%s268 + $0x1a8] sm:$0xff] %vm978, %v4462
        %4881 = vst.msk [vmem:[%s268 + $0x1b0] sm:$0xff] %vm978, %v4467
        %4882 = vst.msk [vmem:[%s268 + $0x1b8] sm:$0xff] %vm978, %v4470
        %4883 = vst.msk [vmem:[%s268 + $0x1c0] sm:$0xff] %vm978, %v4475
        %4884 = vst.msk [vmem:[%s268 + $0x1c8] sm:$0xff] %vm978, %v4478
        %4885 = vst.msk [vmem:[%s268 + $0x1d0] sm:$0xff] %vm978, %v4483
        %4886 = vst.msk [vmem:[%s268 + $0x1d8] sm:$0xff] %vm978, %v4486
        %4887 = vst.msk [vmem:[%s268 + $0x1e0] sm:$0xff] %vm978, %v4491
        %4888 = vst.msk [vmem:[%s268 + $0x1e8] sm:$0xff] %vm978, %v4494
        %4889 = vst.msk [vmem:[%s268 + $0x1f0] sm:$0xff] %vm978, %v4499
        %4890 = vst.msk [vmem:[%s268 + $0x1f8] sm:$0xff] %vm978, %v4502
        %4891 = vst.msk [vmem:[%s268 + $0x200] sm:$0xff] %vm978, %v4540
        %4892 = vst.msk [vmem:[%s268 + $0x208] sm:$0xff] %vm978, %v4543
        %4893 = vst.msk [vmem:[%s268 + $0x210] sm:$0xff] %vm978, %v4548
        %4894 = vst.msk [vmem:[%s268 + $0x218] sm:$0xff] %vm978, %v4551
        %4895 = vst.msk [vmem:[%s268 + $0x220] sm:$0xff] %vm978, %v4556
        %4896 = vst.msk [vmem:[%s268 + $0x228] sm:$0xff] %vm978, %v4559
        %4897 = vst.msk [vmem:[%s268 + $0x230] sm:$0xff] %vm978, %v4564
        %4898 = vst.msk [vmem:[%s268 + $0x238] sm:$0xff] %vm978, %v4567
        %4899 = vst.msk [vmem:[%s268 + $0x240] sm:$0xff] %vm978, %v4572
        %4900 = vst.msk [vmem:[%s268 + $0x248] sm:$0xff] %vm978, %v4575
        %4901 = vst.msk [vmem:[%s268 + $0x250] sm:$0xff] %vm978, %v4580
        %4902 = vst.msk [vmem:[%s268 + $0x258] sm:$0xff] %vm978, %v4583
        %4903 = vst.msk [vmem:[%s268 + $0x260] sm:$0xff] %vm978, %v4588
        %4904 = vst.msk [vmem:[%s268 + $0x268] sm:$0xff] %vm978, %v4591
        %4905 = vst.msk [vmem:[%s268 + $0x270] sm:$0xff] %vm978, %v4596
        %4906 = vst.msk [vmem:[%s268 + $0x278] sm:$0xff] %vm978, %v4599
        %4907 = vst.msk [vmem:[%s268 + $0x280] sm:$0xff] %vm978, %v4604
        %4908 = vst.msk [vmem:[%s268 + $0x288] sm:$0xff] %vm978, %v4607
        %4909 = vst.msk [vmem:[%s268 + $0x290] sm:$0xff] %vm978, %v4612
        %4910 = vst.msk [vmem:[%s268 + $0x298] sm:$0xff] %vm978, %v4615
        %4911 = vst.msk [vmem:[%s268 + $0x2a0] sm:$0xff] %vm978, %v4620
        %4912 = vst.msk [vmem:[%s268 + $0x2a8] sm:$0xff] %vm978, %v4623
        %4913 = vst.msk [vmem:[%s268 + $0x2b0] sm:$0xff] %vm978, %v4628
        %4914 = vst.msk [vmem:[%s268 + $0x2b8] sm:$0xff] %vm978, %v4631
        %4915 = vst.msk [vmem:[%s268 + $0x2c0] sm:$0xff] %vm978, %v4636
        %4916 = vst.msk [vmem:[%s268 + $0x2c8] sm:$0xff] %vm978, %v4639
        %4917 = vst.msk [vmem:[%s268 + $0x2d0] sm:$0xff] %vm978, %v4644
        %4918 = vst.msk [vmem:[%s268 + $0x2d8] sm:$0xff] %vm978, %v4647
        %4919 = vst.msk [vmem:[%s268 + $0x2e0] sm:$0xff] %vm978, %v4652
        %4920 = vst.msk [vmem:[%s268 + $0x2e8] sm:$0xff] %vm978, %v4655
        %4921 = vst.msk [vmem:[%s268 + $0x2f0] sm:$0xff] %vm978, %v4660
        %4922 = vst.msk [vmem:[%s268 + $0x2f8] sm:$0xff] %vm978, %v4663
        %4923 = vst.msk [vmem:[%s268 + $0x300] sm:$0xff] %vm978, %v4701
        %4924 = vst.msk [vmem:[%s268 + $0x308] sm:$0xff] %vm978, %v4704
        %4925 = vst.msk [vmem:[%s268 + $0x310] sm:$0xff] %vm978, %v4709
        %4926 = vst.msk [vmem:[%s268 + $0x318] sm:$0xff] %vm978, %v4712
        %4927 = vst.msk [vmem:[%s268 + $0x320] sm:$0xff] %vm978, %v4717
        %4928 = vst.msk [vmem:[%s268 + $0x328] sm:$0xff] %vm978, %v4720
        %4929 = vst.msk [vmem:[%s268 + $0x330] sm:$0xff] %vm978, %v4725
        %4930 = vst.msk [vmem:[%s268 + $0x338] sm:$0xff] %vm978, %v4728
        %4931 = vst.msk [vmem:[%s268 + $0x340] sm:$0xff] %vm978, %v4733
        %4932 = vst.msk [vmem:[%s268 + $0x348] sm:$0xff] %vm978, %v4736
        %4933 = vst.msk [vmem:[%s268 + $0x350] sm:$0xff] %vm978, %v4741
        %4934 = vst.msk [vmem:[%s268 + $0x358] sm:$0xff] %vm978, %v4744
        %4935 = vst.msk [vmem:[%s268 + $0x360] sm:$0xff] %vm978, %v4749
        %4936 = vst.msk [vmem:[%s268 + $0x368] sm:$0xff] %vm978, %v4752
        %4937 = vst.msk [vmem:[%s268 + $0x370] sm:$0xff] %vm978, %v4757
        %4938 = vst.msk [vmem:[%s268 + $0x378] sm:$0xff] %vm978, %v4760
        %4939 = vst.msk [vmem:[%s268 + $0x380] sm:$0xff] %vm978, %v4765
        %4940 = vst.msk [vmem:[%s268 + $0x388] sm:$0xff] %vm978, %v4768
        %4941 = vst.msk [vmem:[%s268 + $0x390] sm:$0xff] %vm978, %v4773
        %4942 = vst.msk [vmem:[%s268 + $0x398] sm:$0xff] %vm978, %v4776
        %4943 = vst.msk [vmem:[%s268 + $0x3a0] sm:$0xff] %vm978, %v4781
        %4944 = vst.msk [vmem:[%s268 + $0x3a8] sm:$0xff] %vm978, %v4784
        %4945 = vst.msk [vmem:[%s268 + $0x3b0] sm:$0xff] %vm978, %v4789
        %4946 = vst.msk [vmem:[%s268 + $0x3b8] sm:$0xff] %vm978, %v4792
        %4947 = vst.msk [vmem:[%s268 + $0x3c0] sm:$0xff] %vm978, %v4797
        %4948 = vst.msk [vmem:[%s268 + $0x3c8] sm:$0xff] %vm978, %v4800
        %4949 = vst.msk [vmem:[%s268 + $0x3d0] sm:$0xff] %vm978, %v4805
        %4950 = vst.msk [vmem:[%s268 + $0x3d8] sm:$0xff] %vm978, %v4808
        %4951 = vst.msk [vmem:[%s268 + $0x3e0] sm:$0xff] %vm978, %v4813
        %4952 = vst.msk [vmem:[%s268 + $0x3e8] sm:$0xff] %vm978, %v4816
        %4953 = vst.msk [vmem:[%s268 + $0x3f0] sm:$0xff] %vm978, %v4821
        %4954 = vst.msk [vmem:[%s268 + $0x3f8] sm:$0xff] %vm978, %v4824
        %s4955 = sand.u32 %s109, 1
        %s4956 = scalar_lea.sflag [#allocation4], %s4955
        %s4957 = sand.u32 %s109, 1
        %s4958 = smul.addr %s4957, 1024
        %s4959 = scalar_lea.vmem [#allocation8], %s4958
        // Predicated region
        $region45: #{transformer_encode_block.5} parent=31 // pred_check
          %p4960 = pneg %p119
        $region46: #{transformer_encode_block.5} parent=31 // pred_check_branch
          %4962 = sbr.rel (%p4960) target = $region48
        $region47: #{transformer_encode_block.5} parent=31 // pred_region
          %s4963 = smul.u32 4, %s23
          %s4965 = ssub.s32 16384, 16384
          %4966 = vsyncadd %s4956, %s4965
          %s4967 = smul.addr %s4963, 32
          %s4968 = smul.addr %s4967, 128
          %s4969 = scalar_lea.hbm %s3, %s4968
          %s4970 = sshll.u32 %s4959, 4
          %s4971 = int_to_ptr.vmem [resolvable:$true] %s4970
          %4976 = dma.vmem_to_hbm [thread:$0]  %s4971, 16384, %s4969, %s4956, 128, 128, 8
        $region48: #{transformer_encode_block.5} parent=31 // pred_fallthru
          _
      $region32: #{transformer_encode_block.5} parent=5 // pred_fallthru
        _
      %p4977 = scmp.le.s32.totalorder 2, %s18
      // Predicated region
      $region49: #{transformer_encode_block.5} parent=5 // pred_check
        %p4978 = pneg %p4977
      $region50: #{transformer_encode_block.5} parent=5 // pred_check_branch
        %4980 = sbr.rel (%p4978) target = $region52
      $region51: #{transformer_encode_block.5} parent=5 // pred_region
        %s4981 = ssub.s32 %s18, 2
        // Predicated region
        $region53: #{transformer_encode_block.5} parent=51 // pred_check
          %p4982 = pneg %p125
        $region54: #{transformer_encode_block.5} parent=51 // pred_check_branch
          %4984 = sbr.rel (%p4982) target = $region56
        $region55: #{transformer_encode_block.5} parent=51 // pred_region
          %s4985 = sand.u32 %s110, 1
          %s4986 = scalar_lea.sflag [#allocation4], %s4985
          %s4987 = sand.u32 %s110, 1
          %s4988 = smul.addr %s4987, 1024
          %s4989 = scalar_lea.vmem [#allocation8], %s4988
          %4990 = dma.done %s4986, 16384
        $region56: #{transformer_encode_block.5} parent=51 // pred_fallthru
          _
      $region52: #{transformer_encode_block.5} parent=5 // pred_fallthru
        _
    $region6: #{transformer_encode_block.5} parent=1 // loop_footer
      %s22 = sadd.s32 1, %s18
    $region7: #{transformer_encode_block.5} parent=1 // loop_footer_branch
      %17 = sbr.rel target = $region3
    $region8: #{transformer_encode_block.5} parent=1 // loop_exit
      _
    %4991 = vsyncpa [#allocation3], 1
    %s4992 = scalar_lea.sflag [#allocation3], 1
    %4993 = vsyncpa %s4992, 1
    %4994 = vsyncpa [#allocation6], 1
    %s4995 = scalar_lea.sflag [#allocation6], 1
    %4996 = vsyncpa %s4995, 1
    %4997 = vsyncpa [#allocation4], 1
    %s4998 = scalar_lea.sflag [#allocation4], 1
    %4999 = vsyncpa %s4998, 1

// kernel: transformer_encode_block.7
$region0: #{transformer_encode_block.7}
  #allocation0 [shape = 'u32[]', space=smem, size = 0x4, offset = 0x4, fixed_abs, tag = 'smem constant byte address 0x4 - core index']
  #allocation1 [shape = 'u32[144,128]{1,0:T(1,128)}', space=vmem, size = 0x12000, scoped, tag = 'internal scratch']
  %s0 = inlined_call_operand.hbm [shape: f32[512,128], index: 0, kind: input, shape index: {}]
  %s1 = inlined_call_operand.hbm [shape: bf16[128,512], index: 1, kind: input, shape index: {}]
  %s2 = inlined_call_operand.hbm [shape: f32[1,512], index: 2, kind: input, shape index: {}]
  %s3 = inlined_call_operand.hbm [shape: bf16[512,128], index: 3, kind: input, shape index: {}]
  %s4 = inlined_call_operand.hbm [shape: f32[1,128], index: 4, kind: input, shape index: {}]
  %s5 = inlined_call_operand.hbm [shape: f32[1,128], index: 5, kind: input, shape index: {}]
  %s6 = inlined_call_operand.hbm [shape: f32[1,128], index: 6, kind: input, shape index: {}]
  %s7 = inlined_call_operand.hbm [shape: f32[512,128], index: 7, kind: output, shape index: {}]
  %s8 = sld [smem:[#allocation0]]
  $region89: #{transformer_encode_block.7} parent=0
    _
  %s10 = ssub.s32 1, %s8
  %s11 = scalar_select 0, %s10, %s8
  $region1: #{transformer_encode_block.7} parent=0
    #allocation2 [shape = 'u8[262144]{0}', space=vmem, size = 0x40000, scoped, tag = 'input window, operand 0']
    #allocation3 [shape = 's32[2]{0}', space=sflag, size = 0x8, scoped, tag = 'scoped memory for transformer_encode_block.7']
    #allocation4 [shape = 's32[2]{0}', space=sflag, size = 0x8, scoped, tag = 'scoped memory for transformer_encode_block.7']
    #allocation5 [shape = 'u8[131072]{0}', space=vmem, size = 0x20000, scoped, tag = 'input window, operand 1, single buffered']
    #allocation6 [shape = 's32[1]{0}', space=sflag, size = 0x4, scoped, tag = 'scoped memory for transformer_encode_block.7']
    #allocation7 [shape = 'u8[2048]{0}', space=vmem, size = 0x800, scoped, tag = 'input window, operand 2, single buffered']
    #allocation8 [shape = 'u8[131072]{0}', space=vmem, size = 0x20000, scoped, tag = 'input window, operand 3, single buffered']
    #allocation9 [shape = 's32[1]{0}', space=sflag, size = 0x4, scoped, tag = 'scoped memory for transformer_encode_block.7']
    #allocation10 [shape = 'u8[512]{0}', space=vmem, size = 0x400, scoped, tag = 'input window, operand 4, single buffered']
    #allocation11 [shape = 'u8[512]{0}', space=vmem, size = 0x400, scoped, tag = 'input window, operand 5, single buffered']
    #allocation12 [shape = 's32[1]{0}', space=sflag, size = 0x4, scoped, tag = 'scoped memory for transformer_encode_block.7']
    #allocation13 [shape = 'u8[512]{0}', space=vmem, size = 0x400, scoped, tag = 'input window, operand 6, single buffered']
    #allocation14 [shape = 'u8[262144]{0}', space=vmem, size = 0x40000, scoped, tag = 'output window, operand 0']
    %12 = vsyncpa [#allocation3], 0
    %s13 = scalar_lea.sflag [#allocation3], 1
    %14 = vsyncpa %s13, 0
    %15 = vsyncpa [#allocation6], 0
    %16 = vsyncpa [#allocation9], 0
    %17 = vsyncpa [#allocation12], 0
    %18 = vsyncpa [#allocation4], 0
    %s19 = scalar_lea.sflag [#allocation4], 1
    %20 = vsyncpa %s19, 0
    loop: start=0, step=1, limit=4
    $region2: #{transformer_encode_block.7} parent=1 // loop_pre_header
      _
    $region3: #{transformer_encode_block.7} parent=1 // loop_header
      %s22 = sphi 0, %s26
      %p23 = scmp.ge.s32.totalorder %s22, 4
      %s32 = sphi 0, %s34
      %s35 = sphi 0, %s32
      %s36 = sphi 0, %s35
      %s52 = sphi 0, %s36
      %s56 = sphi 0, %s56
      %s58 = sphi 0, %s56
      %s59 = sphi 0, %s58
      %s73 = sphi 0, %s59
      %s77 = sphi 0, %s77
      %s79 = sphi 0, %s77
      %s80 = sphi 0, %s79
      %s94 = sphi 0, %s80
      %s98 = sphi 0, %s98
      %s100 = sphi 0, %s98
      %s101 = sphi 0, %s100
      %s115 = sphi 0, %s101
      %s119 = sphi 0, %s119
      %s121 = sphi 0, %s119
      %s122 = sphi 0, %s121
      %s136 = sphi 0, %s122
      %s140 = sphi 0, %s140
      %s142 = sphi 0, %s140
      %s143 = sphi 0, %s142
      %s157 = sphi 0, %s143
      %s161 = sphi 0, %s161
      %s163 = sphi 0, %s161
      %s164 = sphi 0, %s163
      %s178 = sphi 0, %s164
      %s184 = sphi 0, %s186
      %s187 = sphi 0, %s184
      %s188 = sphi 0, %s187
      %s204 = sphi 0, %s188
    $region4: #{transformer_encode_block.7} parent=1 // loop_header_branch
      %25 = sbr.rel (%p23) target = $region8
    $region5: #{transformer_encode_block.7} parent=1 // loop_body
      %s27 = ssub.s32 %s22, 1
      %s28 = ssub.s32 %s22, 2
      %s29 = sadd.s32 %s22, 1
      %s30 = ssub.s32 %s22, %s29
      %p31 = scmp.eq.s32.totalorder %s30, 0
      %s33 = sadd.s32 %s32, 1
      %s34 = scalar_select %p31, %s32, %s33
      %p37 = pneg %p31
      %p38 = scmp.eq.s32.totalorder %s22, 1
      %p39 = por %p37, %p38
      %p40 = scmp.ne.s32.totalorder %s32, %s35
      %p41 = scmp.eq.s32.totalorder %s22, 0
      %p42 = por %p40, %p41
      %p43 = scmp.ne.s32.totalorder %s32, %s35
      %p44 = scmp.eq.s32.totalorder %s27, 1
      %p45 = por %p43, %p44
      %p46 = scmp.ne.s32.totalorder %s35, %s36
      %p47 = scmp.eq.s32.totalorder %s27, 0
      %p48 = por %p46, %p47
      %p49 = scmp.ne.s32.totalorder %s35, %s36
      %p50 = scmp.eq.s32.totalorder %s28, 1
      %p51 = por %p49, %p50
      %p53 = scmp.ne.s32.totalorder %s36, %s52
      %p54 = scmp.eq.s32.totalorder %s28, 0
      %p55 = por %p53, %p54
      %s57 = sadd.s32 %s56, 1
      %p60 = scmp.eq.s32.totalorder %s22, 1
      %p61 = scmp.ne.s32.totalorder %s56, %s58
      %p62 = scmp.eq.s32.totalorder %s22, 0
      %p63 = por %p61, %p62
      %p64 = scmp.ne.s32.totalorder %s56, %s58
      %p65 = scmp.eq.s32.totalorder %s27, 1
      %p66 = por %p64, %p65
      %p67 = scmp.ne.s32.totalorder %s58, %s59
      %p68 = scmp.eq.s32.totalorder %s27, 0
      %p69 = por %p67, %p68
      %p70 = scmp.ne.s32.totalorder %s58, %s59
      %p71 = scmp.eq.s32.totalorder %s28, 1
      %p72 = por %p70, %p71
      %p74 = scmp.ne.s32.totalorder %s59, %s73
      %p75 = scmp.eq.s32.totalorder %s28, 0
      %p76 = por %p74, %p75
      %s78 = sadd.s32 %s77, 1
      %p81 = scmp.eq.s32.totalorder %s22, 1
      %p82 = scmp.ne.s32.totalorder %s77, %s79
      %p83 = scmp.eq.s32.totalorder %s22, 0
      %p84 = por %p82, %p83
      %p85 = scmp.ne.s32.totalorder %s77, %s79
      %p86 = scmp.eq.s32.totalorder %s27, 1
      %p87 = por %p85, %p86
      %p88 = scmp.ne.s32.totalorder %s79, %s80
      %p89 = scmp.eq.s32.totalorder %s27, 0
      %p90 = por %p88, %p89
      %p91 = scmp.ne.s32.totalorder %s79, %s80
      %p92 = scmp.eq.s32.totalorder %s28, 1
      %p93 = por %p91, %p92
      %p95 = scmp.ne.s32.totalorder %s80, %s94
      %p96 = scmp.eq.s32.totalorder %s28, 0
      %p97 = por %p95, %p96
      %s99 = sadd.s32 %s98, 1
      %p102 = scmp.eq.s32.totalorder %s22, 1
      %p103 = scmp.ne.s32.totalorder %s98, %s100
      %p104 = scmp.eq.s32.totalorder %s22, 0
      %p105 = por %p103, %p104
      %p106 = scmp.ne.s32.totalorder %s98, %s100
      %p107 = scmp.eq.s32.totalorder %s27, 1
      %p108 = por %p106, %p107
      %p109 = scmp.ne.s32.totalorder %s100, %s101
      %p110 = scmp.eq.s32.totalorder %s27, 0
      %p111 = por %p109, %p110
      %p112 = scmp.ne.s32.totalorder %s100, %s101
      %p113 = scmp.eq.s32.totalorder %s28, 1
      %p114 = por %p112, %p113
      %p116 = scmp.ne.s32.totalorder %s101, %s115
      %p117 = scmp.eq.s32.totalorder %s28, 0
      %p118 = por %p116, %p117
      %s120 = sadd.s32 %s119, 1
      %p123 = scmp.eq.s32.totalorder %s22, 1
      %p124 = scmp.ne.s32.totalorder %s119, %s121
      %p125 = scmp.eq.s32.totalorder %s22, 0
      %p126 = por %p124, %p125
      %p127 = scmp.ne.s32.totalorder %s119, %s121
      %p128 = scmp.eq.s32.totalorder %s27, 1
      %p129 = por %p127, %p128
      %p130 = scmp.ne.s32.totalorder %s121, %s122
      %p131 = scmp.eq.s32.totalorder %s27, 0
      %p132 = por %p130, %p131
      %p133 = scmp.ne.s32.totalorder %s121, %s122
      %p134 = scmp.eq.s32.totalorder %s28, 1
      %p135 = por %p133, %p134
      %p137 = scmp.ne.s32.totalorder %s122, %s136
      %p138 = scmp.eq.s32.totalorder %s28, 0
      %p139 = por %p137, %p138
      %s141 = sadd.s32 %s140, 1
      %p144 = scmp.eq.s32.totalorder %s22, 1
      %p145 = scmp.ne.s32.totalorder %s140, %s142
      %p146 = scmp.eq.s32.totalorder %s22, 0
      %p147 = por %p145, %p146
      %p148 = scmp.ne.s32.totalorder %s140, %s142
      %p149 = scmp.eq.s32.totalorder %s27, 1
      %p150 = por %p148, %p149
      %p151 = scmp.ne.s32.totalorder %s142, %s143
      %p152 = scmp.eq.s32.totalorder %s27, 0
      %p153 = por %p151, %p152
      %p154 = scmp.ne.s32.totalorder %s142, %s143
      %p155 = scmp.eq.s32.totalorder %s28, 1
      %p156 = por %p154, %p155
      %p158 = scmp.ne.s32.totalorder %s143, %s157
      %p159 = scmp.eq.s32.totalorder %s28, 0
      %p160 = por %p158, %p159
      %s162 = sadd.s32 %s161, 1
      %p165 = scmp.eq.s32.totalorder %s22, 1
      %p166 = scmp.ne.s32.totalorder %s161, %s163
      %p167 = scmp.eq.s32.totalorder %s22, 0
      %p168 = por %p166, %p167
      %p169 = scmp.ne.s32.totalorder %s161, %s163
      %p170 = scmp.eq.s32.totalorder %s27, 1
      %p171 = por %p169, %p170
      %p172 = scmp.ne.s32.totalorder %s163, %s164
      %p173 = scmp.eq.s32.totalorder %s27, 0
      %p174 = por %p172, %p173
      %p175 = scmp.ne.s32.totalorder %s163, %s164
      %p176 = scmp.eq.s32.totalorder %s28, 1
      %p177 = por %p175, %p176
      %p179 = scmp.ne.s32.totalorder %s164, %s178
      %p180 = scmp.eq.s32.totalorder %s28, 0
      %p181 = por %p179, %p180
      %s182 = ssub.s32 %s22, %s29
      %p183 = scmp.eq.s32.totalorder %s182, 0
      %s185 = sadd.s32 %s184, 1
      %s186 = scalar_select %p183, %s184, %s185
      %p189 = pneg %p183
      %p190 = scmp.eq.s32.totalorder %s22, 1
      %p191 = por %p189, %p190
      %p192 = scmp.ne.s32.totalorder %s184, %s187
      %p193 = scmp.eq.s32.totalorder %s22, 0
      %p194 = por %p192, %p193
      %p195 = scmp.ne.s32.totalorder %s184, %s187
      %p196 = scmp.eq.s32.totalorder %s27, 1
      %p197 = por %p195, %p196
      %p198 = scmp.ne.s32.totalorder %s187, %s188
      %p199 = scmp.eq.s32.totalorder %s27, 0
      %p200 = por %p198, %p199
      %p201 = scmp.ne.s32.totalorder %s187, %s188
      %p202 = scmp.eq.s32.totalorder %s28, 1
      %p203 = por %p201, %p202
      %p205 = scmp.ne.s32.totalorder %s188, %s204
      %p206 = scmp.eq.s32.totalorder %s28, 0
      %p207 = por %p205, %p206
      %p208 = scmp.le.s32.totalorder 1, %s22
      %p209 = scmp.lt.s32.totalorder %s22, 3
      %p210 = pnand %p208, %p209
      %p211 = pneg %p210
      // Predicated region
      $region9: #{transformer_encode_block.7} parent=5 // pred_check
        _
      $region10: #{transformer_encode_block.7} parent=5 // pred_check_branch
        %213 = sbr.rel (%p210) target = $region12
      $region11: #{transformer_encode_block.7} parent=5 // pred_region
        %s214 = ssub.s32 %s22, 1
        // Predicated region
        $region13: #{transformer_encode_block.7} parent=11 // pred_check
          %p215 = pneg %p69
        $region14: #{transformer_encode_block.7} parent=11 // pred_check_branch
          %217 = sbr.rel (%p215) target = $region16
        $region15: #{transformer_encode_block.7} parent=11 // pred_region
          %s219 = ssub.s32 4096, 4096
          %220 = vsyncadd [#allocation6], %s219
          %s221 = sshll.u32 [#allocation5], 4
          %s222 = int_to_ptr.vmem [resolvable:$true] %s221
          %227 = dma.hbm_to_vmem [thread:$0]  %s1, 4096, %s222, [#allocation6], 256, 256, 16
        $region16: #{transformer_encode_block.7} parent=11 // pred_fallthru
          _
        // Predicated region
        $region17: #{transformer_encode_block.7} parent=11 // pred_check
          %p228 = pneg %p90
        $region18: #{transformer_encode_block.7} parent=11 // pred_check_branch
          %230 = sbr.rel (%p228) target = $region20
        $region19: #{transformer_encode_block.7} parent=11 // pred_region
          %s232 = ssub.s32 64, 64
          %233 = vsyncadd [#allocation6], %s232
          %s235 = sshll.u32 [#allocation7], 4
          %s236 = int_to_ptr.vmem [resolvable:$true] %s235
          %238 = dma.hbm_to_vmem [thread:$0]  %s2, 64, %s236, [#allocation6]
        $region20: #{transformer_encode_block.7} parent=11 // pred_fallthru
          _
        // Predicated region
        $region21: #{transformer_encode_block.7} parent=11 // pred_check
          %p239 = pneg %p111
        $region22: #{transformer_encode_block.7} parent=11 // pred_check_branch
          %241 = sbr.rel (%p239) target = $region24
        $region23: #{transformer_encode_block.7} parent=11 // pred_region
          %s243 = ssub.s32 4096, 4096
          %244 = vsyncadd [#allocation9], %s243
          %s245 = sshll.u32 [#allocation8], 4
          %s246 = int_to_ptr.vmem [resolvable:$true] %s245
          %251 = dma.hbm_to_vmem [thread:$0]  %s3, 4096, %s246, [#allocation9], 64, 64, 4
        $region24: #{transformer_encode_block.7} parent=11 // pred_fallthru
          _
        // Predicated region
        $region25: #{transformer_encode_block.7} parent=11 // pred_check
          %p252 = pneg %p132
        $region26: #{transformer_encode_block.7} parent=11 // pred_check_branch
          %254 = sbr.rel (%p252) target = $region28
        $region27: #{transformer_encode_block.7} parent=11 // pred_region
          %s256 = ssub.s32 16, 16
          %257 = vsyncadd [#allocation9], %s256
          %s259 = sshll.u32 [#allocation10], 4
          %s260 = int_to_ptr.vmem [resolvable:$true] %s259
          %262 = dma.hbm_to_vmem [thread:$0]  %s4, 16, %s260, [#allocation9]
        $region28: #{transformer_encode_block.7} parent=11 // pred_fallthru
          _
        // Predicated region
        $region29: #{transformer_encode_block.7} parent=11 // pred_check
          %p263 = pneg %p153
        $region30: #{transformer_encode_block.7} parent=11 // pred_check_branch
          %265 = sbr.rel (%p263) target = $region32
        $region31: #{transformer_encode_block.7} parent=11 // pred_region
          %s267 = ssub.s32 16, 16
          %268 = vsyncadd [#allocation12], %s267
          %s270 = sshll.u32 [#allocation11], 4
          %s271 = int_to_ptr.vmem [resolvable:$true] %s270
          %273 = dma.hbm_to_vmem [thread:$0]  %s5, 16, %s271, [#allocation12]
        $region32: #{transformer_encode_block.7} parent=11 // pred_fallthru
          _
        // Predicated region
        $region33: #{transformer_encode_block.7} parent=11 // pred_check
          %p274 = pneg %p174
        $region34: #{transformer_encode_block.7} parent=11 // pred_check_branch
          %276 = sbr.rel (%p274) target = $region36
        $region35: #{transformer_encode_block.7} parent=11 // pred_region
          %s278 = ssub.s32 16, 16
          %279 = vsyncadd [#allocation12], %s278
          %s281 = sshll.u32 [#allocation13], 4
          %s282 = int_to_ptr.vmem [resolvable:$true] %s281
          %284 = dma.hbm_to_vmem [thread:$0]  %s6, 16, %s282, [#allocation12]
        $region36: #{transformer_encode_block.7} parent=11 // pred_fallthru
          _
      $region12: #{transformer_encode_block.7} parent=5 // pred_fallthru
        _
      %p285 = scmp.lt.s32.totalorder %s22, 2
      // Predicated region
      $region37: #{transformer_encode_block.7} parent=5 // pred_check
        %p286 = pneg %p285
      $region38: #{transformer_encode_block.7} parent=5 // pred_check_branch
        %288 = sbr.rel (%p286) target = $region40
      $region39: #{transformer_encode_block.7} parent=5 // pred_region
        // Predicated region
        $region41: #{transformer_encode_block.7} parent=39 // pred_check
          %p289 = pneg %p42
        $region42: #{transformer_encode_block.7} parent=39 // pred_check_branch
          %291 = sbr.rel (%p289) target = $region44
        $region43: #{transformer_encode_block.7} parent=39 // pred_region
          %s292 = sand.u32 %s32, 1
          %s293 = scalar_lea.sflag [#allocation3], %s292
          %s294 = sand.u32 %s32, 1
          %s295 = smul.addr %s294, 256
          %s296 = scalar_lea.vmem [#allocation2], %s295
          %s297 = smul.u32 32, %s22
          %s299 = ssub.s32 4096, 4096
          %300 = vsyncadd %s293, %s299
          %s301 = smul.addr %s297, 128
          %s302 = scalar_lea.hbm %s0, %s301
          %s303 = sshll.u32 %s296, 4
          %s304 = int_to_ptr.vmem [resolvable:$true] %s303
          %309 = dma.hbm_to_vmem [thread:$0]  %s302, 4096, %s304, %s293, 128, 128, 8
        $region44: #{transformer_encode_block.7} parent=39 // pred_fallthru
          _
      $region40: #{transformer_encode_block.7} parent=5 // pred_fallthru
        _
      %p310 = scmp.le.s32.totalorder 1, %s22
      %p311 = scmp.lt.s32.totalorder %s22, 3
      %p312 = pnand %p310, %p311
      %p313 = pneg %p312
      // Predicated region
      $region45: #{transformer_encode_block.7} parent=5 // pred_check
        _
      $region46: #{transformer_encode_block.7} parent=5 // pred_check_branch
        %315 = sbr.rel (%p312) target = $region48
      $region47: #{transformer_encode_block.7} parent=5 // pred_region
        %s316 = ssub.s32 %s22, 1
        %s317 = sand.u32 %s35, 1
        %s318 = scalar_lea.sflag [#allocation3], %s317
        %s319 = sand.u32 %s35, 1
        %s320 = smul.addr %s319, 256
        %s321 = scalar_lea.vmem [#allocation2], %s320
        // Predicated region
        $region49: #{transformer_encode_block.7} parent=47 // pred_check
          %p322 = pneg %p48
        $region50: #{transformer_encode_block.7} parent=47 // pred_check_branch
          %324 = sbr.rel (%p322) target = $region52
        $region51: #{transformer_encode_block.7} parent=47 // pred_region
          %325 = dma.done %s318, 4096
        $region52: #{transformer_encode_block.7} parent=47 // pred_fallthru
          _
        // Predicated region
        $region53: #{transformer_encode_block.7} parent=47 // pred_check
          %p326 = pneg %p69
        $region54: #{transformer_encode_block.7} parent=47 // pred_check_branch
          %328 = sbr.rel (%p326) target = $region56
        $region55: #{transformer_encode_block.7} parent=47 // pred_region
          %329 = dma.done [#allocation6], 4096
        $region56: #{transformer_encode_block.7} parent=47 // pred_fallthru
          _
        // Predicated region
        $region57: #{transformer_encode_block.7} parent=47 // pred_check
          %p330 = pneg %p90
        $region58: #{transformer_encode_block.7} parent=47 // pred_check_branch
          %332 = sbr.rel (%p330) target = $region60
        $region59: #{transformer_encode_block.7} parent=47 // pred_region
          %333 = dma.done [#allocation6], 64
        $region60: #{transformer_encode_block.7} parent=47 // pred_fallthru
          _
        // Predicated region
        $region61: #{transformer_encode_block.7} parent=47 // pred_check
          %p334 = pneg %p111
        $region62: #{transformer_encode_block.7} parent=47 // pred_check_branch
          %336 = sbr.rel (%p334) target = $region64
        $region63: #{transformer_encode_block.7} parent=47 // pred_region
          %337 = dma.done [#allocation9], 4096
        $region64: #{transformer_encode_block.7} parent=47 // pred_fallthru
          _
        // Predicated region
        $region65: #{transformer_encode_block.7} parent=47 // pred_check
          %p338 = pneg %p132
        $region66: #{transformer_encode_block.7} parent=47 // pred_check_branch
          %340 = sbr.rel (%p338) target = $region68
        $region67: #{transformer_encode_block.7} parent=47 // pred_region
          %341 = dma.done [#allocation9], 16
        $region68: #{transformer_encode_block.7} parent=47 // pred_fallthru
          _
        // Predicated region
        $region69: #{transformer_encode_block.7} parent=47 // pred_check
          %p342 = pneg %p153
        $region70: #{transformer_encode_block.7} parent=47 // pred_check_branch
          %344 = sbr.rel (%p342) target = $region72
        $region71: #{transformer_encode_block.7} parent=47 // pred_region
          %345 = dma.done [#allocation12], 16
        $region72: #{transformer_encode_block.7} parent=47 // pred_fallthru
          _
        // Predicated region
        $region73: #{transformer_encode_block.7} parent=47 // pred_check
          %p346 = pneg %p174
        $region74: #{transformer_encode_block.7} parent=47 // pred_check_branch
          %348 = sbr.rel (%p346) target = $region76
        $region75: #{transformer_encode_block.7} parent=47 // pred_region
          %349 = dma.done [#allocation12], 16
        $region76: #{transformer_encode_block.7} parent=47 // pred_fallthru
          _
        %s350 = sand.u32 %s35, 1
        %s351 = scalar_lea.sflag [#allocation3], %s350
        %s352 = sand.u32 %s35, 1
        %s353 = smul.addr %s352, 256
        %s354 = scalar_lea.vmem [#allocation2], %s353
        %p355 = pneg %p48
        %p356 = pneg %p45
        %p357 = pneg %p69
        %p358 = pneg %p66
        %p359 = pneg %p90
        %p360 = pneg %p87
        %p361 = pneg %p111
        %p362 = pneg %p108
        %p363 = pneg %p132
        %p364 = pneg %p129
        %p365 = pneg %p153
        %p366 = pneg %p150
        %p367 = pneg %p174
        %p368 = pneg %p171
        %p369 = pneg %p200
        %p370 = pneg %p197
        %s371 = sand.u32 %s187, 1
        %s372 = scalar_lea.sflag [#allocation4], %s371
        %s373 = sand.u32 %s187, 1
        %s374 = smul.addr %s373, 256
        %s375 = scalar_lea.vmem [#allocation14], %s374
        %s376 = smul.u32 32, %s27
        %s377 = smul.u32 32, %s27
        %v379 = vld [vmem:[%s321] sm:$0xff]
        %v380 = vld [vmem:[%s321 + $0x8] sm:$0xff]
        %v381 = vld [vmem:[%s321 + $0x10] sm:$0xff]
        %v382 = vld [vmem:[%s321 + $0x18] sm:$0xff]
        %v383 = vld [vmem:[%s321 + $0x20] sm:$0xff]
        %v384 = vld [vmem:[%s321 + $0x28] sm:$0xff]
        %v385 = vld [vmem:[%s321 + $0x30] sm:$0xff]
        %v386 = vld [vmem:[%s321 + $0x38] sm:$0xff]
        %v387 = vld [vmem:[%s321 + $0x40] sm:$0xff]
        %v388 = vld [vmem:[%s321 + $0x48] sm:$0xff]
        %v389 = vld [vmem:[%s321 + $0x50] sm:$0xff]
        %v390 = vld [vmem:[%s321 + $0x58] sm:$0xff]
        %v391 = vld [vmem:[%s321 + $0x60] sm:$0xff]
        %v392 = vld [vmem:[%s321 + $0x68] sm:$0xff]
        %v393 = vld [vmem:[%s321 + $0x70] sm:$0xff]
        %v394 = vld [vmem:[%s321 + $0x78] sm:$0xff]
        %v395 = vld [vmem:[%s321 + $0x80] sm:$0xff]
        %v396 = vld [vmem:[%s321 + $0x88] sm:$0xff]
        %v397 = vld [vmem:[%s321 + $0x90] sm:$0xff]
        %v398 = vld [vmem:[%s321 + $0x98] sm:$0xff]
        %v399 = vld [vmem:[%s321 + $0xa0] sm:$0xff]
        %v400 = vld [vmem:[%s321 + $0xa8] sm:$0xff]
        %v401 = vld [vmem:[%s321 + $0xb0] sm:$0xff]
        %v402 = vld [vmem:[%s321 + $0xb8] sm:$0xff]
        %v403 = vld [vmem:[%s321 + $0xc0] sm:$0xff]
        %v404 = vld [vmem:[%s321 + $0xc8] sm:$0xff]
        %v405 = vld [vmem:[%s321 + $0xd0] sm:$0xff]
        %v406 = vld [vmem:[%s321 + $0xd8] sm:$0xff]
        %v407 = vld [vmem:[%s321 + $0xe0] sm:$0xff]
        %v408 = vld [vmem:[%s321 + $0xe8] sm:$0xff]
        %v409 = vld [vmem:[%s321 + $0xf0] sm:$0xff]
        %v410 = vld [vmem:[%s321 + $0xf8] sm:$0xff]
        %v411 = vpack.c.bf16 %v380, %v379
        %v412 = vpack.c.bf16 %v382, %v381
        %v413 = vpack.c.bf16 %v384, %v383
        %v414 = vpack.c.bf16 %v386, %v385
        %v415 = vpack.c.bf16 %v388, %v387
        %v416 = vpack.c.bf16 %v390, %v389
        %v417 = vpack.c.bf16 %v392, %v391
        %v418 = vpack.c.bf16 %v394, %v393
        %v419 = vpack.c.bf16 %v396, %v395
        %v420 = vpack.c.bf16 %v398, %v397
        %v421 = vpack.c.bf16 %v400, %v399
        %v422 = vpack.c.bf16 %v402, %v401
        %v423 = vpack.c.bf16 %v404, %v403
        %v424 = vpack.c.bf16 %v406, %v405
        %v425 = vpack.c.bf16 %v408, %v407
        %v426 = vpack.c.bf16 %v410, %v409
        %v427 = vld [vmem:[#allocation5] sm:$0xff]
        %v428 = vld [vmem:[#allocation5 + $0x8] sm:$0xff]
        %v429 = vld [vmem:[#allocation5 + $0x10] sm:$0xff]
        %v430 = vld [vmem:[#allocation5 + $0x18] sm:$0xff]
        %v431 = vld [vmem:[#allocation5 + $0x20] sm:$0xff]
        %v432 = vld [vmem:[#allocation5 + $0x28] sm:$0xff]
        %v433 = vld [vmem:[#allocation5 + $0x30] sm:$0xff]
        %v434 = vld [vmem:[#allocation5 + $0x38] sm:$0xff]
        %v435 = vld [vmem:[#allocation5 + $0x40] sm:$0xff]
        %v436 = vld [vmem:[#allocation5 + $0x48] sm:$0xff]
        %v437 = vld [vmem:[#allocation5 + $0x50] sm:$0xff]
        %v438 = vld [vmem:[#allocation5 + $0x58] sm:$0xff]
        %v439 = vld [vmem:[#allocation5 + $0x60] sm:$0xff]
        %v440 = vld [vmem:[#allocation5 + $0x68] sm:$0xff]
        %v441 = vld [vmem:[#allocation5 + $0x70] sm:$0xff]
        %v442 = vld [vmem:[#allocation5 + $0x78] sm:$0xff]
        %v443 = vld [vmem:[#allocation5 + $0x80] sm:$0xff]
        %v444 = vld [vmem:[#allocation5 + $0x88] sm:$0xff]
        %v445 = vld [vmem:[#allocation5 + $0x90] sm:$0xff]
        %v446 = vld [vmem:[#allocation5 + $0x98] sm:$0xff]
        %v447 = vld [vmem:[#allocation5 + $0xa0] sm:$0xff]
        %v448 = vld [vmem:[#allocation5 + $0xa8] sm:$0xff]
        %v449 = vld [vmem:[#allocation5 + $0xb0] sm:$0xff]
        %v450 = vld [vmem:[#allocation5 + $0xb8] sm:$0xff]
        %v451 = vld [vmem:[#allocation5 + $0xc0] sm:$0xff]
        %v452 = vld [vmem:[#allocation5 + $0xc8] sm:$0xff]
        %v453 = vld [vmem:[#allocation5 + $0xd0] sm:$0xff]
        %v454 = vld [vmem:[#allocation5 + $0xd8] sm:$0xff]
        %v455 = vld [vmem:[#allocation5 + $0xe0] sm:$0xff]
        %v456 = vld [vmem:[#allocation5 + $0xe8] sm:$0xff]
        %v457 = vld [vmem:[#allocation5 + $0xf0] sm:$0xff]
        %v458 = vld [vmem:[#allocation5 + $0xf8] sm:$0xff]
        %v459 = vld [vmem:[#allocation7] sm:$0xf]
        %v461 = vlaneseq
        %v462 = vshrl.u32 %v461, 7
        %v463 = vsub.s32 0, %v462
        %v464 = vrot.slane %v459, %v463
        %v465 = vlaneseq
        %v466 = vshrl.u32 %v465, 7
        %v467 = vsub.s32 1, %v466
        %v468 = vrot.slane %v459, %v467
        %v469 = vlaneseq
        %v470 = vshrl.u32 %v469, 7
        %v471 = vsub.s32 2, %v470
        %v472 = vrot.slane %v459, %v471
        %v473 = vlaneseq
        %v474 = vshrl.u32 %v473, 7
        %v475 = vsub.s32 3, %v474
        %v476 = vrot.slane %v459, %v475
        %v513 = vunpack.c.l.b16 %v427
        %v514 = vunpack.c.h.b16 %v427
        %v515 = vunpack.c.l.b16 %v428
        %v516 = vunpack.c.h.b16 %v428
        %v517 = vunpack.c.l.b16 %v429
        %v518 = vunpack.c.h.b16 %v429
        %v519 = vunpack.c.l.b16 %v430
        %v520 = vunpack.c.h.b16 %v430
        %v521 = vunpack.c.l.b16 %v431
        %v522 = vunpack.c.h.b16 %v431
        %v523 = vunpack.c.l.b16 %v432
        %v524 = vunpack.c.h.b16 %v432
        %v525 = vunpack.c.l.b16 %v433
        %v526 = vunpack.c.h.b16 %v433
        %v527 = vunpack.c.l.b16 %v434
        %v528 = vunpack.c.h.b16 %v434
        %v529 = vunpack.c.l.b16 %v435
        %v530 = vunpack.c.h.b16 %v435
        %v531 = vunpack.c.l.b16 %v436
        %v532 = vunpack.c.h.b16 %v436
        %v533 = vunpack.c.l.b16 %v437
        %v534 = vunpack.c.h.b16 %v437
        %v535 = vunpack.c.l.b16 %v438
        %v536 = vunpack.c.h.b16 %v438
        %v537 = vunpack.c.l.b16 %v439
        %v538 = vunpack.c.h.b16 %v439
        %v539 = vunpack.c.l.b16 %v440
        %v540 = vunpack.c.h.b16 %v440
        %v541 = vunpack.c.l.b16 %v441
        %v542 = vunpack.c.h.b16 %v441
        %v543 = vunpack.c.l.b16 %v442
        %v544 = vunpack.c.h.b16 %v442
        %v545 = vunpack.c.l.b16 %v443
        %v546 = vunpack.c.h.b16 %v443
        %v547 = vunpack.c.l.b16 %v444
        %v548 = vunpack.c.h.b16 %v444
        %v549 = vunpack.c.l.b16 %v445
        %v550 = vunpack.c.h.b16 %v445
        %v551 = vunpack.c.l.b16 %v446
        %v552 = vunpack.c.h.b16 %v446
        %v553 = vunpack.c.l.b16 %v447
        %v554 = vunpack.c.h.b16 %v447
        %v555 = vunpack.c.l.b16 %v448
        %v556 = vunpack.c.h.b16 %v448
        %v557 = vunpack.c.l.b16 %v449
        %v558 = vunpack.c.h.b16 %v449
        %v559 = vunpack.c.l.b16 %v450
        %v560 = vunpack.c.h.b16 %v450
        %v561 = vunpack.c.l.b16 %v451
        %v562 = vunpack.c.h.b16 %v451
        %v563 = vunpack.c.l.b16 %v452
        %v564 = vunpack.c.h.b16 %v452
        %v565 = vunpack.c.l.b16 %v453
        %v566 = vunpack.c.h.b16 %v453
        %v567 = vunpack.c.l.b16 %v454
        %v568 = vunpack.c.h.b16 %v454
        %v569 = vunpack.c.l.b16 %v455
        %v570 = vunpack.c.h.b16 %v455
        %v571 = vunpack.c.l.b16 %v456
        %v572 = vunpack.c.h.b16 %v456
        %v573 = vunpack.c.l.b16 %v457
        %v574 = vunpack.c.h.b16 %v457
        %v575 = vunpack.c.l.b16 %v458
        %v576 = vunpack.c.h.b16 %v458
        %v577 = vpack.c.b16 %v517, %v513
        %v578 = vpack.c.b16 %v518, %v514
        %v579 = vpack.c.b16 %v519, %v515
        %v580 = vpack.c.b16 %v520, %v516
        %v581 = vpack.c.b16 %v525, %v521
        %v582 = vpack.c.b16 %v526, %v522
        %v583 = vpack.c.b16 %v527, %v523
        %v584 = vpack.c.b16 %v528, %v524
        %v585 = vpack.c.b16 %v533, %v529
        %v586 = vpack.c.b16 %v534, %v530
        %v587 = vpack.c.b16 %v535, %v531
        %v588 = vpack.c.b16 %v536, %v532
        %v589 = vpack.c.b16 %v541, %v537
        %v590 = vpack.c.b16 %v542, %v538
        %v591 = vpack.c.b16 %v543, %v539
        %v592 = vpack.c.b16 %v544, %v540
        %v593 = vpack.c.b16 %v549, %v545
        %v594 = vpack.c.b16 %v550, %v546
        %v595 = vpack.c.b16 %v551, %v547
        %v596 = vpack.c.b16 %v552, %v548
        %v597 = vpack.c.b16 %v557, %v553
        %v598 = vpack.c.b16 %v558, %v554
        %v599 = vpack.c.b16 %v559, %v555
        %v600 = vpack.c.b16 %v560, %v556
        %v601 = vpack.c.b16 %v565, %v561
        %v602 = vpack.c.b16 %v566, %v562
        %v603 = vpack.c.b16 %v567, %v563
        %v604 = vpack.c.b16 %v568, %v564
        %v605 = vpack.c.b16 %v573, %v569
        %v606 = vpack.c.b16 %v574, %v570
        %v607 = vpack.c.b16 %v575, %v571
        %v608 = vpack.c.b16 %v576, %v572
        %641 = vmatprep.subr.bf16.mxu0 %v578
        %642 = vmatpush1.bf16.msra.mxu0 %v577
        %643 = vmatprep.subr.bf16.mxu0 %v582
        %644 = vmatpush1.bf16.msra.mxu0 %v581
        %645 = vmatprep.subr.bf16.mxu0 %v586
        %646 = vmatpush1.bf16.msra.mxu0 %v585
        %647 = vmatprep.subr.bf16.mxu0 %v590
        %648 = vmatpush1.bf16.msra.mxu0 %v589
        %649 = vmatprep.subr.bf16.mxu0 %v594
        %650 = vmatpush1.bf16.msra.mxu0 %v593
        %651 = vmatprep.subr.bf16.mxu0 %v598
        %652 = vmatpush1.bf16.msra.mxu0 %v597
        %653 = vmatprep.subr.bf16.mxu0 %v602
        %654 = vmatpush1.bf16.msra.mxu0 %v601
        %655 = vmatprep.subr.bf16.mxu0 %v606
        %656 = vmatpush1.bf16.msra.mxu0 %v605
        %657 = vmatprep.subr.bf16.mxu0 0
        %658 = vmatpush1.bf16.msra.mxu0 0
        %659 = vmatprep.subr.bf16.mxu0 0
        %660 = vmatpush1.bf16.msra.mxu0 0
        %661 = vmatprep.subr.bf16.mxu0 0
        %662 = vmatpush1.bf16.msra.mxu0 0
        %663 = vmatprep.subr.bf16.mxu0 0
        %664 = vmatpush1.bf16.msra.mxu0 0
        %665 = vmatprep.subr.bf16.mxu0 0
        %666 = vmatpush1.bf16.msra.mxu0 0
        %667 = vmatprep.subr.bf16.mxu0 0
        %668 = vmatpush1.bf16.msra.mxu0 0
        %669 = vmatprep.subr.bf16.mxu0 0
        %670 = vmatpush1.bf16.msra.mxu0 0
        %671 = vmatprep.subr.bf16.mxu0 0
        %672 = vmatpush1.bf16.msra.mxu0 0
        %673 = vmatprep.mubr.bf16.mxu0 0
        %674 = vmatmul.mubr.bf16.gmra.mrb[0].mxu0 %v411
        %v675 = vpop.f32.mrb[0].mxu0
        %v676 = vadd.f32 %v464, %v675
        %v677 = vpop.f32.mrb[0].mxu0
        %v678 = vadd.f32 %v468, %v677
        %v679 = vpop.f32.mrb[0].mxu0
        %v680 = vadd.f32 %v464, %v679
        %v681 = vpop.f32.mrb[0].mxu0
        %v682 = vadd.f32 %v468, %v681
        %683 = vmatprep.mubr.bf16.mxu0 0
        %684 = vmatmul.mubr.bf16.gmra.mrb[0].mxu0 %v412
        %v685 = vpop.f32.mrb[0].mxu0
        %v686 = vadd.f32 %v464, %v685
        %v687 = vpop.f32.mrb[0].mxu0
        %v688 = vadd.f32 %v468, %v687
        %v689 = vpop.f32.mrb[0].mxu0
        %v690 = vadd.f32 %v464, %v689
        %v691 = vpop.f32.mrb[0].mxu0
        %v692 = vadd.f32 %v468, %v691
        %693 = vmatprep.mubr.bf16.mxu0 0
        %694 = vmatmul.mubr.bf16.gmra.mrb[0].mxu0 %v413
        %v695 = vpop.f32.mrb[0].mxu0
        %v696 = vadd.f32 %v464, %v695
        %v697 = vpop.f32.mrb[0].mxu0
        %v698 = vadd.f32 %v468, %v697
        %v699 = vpop.f32.mrb[0].mxu0
        %v700 = vadd.f32 %v464, %v699
        %v701 = vpop.f32.mrb[0].mxu0
        %v702 = vadd.f32 %v468, %v701
        %703 = vmatprep.mubr.bf16.mxu0 0
        %704 = vmatmul.mubr.bf16.gmra.mrb[0].mxu0 %v414
        %v705 = vpop.f32.mrb[0].mxu0
        %v706 = vadd.f32 %v464, %v705
        %v707 = vpop.f32.mrb[0].mxu0
        %v708 = vadd.f32 %v468, %v707
        %v709 = vpop.f32.mrb[0].mxu0
        %v710 = vadd.f32 %v464, %v709
        %v711 = vpop.f32.mrb[0].mxu0
        %v712 = vadd.f32 %v468, %v711
        %713 = vmatprep.mubr.bf16.mxu0 0
        %714 = vmatmul.mubr.bf16.gmra.mrb[0].mxu0 %v415
        %v715 = vpop.f32.mrb[0].mxu0
        %v716 = vadd.f32 %v464, %v715
        %v717 = vpop.f32.mrb[0].mxu0
        %v718 = vadd.f32 %v468, %v717
        %v719 = vpop.f32.mrb[0].mxu0
        %v720 = vadd.f32 %v464, %v719
        %v721 = vpop.f32.mrb[0].mxu0
        %v722 = vadd.f32 %v468, %v721
        %723 = vmatprep.mubr.bf16.mxu0 0
        %724 = vmatmul.mubr.bf16.gmra.mrb[0].mxu0 %v416
        %v725 = vpop.f32.mrb[0].mxu0
        %v726 = vadd.f32 %v464, %v725
        %v727 = vpop.f32.mrb[0].mxu0
        %v728 = vadd.f32 %v468, %v727
        %v729 = vpop.f32.mrb[0].mxu0
        %v730 = vadd.f32 %v464, %v729
        %v731 = vpop.f32.mrb[0].mxu0
        %v732 = vadd.f32 %v468, %v731
        %733 = vmatprep.mubr.bf16.mxu0 0
        %734 = vmatmul.mubr.bf16.gmra.mrb[0].mxu0 %v417
        %v735 = vpop.f32.mrb[0].mxu0
        %v736 = vadd.f32 %v464, %v735
        %v737 = vpop.f32.mrb[0].mxu0
        %v738 = vadd.f32 %v468, %v737
        %v739 = vpop.f32.mrb[0].mxu0
        %v740 = vadd.f32 %v464, %v739
        %v741 = vpop.f32.mrb[0].mxu0
        %v742 = vadd.f32 %v468, %v741
        %743 = vmatprep.mubr.bf16.mxu0 0
        %744 = vmatmul.mubr.bf16.gmra.mrb[0].mxu0 %v418
        %v745 = vpop.f32.mrb[0].mxu0
        %v746 = vadd.f32 %v464, %v745
        %v747 = vpop.f32.mrb[0].mxu0
        %v748 = vadd.f32 %v468, %v747
        %v749 = vpop.f32.mrb[0].mxu0
        %v750 = vadd.f32 %v464, %v749
        %v751 = vpop.f32.mrb[0].mxu0
        %v752 = vadd.f32 %v468, %v751
        %753 = vmatprep.mubr.bf16.mxu0 0
        %754 = vmatmul.mubr.bf16.gmra.mrb[0].mxu0 %v419
        %v755 = vpop.f32.mrb[0].mxu0
        %v756 = vadd.f32 %v464, %v755
        %v757 = vpop.f32.mrb[0].mxu0
        %v758 = vadd.f32 %v468, %v757
        %v759 = vpop.f32.mrb[0].mxu0
        %v760 = vadd.f32 %v464, %v759
        %v761 = vpop.f32.mrb[0].mxu0
        %v762 = vadd.f32 %v468, %v761
        %763 = vmatprep.mubr.bf16.mxu0 0
        %764 = vmatmul.mubr.bf16.gmra.mrb[0].mxu0 %v420
        %v765 = vpop.f32.mrb[0].mxu0
        %v766 = vadd.f32 %v464, %v765
        %v767 = vpop.f32.mrb[0].mxu0
        %v768 = vadd.f32 %v468, %v767
        %v769 = vpop.f32.mrb[0].mxu0
        %v770 = vadd.f32 %v464, %v769
        %v771 = vpop.f32.mrb[0].mxu0
        %v772 = vadd.f32 %v468, %v771
        %773 = vmatprep.mubr.bf16.mxu0 0
        %774 = vmatmul.mubr.bf16.gmra.mrb[0].mxu0 %v421
        %v775 = vpop.f32.mrb[0].mxu0
        %v776 = vadd.f32 %v464, %v775
        %v777 = vpop.f32.mrb[0].mxu0
        %v778 = vadd.f32 %v468, %v777
        %v779 = vpop.f32.mrb[0].mxu0
        %v780 = vadd.f32 %v464, %v779
        %v781 = vpop.f32.mrb[0].mxu0
        %v782 = vadd.f32 %v468, %v781
        %783 = vmatprep.mubr.bf16.mxu0 0
        %784 = vmatmul.mubr.bf16.gmra.mrb[0].mxu0 %v422
        %v785 = vpop.f32.mrb[0].mxu0
        %v786 = vadd.f32 %v464, %v785
        %v787 = vpop.f32.mrb[0].mxu0
        %v788 = vadd.f32 %v468, %v787
        %v789 = vpop.f32.mrb[0].mxu0
        %v790 = vadd.f32 %v464, %v789
        %v791 = vpop.f32.mrb[0].mxu0
        %v792 = vadd.f32 %v468, %v791
        %793 = vmatprep.mubr.bf16.mxu0 0
        %794 = vmatmul.mubr.bf16.gmra.mrb[0].mxu0 %v423
        %v795 = vpop.f32.mrb[0].mxu0
        %v796 = vadd.f32 %v464, %v795
        %v797 = vpop.f32.mrb[0].mxu0
        %v798 = vadd.f32 %v468, %v797
        %v799 = vpop.f32.mrb[0].mxu0
        %v800 = vadd.f32 %v464, %v799
        %v801 = vpop.f32.mrb[0].mxu0
        %v802 = vadd.f32 %v468, %v801
        %803 = vmatprep.mubr.bf16.mxu0 0
        %804 = vmatmul.mubr.bf16.gmra.mrb[0].mxu0 %v424
        %v805 = vpop.f32.mrb[0].mxu0
        %v806 = vadd.f32 %v464, %v805
        %v807 = vpop.f32.mrb[0].mxu0
        %v808 = vadd.f32 %v468, %v807
        %v809 = vpop.f32.mrb[0].mxu0
        %v810 = vadd.f32 %v464, %v809
        %v811 = vpop.f32.mrb[0].mxu0
        %v812 = vadd.f32 %v468, %v811
        %813 = vmatprep.mubr.bf16.mxu0 0
        %814 = vmatmul.mubr.bf16.gmra.mrb[0].mxu0 %v425
        %v815 = vpop.f32.mrb[0].mxu0
        %v816 = vadd.f32 %v464, %v815
        %v817 = vpop.f32.mrb[0].mxu0
        %v818 = vadd.f32 %v468, %v817
        %v819 = vpop.f32.mrb[0].mxu0
        %v820 = vadd.f32 %v464, %v819
        %v821 = vpop.f32.mrb[0].mxu0
        %v822 = vadd.f32 %v468, %v821
        %823 = vmatprep.mubr.bf16.mxu0 0
        %824 = vmatmul.mubr.bf16.gmra.mrb[0].mxu0 %v426
        %v825 = vpop.f32.mrb[0].mxu0
        %v826 = vadd.f32 %v464, %v825
        %v827 = vpop.f32.mrb[0].mxu0
        %v828 = vadd.f32 %v468, %v827
        %v829 = vpop.f32.mrb[0].mxu0
        %v830 = vadd.f32 %v464, %v829
        %v831 = vpop.f32.mrb[0].mxu0
        %v832 = vadd.f32 %v468, %v831
        %833 = vdwg.mxu0
        %834 = vmatprep.subr.bf16.mxu0 %v580
        %835 = vmatpush1.bf16.msra.mxu0 %v579
        %836 = vmatprep.subr.bf16.mxu0 %v584
        %837 = vmatpush1.bf16.msra.mxu0 %v583
        %838 = vmatprep.subr.bf16.mxu0 %v588
        %839 = vmatpush1.bf16.msra.mxu0 %v587
        %840 = vmatprep.subr.bf16.mxu0 %v592
        %841 = vmatpush1.bf16.msra.mxu0 %v591
        %842 = vmatprep.subr.bf16.mxu0 %v596
        %843 = vmatpush1.bf16.msra.mxu0 %v595
        %844 = vmatprep.subr.bf16.mxu0 %v600
        %845 = vmatpush1.bf16.msra.mxu0 %v599
        %846 = vmatprep.subr.bf16.mxu0 %v604
        %847 = vmatpush1.bf16.msra.mxu0 %v603
        %848 = vmatprep.subr.bf16.mxu0 %v608
        %849 = vmatpush1.bf16.msra.mxu0 %v607
        %850 = vmatprep.subr.bf16.mxu0 0
        %851 = vmatpush1.bf16.msra.mxu0 0
        %852 = vmatprep.subr.bf16.mxu0 0
        %853 = vmatpush1.bf16.msra.mxu0 0
        %854 = vmatprep.subr.bf16.mxu0 0
        %855 = vmatpush1.bf16.msra.mxu0 0
        %856 = vmatprep.subr.bf16.mxu0 0
        %857 = vmatpush1.bf16.msra.mxu0 0
        %858 = vmatprep.subr.bf16.mxu0 0
        %859 = vmatpush1.bf16.msra.mxu0 0
        %860 = vmatprep.subr.bf16.mxu0 0
        %861 = vmatpush1.bf16.msra.mxu0 0
        %862 = vmatprep.subr.bf16.mxu0 0
        %863 = vmatpush1.bf16.msra.mxu0 0
        %864 = vmatprep.subr.bf16.mxu0 0
        %865 = vmatpush1.bf16.msra.mxu0 0
        %866 = vmatprep.mubr.bf16.mxu0 0
        %867 = vmatmul.mubr.bf16.gmra.mrb[0].mxu0 %v411
        %v868 = vpop.f32.mrb[0].mxu0
        %v869 = vadd.f32 %v472, %v868
        %v870 = vpop.f32.mrb[0].mxu0
        %v871 = vadd.f32 %v476, %v870
        %v872 = vpop.f32.mrb[0].mxu0
        %v873 = vadd.f32 %v472, %v872
        %v874 = vpop.f32.mrb[0].mxu0
        %v875 = vadd.f32 %v476, %v874
        %876 = vmatprep.mubr.bf16.mxu0 0
        %877 = vmatmul.mubr.bf16.gmra.mrb[0].mxu0 %v412
        %v878 = vpop.f32.mrb[0].mxu0
        %v879 = vadd.f32 %v472, %v878
        %v880 = vpop.f32.mrb[0].mxu0
        %v881 = vadd.f32 %v476, %v880
        %v882 = vpop.f32.mrb[0].mxu0
        %v883 = vadd.f32 %v472, %v882
        %v884 = vpop.f32.mrb[0].mxu0
        %v885 = vadd.f32 %v476, %v884
        %886 = vmatprep.mubr.bf16.mxu0 0
        %887 = vmatmul.mubr.bf16.gmra.mrb[0].mxu0 %v413
        %v888 = vpop.f32.mrb[0].mxu0
        %v889 = vadd.f32 %v472, %v888
        %v890 = vpop.f32.mrb[0].mxu0
        %v891 = vadd.f32 %v476, %v890
        %v892 = vpop.f32.mrb[0].mxu0
        %v893 = vadd.f32 %v472, %v892
        %v894 = vpop.f32.mrb[0].mxu0
        %v895 = vadd.f32 %v476, %v894
        %896 = vmatprep.mubr.bf16.mxu0 0
        %897 = vmatmul.mubr.bf16.gmra.mrb[0].mxu0 %v414
        %v898 = vpop.f32.mrb[0].mxu0
        %v899 = vadd.f32 %v472, %v898
        %v900 = vpop.f32.mrb[0].mxu0
        %v901 = vadd.f32 %v476, %v900
        %v902 = vpop.f32.mrb[0].mxu0
        %v903 = vadd.f32 %v472, %v902
        %v904 = vpop.f32.mrb[0].mxu0
        %v905 = vadd.f32 %v476, %v904
        %906 = vmatprep.mubr.bf16.mxu0 0
        %907 = vmatmul.mubr.bf16.gmra.mrb[0].mxu0 %v415
        %v908 = vpop.f32.mrb[0].mxu0
        %v909 = vadd.f32 %v472, %v908
        %v910 = vpop.f32.mrb[0].mxu0
        %v911 = vadd.f32 %v476, %v910
        %v912 = vpop.f32.mrb[0].mxu0
        %v913 = vadd.f32 %v472, %v912
        %v914 = vpop.f32.mrb[0].mxu0
        %v915 = vadd.f32 %v476, %v914
        %916 = vmatprep.mubr.bf16.mxu0 0
        %917 = vmatmul.mubr.bf16.gmra.mrb[0].mxu0 %v416
        %v918 = vpop.f32.mrb[0].mxu0
        %v919 = vadd.f32 %v472, %v918
        %v920 = vpop.f32.mrb[0].mxu0
        %v921 = vadd.f32 %v476, %v920
        %v922 = vpop.f32.mrb[0].mxu0
        %v923 = vadd.f32 %v472, %v922
        %v924 = vpop.f32.mrb[0].mxu0
        %v925 = vadd.f32 %v476, %v924
        %926 = vmatprep.mubr.bf16.mxu0 0
        %927 = vmatmul.mubr.bf16.gmra.mrb[0].mxu0 %v417
        %v928 = vpop.f32.mrb[0].mxu0
        %v929 = vadd.f32 %v472, %v928
        %v930 = vpop.f32.mrb[0].mxu0
        %v931 = vadd.f32 %v476, %v930
        %v932 = vpop.f32.mrb[0].mxu0
        %v933 = vadd.f32 %v472, %v932
        %v934 = vpop.f32.mrb[0].mxu0
        %v935 = vadd.f32 %v476, %v934
        %936 = vmatprep.mubr.bf16.mxu0 0
        %937 = vmatmul.mubr.bf16.gmra.mrb[0].mxu0 %v418
        %v938 = vpop.f32.mrb[0].mxu0
        %v939 = vadd.f32 %v472, %v938
        %v940 = vpop.f32.mrb[0].mxu0
        %v941 = vadd.f32 %v476, %v940
        %v942 = vpop.f32.mrb[0].mxu0
        %v943 = vadd.f32 %v472, %v942
        %v944 = vpop.f32.mrb[0].mxu0
        %v945 = vadd.f32 %v476, %v944
        %946 = vmatprep.mubr.bf16.mxu0 0
        %947 = vmatmul.mubr.bf16.gmra.mrb[0].mxu0 %v419
        %v948 = vpop.f32.mrb[0].mxu0
        %v949 = vadd.f32 %v472, %v948
        %v950 = vpop.f32.mrb[0].mxu0
        %v951 = vadd.f32 %v476, %v950
        %v952 = vpop.f32.mrb[0].mxu0
        %v953 = vadd.f32 %v472, %v952
        %v954 = vpop.f32.mrb[0].mxu0
        %v955 = vadd.f32 %v476, %v954
        %956 = vmatprep.mubr.bf16.mxu0 0
        %957 = vmatmul.mubr.bf16.gmra.mrb[0].mxu0 %v420
        %v958 = vpop.f32.mrb[0].mxu0
        %v959 = vadd.f32 %v472, %v958
        %v960 = vpop.f32.mrb[0].mxu0
        %v961 = vadd.f32 %v476, %v960
        %v962 = vpop.f32.mrb[0].mxu0
        %v963 = vadd.f32 %v472, %v962
        %v964 = vpop.f32.mrb[0].mxu0
        %v965 = vadd.f32 %v476, %v964
        %966 = vmatprep.mubr.bf16.mxu0 0
        %967 = vmatmul.mubr.bf16.gmra.mrb[0].mxu0 %v421
        %v968 = vpop.f32.mrb[0].mxu0
        %v969 = vadd.f32 %v472, %v968
        %v970 = vpop.f32.mrb[0].mxu0
        %v971 = vadd.f32 %v476, %v970
        %v972 = vpop.f32.mrb[0].mxu0
        %v973 = vadd.f32 %v472, %v972
        %v974 = vpop.f32.mrb[0].mxu0
        %v975 = vadd.f32 %v476, %v974
        %976 = vmatprep.mubr.bf16.mxu0 0
        %977 = vmatmul.mubr.bf16.gmra.mrb[0].mxu0 %v422
        %v978 = vpop.f32.mrb[0].mxu0
        %v979 = vadd.f32 %v472, %v978
        %v980 = vpop.f32.mrb[0].mxu0
        %v981 = vadd.f32 %v476, %v980
        %v982 = vpop.f32.mrb[0].mxu0
        %v983 = vadd.f32 %v472, %v982
        %v984 = vpop.f32.mrb[0].mxu0
        %v985 = vadd.f32 %v476, %v984
        %986 = vmatprep.mubr.bf16.mxu0 0
        %987 = vmatmul.mubr.bf16.gmra.mrb[0].mxu0 %v423
        %v988 = vpop.f32.mrb[0].mxu0
        %v989 = vadd.f32 %v472, %v988
        %v990 = vpop.f32.mrb[0].mxu0
        %v991 = vadd.f32 %v476, %v990
        %v992 = vpop.f32.mrb[0].mxu0
        %v993 = vadd.f32 %v472, %v992
        %v994 = vpop.f32.mrb[0].mxu0
        %v995 = vadd.f32 %v476, %v994
        %996 = vmatprep.mubr.bf16.mxu0 0
        %997 = vmatmul.mubr.bf16.gmra.mrb[0].mxu0 %v424
        %v998 = vpop.f32.mrb[0].mxu0
        %v999 = vadd.f32 %v472, %v998
        %v1000 = vpop.f32.mrb[0].mxu0
        %v1001 = vadd.f32 %v476, %v1000
        %v1002 = vpop.f32.mrb[0].mxu0
        %v1003 = vadd.f32 %v472, %v1002
        %v1004 = vpop.f32.mrb[0].mxu0
        %v1005 = vadd.f32 %v476, %v1004
        %1006 = vmatprep.mubr.bf16.mxu0 0
        %1007 = vmatmul.mubr.bf16.gmra.mrb[0].mxu0 %v425
        %v1008 = vpop.f32.mrb[0].mxu0
        %v1009 = vadd.f32 %v472, %v1008
        %v1010 = vpop.f32.mrb[0].mxu0
        %v1011 = vadd.f32 %v476, %v1010
        %v1012 = vpop.f32.mrb[0].mxu0
        %v1013 = vadd.f32 %v472, %v1012
        %v1014 = vpop.f32.mrb[0].mxu0
        %v1015 = vadd.f32 %v476, %v1014
        %1016 = vmatprep.mubr.bf16.mxu0 0
        %1017 = vmatmul.mubr.bf16.gmra.mrb[0].mxu0 %v426
        %v1018 = vpop.f32.mrb[0].mxu0
        %v1019 = vadd.f32 %v472, %v1018
        %v1020 = vpop.f32.mrb[0].mxu0
        %v1021 = vadd.f32 %v476, %v1020
        %v1022 = vpop.f32.mrb[0].mxu0
        %v1023 = vadd.f32 %v472, %v1022
        %v1024 = vpop.f32.mrb[0].mxu0
        %v1025 = vadd.f32 %v476, %v1024
        %1026 = vdwg.mxu0
        %v1027 = vmul.f32 %v676, 0.5
        %v1028 = vmul.f32 %v678, 0.5
        %v1029 = vmul.f32 %v869, 0.5
        %v1030 = vmul.f32 %v871, 0.5
        %v1031 = vmul.f32 %v680, 0.5
        %v1032 = vmul.f32 %v682, 0.5
        %v1033 = vmul.f32 %v873, 0.5
        %v1034 = vmul.f32 %v875, 0.5
        %v1035 = vmul.f32 %v686, 0.5
        %v1036 = vmul.f32 %v688, 0.5
        %v1037 = vmul.f32 %v879, 0.5
        %v1038 = vmul.f32 %v881, 0.5
        %v1039 = vmul.f32 %v690, 0.5
        %v1040 = vmul.f32 %v692, 0.5
        %v1041 = vmul.f32 %v883, 0.5
        %v1042 = vmul.f32 %v885, 0.5
        %v1043 = vmul.f32 %v696, 0.5
        %v1044 = vmul.f32 %v698, 0.5
        %v1045 = vmul.f32 %v889, 0.5
        %v1046 = vmul.f32 %v891, 0.5
        %v1047 = vmul.f32 %v700, 0.5
        %v1048 = vmul.f32 %v702, 0.5
        %v1049 = vmul.f32 %v893, 0.5
        %v1050 = vmul.f32 %v895, 0.5
        %v1051 = vmul.f32 %v706, 0.5
        %v1052 = vmul.f32 %v708, 0.5
        %v1053 = vmul.f32 %v899, 0.5
        %v1054 = vmul.f32 %v901, 0.5
        %v1055 = vmul.f32 %v710, 0.5
        %v1056 = vmul.f32 %v712, 0.5
        %v1057 = vmul.f32 %v903, 0.5
        %v1058 = vmul.f32 %v905, 0.5
        %v1059 = vmul.f32 %v716, 0.5
        %v1060 = vmul.f32 %v718, 0.5
        %v1061 = vmul.f32 %v909, 0.5
        %v1062 = vmul.f32 %v911, 0.5
        %v1063 = vmul.f32 %v720, 0.5
        %v1064 = vmul.f32 %v722, 0.5
        %v1065 = vmul.f32 %v913, 0.5
        %v1066 = vmul.f32 %v915, 0.5
        %v1067 = vmul.f32 %v726, 0.5
        %v1068 = vmul.f32 %v728, 0.5
        %v1069 = vmul.f32 %v919, 0.5
        %v1070 = vmul.f32 %v921, 0.5
        %v1071 = vmul.f32 %v730, 0.5
        %v1072 = vmul.f32 %v732, 0.5
        %v1073 = vmul.f32 %v923, 0.5
        %v1074 = vmul.f32 %v925, 0.5
        %v1075 = vmul.f32 %v736, 0.5
        %v1076 = vmul.f32 %v738, 0.5
        %v1077 = vmul.f32 %v929, 0.5
        %v1078 = vmul.f32 %v931, 0.5
        %v1079 = vmul.f32 %v740, 0.5
        %v1080 = vmul.f32 %v742, 0.5
        %v1081 = vmul.f32 %v933, 0.5
        %v1082 = vmul.f32 %v935, 0.5
        %v1083 = vmul.f32 %v746, 0.5
        %v1084 = vmul.f32 %v748, 0.5
        %v1085 = vmul.f32 %v939, 0.5
        %v1086 = vmul.f32 %v941, 0.5
        %v1087 = vmul.f32 %v750, 0.5
        %v1088 = vmul.f32 %v752, 0.5
        %v1089 = vmul.f32 %v943, 0.5
        %v1090 = vmul.f32 %v945, 0.5
        %v1091 = vmul.f32 %v756, 0.5
        %v1092 = vmul.f32 %v758, 0.5
        %v1093 = vmul.f32 %v949, 0.5
        %v1094 = vmul.f32 %v951, 0.5
        %v1095 = vmul.f32 %v760, 0.5
        %v1096 = vmul.f32 %v762, 0.5
        %v1097 = vmul.f32 %v953, 0.5
        %v1098 = vmul.f32 %v955, 0.5
        %v1099 = vmul.f32 %v766, 0.5
        %v1100 = vmul.f32 %v768, 0.5
        %v1101 = vmul.f32 %v959, 0.5
        %v1102 = vmul.f32 %v961, 0.5
        %v1103 = vmul.f32 %v770, 0.5
        %v1104 = vmul.f32 %v772, 0.5
        %v1105 = vmul.f32 %v963, 0.5
        %v1106 = vmul.f32 %v965, 0.5
        %v1107 = vmul.f32 %v776, 0.5
        %v1108 = vmul.f32 %v778, 0.5
        %v1109 = vmul.f32 %v969, 0.5
        %v1110 = vmul.f32 %v971, 0.5
        %v1111 = vmul.f32 %v780, 0.5
        %v1112 = vmul.f32 %v782, 0.5
        %v1113 = vmul.f32 %v973, 0.5
        %v1114 = vmul.f32 %v975, 0.5
        %v1115 = vmul.f32 %v786, 0.5
        %v1116 = vmul.f32 %v788, 0.5
        %v1117 = vmul.f32 %v979, 0.5
        %v1118 = vmul.f32 %v981, 0.5
        %v1119 = vmul.f32 %v790, 0.5
        %v1120 = vmul.f32 %v792, 0.5
        %v1121 = vmul.f32 %v983, 0.5
        %v1122 = vmul.f32 %v985, 0.5
        %v1123 = vmul.f32 %v796, 0.5
        %v1124 = vmul.f32 %v798, 0.5
        %v1125 = vmul.f32 %v989, 0.5
        %v1126 = vmul.f32 %v991, 0.5
        %v1127 = vmul.f32 %v800, 0.5
        %v1128 = vmul.f32 %v802, 0.5
        %v1129 = vmul.f32 %v993, 0.5
        %v1130 = vmul.f32 %v995, 0.5
        %v1131 = vmul.f32 %v806, 0.5
        %v1132 = vmul.f32 %v808, 0.5
        %v1133 = vmul.f32 %v999, 0.5
        %v1134 = vmul.f32 %v1001, 0.5
        %v1135 = vmul.f32 %v810, 0.5
        %v1136 = vmul.f32 %v812, 0.5
        %v1137 = vmul.f32 %v1003, 0.5
        %v1138 = vmul.f32 %v1005, 0.5
        %v1139 = vmul.f32 %v816, 0.5
        %v1140 = vmul.f32 %v818, 0.5
        %v1141 = vmul.f32 %v1009, 0.5
        %v1142 = vmul.f32 %v1011, 0.5
        %v1143 = vmul.f32 %v820, 0.5
        %v1144 = vmul.f32 %v822, 0.5
        %v1145 = vmul.f32 %v1013, 0.5
        %v1146 = vmul.f32 %v1015, 0.5
        %v1147 = vmul.f32 %v826, 0.5
        %v1148 = vmul.f32 %v828, 0.5
        %v1149 = vmul.f32 %v1019, 0.5
        %v1150 = vmul.f32 %v1021, 0.5
        %v1151 = vmul.f32 %v830, 0.5
        %v1152 = vmul.f32 %v832, 0.5
        %v1153 = vmul.f32 %v1023, 0.5
        %v1154 = vmul.f32 %v1025, 0.5
        %v1155 = vmul.f32 %v676, 0.70710677
        %v1156 = vmul.f32 %v678, 0.70710677
        %v1157 = vmul.f32 %v869, 0.70710677
        %v1158 = vmul.f32 %v871, 0.70710677
        %v1159 = vmul.f32 %v680, 0.70710677
        %v1160 = vmul.f32 %v682, 0.70710677
        %v1161 = vmul.f32 %v873, 0.70710677
        %v1162 = vmul.f32 %v875, 0.70710677
        %v1163 = vmul.f32 %v686, 0.70710677
        %v1164 = vmul.f32 %v688, 0.70710677
        %v1165 = vmul.f32 %v879, 0.70710677
        %v1166 = vmul.f32 %v881, 0.70710677
        %v1167 = vmul.f32 %v690, 0.70710677
        %v1168 = vmul.f32 %v692, 0.70710677
        %v1169 = vmul.f32 %v883, 0.70710677
        %v1170 = vmul.f32 %v885, 0.70710677
        %v1171 = vmul.f32 %v696, 0.70710677
        %v1172 = vmul.f32 %v698, 0.70710677
        %v1173 = vmul.f32 %v889, 0.70710677
        %v1174 = vmul.f32 %v891, 0.70710677
        %v1175 = vmul.f32 %v700, 0.70710677
        %v1176 = vmul.f32 %v702, 0.70710677
        %v1177 = vmul.f32 %v893, 0.70710677
        %v1178 = vmul.f32 %v895, 0.70710677
        %v1179 = vmul.f32 %v706, 0.70710677
        %v1180 = vmul.f32 %v708, 0.70710677
        %v1181 = vmul.f32 %v899, 0.70710677
        %v1182 = vmul.f32 %v901, 0.70710677
        %v1183 = vmul.f32 %v710, 0.70710677
        %v1184 = vmul.f32 %v712, 0.70710677
        %v1185 = vmul.f32 %v903, 0.70710677
        %v1186 = vmul.f32 %v905, 0.70710677
        %v1187 = vmul.f32 %v716, 0.70710677
        %v1188 = vmul.f32 %v718, 0.70710677
        %v1189 = vmul.f32 %v909, 0.70710677
        %v1190 = vmul.f32 %v911, 0.70710677
        %v1191 = vmul.f32 %v720, 0.70710677
        %v1192 = vmul.f32 %v722, 0.70710677
        %v1193 = vmul.f32 %v913, 0.70710677
        %v1194 = vmul.f32 %v915, 0.70710677
        %v1195 = vmul.f32 %v726, 0.70710677
        %v1196 = vmul.f32 %v728, 0.70710677
        %v1197 = vmul.f32 %v919, 0.70710677
        %v1198 = vmul.f32 %v921, 0.70710677
        %v1199 = vmul.f32 %v730, 0.70710677
        %v1200 = vmul.f32 %v732, 0.70710677
        %v1201 = vmul.f32 %v923, 0.70710677
        %v1202 = vmul.f32 %v925, 0.70710677
        %v1203 = vmul.f32 %v736, 0.70710677
        %v1204 = vmul.f32 %v738, 0.70710677
        %v1205 = vmul.f32 %v929, 0.70710677
        %v1206 = vmul.f32 %v931, 0.70710677
        %v1207 = vmul.f32 %v740, 0.70710677
        %v1208 = vmul.f32 %v742, 0.70710677
        %v1209 = vmul.f32 %v933, 0.70710677
        %v1210 = vmul.f32 %v935, 0.70710677
        %v1211 = vmul.f32 %v746, 0.70710677
        %v1212 = vmul.f32 %v748, 0.70710677
        %v1213 = vmul.f32 %v939, 0.70710677
        %v1214 = vmul.f32 %v941, 0.70710677
        %v1215 = vmul.f32 %v750, 0.70710677
        %v1216 = vmul.f32 %v752, 0.70710677
        %v1217 = vmul.f32 %v943, 0.70710677
        %v1218 = vmul.f32 %v945, 0.70710677
        %v1219 = vmul.f32 %v756, 0.70710677
        %v1220 = vmul.f32 %v758, 0.70710677
        %v1221 = vmul.f32 %v949, 0.70710677
        %v1222 = vmul.f32 %v951, 0.70710677
        %v1223 = vmul.f32 %v760, 0.70710677
        %v1224 = vmul.f32 %v762, 0.70710677
        %v1225 = vmul.f32 %v953, 0.70710677
        %v1226 = vmul.f32 %v955, 0.70710677
        %v1227 = vmul.f32 %v766, 0.70710677
        %v1228 = vmul.f32 %v768, 0.70710677
        %v1229 = vmul.f32 %v959, 0.70710677
        %v1230 = vmul.f32 %v961, 0.70710677
        %v1231 = vmul.f32 %v770, 0.70710677
        %v1232 = vmul.f32 %v772, 0.70710677
        %v1233 = vmul.f32 %v963, 0.70710677
        %v1234 = vmul.f32 %v965, 0.70710677
        %v1235 = vmul.f32 %v776, 0.70710677
        %v1236 = vmul.f32 %v778, 0.70710677
        %v1237 = vmul.f32 %v969, 0.70710677
        %v1238 = vmul.f32 %v971, 0.70710677
        %v1239 = vmul.f32 %v780, 0.70710677
        %v1240 = vmul.f32 %v782, 0.70710677
        %v1241 = vmul.f32 %v973, 0.70710677
        %v1242 = vmul.f32 %v975, 0.70710677
        %v1243 = vmul.f32 %v786, 0.70710677
        %v1244 = vmul.f32 %v788, 0.70710677
        %v1245 = vmul.f32 %v979, 0.70710677
        %v1246 = vmul.f32 %v981, 0.70710677
        %v1247 = vmul.f32 %v790, 0.70710677
        %v1248 = vmul.f32 %v792, 0.70710677
        %v1249 = vmul.f32 %v983, 0.70710677
        %v1250 = vmul.f32 %v985, 0.70710677
        %v1251 = vmul.f32 %v796, 0.70710677
        %v1252 = vmul.f32 %v798, 0.70710677
        %v1253 = vmul.f32 %v989, 0.70710677
        %v1254 = vmul.f32 %v991, 0.70710677
        %v1255 = vmul.f32 %v800, 0.70710677
        %v1256 = vmul.f32 %v802, 0.70710677
        %v1257 = vmul.f32 %v993, 0.70710677
        %v1258 = vmul.f32 %v995, 0.70710677
        %v1259 = vmul.f32 %v806, 0.70710677
        %v1260 = vmul.f32 %v808, 0.70710677
        %v1261 = vmul.f32 %v999, 0.70710677
        %v1262 = vmul.f32 %v1001, 0.70710677
        %v1263 = vmul.f32 %v810, 0.70710677
        %v1264 = vmul.f32 %v812, 0.70710677
        %v1265 = vmul.f32 %v1003, 0.70710677
        %v1266 = vmul.f32 %v1005, 0.70710677
        %v1267 = vmul.f32 %v816, 0.70710677
        %v1268 = vmul.f32 %v818, 0.70710677
        %v1269 = vmul.f32 %v1009, 0.70710677
        %v1270 = vmul.f32 %v1011, 0.70710677
        %v1271 = vmul.f32 %v820, 0.70710677
        %v1272 = vmul.f32 %v822, 0.70710677
        %v1273 = vmul.f32 %v1013, 0.70710677
        %v1274 = vmul.f32 %v1015, 0.70710677
        %v1275 = vmul.f32 %v826, 0.70710677
        %v1276 = vmul.f32 %v828, 0.70710677
        %v1277 = vmul.f32 %v1019, 0.70710677
        %v1278 = vmul.f32 %v1021, 0.70710677
        %v1279 = vmul.f32 %v830, 0.70710677
        %v1280 = vmul.f32 %v832, 0.70710677
        %v1281 = vmul.f32 %v1023, 0.70710677
        %v1282 = vmul.f32 %v1025, 0.70710677
        %v1283 = verf.f32.pop %v1155
        %v1284 = verf.f32.pop %v1156
        %v1285 = verf.f32.pop %v1157
        %v1286 = verf.f32.pop %v1158
        %v1287 = verf.f32.pop %v1159
        %v1288 = verf.f32.pop %v1160
        %v1289 = verf.f32.pop %v1161
        %v1290 = verf.f32.pop %v1162
        %v1291 = verf.f32.pop %v1163
        %v1292 = verf.f32.pop %v1164
        %v1293 = verf.f32.pop %v1165
        %v1294 = verf.f32.pop %v1166
        %v1295 = verf.f32.pop %v1167
        %v1296 = verf.f32.pop %v1168
        %v1297 = verf.f32.pop %v1169
        %v1298 = verf.f32.pop %v1170
        %v1299 = verf.f32.pop %v1171
        %v1300 = verf.f32.pop %v1172
        %v1301 = verf.f32.pop %v1173
        %v1302 = verf.f32.pop %v1174
        %v1303 = verf.f32.pop %v1175
        %v1304 = verf.f32.pop %v1176
        %v1305 = verf.f32.pop %v1177
        %v1306 = verf.f32.pop %v1178
        %v1307 = verf.f32.pop %v1179
        %v1308 = verf.f32.pop %v1180
        %v1309 = verf.f32.pop %v1181
        %v1310 = verf.f32.pop %v1182
        %v1311 = verf.f32.pop %v1183
        %v1312 = verf.f32.pop %v1184
        %v1313 = verf.f32.pop %v1185
        %v1314 = verf.f32.pop %v1186
        %v1315 = verf.f32.pop %v1187
        %v1316 = verf.f32.pop %v1188
        %v1317 = verf.f32.pop %v1189
        %v1318 = verf.f32.pop %v1190
        %v1319 = verf.f32.pop %v1191
        %v1320 = verf.f32.pop %v1192
        %v1321 = verf.f32.pop %v1193
        %v1322 = verf.f32.pop %v1194
        %v1323 = verf.f32.pop %v1195
        %v1324 = verf.f32.pop %v1196
        %v1325 = verf.f32.pop %v1197
        %v1326 = verf.f32.pop %v1198
        %v1327 = verf.f32.pop %v1199
        %v1328 = verf.f32.pop %v1200
        %v1329 = verf.f32.pop %v1201
        %v1330 = verf.f32.pop %v1202
        %v1331 = verf.f32.pop %v1203
        %v1332 = verf.f32.pop %v1204
        %v1333 = verf.f32.pop %v1205
        %v1334 = verf.f32.pop %v1206
        %v1335 = verf.f32.pop %v1207
        %v1336 = verf.f32.pop %v1208
        %v1337 = verf.f32.pop %v1209
        %v1338 = verf.f32.pop %v1210
        %v1339 = verf.f32.pop %v1211
        %v1340 = verf.f32.pop %v1212
        %v1341 = verf.f32.pop %v1213
        %v1342 = verf.f32.pop %v1214
        %v1343 = verf.f32.pop %v1215
        %v1344 = verf.f32.pop %v1216
        %v1345 = verf.f32.pop %v1217
        %v1346 = verf.f32.pop %v1218
        %v1347 = verf.f32.pop %v1219
        %v1348 = verf.f32.pop %v1220
        %v1349 = verf.f32.pop %v1221
        %v1350 = verf.f32.pop %v1222
        %v1351 = verf.f32.pop %v1223
        %v1352 = verf.f32.pop %v1224
        %v1353 = verf.f32.pop %v1225
        %v1354 = verf.f32.pop %v1226
        %v1355 = verf.f32.pop %v1227
        %v1356 = verf.f32.pop %v1228
        %v1357 = verf.f32.pop %v1229
        %v1358 = verf.f32.pop %v1230
        %v1359 = verf.f32.pop %v1231
        %v1360 = verf.f32.pop %v1232
        %v1361 = verf.f32.pop %v1233
        %v1362 = verf.f32.pop %v1234
        %v1363 = verf.f32.pop %v1235
        %v1364 = verf.f32.pop %v1236
        %v1365 = verf.f32.pop %v1237
        %v1366 = verf.f32.pop %v1238
        %v1367 = verf.f32.pop %v1239
        %v1368 = verf.f32.pop %v1240
        %v1369 = verf.f32.pop %v1241
        %v1370 = verf.f32.pop %v1242
        %v1371 = verf.f32.pop %v1243
        %v1372 = verf.f32.pop %v1244
        %v1373 = verf.f32.pop %v1245
        %v1374 = verf.f32.pop %v1246
        %v1375 = verf.f32.pop %v1247
        %v1376 = verf.f32.pop %v1248
        %v1377 = verf.f32.pop %v1249
        %v1378 = verf.f32.pop %v1250
        %v1379 = verf.f32.pop %v1251
        %v1380 = verf.f32.pop %v1252
        %v1381 = verf.f32.pop %v1253
        %v1382 = verf.f32.pop %v1254
        %v1383 = verf.f32.pop %v1255
        %v1384 = verf.f32.pop %v1256
        %v1385 = verf.f32.pop %v1257
        %v1386 = verf.f32.pop %v1258
        %v1387 = verf.f32.pop %v1259
        %v1388 = verf.f32.pop %v1260
        %v1389 = verf.f32.pop %v1261
        %v1390 = verf.f32.pop %v1262
        %v1391 = verf.f32.pop %v1263
        %v1392 = verf.f32.pop %v1264
        %v1393 = verf.f32.pop %v1265
        %v1394 = verf.f32.pop %v1266
        %v1395 = verf.f32.pop %v1267
        %v1396 = verf.f32.pop %v1268
        %v1397 = verf.f32.pop %v1269
        %v1398 = verf.f32.pop %v1270
        %v1399 = verf.f32.pop %v1271
        %v1400 = verf.f32.pop %v1272
        %v1401 = verf.f32.pop %v1273
        %v1402 = verf.f32.pop %v1274
        %v1403 = verf.f32.pop %v1275
        %v1404 = verf.f32.pop %v1276
        %v1405 = verf.f32.pop %v1277
        %v1406 = verf.f32.pop %v1278
        %v1407 = verf.f32.pop %v1279
        %v1408 = verf.f32.pop %v1280
        %v1409 = verf.f32.pop %v1281
        %v1410 = verf.f32.pop %v1282
        %v1411 = vadd.f32 %v1283, 1.0
        %v1412 = vadd.f32 %v1284, 1.0
        %v1413 = vadd.f32 %v1285, 1.0
        %v1414 = vadd.f32 %v1286, 1.0
        %v1415 = vadd.f32 %v1287, 1.0
        %v1416 = vadd.f32 %v1288, 1.0
        %v1417 = vadd.f32 %v1289, 1.0
        %v1418 = vadd.f32 %v1290, 1.0
        %v1419 = vadd.f32 %v1291, 1.0
        %v1420 = vadd.f32 %v1292, 1.0
        %v1421 = vadd.f32 %v1293, 1.0
        %v1422 = vadd.f32 %v1294, 1.0
        %v1423 = vadd.f32 %v1295, 1.0
        %v1424 = vadd.f32 %v1296, 1.0
        %v1425 = vadd.f32 %v1297, 1.0
        %v1426 = vadd.f32 %v1298, 1.0
        %v1427 = vadd.f32 %v1299, 1.0
        %v1428 = vadd.f32 %v1300, 1.0
        %v1429 = vadd.f32 %v1301, 1.0
        %v1430 = vadd.f32 %v1302, 1.0
        %v1431 = vadd.f32 %v1303, 1.0
        %v1432 = vadd.f32 %v1304, 1.0
        %v1433 = vadd.f32 %v1305, 1.0
        %v1434 = vadd.f32 %v1306, 1.0
        %v1435 = vadd.f32 %v1307, 1.0
        %v1436 = vadd.f32 %v1308, 1.0
        %v1437 = vadd.f32 %v1309, 1.0
        %v1438 = vadd.f32 %v1310, 1.0
        %v1439 = vadd.f32 %v1311, 1.0
        %v1440 = vadd.f32 %v1312, 1.0
        %v1441 = vadd.f32 %v1313, 1.0
        %v1442 = vadd.f32 %v1314, 1.0
        %v1443 = vadd.f32 %v1315, 1.0
        %v1444 = vadd.f32 %v1316, 1.0
        %v1445 = vadd.f32 %v1317, 1.0
        %v1446 = vadd.f32 %v1318, 1.0
        %v1447 = vadd.f32 %v1319, 1.0
        %v1448 = vadd.f32 %v1320, 1.0
        %v1449 = vadd.f32 %v1321, 1.0
        %v1450 = vadd.f32 %v1322, 1.0
        %v1451 = vadd.f32 %v1323, 1.0
        %v1452 = vadd.f32 %v1324, 1.0
        %v1453 = vadd.f32 %v1325, 1.0
        %v1454 = vadd.f32 %v1326, 1.0
        %v1455 = vadd.f32 %v1327, 1.0
        %v1456 = vadd.f32 %v1328, 1.0
        %v1457 = vadd.f32 %v1329, 1.0
        %v1458 = vadd.f32 %v1330, 1.0
        %v1459 = vadd.f32 %v1331, 1.0
        %v1460 = vadd.f32 %v1332, 1.0
        %v1461 = vadd.f32 %v1333, 1.0
        %v1462 = vadd.f32 %v1334, 1.0
        %v1463 = vadd.f32 %v1335, 1.0
        %v1464 = vadd.f32 %v1336, 1.0
        %v1465 = vadd.f32 %v1337, 1.0
        %v1466 = vadd.f32 %v1338, 1.0
        %v1467 = vadd.f32 %v1339, 1.0
        %v1468 = vadd.f32 %v1340, 1.0
        %v1469 = vadd.f32 %v1341, 1.0
        %v1470 = vadd.f32 %v1342, 1.0
        %v1471 = vadd.f32 %v1343, 1.0
        %v1472 = vadd.f32 %v1344, 1.0
        %v1473 = vadd.f32 %v1345, 1.0
        %v1474 = vadd.f32 %v1346, 1.0
        %v1475 = vadd.f32 %v1347, 1.0
        %v1476 = vadd.f32 %v1348, 1.0
        %v1477 = vadd.f32 %v1349, 1.0
        %v1478 = vadd.f32 %v1350, 1.0
        %v1479 = vadd.f32 %v1351, 1.0
        %v1480 = vadd.f32 %v1352, 1.0
        %v1481 = vadd.f32 %v1353, 1.0
        %v1482 = vadd.f32 %v1354, 1.0
        %v1483 = vadd.f32 %v1355, 1.0
        %v1484 = vadd.f32 %v1356, 1.0
        %v1485 = vadd.f32 %v1357, 1.0
        %v1486 = vadd.f32 %v1358, 1.0
        %v1487 = vadd.f32 %v1359, 1.0
        %v1488 = vadd.f32 %v1360, 1.0
        %v1489 = vadd.f32 %v1361, 1.0
        %v1490 = vadd.f32 %v1362, 1.0
        %v1491 = vadd.f32 %v1363, 1.0
        %v1492 = vadd.f32 %v1364, 1.0
        %v1493 = vadd.f32 %v1365, 1.0
        %v1494 = vadd.f32 %v1366, 1.0
        %v1495 = vadd.f32 %v1367, 1.0
        %v1496 = vadd.f32 %v1368, 1.0
        %v1497 = vadd.f32 %v1369, 1.0
        %v1498 = vadd.f32 %v1370, 1.0
        %v1499 = vadd.f32 %v1371, 1.0
        %v1500 = vadd.f32 %v1372, 1.0
        %v1501 = vadd.f32 %v1373, 1.0
        %v1502 = vadd.f32 %v1374, 1.0
        %v1503 = vadd.f32 %v1375, 1.0
        %v1504 = vadd.f32 %v1376, 1.0
        %v1505 = vadd.f32 %v1377, 1.0
        %v1506 = vadd.f32 %v1378, 1.0
        %v1507 = vadd.f32 %v1379, 1.0
        %v1508 = vadd.f32 %v1380, 1.0
        %v1509 = vadd.f32 %v1381, 1.0
        %v1510 = vadd.f32 %v1382, 1.0
        %v1511 = vadd.f32 %v1383, 1.0
        %v1512 = vadd.f32 %v1384, 1.0
        %v1513 = vadd.f32 %v1385, 1.0
        %v1514 = vadd.f32 %v1386, 1.0
        %v1515 = vadd.f32 %v1387, 1.0
        %v1516 = vadd.f32 %v1388, 1.0
        %v1517 = vadd.f32 %v1389, 1.0
        %v1518 = vadd.f32 %v1390, 1.0
        %v1519 = vadd.f32 %v1391, 1.0
        %v1520 = vadd.f32 %v1392, 1.0
        %v1521 = vadd.f32 %v1393, 1.0
        %v1522 = vadd.f32 %v1394, 1.0
        %v1523 = vadd.f32 %v1395, 1.0
        %v1524 = vadd.f32 %v1396, 1.0
        %v1525 = vadd.f32 %v1397, 1.0
        %v1526 = vadd.f32 %v1398, 1.0
        %v1527 = vadd.f32 %v1399, 1.0
        %v1528 = vadd.f32 %v1400, 1.0
        %v1529 = vadd.f32 %v1401, 1.0
        %v1530 = vadd.f32 %v1402, 1.0
        %v1531 = vadd.f32 %v1403, 1.0
        %v1532 = vadd.f32 %v1404, 1.0
        %v1533 = vadd.f32 %v1405, 1.0
        %v1534 = vadd.f32 %v1406, 1.0
        %v1535 = vadd.f32 %v1407, 1.0
        %v1536 = vadd.f32 %v1408, 1.0
        %v1537 = vadd.f32 %v1409, 1.0
        %v1538 = vadd.f32 %v1410, 1.0
        %v1539 = vmul.f32 %v1027, %v1411
        %v1540 = vmul.f32 %v1028, %v1412
        %v1541 = vmul.f32 %v1029, %v1413
        %v1542 = vmul.f32 %v1030, %v1414
        %v1543 = vmul.f32 %v1031, %v1415
        %v1544 = vmul.f32 %v1032, %v1416
        %v1545 = vmul.f32 %v1033, %v1417
        %v1546 = vmul.f32 %v1034, %v1418
        %v1547 = vmul.f32 %v1035, %v1419
        %v1548 = vmul.f32 %v1036, %v1420
        %v1549 = vmul.f32 %v1037, %v1421
        %v1550 = vmul.f32 %v1038, %v1422
        %v1551 = vmul.f32 %v1039, %v1423
        %v1552 = vmul.f32 %v1040, %v1424
        %v1553 = vmul.f32 %v1041, %v1425
        %v1554 = vmul.f32 %v1042, %v1426
        %v1555 = vmul.f32 %v1043, %v1427
        %v1556 = vmul.f32 %v1044, %v1428
        %v1557 = vmul.f32 %v1045, %v1429
        %v1558 = vmul.f32 %v1046, %v1430
        %v1559 = vmul.f32 %v1047, %v1431
        %v1560 = vmul.f32 %v1048, %v1432
        %v1561 = vmul.f32 %v1049, %v1433
        %v1562 = vmul.f32 %v1050, %v1434
        %v1563 = vmul.f32 %v1051, %v1435
        %v1564 = vmul.f32 %v1052, %v1436
        %v1565 = vmul.f32 %v1053, %v1437
        %v1566 = vmul.f32 %v1054, %v1438
        %v1567 = vmul.f32 %v1055, %v1439
        %v1568 = vmul.f32 %v1056, %v1440
        %v1569 = vmul.f32 %v1057, %v1441
        %v1570 = vmul.f32 %v1058, %v1442
        %v1571 = vmul.f32 %v1059, %v1443
        %v1572 = vmul.f32 %v1060, %v1444
        %v1573 = vmul.f32 %v1061, %v1445
        %v1574 = vmul.f32 %v1062, %v1446
        %v1575 = vmul.f32 %v1063, %v1447
        %v1576 = vmul.f32 %v1064, %v1448
        %v1577 = vmul.f32 %v1065, %v1449
        %v1578 = vmul.f32 %v1066, %v1450
        %v1579 = vmul.f32 %v1067, %v1451
        %v1580 = vmul.f32 %v1068, %v1452
        %v1581 = vmul.f32 %v1069, %v1453
        %v1582 = vmul.f32 %v1070, %v1454
        %v1583 = vmul.f32 %v1071, %v1455
        %v1584 = vmul.f32 %v1072, %v1456
        %v1585 = vmul.f32 %v1073, %v1457
        %v1586 = vmul.f32 %v1074, %v1458
        %v1587 = vmul.f32 %v1075, %v1459
        %v1588 = vmul.f32 %v1076, %v1460
        %v1589 = vmul.f32 %v1077, %v1461
        %v1590 = vmul.f32 %v1078, %v1462
        %v1591 = vmul.f32 %v1079, %v1463
        %v1592 = vmul.f32 %v1080, %v1464
        %v1593 = vmul.f32 %v1081, %v1465
        %v1594 = vmul.f32 %v1082, %v1466
        %v1595 = vmul.f32 %v1083, %v1467
        %v1596 = vmul.f32 %v1084, %v1468
        %v1597 = vmul.f32 %v1085, %v1469
        %v1598 = vmul.f32 %v1086, %v1470
        %v1599 = vmul.f32 %v1087, %v1471
        %v1600 = vmul.f32 %v1088, %v1472
        %v1601 = vmul.f32 %v1089, %v1473
        %v1602 = vmul.f32 %v1090, %v1474
        %v1603 = vmul.f32 %v1091, %v1475
        %v1604 = vmul.f32 %v1092, %v1476
        %v1605 = vmul.f32 %v1093, %v1477
        %v1606 = vmul.f32 %v1094, %v1478
        %v1607 = vmul.f32 %v1095, %v1479
        %v1608 = vmul.f32 %v1096, %v1480
        %v1609 = vmul.f32 %v1097, %v1481
        %v1610 = vmul.f32 %v1098, %v1482
        %v1611 = vmul.f32 %v1099, %v1483
        %v1612 = vmul.f32 %v1100, %v1484
        %v1613 = vmul.f32 %v1101, %v1485
        %v1614 = vmul.f32 %v1102, %v1486
        %v1615 = vmul.f32 %v1103, %v1487
        %v1616 = vmul.f32 %v1104, %v1488
        %v1617 = vmul.f32 %v1105, %v1489
        %v1618 = vmul.f32 %v1106, %v1490
        %v1619 = vmul.f32 %v1107, %v1491
        %v1620 = vmul.f32 %v1108, %v1492
        %v1621 = vmul.f32 %v1109, %v1493
        %v1622 = vmul.f32 %v1110, %v1494
        %v1623 = vmul.f32 %v1111, %v1495
        %v1624 = vmul.f32 %v1112, %v1496
        %v1625 = vmul.f32 %v1113, %v1497
        %v1626 = vmul.f32 %v1114, %v1498
        %v1627 = vmul.f32 %v1115, %v1499
        %v1628 = vmul.f32 %v1116, %v1500
        %v1629 = vmul.f32 %v1117, %v1501
        %v1630 = vmul.f32 %v1118, %v1502
        %v1631 = vmul.f32 %v1119, %v1503
        %v1632 = vmul.f32 %v1120, %v1504
        %v1633 = vmul.f32 %v1121, %v1505
        %v1634 = vmul.f32 %v1122, %v1506
        %v1635 = vmul.f32 %v1123, %v1507
        %v1636 = vmul.f32 %v1124, %v1508
        %v1637 = vmul.f32 %v1125, %v1509
        %v1638 = vmul.f32 %v1126, %v1510
        %v1639 = vmul.f32 %v1127, %v1511
        %v1640 = vmul.f32 %v1128, %v1512
        %v1641 = vmul.f32 %v1129, %v1513
        %v1642 = vmul.f32 %v1130, %v1514
        %v1643 = vmul.f32 %v1131, %v1515
        %v1644 = vmul.f32 %v1132, %v1516
        %v1645 = vmul.f32 %v1133, %v1517
        %v1646 = vmul.f32 %v1134, %v1518
        %v1647 = vmul.f32 %v1135, %v1519
        %v1648 = vmul.f32 %v1136, %v1520
        %v1649 = vmul.f32 %v1137, %v1521
        %v1650 = vmul.f32 %v1138, %v1522
        %v1651 = vmul.f32 %v1139, %v1523
        %v1652 = vmul.f32 %v1140, %v1524
        %v1653 = vmul.f32 %v1141, %v1525
        %v1654 = vmul.f32 %v1142, %v1526
        %v1655 = vmul.f32 %v1143, %v1527
        %v1656 = vmul.f32 %v1144, %v1528
        %v1657 = vmul.f32 %v1145, %v1529
        %v1658 = vmul.f32 %v1146, %v1530
        %v1659 = vmul.f32 %v1147, %v1531
        %v1660 = vmul.f32 %v1148, %v1532
        %v1661 = vmul.f32 %v1149, %v1533
        %v1662 = vmul.f32 %v1150, %v1534
        %v1663 = vmul.f32 %v1151, %v1535
        %v1664 = vmul.f32 %v1152, %v1536
        %v1665 = vmul.f32 %v1153, %v1537
        %v1666 = vmul.f32 %v1154, %v1538
        %v1667 = vpack.c.bf16 %v1543, %v1539
        %v1668 = vpack.c.bf16 %v1544, %v1540
        %v1669 = vpack.c.bf16 %v1545, %v1541
        %v1670 = vpack.c.bf16 %v1546, %v1542
        %v1671 = vpack.c.bf16 %v1551, %v1547
        %v1672 = vpack.c.bf16 %v1552, %v1548
        %v1673 = vpack.c.bf16 %v1553, %v1549
        %v1674 = vpack.c.bf16 %v1554, %v1550
        %v1675 = vpack.c.bf16 %v1559, %v1555
        %v1676 = vpack.c.bf16 %v1560, %v1556
        %v1677 = vpack.c.bf16 %v1561, %v1557
        %v1678 = vpack.c.bf16 %v1562, %v1558
        %v1679 = vpack.c.bf16 %v1567, %v1563
        %v1680 = vpack.c.bf16 %v1568, %v1564
        %v1681 = vpack.c.bf16 %v1569, %v1565
        %v1682 = vpack.c.bf16 %v1570, %v1566
        %v1683 = vpack.c.bf16 %v1575, %v1571
        %v1684 = vpack.c.bf16 %v1576, %v1572
        %v1685 = vpack.c.bf16 %v1577, %v1573
        %v1686 = vpack.c.bf16 %v1578, %v1574
        %v1687 = vpack.c.bf16 %v1583, %v1579
        %v1688 = vpack.c.bf16 %v1584, %v1580
        %v1689 = vpack.c.bf16 %v1585, %v1581
        %v1690 = vpack.c.bf16 %v1586, %v1582
        %v1691 = vpack.c.bf16 %v1591, %v1587
        %v1692 = vpack.c.bf16 %v1592, %v1588
        %v1693 = vpack.c.bf16 %v1593, %v1589
        %v1694 = vpack.c.bf16 %v1594, %v1590
        %v1695 = vpack.c.bf16 %v1599, %v1595
        %v1696 = vpack.c.bf16 %v1600, %v1596
        %v1697 = vpack.c.bf16 %v1601, %v1597
        %v1698 = vpack.c.bf16 %v1602, %v1598
        %v1699 = vpack.c.bf16 %v1607, %v1603
        %v1700 = vpack.c.bf16 %v1608, %v1604
        %v1701 = vpack.c.bf16 %v1609, %v1605
        %v1702 = vpack.c.bf16 %v1610, %v1606
        %v1703 = vpack.c.bf16 %v1615, %v1611
        %v1704 = vpack.c.bf16 %v1616, %v1612
        %v1705 = vpack.c.bf16 %v1617, %v1613
        %v1706 = vpack.c.bf16 %v1618, %v1614
        %v1707 = vpack.c.bf16 %v1623, %v1619
        %v1708 = vpack.c.bf16 %v1624, %v1620
        %v1709 = vpack.c.bf16 %v1625, %v1621
        %v1710 = vpack.c.bf16 %v1626, %v1622
        %v1711 = vpack.c.bf16 %v1631, %v1627
        %v1712 = vpack.c.bf16 %v1632, %v1628
        %v1713 = vpack.c.bf16 %v1633, %v1629
        %v1714 = vpack.c.bf16 %v1634, %v1630
        %v1715 = vpack.c.bf16 %v1639, %v1635
        %v1716 = vpack.c.bf16 %v1640, %v1636
        %v1717 = vpack.c.bf16 %v1641, %v1637
        %v1718 = vpack.c.bf16 %v1642, %v1638
        %v1719 = vpack.c.bf16 %v1647, %v1643
        %v1720 = vpack.c.bf16 %v1648, %v1644
        %v1721 = vpack.c.bf16 %v1649, %v1645
        %v1722 = vpack.c.bf16 %v1650, %v1646
        %v1723 = vpack.c.bf16 %v1655, %v1651
        %v1724 = vpack.c.bf16 %v1656, %v1652
        %v1725 = vpack.c.bf16 %v1657, %v1653
        %v1726 = vpack.c.bf16 %v1658, %v1654
        %v1727 = vpack.c.bf16 %v1663, %v1659
        %v1728 = vpack.c.bf16 %v1664, %v1660
        %v1729 = vpack.c.bf16 %v1665, %v1661
        %v1730 = vpack.c.bf16 %v1666, %v1662
        %v1731 = vld [vmem:[#allocation8] sm:$0xf]
        %v1732 = vld [vmem:[#allocation8 + $0x4] sm:$0xf]
        %v1733 = vld [vmem:[#allocation8 + $0x8] sm:$0xf]
        %v1734 = vld [vmem:[#allocation8 + $0xc] sm:$0xf]
        %v1735 = vld [vmem:[#allocation8 + $0x10] sm:$0xf]
        %v1736 = vld [vmem:[#allocation8 + $0x14] sm:$0xf]
        %v1737 = vld [vmem:[#allocation8 + $0x18] sm:$0xf]
        %v1738 = vld [vmem:[#allocation8 + $0x1c] sm:$0xf]
        %v1739 = vld [vmem:[#allocation8 + $0x20] sm:$0xf]
        %v1740 = vld [vmem:[#allocation8 + $0x24] sm:$0xf]
        %v1741 = vld [vmem:[#allocation8 + $0x28] sm:$0xf]
        %v1742 = vld [vmem:[#allocation8 + $0x2c] sm:$0xf]
        %v1743 = vld [vmem:[#allocation8 + $0x30] sm:$0xf]
        %v1744 = vld [vmem:[#allocation8 + $0x34] sm:$0xf]
        %v1745 = vld [vmem:[#allocation8 + $0x38] sm:$0xf]
        %v1746 = vld [vmem:[#allocation8 + $0x3c] sm:$0xf]
        %v1747 = vld [vmem:[#allocation8 + $0x40] sm:$0xf]
        %v1748 = vld [vmem:[#allocation8 + $0x44] sm:$0xf]
        %v1749 = vld [vmem:[#allocation8 + $0x48] sm:$0xf]
        %v1750 = vld [vmem:[#allocation8 + $0x4c] sm:$0xf]
        %v1751 = vld [vmem:[#allocation8 + $0x50] sm:$0xf]
        %v1752 = vld [vmem:[#allocation8 + $0x54] sm:$0xf]
        %v1753 = vld [vmem:[#allocation8 + $0x58] sm:$0xf]
        %v1754 = vld [vmem:[#allocation8 + $0x5c] sm:$0xf]
        %v1755 = vld [vmem:[#allocation8 + $0x60] sm:$0xf]
        %v1756 = vld [vmem:[#allocation8 + $0x64] sm:$0xf]
        %v1757 = vld [vmem:[#allocation8 + $0x68] sm:$0xf]
        %v1758 = vld [vmem:[#allocation8 + $0x6c] sm:$0xf]
        %v1759 = vld [vmem:[#allocation8 + $0x70] sm:$0xf]
        %v1760 = vld [vmem:[#allocation8 + $0x74] sm:$0xf]
        %v1761 = vld [vmem:[#allocation8 + $0x78] sm:$0xf]
        %v1762 = vld [vmem:[#allocation8 + $0x7c] sm:$0xf]
        %v1763 = vld [vmem:[#allocation8 + $0x80] sm:$0xf]
        %v1764 = vld [vmem:[#allocation8 + $0x84] sm:$0xf]
        %v1765 = vld [vmem:[#allocation8 + $0x88] sm:$0xf]
        %v1766 = vld [vmem:[#allocation8 + $0x8c] sm:$0xf]
        %v1767 = vld [vmem:[#allocation8 + $0x90] sm:$0xf]
        %v1768 = vld [vmem:[#allocation8 + $0x94] sm:$0xf]
        %v1769 = vld [vmem:[#allocation8 + $0x98] sm:$0xf]
        %v1770 = vld [vmem:[#allocation8 + $0x9c] sm:$0xf]
        %v1771 = vld [vmem:[#allocation8 + $0xa0] sm:$0xf]
        %v1772 = vld [vmem:[#allocation8 + $0xa4] sm:$0xf]
        %v1773 = vld [vmem:[#allocation8 + $0xa8] sm:$0xf]
        %v1774 = vld [vmem:[#allocation8 + $0xac] sm:$0xf]
        %v1775 = vld [vmem:[#allocation8 + $0xb0] sm:$0xf]
        %v1776 = vld [vmem:[#allocation8 + $0xb4] sm:$0xf]
        %v1777 = vld [vmem:[#allocation8 + $0xb8] sm:$0xf]
        %v1778 = vld [vmem:[#allocation8 + $0xbc] sm:$0xf]
        %v1779 = vld [vmem:[#allocation8 + $0xc0] sm:$0xf]
        %v1780 = vld [vmem:[#allocation8 + $0xc4] sm:$0xf]
        %v1781 = vld [vmem:[#allocation8 + $0xc8] sm:$0xf]
        %v1782 = vld [vmem:[#allocation8 + $0xcc] sm:$0xf]
        %v1783 = vld [vmem:[#allocation8 + $0xd0] sm:$0xf]
        %v1784 = vld [vmem:[#allocation8 + $0xd4] sm:$0xf]
        %v1785 = vld [vmem:[#allocation8 + $0xd8] sm:$0xf]
        %v1786 = vld [vmem:[#allocation8 + $0xdc] sm:$0xf]
        %v1787 = vld [vmem:[#allocation8 + $0xe0] sm:$0xf]
        %v1788 = vld [vmem:[#allocation8 + $0xe4] sm:$0xf]
        %v1789 = vld [vmem:[#allocation8 + $0xe8] sm:$0xf]
        %v1790 = vld [vmem:[#allocation8 + $0xec] sm:$0xf]
        %v1791 = vld [vmem:[#allocation8 + $0xf0] sm:$0xf]
        %v1792 = vld [vmem:[#allocation8 + $0xf4] sm:$0xf]
        %v1793 = vld [vmem:[#allocation8 + $0xf8] sm:$0xf]
        %v1794 = vld [vmem:[#allocation8 + $0xfc] sm:$0xf]
        %v1795 = vld [vmem:[#allocation10] sm:$0x1]
        %v1797 = vlaneseq
        %v1798 = vshrl.u32 %v1797, 7
        %v1799 = vsub.s32 0, %v1798
        %v1800 = vrot.slane %v1795, %v1799
        %v1866 = vunpack.c.l.b16 %v1731
        %v1867 = vunpack.c.l.b16 %v1732
        %v1868 = vunpack.c.l.b16 %v1733
        %v1869 = vunpack.c.l.b16 %v1734
        %v1870 = vunpack.c.l.b16 %v1735
        %v1871 = vunpack.c.l.b16 %v1736
        %v1872 = vunpack.c.l.b16 %v1737
        %v1873 = vunpack.c.l.b16 %v1738
        %v1874 = vunpack.c.l.b16 %v1739
        %v1875 = vunpack.c.l.b16 %v1740
        %v1876 = vunpack.c.l.b16 %v1741
        %v1877 = vunpack.c.l.b16 %v1742
        %v1878 = vunpack.c.l.b16 %v1743
        %v1879 = vunpack.c.l.b16 %v1744
        %v1880 = vunpack.c.l.b16 %v1745
        %v1881 = vunpack.c.l.b16 %v1746
        %v1882 = vunpack.c.l.b16 %v1747
        %v1883 = vunpack.c.l.b16 %v1748
        %v1884 = vunpack.c.l.b16 %v1749
        %v1885 = vunpack.c.l.b16 %v1750
        %v1886 = vunpack.c.l.b16 %v1751
        %v1887 = vunpack.c.l.b16 %v1752
        %v1888 = vunpack.c.l.b16 %v1753
        %v1889 = vunpack.c.l.b16 %v1754
        %v1890 = vunpack.c.l.b16 %v1755
        %v1891 = vunpack.c.l.b16 %v1756
        %v1892 = vunpack.c.l.b16 %v1757
        %v1893 = vunpack.c.l.b16 %v1758
        %v1894 = vunpack.c.l.b16 %v1759
        %v1895 = vunpack.c.l.b16 %v1760
        %v1896 = vunpack.c.l.b16 %v1761
        %v1897 = vunpack.c.l.b16 %v1762
        %v1898 = vunpack.c.l.b16 %v1763
        %v1899 = vunpack.c.l.b16 %v1764
        %v1900 = vunpack.c.l.b16 %v1765
        %v1901 = vunpack.c.l.b16 %v1766
        %v1902 = vunpack.c.l.b16 %v1767
        %v1903 = vunpack.c.l.b16 %v1768
        %v1904 = vunpack.c.l.b16 %v1769
        %v1905 = vunpack.c.l.b16 %v1770
        %v1906 = vunpack.c.l.b16 %v1771
        %v1907 = vunpack.c.l.b16 %v1772
        %v1908 = vunpack.c.l.b16 %v1773
        %v1909 = vunpack.c.l.b16 %v1774
        %v1910 = vunpack.c.l.b16 %v1775
        %v1911 = vunpack.c.l.b16 %v1776
        %v1912 = vunpack.c.l.b16 %v1777
        %v1913 = vunpack.c.l.b16 %v1778
        %v1914 = vunpack.c.l.b16 %v1779
        %v1915 = vunpack.c.l.b16 %v1780
        %v1916 = vunpack.c.l.b16 %v1781
        %v1917 = vunpack.c.l.b16 %v1782
        %v1918 = vunpack.c.l.b16 %v1783
        %v1919 = vunpack.c.l.b16 %v1784
        %v1920 = vunpack.c.l.b16 %v1785
        %v1921 = vunpack.c.l.b16 %v1786
        %v1922 = vunpack.c.l.b16 %v1787
        %v1923 = vunpack.c.l.b16 %v1788
        %v1924 = vunpack.c.l.b16 %v1789
        %v1925 = vunpack.c.l.b16 %v1790
        %v1926 = vunpack.c.l.b16 %v1791
        %v1927 = vunpack.c.l.b16 %v1792
        %v1928 = vunpack.c.l.b16 %v1793
        %v1929 = vunpack.c.l.b16 %v1794
        %v1930 = vpack.c.b16 %v1867, %v1866
        %v1931 = vpack.c.b16 %v1869, %v1868
        %v1932 = vpack.c.b16 %v1871, %v1870
        %v1933 = vpack.c.b16 %v1873, %v1872
        %v1934 = vpack.c.b16 %v1875, %v1874
        %v1935 = vpack.c.b16 %v1877, %v1876
        %v1936 = vpack.c.b16 %v1879, %v1878
        %v1937 = vpack.c.b16 %v1881, %v1880
        %v1938 = vpack.c.b16 %v1883, %v1882
        %v1939 = vpack.c.b16 %v1885, %v1884
        %v1940 = vpack.c.b16 %v1887, %v1886
        %v1941 = vpack.c.b16 %v1889, %v1888
        %v1942 = vpack.c.b16 %v1891, %v1890
        %v1943 = vpack.c.b16 %v1893, %v1892
        %v1944 = vpack.c.b16 %v1895, %v1894
        %v1945 = vpack.c.b16 %v1897, %v1896
        %v1946 = vpack.c.b16 %v1899, %v1898
        %v1947 = vpack.c.b16 %v1901, %v1900
        %v1948 = vpack.c.b16 %v1903, %v1902
        %v1949 = vpack.c.b16 %v1905, %v1904
        %v1950 = vpack.c.b16 %v1907, %v1906
        %v1951 = vpack.c.b16 %v1909, %v1908
        %v1952 = vpack.c.b16 %v1911, %v1910
        %v1953 = vpack.c.b16 %v1913, %v1912
        %v1954 = vpack.c.b16 %v1915, %v1914
        %v1955 = vpack.c.b16 %v1917, %v1916
        %v1956 = vpack.c.b16 %v1919, %v1918
        %v1957 = vpack.c.b16 %v1921, %v1920
        %v1958 = vpack.c.b16 %v1923, %v1922
        %v1959 = vpack.c.b16 %v1925, %v1924
        %v1960 = vpack.c.b16 %v1927, %v1926
        %v1961 = vpack.c.b16 %v1929, %v1928
        %1994 = vmatprep.subr.bf16.mxu0 0
        %1995 = vmatpush1.bf16.msra.mxu0 %v1930
        %1996 = vmatprep.subr.bf16.mxu0 0
        %1997 = vmatpush1.bf16.msra.mxu0 %v1931
        %1998 = vmatprep.subr.bf16.mxu0 0
        %1999 = vmatpush1.bf16.msra.mxu0 %v1932
        %2000 = vmatprep.subr.bf16.mxu0 0
        %2001 = vmatpush1.bf16.msra.mxu0 %v1933
        %2002 = vmatprep.subr.bf16.mxu0 0
        %2003 = vmatpush1.bf16.msra.mxu0 %v1934
        %2004 = vmatprep.subr.bf16.mxu0 0
        %2005 = vmatpush1.bf16.msra.mxu0 %v1935
        %2006 = vmatprep.subr.bf16.mxu0 0
        %2007 = vmatpush1.bf16.msra.mxu0 %v1936
        %2008 = vmatprep.subr.bf16.mxu0 0
        %2009 = vmatpush1.bf16.msra.mxu0 %v1937
        %2010 = vmatprep.subr.bf16.mxu0 0
        %2011 = vmatpush1.bf16.msra.mxu0 %v1938
        %2012 = vmatprep.subr.bf16.mxu0 0
        %2013 = vmatpush1.bf16.msra.mxu0 %v1939
        %2014 = vmatprep.subr.bf16.mxu0 0
        %2015 = vmatpush1.bf16.msra.mxu0 %v1940
        %2016 = vmatprep.subr.bf16.mxu0 0
        %2017 = vmatpush1.bf16.msra.mxu0 %v1941
        %2018 = vmatprep.subr.bf16.mxu0 0
        %2019 = vmatpush1.bf16.msra.mxu0 %v1942
        %2020 = vmatprep.subr.bf16.mxu0 0
        %2021 = vmatpush1.bf16.msra.mxu0 %v1943
        %2022 = vmatprep.subr.bf16.mxu0 0
        %2023 = vmatpush1.bf16.msra.mxu0 %v1944
        %2024 = vmatprep.subr.bf16.mxu0 0
        %2025 = vmatpush1.bf16.msra.mxu0 %v1945
        %2026 = vmatprep.mubr.bf16.mxu0 %v1668
        %2027 = vmatmul.mubr.bf16.gmra.mrb[0].mxu0 %v1667
        %v2028 = vpop.f32.mrb[0].mxu0
        %v2029 = vadd.f32 %v1800, %v2028
        %v2030 = vpop.f32.mrb[0].mxu0
        %v2031 = vpop.f32.mrb[0].mxu0
        %v2032 = vadd.f32 %v1800, %v2031
        %v2033 = vpop.f32.mrb[0].mxu0
        %2034 = vmatprep.mubr.bf16.mxu0 %v1672
        %2035 = vmatmul.mubr.bf16.gmra.mrb[0].mxu0 %v1671
        %v2036 = vpop.f32.mrb[0].mxu0
        %v2037 = vadd.f32 %v1800, %v2036
        %v2038 = vpop.f32.mrb[0].mxu0
        %v2039 = vpop.f32.mrb[0].mxu0
        %v2040 = vadd.f32 %v1800, %v2039
        %v2041 = vpop.f32.mrb[0].mxu0
        %2042 = vmatprep.mubr.bf16.mxu0 %v1676
        %2043 = vmatmul.mubr.bf16.gmra.mrb[0].mxu0 %v1675
        %v2044 = vpop.f32.mrb[0].mxu0
        %v2045 = vadd.f32 %v1800, %v2044
        %v2046 = vpop.f32.mrb[0].mxu0
        %v2047 = vpop.f32.mrb[0].mxu0
        %v2048 = vadd.f32 %v1800, %v2047
        %v2049 = vpop.f32.mrb[0].mxu0
        %2050 = vmatprep.mubr.bf16.mxu0 %v1680
        %2051 = vmatmul.mubr.bf16.gmra.mrb[0].mxu0 %v1679
        %v2052 = vpop.f32.mrb[0].mxu0
        %v2053 = vadd.f32 %v1800, %v2052
        %v2054 = vpop.f32.mrb[0].mxu0
        %v2055 = vpop.f32.mrb[0].mxu0
        %v2056 = vadd.f32 %v1800, %v2055
        %v2057 = vpop.f32.mrb[0].mxu0
        %2058 = vmatprep.mubr.bf16.mxu0 %v1684
        %2059 = vmatmul.mubr.bf16.gmra.mrb[0].mxu0 %v1683
        %v2060 = vpop.f32.mrb[0].mxu0
        %v2061 = vadd.f32 %v1800, %v2060
        %v2062 = vpop.f32.mrb[0].mxu0
        %v2063 = vpop.f32.mrb[0].mxu0
        %v2064 = vadd.f32 %v1800, %v2063
        %v2065 = vpop.f32.mrb[0].mxu0
        %2066 = vmatprep.mubr.bf16.mxu0 %v1688
        %2067 = vmatmul.mubr.bf16.gmra.mrb[0].mxu0 %v1687
        %v2068 = vpop.f32.mrb[0].mxu0
        %v2069 = vadd.f32 %v1800, %v2068
        %v2070 = vpop.f32.mrb[0].mxu0
        %v2071 = vpop.f32.mrb[0].mxu0
        %v2072 = vadd.f32 %v1800, %v2071
        %v2073 = vpop.f32.mrb[0].mxu0
        %2074 = vmatprep.mubr.bf16.mxu0 %v1692
        %2075 = vmatmul.mubr.bf16.gmra.mrb[0].mxu0 %v1691
        %v2076 = vpop.f32.mrb[0].mxu0
        %v2077 = vadd.f32 %v1800, %v2076
        %v2078 = vpop.f32.mrb[0].mxu0
        %v2079 = vpop.f32.mrb[0].mxu0
        %v2080 = vadd.f32 %v1800, %v2079
        %v2081 = vpop.f32.mrb[0].mxu0
        %2082 = vmatprep.mubr.bf16.mxu0 %v1696
        %2083 = vmatmul.mubr.bf16.gmra.mrb[0].mxu0 %v1695
        %v2084 = vpop.f32.mrb[0].mxu0
        %v2085 = vadd.f32 %v1800, %v2084
        %v2086 = vpop.f32.mrb[0].mxu0
        %v2087 = vpop.f32.mrb[0].mxu0
        %v2088 = vadd.f32 %v1800, %v2087
        %v2089 = vpop.f32.mrb[0].mxu0
        %2090 = vmatprep.mubr.bf16.mxu0 %v1700
        %2091 = vmatmul.mubr.bf16.gmra.mrb[0].mxu0 %v1699
        %v2092 = vpop.f32.mrb[0].mxu0
        %v2093 = vadd.f32 %v1800, %v2092
        %v2094 = vpop.f32.mrb[0].mxu0
        %v2095 = vpop.f32.mrb[0].mxu0
        %v2096 = vadd.f32 %v1800, %v2095
        %v2097 = vpop.f32.mrb[0].mxu0
        %2098 = vmatprep.mubr.bf16.mxu0 %v1704
        %2099 = vmatmul.mubr.bf16.gmra.mrb[0].mxu0 %v1703
        %v2100 = vpop.f32.mrb[0].mxu0
        %v2101 = vadd.f32 %v1800, %v2100
        %v2102 = vpop.f32.mrb[0].mxu0
        %v2103 = vpop.f32.mrb[0].mxu0
        %v2104 = vadd.f32 %v1800, %v2103
        %v2105 = vpop.f32.mrb[0].mxu0
        %2106 = vmatprep.mubr.bf16.mxu0 %v1708
        %2107 = vmatmul.mubr.bf16.gmra.mrb[0].mxu0 %v1707
        %v2108 = vpop.f32.mrb[0].mxu0
        %v2109 = vadd.f32 %v1800, %v2108
        %v2110 = vpop.f32.mrb[0].mxu0
        %v2111 = vpop.f32.mrb[0].mxu0
        %v2112 = vadd.f32 %v1800, %v2111
        %v2113 = vpop.f32.mrb[0].mxu0
        %2114 = vmatprep.mubr.bf16.mxu0 %v1712
        %2115 = vmatmul.mubr.bf16.gmra.mrb[0].mxu0 %v1711
        %v2116 = vpop.f32.mrb[0].mxu0
        %v2117 = vadd.f32 %v1800, %v2116
        %v2118 = vpop.f32.mrb[0].mxu0
        %v2119 = vpop.f32.mrb[0].mxu0
        %v2120 = vadd.f32 %v1800, %v2119
        %v2121 = vpop.f32.mrb[0].mxu0
        %2122 = vmatprep.mubr.bf16.mxu0 %v1716
        %2123 = vmatmul.mubr.bf16.gmra.mrb[0].mxu0 %v1715
        %v2124 = vpop.f32.mrb[0].mxu0
        %v2125 = vadd.f32 %v1800, %v2124
        %v2126 = vpop.f32.mrb[0].mxu0
        %v2127 = vpop.f32.mrb[0].mxu0
        %v2128 = vadd.f32 %v1800, %v2127
        %v2129 = vpop.f32.mrb[0].mxu0
        %2130 = vmatprep.mubr.bf16.mxu0 %v1720
        %2131 = vmatmul.mubr.bf16.gmra.mrb[0].mxu0 %v1719
        %v2132 = vpop.f32.mrb[0].mxu0
        %v2133 = vadd.f32 %v1800, %v2132
        %v2134 = vpop.f32.mrb[0].mxu0
        %v2135 = vpop.f32.mrb[0].mxu0
        %v2136 = vadd.f32 %v1800, %v2135
        %v2137 = vpop.f32.mrb[0].mxu0
        %2138 = vmatprep.mubr.bf16.mxu0 %v1724
        %2139 = vmatmul.mubr.bf16.gmra.mrb[0].mxu0 %v1723
        %v2140 = vpop.f32.mrb[0].mxu0
        %v2141 = vadd.f32 %v1800, %v2140
        %v2142 = vpop.f32.mrb[0].mxu0
        %v2143 = vpop.f32.mrb[0].mxu0
        %v2144 = vadd.f32 %v1800, %v2143
        %v2145 = vpop.f32.mrb[0].mxu0
        %2146 = vmatprep.mubr.bf16.mxu0 %v1728
        %2147 = vmatmul.mubr.bf16.gmra.mrb[0].mxu0 %v1727
        %v2148 = vpop.f32.mrb[0].mxu0
        %v2149 = vadd.f32 %v1800, %v2148
        %v2150 = vpop.f32.mrb[0].mxu0
        %v2151 = vpop.f32.mrb[0].mxu0
        %v2152 = vadd.f32 %v1800, %v2151
        %v2153 = vpop.f32.mrb[0].mxu0
        %2154 = vdwg.mxu0
        %2155 = vmatprep.subr.bf16.mxu0 0
        %2156 = vmatpush1.bf16.msra.mxu0 %v1946
        %2157 = vmatprep.subr.bf16.mxu0 0
        %2158 = vmatpush1.bf16.msra.mxu0 %v1947
        %2159 = vmatprep.subr.bf16.mxu0 0
        %2160 = vmatpush1.bf16.msra.mxu0 %v1948
        %2161 = vmatprep.subr.bf16.mxu0 0
        %2162 = vmatpush1.bf16.msra.mxu0 %v1949
        %2163 = vmatprep.subr.bf16.mxu0 0
        %2164 = vmatpush1.bf16.msra.mxu0 %v1950
        %2165 = vmatprep.subr.bf16.mxu0 0
        %2166 = vmatpush1.bf16.msra.mxu0 %v1951
        %2167 = vmatprep.subr.bf16.mxu0 0
        %2168 = vmatpush1.bf16.msra.mxu0 %v1952
        %2169 = vmatprep.subr.bf16.mxu0 0
        %2170 = vmatpush1.bf16.msra.mxu0 %v1953
        %2171 = vmatprep.subr.bf16.mxu0 0
        %2172 = vmatpush1.bf16.msra.mxu0 %v1954
        %2173 = vmatprep.subr.bf16.mxu0 0
        %2174 = vmatpush1.bf16.msra.mxu0 %v1955
        %2175 = vmatprep.subr.bf16.mxu0 0
        %2176 = vmatpush1.bf16.msra.mxu0 %v1956
        %2177 = vmatprep.subr.bf16.mxu0 0
        %2178 = vmatpush1.bf16.msra.mxu0 %v1957
        %2179 = vmatprep.subr.bf16.mxu0 0
        %2180 = vmatpush1.bf16.msra.mxu0 %v1958
        %2181 = vmatprep.subr.bf16.mxu0 0
        %2182 = vmatpush1.bf16.msra.mxu0 %v1959
        %2183 = vmatprep.subr.bf16.mxu0 0
        %2184 = vmatpush1.bf16.msra.mxu0 %v1960
        %2185 = vmatprep.subr.bf16.mxu0 0
        %2186 = vmatpush1.bf16.msra.mxu0 %v1961
        %2187 = vmatprep.mubr.bf16.mxu0 %v1670
        %2188 = vmatmul.mubr.bf16.gmra.mrb[0].mxu0 %v1669
        %v2189 = vpop.f32.mrb[0].mxu0
        %v2190 = vadd.f32 %v2029, %v2189
        %v2191 = vpop.f32.mrb[0].mxu0
        %v2192 = vpop.f32.mrb[0].mxu0
        %v2193 = vadd.f32 %v2032, %v2192
        %v2194 = vpop.f32.mrb[0].mxu0
        %2195 = vmatprep.mubr.bf16.mxu0 %v1674
        %2196 = vmatmul.mubr.bf16.gmra.mrb[0].mxu0 %v1673
        %v2197 = vpop.f32.mrb[0].mxu0
        %v2198 = vadd.f32 %v2037, %v2197
        %v2199 = vpop.f32.mrb[0].mxu0
        %v2200 = vpop.f32.mrb[0].mxu0
        %v2201 = vadd.f32 %v2040, %v2200
        %v2202 = vpop.f32.mrb[0].mxu0
        %2203 = vmatprep.mubr.bf16.mxu0 %v1678
        %2204 = vmatmul.mubr.bf16.gmra.mrb[0].mxu0 %v1677
        %v2205 = vpop.f32.mrb[0].mxu0
        %v2206 = vadd.f32 %v2045, %v2205
        %v2207 = vpop.f32.mrb[0].mxu0
        %v2208 = vpop.f32.mrb[0].mxu0
        %v2209 = vadd.f32 %v2048, %v2208
        %v2210 = vpop.f32.mrb[0].mxu0
        %2211 = vmatprep.mubr.bf16.mxu0 %v1682
        %2212 = vmatmul.mubr.bf16.gmra.mrb[0].mxu0 %v1681
        %v2213 = vpop.f32.mrb[0].mxu0
        %v2214 = vadd.f32 %v2053, %v2213
        %v2215 = vpop.f32.mrb[0].mxu0
        %v2216 = vpop.f32.mrb[0].mxu0
        %v2217 = vadd.f32 %v2056, %v2216
        %v2218 = vpop.f32.mrb[0].mxu0
        %2219 = vmatprep.mubr.bf16.mxu0 %v1686
        %2220 = vmatmul.mubr.bf16.gmra.mrb[0].mxu0 %v1685
        %v2221 = vpop.f32.mrb[0].mxu0
        %v2222 = vadd.f32 %v2061, %v2221
        %v2223 = vpop.f32.mrb[0].mxu0
        %v2224 = vpop.f32.mrb[0].mxu0
        %v2225 = vadd.f32 %v2064, %v2224
        %v2226 = vpop.f32.mrb[0].mxu0
        %2227 = vmatprep.mubr.bf16.mxu0 %v1690
        %2228 = vmatmul.mubr.bf16.gmra.mrb[0].mxu0 %v1689
        %v2229 = vpop.f32.mrb[0].mxu0
        %v2230 = vadd.f32 %v2069, %v2229
        %v2231 = vpop.f32.mrb[0].mxu0
        %v2232 = vpop.f32.mrb[0].mxu0
        %v2233 = vadd.f32 %v2072, %v2232
        %v2234 = vpop.f32.mrb[0].mxu0
        %2235 = vmatprep.mubr.bf16.mxu0 %v1694
        %2236 = vmatmul.mubr.bf16.gmra.mrb[0].mxu0 %v1693
        %v2237 = vpop.f32.mrb[0].mxu0
        %v2238 = vadd.f32 %v2077, %v2237
        %v2239 = vpop.f32.mrb[0].mxu0
        %v2240 = vpop.f32.mrb[0].mxu0
        %v2241 = vadd.f32 %v2080, %v2240
        %v2242 = vpop.f32.mrb[0].mxu0
        %2243 = vmatprep.mubr.bf16.mxu0 %v1698
        %2244 = vmatmul.mubr.bf16.gmra.mrb[0].mxu0 %v1697
        %v2245 = vpop.f32.mrb[0].mxu0
        %v2246 = vadd.f32 %v2085, %v2245
        %v2247 = vpop.f32.mrb[0].mxu0
        %v2248 = vpop.f32.mrb[0].mxu0
        %v2249 = vadd.f32 %v2088, %v2248
        %v2250 = vpop.f32.mrb[0].mxu0
        %2251 = vmatprep.mubr.bf16.mxu0 %v1702
        %2252 = vmatmul.mubr.bf16.gmra.mrb[0].mxu0 %v1701
        %v2253 = vpop.f32.mrb[0].mxu0
        %v2254 = vadd.f32 %v2093, %v2253
        %v2255 = vpop.f32.mrb[0].mxu0
        %v2256 = vpop.f32.mrb[0].mxu0
        %v2257 = vadd.f32 %v2096, %v2256
        %v2258 = vpop.f32.mrb[0].mxu0
        %2259 = vmatprep.mubr.bf16.mxu0 %v1706
        %2260 = vmatmul.mubr.bf16.gmra.mrb[0].mxu0 %v1705
        %v2261 = vpop.f32.mrb[0].mxu0
        %v2262 = vadd.f32 %v2101, %v2261
        %v2263 = vpop.f32.mrb[0].mxu0
        %v2264 = vpop.f32.mrb[0].mxu0
        %v2265 = vadd.f32 %v2104, %v2264
        %v2266 = vpop.f32.mrb[0].mxu0
        %2267 = vmatprep.mubr.bf16.mxu0 %v1710
        %2268 = vmatmul.mubr.bf16.gmra.mrb[0].mxu0 %v1709
        %v2269 = vpop.f32.mrb[0].mxu0
        %v2270 = vadd.f32 %v2109, %v2269
        %v2271 = vpop.f32.mrb[0].mxu0
        %v2272 = vpop.f32.mrb[0].mxu0
        %v2273 = vadd.f32 %v2112, %v2272
        %v2274 = vpop.f32.mrb[0].mxu0
        %2275 = vmatprep.mubr.bf16.mxu0 %v1714
        %2276 = vmatmul.mubr.bf16.gmra.mrb[0].mxu0 %v1713
        %v2277 = vpop.f32.mrb[0].mxu0
        %v2278 = vadd.f32 %v2117, %v2277
        %v2279 = vpop.f32.mrb[0].mxu0
        %v2280 = vpop.f32.mrb[0].mxu0
        %v2281 = vadd.f32 %v2120, %v2280
        %v2282 = vpop.f32.mrb[0].mxu0
        %2283 = vmatprep.mubr.bf16.mxu0 %v1718
        %2284 = vmatmul.mubr.bf16.gmra.mrb[0].mxu0 %v1717
        %v2285 = vpop.f32.mrb[0].mxu0
        %v2286 = vadd.f32 %v2125, %v2285
        %v2287 = vpop.f32.mrb[0].mxu0
        %v2288 = vpop.f32.mrb[0].mxu0
        %v2289 = vadd.f32 %v2128, %v2288
        %v2290 = vpop.f32.mrb[0].mxu0
        %2291 = vmatprep.mubr.bf16.mxu0 %v1722
        %2292 = vmatmul.mubr.bf16.gmra.mrb[0].mxu0 %v1721
        %v2293 = vpop.f32.mrb[0].mxu0
        %v2294 = vadd.f32 %v2133, %v2293
        %v2295 = vpop.f32.mrb[0].mxu0
        %v2296 = vpop.f32.mrb[0].mxu0
        %v2297 = vadd.f32 %v2136, %v2296
        %v2298 = vpop.f32.mrb[0].mxu0
        %2299 = vmatprep.mubr.bf16.mxu0 %v1726
        %2300 = vmatmul.mubr.bf16.gmra.mrb[0].mxu0 %v1725
        %v2301 = vpop.f32.mrb[0].mxu0
        %v2302 = vadd.f32 %v2141, %v2301
        %v2303 = vpop.f32.mrb[0].mxu0
        %v2304 = vpop.f32.mrb[0].mxu0
        %v2305 = vadd.f32 %v2144, %v2304
        %v2306 = vpop.f32.mrb[0].mxu0
        %2307 = vmatprep.mubr.bf16.mxu0 %v1730
        %2308 = vmatmul.mubr.bf16.gmra.mrb[0].mxu0 %v1729
        %v2309 = vpop.f32.mrb[0].mxu0
        %v2310 = vadd.f32 %v2149, %v2309
        %v2311 = vpop.f32.mrb[0].mxu0
        %v2312 = vpop.f32.mrb[0].mxu0
        %v2313 = vadd.f32 %v2152, %v2312
        %v2314 = vpop.f32.mrb[0].mxu0
        %2315 = vdwg.mxu0
        %v2316 = vadd.f32 %v379, %v2190
        %v2317 = vadd.f32 %v380, %v2193
        %v2318 = vadd.f32 %v381, %v2198
        %v2319 = vadd.f32 %v382, %v2201
        %v2320 = vadd.f32 %v383, %v2206
        %v2321 = vadd.f32 %v384, %v2209
        %v2322 = vadd.f32 %v385, %v2214
        %v2323 = vadd.f32 %v386, %v2217
        %v2324 = vadd.f32 %v387, %v2222
        %v2325 = vadd.f32 %v388, %v2225
        %v2326 = vadd.f32 %v389, %v2230
        %v2327 = vadd.f32 %v390, %v2233
        %v2328 = vadd.f32 %v391, %v2238
        %v2329 = vadd.f32 %v392, %v2241
        %v2330 = vadd.f32 %v393, %v2246
        %v2331 = vadd.f32 %v394, %v2249
        %v2332 = vadd.f32 %v395, %v2254
        %v2333 = vadd.f32 %v396, %v2257
        %v2334 = vadd.f32 %v397, %v2262
        %v2335 = vadd.f32 %v398, %v2265
        %v2336 = vadd.f32 %v399, %v2270
        %v2337 = vadd.f32 %v400, %v2273
        %v2338 = vadd.f32 %v401, %v2278
        %v2339 = vadd.f32 %v402, %v2281
        %v2340 = vadd.f32 %v403, %v2286
        %v2341 = vadd.f32 %v404, %v2289
        %v2342 = vadd.f32 %v405, %v2294
        %v2343 = vadd.f32 %v406, %v2297
        %v2344 = vadd.f32 %v407, %v2302
        %v2345 = vadd.f32 %v408, %v2305
        %v2346 = vadd.f32 %v409, %v2310
        %v2347 = vadd.f32 %v410, %v2313
        %v2348 = vld [vmem:[#allocation11] sm:$0x1]
        %v2349 = vld [vmem:[#allocation13] sm:$0x1]
        %2350 = vadd.xlane.f32.xlu0 %v2316
        %v2351 = vpop.xlane.xlu0 %2350
        %2352 = vadd.xlane.f32.xlu0 %v2317
        %v2353 = vpop.xlane.xlu0 %2352
        %2354 = vadd.xlane.f32.xlu0 %v2318
        %v2355 = vpop.xlane.xlu0 %2354
        %2356 = vadd.xlane.f32.xlu0 %v2319
        %v2357 = vpop.xlane.xlu0 %2356
        %2358 = vadd.xlane.f32.xlu0 %v2320
        %v2359 = vpop.xlane.xlu0 %2358
        %2360 = vadd.xlane.f32.xlu0 %v2321
        %v2361 = vpop.xlane.xlu0 %2360
        %2362 = vadd.xlane.f32.xlu0 %v2322
        %v2363 = vpop.xlane.xlu0 %2362
        %2364 = vadd.xlane.f32.xlu0 %v2323
        %v2365 = vpop.xlane.xlu0 %2364
        %2366 = vadd.xlane.f32.xlu0 %v2324
        %v2367 = vpop.xlane.xlu0 %2366
        %2368 = vadd.xlane.f32.xlu0 %v2325
        %v2369 = vpop.xlane.xlu0 %2368
        %2370 = vadd.xlane.f32.xlu0 %v2326
        %v2371 = vpop.xlane.xlu0 %2370
        %2372 = vadd.xlane.f32.xlu0 %v2327
        %v2373 = vpop.xlane.xlu0 %2372
        %2374 = vadd.xlane.f32.xlu0 %v2328
        %v2375 = vpop.xlane.xlu0 %2374
        %2376 = vadd.xlane.f32.xlu0 %v2329
        %v2377 = vpop.xlane.xlu0 %2376
        %2378 = vadd.xlane.f32.xlu0 %v2330
        %v2379 = vpop.xlane.xlu0 %2378
        %2380 = vadd.xlane.f32.xlu0 %v2331
        %v2381 = vpop.xlane.xlu0 %2380
        %2382 = vadd.xlane.f32.xlu0 %v2332
        %v2383 = vpop.xlane.xlu0 %2382
        %2384 = vadd.xlane.f32.xlu0 %v2333
        %v2385 = vpop.xlane.xlu0 %2384
        %2386 = vadd.xlane.f32.xlu0 %v2334
        %v2387 = vpop.xlane.xlu0 %2386
        %2388 = vadd.xlane.f32.xlu0 %v2335
        %v2389 = vpop.xlane.xlu0 %2388
        %2390 = vadd.xlane.f32.xlu0 %v2336
        %v2391 = vpop.xlane.xlu0 %2390
        %2392 = vadd.xlane.f32.xlu0 %v2337
        %v2393 = vpop.xlane.xlu0 %2392
        %2394 = vadd.xlane.f32.xlu0 %v2338
        %v2395 = vpop.xlane.xlu0 %2394
        %2396 = vadd.xlane.f32.xlu0 %v2339
        %v2397 = vpop.xlane.xlu0 %2396
        %2398 = vadd.xlane.f32.xlu0 %v2340
        %v2399 = vpop.xlane.xlu0 %2398
        %2400 = vadd.xlane.f32.xlu0 %v2341
        %v2401 = vpop.xlane.xlu0 %2400
        %2402 = vadd.xlane.f32.xlu0 %v2342
        %v2403 = vpop.xlane.xlu0 %2402
        %2404 = vadd.xlane.f32.xlu0 %v2343
        %v2405 = vpop.xlane.xlu0 %2404
        %2406 = vadd.xlane.f32.xlu0 %v2344
        %v2407 = vpop.xlane.xlu0 %2406
        %2408 = vadd.xlane.f32.xlu0 %v2345
        %v2409 = vpop.xlane.xlu0 %2408
        %2410 = vadd.xlane.f32.xlu0 %v2346
        %v2411 = vpop.xlane.xlu0 %2410
        %2412 = vadd.xlane.f32.xlu0 %v2347
        %v2413 = vpop.xlane.xlu0 %2412
        %v2414 = vrcp.pop 128.0
        %v2415 = vmul.f32 %v2351, %v2414
        %v2416 = vmul.f32 %v2353, %v2414
        %v2417 = vmul.f32 %v2355, %v2414
        %v2418 = vmul.f32 %v2357, %v2414
        %v2419 = vmul.f32 %v2359, %v2414
        %v2420 = vmul.f32 %v2361, %v2414
        %v2421 = vmul.f32 %v2363, %v2414
        %v2422 = vmul.f32 %v2365, %v2414
        %v2423 = vmul.f32 %v2367, %v2414
        %v2424 = vmul.f32 %v2369, %v2414
        %v2425 = vmul.f32 %v2371, %v2414
        %v2426 = vmul.f32 %v2373, %v2414
        %v2427 = vmul.f32 %v2375, %v2414
        %v2428 = vmul.f32 %v2377, %v2414
        %v2429 = vmul.f32 %v2379, %v2414
        %v2430 = vmul.f32 %v2381, %v2414
        %v2431 = vmul.f32 %v2383, %v2414
        %v2432 = vmul.f32 %v2385, %v2414
        %v2433 = vmul.f32 %v2387, %v2414
        %v2434 = vmul.f32 %v2389, %v2414
        %v2435 = vmul.f32 %v2391, %v2414
        %v2436 = vmul.f32 %v2393, %v2414
        %v2437 = vmul.f32 %v2395, %v2414
        %v2438 = vmul.f32 %v2397, %v2414
        %v2439 = vmul.f32 %v2399, %v2414
        %v2440 = vmul.f32 %v2401, %v2414
        %v2441 = vmul.f32 %v2403, %v2414
        %v2442 = vmul.f32 %v2405, %v2414
        %v2443 = vmul.f32 %v2407, %v2414
        %v2444 = vmul.f32 %v2409, %v2414
        %v2445 = vmul.f32 %v2411, %v2414
        %v2446 = vmul.f32 %v2413, %v2414
        %v2447 = vsub.f32 %v2316, %v2415
        %v2448 = vsub.f32 %v2317, %v2416
        %v2449 = vsub.f32 %v2318, %v2417
        %v2450 = vsub.f32 %v2319, %v2418
        %v2451 = vsub.f32 %v2320, %v2419
        %v2452 = vsub.f32 %v2321, %v2420
        %v2453 = vsub.f32 %v2322, %v2421
        %v2454 = vsub.f32 %v2323, %v2422
        %v2455 = vsub.f32 %v2324, %v2423
        %v2456 = vsub.f32 %v2325, %v2424
        %v2457 = vsub.f32 %v2326, %v2425
        %v2458 = vsub.f32 %v2327, %v2426
        %v2459 = vsub.f32 %v2328, %v2427
        %v2460 = vsub.f32 %v2329, %v2428
        %v2461 = vsub.f32 %v2330, %v2429
        %v2462 = vsub.f32 %v2331, %v2430
        %v2463 = vsub.f32 %v2332, %v2431
        %v2464 = vsub.f32 %v2333, %v2432
        %v2465 = vsub.f32 %v2334, %v2433
        %v2466 = vsub.f32 %v2335, %v2434
        %v2467 = vsub.f32 %v2336, %v2435
        %v2468 = vsub.f32 %v2337, %v2436
        %v2469 = vsub.f32 %v2338, %v2437
        %v2470 = vsub.f32 %v2339, %v2438
        %v2471 = vsub.f32 %v2340, %v2439
        %v2472 = vsub.f32 %v2341, %v2440
        %v2473 = vsub.f32 %v2342, %v2441
        %v2474 = vsub.f32 %v2343, %v2442
        %v2475 = vsub.f32 %v2344, %v2443
        %v2476 = vsub.f32 %v2345, %v2444
        %v2477 = vsub.f32 %v2346, %v2445
        %v2478 = vsub.f32 %v2347, %v2446
        %v2479 = vmul.f32 %v2447, %v2447
        %v2480 = vmul.f32 %v2448, %v2448
        %v2481 = vmul.f32 %v2449, %v2449
        %v2482 = vmul.f32 %v2450, %v2450
        %v2483 = vmul.f32 %v2451, %v2451
        %v2484 = vmul.f32 %v2452, %v2452
        %v2485 = vmul.f32 %v2453, %v2453
        %v2486 = vmul.f32 %v2454, %v2454
        %v2487 = vmul.f32 %v2455, %v2455
        %v2488 = vmul.f32 %v2456, %v2456
        %v2489 = vmul.f32 %v2457, %v2457
        %v2490 = vmul.f32 %v2458, %v2458
        %v2491 = vmul.f32 %v2459, %v2459
        %v2492 = vmul.f32 %v2460, %v2460
        %v2493 = vmul.f32 %v2461, %v2461
        %v2494 = vmul.f32 %v2462, %v2462
        %v2495 = vmul.f32 %v2463, %v2463
        %v2496 = vmul.f32 %v2464, %v2464
        %v2497 = vmul.f32 %v2465, %v2465
        %v2498 = vmul.f32 %v2466, %v2466
        %v2499 = vmul.f32 %v2467, %v2467
        %v2500 = vmul.f32 %v2468, %v2468
        %v2501 = vmul.f32 %v2469, %v2469
        %v2502 = vmul.f32 %v2470, %v2470
        %v2503 = vmul.f32 %v2471, %v2471
        %v2504 = vmul.f32 %v2472, %v2472
        %v2505 = vmul.f32 %v2473, %v2473
        %v2506 = vmul.f32 %v2474, %v2474
        %v2507 = vmul.f32 %v2475, %v2475
        %v2508 = vmul.f32 %v2476, %v2476
        %v2509 = vmul.f32 %v2477, %v2477
        %v2510 = vmul.f32 %v2478, %v2478
        %2511 = vadd.xlane.f32.xlu0 %v2479
        %v2512 = vpop.xlane.xlu0 %2511
        %2513 = vadd.xlane.f32.xlu0 %v2480
        %v2514 = vpop.xlane.xlu0 %2513
        %2515 = vadd.xlane.f32.xlu0 %v2481
        %v2516 = vpop.xlane.xlu0 %2515
        %2517 = vadd.xlane.f32.xlu0 %v2482
        %v2518 = vpop.xlane.xlu0 %2517
        %2519 = vadd.xlane.f32.xlu0 %v2483
        %v2520 = vpop.xlane.xlu0 %2519
        %2521 = vadd.xlane.f32.xlu0 %v2484
        %v2522 = vpop.xlane.xlu0 %2521
        %2523 = vadd.xlane.f32.xlu0 %v2485
        %v2524 = vpop.xlane.xlu0 %2523
        %2525 = vadd.xlane.f32.xlu0 %v2486
        %v2526 = vpop.xlane.xlu0 %2525
        %2527 = vadd.xlane.f32.xlu0 %v2487
        %v2528 = vpop.xlane.xlu0 %2527
        %2529 = vadd.xlane.f32.xlu0 %v2488
        %v2530 = vpop.xlane.xlu0 %2529
        %2531 = vadd.xlane.f32.xlu0 %v2489
        %v2532 = vpop.xlane.xlu0 %2531
        %2533 = vadd.xlane.f32.xlu0 %v2490
        %v2534 = vpop.xlane.xlu0 %2533
        %2535 = vadd.xlane.f32.xlu0 %v2491
        %v2536 = vpop.xlane.xlu0 %2535
        %2537 = vadd.xlane.f32.xlu0 %v2492
        %v2538 = vpop.xlane.xlu0 %2537
        %2539 = vadd.xlane.f32.xlu0 %v2493
        %v2540 = vpop.xlane.xlu0 %2539
        %2541 = vadd.xlane.f32.xlu0 %v2494
        %v2542 = vpop.xlane.xlu0 %2541
        %2543 = vadd.xlane.f32.xlu0 %v2495
        %v2544 = vpop.xlane.xlu0 %2543
        %2545 = vadd.xlane.f32.xlu0 %v2496
        %v2546 = vpop.xlane.xlu0 %2545
        %2547 = vadd.xlane.f32.xlu0 %v2497
        %v2548 = vpop.xlane.xlu0 %2547
        %2549 = vadd.xlane.f32.xlu0 %v2498
        %v2550 = vpop.xlane.xlu0 %2549
        %2551 = vadd.xlane.f32.xlu0 %v2499
        %v2552 = vpop.xlane.xlu0 %2551
        %2553 = vadd.xlane.f32.xlu0 %v2500
        %v2554 = vpop.xlane.xlu0 %2553
        %2555 = vadd.xlane.f32.xlu0 %v2501
        %v2556 = vpop.xlane.xlu0 %2555
        %2557 = vadd.xlane.f32.xlu0 %v2502
        %v2558 = vpop.xlane.xlu0 %2557
        %2559 = vadd.xlane.f32.xlu0 %v2503
        %v2560 = vpop.xlane.xlu0 %2559
        %2561 = vadd.xlane.f32.xlu0 %v2504
        %v2562 = vpop.xlane.xlu0 %2561
        %2563 = vadd.xlane.f32.xlu0 %v2505
        %v2564 = vpop.xlane.xlu0 %2563
        %2565 = vadd.xlane.f32.xlu0 %v2506
        %v2566 = vpop.xlane.xlu0 %2565
        %2567 = vadd.xlane.f32.xlu0 %v2507
        %v2568 = vpop.xlane.xlu0 %2567
        %2569 = vadd.xlane.f32.xlu0 %v2508
        %v2570 = vpop.xlane.xlu0 %2569
        %2571 = vadd.xlane.f32.xlu0 %v2509
        %v2572 = vpop.xlane.xlu0 %2571
        %2573 = vadd.xlane.f32.xlu0 %v2510
        %v2574 = vpop.xlane.xlu0 %2573
        %v2575 = vmul.f32 %v2512, %v2414
        %v2576 = vmul.f32 %v2514, %v2414
        %v2577 = vmul.f32 %v2516, %v2414
        %v2578 = vmul.f32 %v2518, %v2414
        %v2579 = vmul.f32 %v2520, %v2414
        %v2580 = vmul.f32 %v2522, %v2414
        %v2581 = vmul.f32 %v2524, %v2414
        %v2582 = vmul.f32 %v2526, %v2414
        %v2583 = vmul.f32 %v2528, %v2414
        %v2584 = vmul.f32 %v2530, %v2414
        %v2585 = vmul.f32 %v2532, %v2414
        %v2586 = vmul.f32 %v2534, %v2414
        %v2587 = vmul.f32 %v2536, %v2414
        %v2588 = vmul.f32 %v2538, %v2414
        %v2589 = vmul.f32 %v2540, %v2414
        %v2590 = vmul.f32 %v2542, %v2414
        %v2591 = vmul.f32 %v2544, %v2414
        %v2592 = vmul.f32 %v2546, %v2414
        %v2593 = vmul.f32 %v2548, %v2414
        %v2594 = vmul.f32 %v2550, %v2414
        %v2595 = vmul.f32 %v2552, %v2414
        %v2596 = vmul.f32 %v2554, %v2414
        %v2597 = vmul.f32 %v2556, %v2414
        %v2598 = vmul.f32 %v2558, %v2414
        %v2599 = vmul.f32 %v2560, %v2414
        %v2600 = vmul.f32 %v2562, %v2414
        %v2601 = vmul.f32 %v2564, %v2414
        %v2602 = vmul.f32 %v2566, %v2414
        %v2603 = vmul.f32 %v2568, %v2414
        %v2604 = vmul.f32 %v2570, %v2414
        %v2605 = vmul.f32 %v2572, %v2414
        %v2606 = vmul.f32 %v2574, %v2414
        %v2607 = vadd.f32 %v2575, 1e-05
        %v2608 = vadd.f32 %v2576, 1e-05
        %v2609 = vadd.f32 %v2577, 1e-05
        %v2610 = vadd.f32 %v2578, 1e-05
        %v2611 = vadd.f32 %v2579, 1e-05
        %v2612 = vadd.f32 %v2580, 1e-05
        %v2613 = vadd.f32 %v2581, 1e-05
        %v2614 = vadd.f32 %v2582, 1e-05
        %v2615 = vadd.f32 %v2583, 1e-05
        %v2616 = vadd.f32 %v2584, 1e-05
        %v2617 = vadd.f32 %v2585, 1e-05
        %v2618 = vadd.f32 %v2586, 1e-05
        %v2619 = vadd.f32 %v2587, 1e-05
        %v2620 = vadd.f32 %v2588, 1e-05
        %v2621 = vadd.f32 %v2589, 1e-05
        %v2622 = vadd.f32 %v2590, 1e-05
        %v2623 = vadd.f32 %v2591, 1e-05
        %v2624 = vadd.f32 %v2592, 1e-05
        %v2625 = vadd.f32 %v2593, 1e-05
        %v2626 = vadd.f32 %v2594, 1e-05
        %v2627 = vadd.f32 %v2595, 1e-05
        %v2628 = vadd.f32 %v2596, 1e-05
        %v2629 = vadd.f32 %v2597, 1e-05
        %v2630 = vadd.f32 %v2598, 1e-05
        %v2631 = vadd.f32 %v2599, 1e-05
        %v2632 = vadd.f32 %v2600, 1e-05
        %v2633 = vadd.f32 %v2601, 1e-05
        %v2634 = vadd.f32 %v2602, 1e-05
        %v2635 = vadd.f32 %v2603, 1e-05
        %v2636 = vadd.f32 %v2604, 1e-05
        %v2637 = vadd.f32 %v2605, 1e-05
        %v2638 = vadd.f32 %v2606, 1e-05
        %v2639 = vrsqrt.pop %v2607
        %v2640 = vrsqrt.pop %v2608
        %v2641 = vrsqrt.pop %v2609
        %v2642 = vrsqrt.pop %v2610
        %v2643 = vrsqrt.pop %v2611
        %v2644 = vrsqrt.pop %v2612
        %v2645 = vrsqrt.pop %v2613
        %v2646 = vrsqrt.pop %v2614
        %v2647 = vrsqrt.pop %v2615
        %v2648 = vrsqrt.pop %v2616
        %v2649 = vrsqrt.pop %v2617
        %v2650 = vrsqrt.pop %v2618
        %v2651 = vrsqrt.pop %v2619
        %v2652 = vrsqrt.pop %v2620
        %v2653 = vrsqrt.pop %v2621
        %v2654 = vrsqrt.pop %v2622
        %v2655 = vrsqrt.pop %v2623
        %v2656 = vrsqrt.pop %v2624
        %v2657 = vrsqrt.pop %v2625
        %v2658 = vrsqrt.pop %v2626
        %v2659 = vrsqrt.pop %v2627
        %v2660 = vrsqrt.pop %v2628
        %v2661 = vrsqrt.pop %v2629
        %v2662 = vrsqrt.pop %v2630
        %v2663 = vrsqrt.pop %v2631
        %v2664 = vrsqrt.pop %v2632
        %v2665 = vrsqrt.pop %v2633
        %v2666 = vrsqrt.pop %v2634
        %v2667 = vrsqrt.pop %v2635
        %v2668 = vrsqrt.pop %v2636
        %v2669 = vrsqrt.pop %v2637
        %v2670 = vrsqrt.pop %v2638
        %v2671 = vmul.f32 %v2447, %v2639
        %v2672 = vmul.f32 %v2448, %v2640
        %v2673 = vmul.f32 %v2449, %v2641
        %v2674 = vmul.f32 %v2450, %v2642
        %v2675 = vmul.f32 %v2451, %v2643
        %v2676 = vmul.f32 %v2452, %v2644
        %v2677 = vmul.f32 %v2453, %v2645
        %v2678 = vmul.f32 %v2454, %v2646
        %v2679 = vmul.f32 %v2455, %v2647
        %v2680 = vmul.f32 %v2456, %v2648
        %v2681 = vmul.f32 %v2457, %v2649
        %v2682 = vmul.f32 %v2458, %v2650
        %v2683 = vmul.f32 %v2459, %v2651
        %v2684 = vmul.f32 %v2460, %v2652
        %v2685 = vmul.f32 %v2461, %v2653
        %v2686 = vmul.f32 %v2462, %v2654
        %v2687 = vmul.f32 %v2463, %v2655
        %v2688 = vmul.f32 %v2464, %v2656
        %v2689 = vmul.f32 %v2465, %v2657
        %v2690 = vmul.f32 %v2466, %v2658
        %v2691 = vmul.f32 %v2467, %v2659
        %v2692 = vmul.f32 %v2468, %v2660
        %v2693 = vmul.f32 %v2469, %v2661
        %v2694 = vmul.f32 %v2470, %v2662
        %v2695 = vmul.f32 %v2471, %v2663
        %v2696 = vmul.f32 %v2472, %v2664
        %v2697 = vmul.f32 %v2473, %v2665
        %v2698 = vmul.f32 %v2474, %v2666
        %v2699 = vmul.f32 %v2475, %v2667
        %v2700 = vmul.f32 %v2476, %v2668
        %v2701 = vmul.f32 %v2477, %v2669
        %v2702 = vmul.f32 %v2478, %v2670
        %v2704 = vlaneseq
        %v2705 = vshrl.u32 %v2704, 7
        %v2706 = vsub.s32 0, %v2705
        %v2707 = vrot.slane %v2348, %v2706
        %v2709 = vmul.f32 %v2671, %v2707
        %v2710 = vmul.f32 %v2672, %v2707
        %v2711 = vmul.f32 %v2673, %v2707
        %v2712 = vmul.f32 %v2674, %v2707
        %v2713 = vmul.f32 %v2675, %v2707
        %v2714 = vmul.f32 %v2676, %v2707
        %v2715 = vmul.f32 %v2677, %v2707
        %v2716 = vmul.f32 %v2678, %v2707
        %v2717 = vmul.f32 %v2679, %v2707
        %v2718 = vmul.f32 %v2680, %v2707
        %v2719 = vmul.f32 %v2681, %v2707
        %v2720 = vmul.f32 %v2682, %v2707
        %v2721 = vmul.f32 %v2683, %v2707
        %v2722 = vmul.f32 %v2684, %v2707
        %v2723 = vmul.f32 %v2685, %v2707
        %v2724 = vmul.f32 %v2686, %v2707
        %v2725 = vmul.f32 %v2687, %v2707
        %v2726 = vmul.f32 %v2688, %v2707
        %v2727 = vmul.f32 %v2689, %v2707
        %v2728 = vmul.f32 %v2690, %v2707
        %v2729 = vmul.f32 %v2691, %v2707
        %v2730 = vmul.f32 %v2692, %v2707
        %v2731 = vmul.f32 %v2693, %v2707
        %v2732 = vmul.f32 %v2694, %v2707
        %v2733 = vmul.f32 %v2695, %v2707
        %v2734 = vmul.f32 %v2696, %v2707
        %v2735 = vmul.f32 %v2697, %v2707
        %v2736 = vmul.f32 %v2698, %v2707
        %v2737 = vmul.f32 %v2699, %v2707
        %v2738 = vmul.f32 %v2700, %v2707
        %v2739 = vmul.f32 %v2701, %v2707
        %v2740 = vmul.f32 %v2702, %v2707
        %v2742 = vlaneseq
        %v2743 = vshrl.u32 %v2742, 7
        %v2744 = vsub.s32 0, %v2743
        %v2745 = vrot.slane %v2349, %v2744
        %v2747 = vadd.f32 %v2709, %v2745
        %v2748 = vadd.f32 %v2710, %v2745
        %v2749 = vadd.f32 %v2711, %v2745
        %v2750 = vadd.f32 %v2712, %v2745
        %v2751 = vadd.f32 %v2713, %v2745
        %v2752 = vadd.f32 %v2714, %v2745
        %v2753 = vadd.f32 %v2715, %v2745
        %v2754 = vadd.f32 %v2716, %v2745
        %v2755 = vadd.f32 %v2717, %v2745
        %v2756 = vadd.f32 %v2718, %v2745
        %v2757 = vadd.f32 %v2719, %v2745
        %v2758 = vadd.f32 %v2720, %v2745
        %v2759 = vadd.f32 %v2721, %v2745
        %v2760 = vadd.f32 %v2722, %v2745
        %v2761 = vadd.f32 %v2723, %v2745
        %v2762 = vadd.f32 %v2724, %v2745
        %v2763 = vadd.f32 %v2725, %v2745
        %v2764 = vadd.f32 %v2726, %v2745
        %v2765 = vadd.f32 %v2727, %v2745
        %v2766 = vadd.f32 %v2728, %v2745
        %v2767 = vadd.f32 %v2729, %v2745
        %v2768 = vadd.f32 %v2730, %v2745
        %v2769 = vadd.f32 %v2731, %v2745
        %v2770 = vadd.f32 %v2732, %v2745
        %v2771 = vadd.f32 %v2733, %v2745
        %v2772 = vadd.f32 %v2734, %v2745
        %v2773 = vadd.f32 %v2735, %v2745
        %v2774 = vadd.f32 %v2736, %v2745
        %v2775 = vadd.f32 %v2737, %v2745
        %v2776 = vadd.f32 %v2738, %v2745
        %v2777 = vadd.f32 %v2739, %v2745
        %v2778 = vadd.f32 %v2740, %v2745
        %2779 = vst [vmem:[%s375] sm:$0xff] %v2747
        %2780 = vst [vmem:[%s375 + $0x8] sm:$0xff] %v2748
        %2781 = vst [vmem:[%s375 + $0x10] sm:$0xff] %v2749
        %2782 = vst [vmem:[%s375 + $0x18] sm:$0xff] %v2750
        %2783 = vst [vmem:[%s375 + $0x20] sm:$0xff] %v2751
        %2784 = vst [vmem:[%s375 + $0x28] sm:$0xff] %v2752
        %2785 = vst [vmem:[%s375 + $0x30] sm:$0xff] %v2753
        %2786 = vst [vmem:[%s375 + $0x38] sm:$0xff] %v2754
        %2787 = vst [vmem:[%s375 + $0x40] sm:$0xff] %v2755
        %2788 = vst [vmem:[%s375 + $0x48] sm:$0xff] %v2756
        %2789 = vst [vmem:[%s375 + $0x50] sm:$0xff] %v2757
        %2790 = vst [vmem:[%s375 + $0x58] sm:$0xff] %v2758
        %2791 = vst [vmem:[%s375 + $0x60] sm:$0xff] %v2759
        %2792 = vst [vmem:[%s375 + $0x68] sm:$0xff] %v2760
        %2793 = vst [vmem:[%s375 + $0x70] sm:$0xff] %v2761
        %2794 = vst [vmem:[%s375 + $0x78] sm:$0xff] %v2762
        %2795 = vst [vmem:[%s375 + $0x80] sm:$0xff] %v2763
        %2796 = vst [vmem:[%s375 + $0x88] sm:$0xff] %v2764
        %2797 = vst [vmem:[%s375 + $0x90] sm:$0xff] %v2765
        %2798 = vst [vmem:[%s375 + $0x98] sm:$0xff] %v2766
        %2799 = vst [vmem:[%s375 + $0xa0] sm:$0xff] %v2767
        %2800 = vst [vmem:[%s375 + $0xa8] sm:$0xff] %v2768
        %2801 = vst [vmem:[%s375 + $0xb0] sm:$0xff] %v2769
        %2802 = vst [vmem:[%s375 + $0xb8] sm:$0xff] %v2770
        %2803 = vst [vmem:[%s375 + $0xc0] sm:$0xff] %v2771
        %2804 = vst [vmem:[%s375 + $0xc8] sm:$0xff] %v2772
        %2805 = vst [vmem:[%s375 + $0xd0] sm:$0xff] %v2773
        %2806 = vst [vmem:[%s375 + $0xd8] sm:$0xff] %v2774
        %2807 = vst [vmem:[%s375 + $0xe0] sm:$0xff] %v2775
        %2808 = vst [vmem:[%s375 + $0xe8] sm:$0xff] %v2776
        %2809 = vst [vmem:[%s375 + $0xf0] sm:$0xff] %v2777
        %2810 = vst [vmem:[%s375 + $0xf8] sm:$0xff] %v2778
        %s2811 = sand.u32 %s187, 1
        %s2812 = scalar_lea.sflag [#allocation4], %s2811
        %s2813 = sand.u32 %s187, 1
        %s2814 = smul.addr %s2813, 256
        %s2815 = scalar_lea.vmem [#allocation14], %s2814
        // Predicated region
        $region77: #{transformer_encode_block.7} parent=47 // pred_check
          %p2816 = pneg %p197
        $region78: #{transformer_encode_block.7} parent=47 // pred_check_branch
          %2818 = sbr.rel (%p2816) target = $region80
        $region79: #{transformer_encode_block.7} parent=47 // pred_region
          %s2819 = smul.u32 32, %s27
          %s2821 = ssub.s32 4096, 4096
          %2822 = vsyncadd %s2812, %s2821
          %s2823 = smul.addr %s2819, 128
          %s2824 = scalar_lea.hbm %s7, %s2823
          %s2825 = sshll.u32 %s2815, 4
          %s2826 = int_to_ptr.vmem [resolvable:$true] %s2825
          %2831 = dma.vmem_to_hbm [thread:$0]  %s2826, 4096, %s2824, %s2812, 128, 128, 8
        $region80: #{transformer_encode_block.7} parent=47 // pred_fallthru
          _
      $region48: #{transformer_encode_block.7} parent=5 // pred_fallthru
        _
      %p2832 = scmp.le.s32.totalorder 2, %s22
      // Predicated region
      $region81: #{transformer_encode_block.7} parent=5 // pred_check
        %p2833 = pneg %p2832
      $region82: #{transformer_encode_block.7} parent=5 // pred_check_branch
        %2835 = sbr.rel (%p2833) target = $region84
      $region83: #{transformer_encode_block.7} parent=5 // pred_region
        %s2836 = ssub.s32 %s22, 2
        // Predicated region
        $region85: #{transformer_encode_block.7} parent=83 // pred_check
          %p2837 = pneg %p203
        $region86: #{transformer_encode_block.7} parent=83 // pred_check_branch
          %2839 = sbr.rel (%p2837) target = $region88
        $region87: #{transformer_encode_block.7} parent=83 // pred_region
          %s2840 = sand.u32 %s188, 1
          %s2841 = scalar_lea.sflag [#allocation4], %s2840
          %s2842 = sand.u32 %s188, 1
          %s2843 = smul.addr %s2842, 256
          %s2844 = scalar_lea.vmem [#allocation14], %s2843
          %2845 = dma.done %s2841, 4096
        $region88: #{transformer_encode_block.7} parent=83 // pred_fallthru
          _
      $region84: #{transformer_encode_block.7} parent=5 // pred_fallthru
        _
    $region6: #{transformer_encode_block.7} parent=1 // loop_footer
      %s26 = sadd.s32 1, %s22
    $region7: #{transformer_encode_block.7} parent=1 // loop_footer_branch
      %21 = sbr.rel target = $region3
    $region8: #{transformer_encode_block.7} parent=1 // loop_exit
      _
    %2846 = vsyncpa [#allocation3], 1
    %s2847 = scalar_lea.sflag [#allocation3], 1
    %2848 = vsyncpa %s2847, 1
    %2849 = vsyncpa [#allocation6], 1
    %2850 = vsyncpa [#allocation9], 1
    %2851 = vsyncpa [#allocation12], 1
    %2852 = vsyncpa [#allocation4], 1
    %s2853 = scalar_lea.sflag [#allocation4], 1
    %2854 = vsyncpa %s2853, 1

</llo_original>
